<compile_context>
chip_gen: v5e
topology: v5e:2x2
jax: 0.10.0
libtpu: 0.0.40
codegen_flags: <defaults>
</compile_context>

<pallas_src>
import functools

import numpy as np
import jax
import jax.numpy as jnp
from jax.experimental import pallas as pl
from jax.experimental.pallas import tpu as pltpu

DIM = 8                     # adapter bottleneck width
HID = 768                   # transformer hidden size
HW = 14                     # patch grid side
N_TOK = 1 + HW * HW         # 197 tokens (cls + 196 patches)
ROWS = 208                  # token rows padded to a multiple of 8 for sublane rolls
NTAP = 9
THETA = 0.7

# flat-row shift of each 3x3 tap, tap order tau = di*3 + dj
_SHIFTS = tuple((di - 1) * HW + (dj - 1) for di in range(3) for dj in range(3))


def _quick_gelu(v):
    return v * jax.nn.sigmoid(1.702 * v)


def _window_mask():
    """(NTAP, ROWS, DIM) 0/1 validity mask; slab tau masks the tau-th shifted window."""
    m = np.zeros((NTAP, ROWS, DIM), np.float32)
    for di in range(3):
        for dj in range(3):
            tau = di * 3 + dj
            for t in range(N_TOK):
                if t == 0:
                    # cls token: 1x1 input with padding=1 -> only the centre tap
                    ok = (di == 1 and dj == 1)
                else:
                    h, w = divmod(t - 1, HW)
                    ok = (0 <= h + di - 1 < HW) and (0 <= w + dj - 1 < HW)
                if ok:
                    m[tau, t, :] = 1.0
    return m


def _cdc_adapter_kernel(x_ref, wd_ref, bd_ref, wc_ref, wu_ref, bu_ref, mask_ref,
                        o_ref, xstage_ref, *, bt):
    wd = wd_ref[...]          # (768, 8)
    bd = bd_ref[...]          # (1, 8)
    wu = wu_ref[...]          # (8, 768)
    bu = bu_ref[...]          # (1, 768)

    # Pad rows are only ever consumed through a zero mask but must be finite.  Zeroing
    # 11 rows per example is ~2 masked vregs -- cheap enough to do every step, which also
    # keeps it correct when the "parallel" grid axis is split across TensorCores.
    xstage_ref[:, N_TOK:ROWS, :] = jnp.zeros((bt, ROWS - N_TOK, DIM), jnp.float32)

    # ---- Phase 1: adapter_down + QuickGELU for every example in the block -----------
    for b in range(bt):
        v = jnp.dot(x_ref[b].astype(jnp.float32), wd,
                    preferred_element_type=jnp.float32) + bd
        xstage_ref[b, 0:N_TOK, :] = _quick_gelu(v)              # (197, 8) f32

    # ---- Phase 2: CDC 3x3 conv + QuickGELU + adapter_up per example ------------------
    # Conv = sum over 9 taps of (rolled rows, masked for window validity) @ (8,8) tap
    # weight, accumulated in f32 registers.  The centre tap already carries the
    # -theta * kernel_diff term (folded in the wrapper).
    for b in range(bt):
        xpad = xstage_ref[b]                                    # (208, 8)
        acc = jnp.zeros((ROWS, DIM), jnp.float32)
        for tau, s in enumerate(_SHIFTS):
            win = xpad if s == 0 else pltpu.roll(xpad, (-s) % ROWS, 0)
            win = win * mask_ref[tau]                           # zero invalid neighbours
            acc = acc + jnp.dot(win, wc_ref[tau],
                                preferred_element_type=jnp.float32)
        y = _quick_gelu(acc[0:N_TOK, :])                        # (197, 8)
        # dropout(p=0.1) == identity in eval mode
        up = jnp.dot(y, wu, preferred_element_type=jnp.float32) + bu
        o_ref[b] = up.astype(o_ref.dtype)                       # lane-dense (197,768) store


def _pick_block_b(B):
    # Prefer >= 4 grid steps (keeps DMA/compute overlap alive and feeds both cores on
    # 2-TC chips); cap block_b at 8 so double-buffered IO fits v7x's 64 MiB VMEM.
    for cand in (8, 4, 2):
        if B % cand == 0 and B // cand >= 4:
            return cand
    for cand in (4, 2):
        if B % cand == 0 and B // cand >= 2:
            return cand
    return 1


def cdc_adapter(x, w_down, b_down, w_conv, w_up, b_up, theta=THETA,
                block_b=None, out_dtype=None):
    """x: (B, 197, 768); w_down: (768, 8); b_down: (1, 8);
       w_conv: (3, 3, 8, 8) in HWIO layout (transpose PyTorch OIHW weights first);
       w_up: (8, 768); b_up: (1, 768)."""
    B, N, C = x.shape
    assert N == N_TOK and C == HID, "CDC_Adapter is hard-wired to a 14x14 ViT grid"
    assert w_conv.shape == (3, 3, DIM, DIM)

    if out_dtype is None:
        out_dtype = x.dtype
    if block_b is None:
        block_b = _pick_block_b(B)
    assert B % block_b == 0

    # Fold the central-difference term (-theta * sum_k w[k]) into the centre tap and
    # split into one (8,8) matrix per tap; tap order tau = di*3 + dj matches _SHIFTS.
    w_conv = jnp.asarray(w_conv, jnp.float32)
    kdiff = w_conv.sum(axis=(0, 1))                             # (C_in, C_out)
    w_conv_taps = w_conv.at[1, 1].add(-theta * kdiff).reshape(NTAP, DIM, DIM)

    mask = jnp.asarray(_window_mask())                          # (9, 208, 8) f32

    itemsize = jnp.dtype(x.dtype).itemsize + jnp.dtype(out_dtype).itemsize
    io_bytes = 2 * block_b * N_TOK * HID * itemsize             # double-buffered in+out
    vmem_limit = int(min(64 * 2**20, max(32 * 2**20, io_bytes + 8 * 2**20)))

    kernel = functools.partial(_cdc_adapter_kernel, bt=block_b)
    return pl.pallas_call(
        kernel,
        out_shape=jax.ShapeDtypeStruct((B, N_TOK, HID), out_dtype),
        grid=(B // block_b,),
        in_specs=[
            pl.BlockSpec((block_b, N_TOK, HID), lambda i: (i, 0, 0)),   # x
            pl.BlockSpec((HID, DIM), lambda i: (0, 0)),                 # w_down
            pl.BlockSpec((1, DIM), lambda i: (0, 0)),                   # b_down
            pl.BlockSpec((NTAP, DIM, DIM), lambda i: (0, 0, 0)),        # per-tap conv w
            pl.BlockSpec((DIM, HID), lambda i: (0, 0)),                 # w_up
            pl.BlockSpec((1, HID), lambda i: (0, 0)),                   # b_up
            pl.BlockSpec((NTAP, ROWS, DIM), lambda i: (0, 0, 0)),       # window mask
        ],
        out_specs=pl.BlockSpec((block_b, N_TOK, HID), lambda i: (i, 0, 0)),
        scratch_shapes=[pltpu.VMEM((block_b, ROWS, DIM), jnp.float32)],  # token staging
        compiler_params=pltpu.CompilerParams(
            dimension_semantics=("parallel",),
            vmem_limit_bytes=vmem_limit),
    )(x, jnp.asarray(w_down, jnp.float32), jnp.asarray(b_down, jnp.float32),
      w_conv_taps, jnp.asarray(w_up, jnp.float32), jnp.asarray(b_up, jnp.float32), mask)


def reference(x, w_down, b_down, w_conv, w_up, b_up, theta):
    """Pure-JAX reference mirroring the PyTorch forward (uses XLA conv)."""
    xd = jnp.einsum('bnc,cd->bnd', x, w_down) + b_down[0]
    xd = _quick_gelu(xd)
    B = x.shape[0]
    dn = ('NHWC', 'HWIO', 'NHWC')
    kdiff = w_conv.sum(axis=(0, 1))[None, None]                 # (1,1,Cin,Cout)

    def cdc(inp, pad):
        o_n = jax.lax.conv_general_dilated(inp, w_conv, (1, 1),
                                           ((pad, pad), (pad, pad)),
                                           dimension_numbers=dn)
        o_d = jax.lax.conv_general_dilated(inp, kdiff, (1, 1),
                                           ((0, 0), (0, 0)),
                                           dimension_numbers=dn)
        return o_n - theta * o_d

    patch = cdc(xd[:, 1:].reshape(B, HW, HW, DIM), 1).reshape(B, HW * HW, DIM)
    cls = cdc(xd[:, :1].reshape(B, 1, 1, DIM), 1).reshape(B, 1, DIM)
    y = _quick_gelu(jnp.concatenate([cls, patch], axis=1))
    return jnp.einsum('bnd,dc->bnc', y, w_up) + b_up[0]


if __name__ == "__main__":
    B = 4
    key = jax.random.PRNGKey(0)
    kx, kd, kc, ku = jax.random.split(key, 4)

    x = jax.random.normal(kx, (B, N_TOK, HID), jnp.float32)
    w_down = jax.random.normal(kd, (HID, DIM), jnp.float32) * (6.0 / (HID + DIM)) ** 0.5
    b_down = jnp.zeros((1, DIM), jnp.float32)
    w_conv = jax.random.normal(kc, (3, 3, DIM, DIM), jnp.float32) * (1.0 / (9 * DIM)) ** 0.5
    # NOTE: the PyTorch module zero-inits adapter_up (output would be identically 0);
    # deterministic small random values are used instead so the kernel is exercised.
    w_up = jax.random.normal(ku, (DIM, HID), jnp.float32) * 0.05
    b_up = jnp.zeros((1, HID), jnp.float32)

    out = jax.block_until_ready(cdc_adapter(x, w_down, b_down, w_conv, w_up, b_up))
    ref = jax.block_until_ready(reference(x, w_down, b_down, w_conv, w_up, b_up, THETA))

    assert out.shape == (B, N_TOK, HID)
    err = float(jnp.max(jnp.abs(out - ref)))
    assert err < 5e-2, f"max abs err {err}"
    print("KERNEL_OK")
</pallas_src>

<mosaic_0001>
module attributes {stable_mosaic.version = 11 : i64} {
  func.func @_cdc_adapter_kernel(%arg0: i32, %arg1: memref<2x197x768xf32, #tpu.memory_space<vmem>>, %arg2: memref<768x8xf32, #tpu.memory_space<vmem>>, %arg3: memref<1x8xf32, #tpu.memory_space<vmem>>, %arg4: memref<9x8x8xf32, #tpu.memory_space<vmem>>, %arg5: memref<8x768xf32, #tpu.memory_space<vmem>>, %arg6: memref<1x768xf32, #tpu.memory_space<vmem>>, %arg7: memref<9x208x8xf32, #tpu.memory_space<vmem>>, %arg8: memref<2x197x768xf32, #tpu.memory_space<vmem>>, %arg9: memref<2x208x8xf32, #tpu.memory_space<vmem>>) attributes {dimension_semantics = [#tpu.dimension_semantics<parallel>], iteration_bounds = array<i64: 2>, scalar_prefetch = 0 : i64, scratch_operands = 1 : i64, tpu.core_type = #tpu.core_type<tc>, window_params = [{transform_indices = @transform_0, window_bounds = array<i64: 2, 197, 768>}, {pipeline_mode = #tpu.pipeline_mode<synchronous>, transform_indices = @transform_1, window_bounds = array<i64: 768, 8>}, {pipeline_mode = #tpu.pipeline_mode<synchronous>, transform_indices = @transform_2, window_bounds = array<i64: 1, 8>}, {pipeline_mode = #tpu.pipeline_mode<synchronous>, transform_indices = @transform_3, window_bounds = array<i64: 9, 8, 8>}, {pipeline_mode = #tpu.pipeline_mode<synchronous>, transform_indices = @transform_4, window_bounds = array<i64: 8, 768>}, {pipeline_mode = #tpu.pipeline_mode<synchronous>, transform_indices = @transform_5, window_bounds = array<i64: 1, 768>}, {pipeline_mode = #tpu.pipeline_mode<synchronous>, transform_indices = @transform_6, window_bounds = array<i64: 9, 208, 8>}, {transform_indices = @transform_7, window_bounds = array<i64: 2, 197, 768>}]} {
    %c0 = arith.constant 0 : index
    %c0_0 = arith.constant 0 : index
    %0 = vector.load %arg2[%c0, %c0_0] : memref<768x8xf32, #tpu.memory_space<vmem>>, vector<768x8xf32>
    %c0_1 = arith.constant 0 : index
    %c0_2 = arith.constant 0 : index
    %1 = vector.load %arg3[%c0_1, %c0_2] : memref<1x8xf32, #tpu.memory_space<vmem>>, vector<1x8xf32>
    %c0_3 = arith.constant 0 : index
    %c0_4 = arith.constant 0 : index
    %2 = vector.load %arg5[%c0_3, %c0_4] : memref<8x768xf32, #tpu.memory_space<vmem>>, vector<8x768xf32>
    %c0_5 = arith.constant 0 : index
    %c0_6 = arith.constant 0 : index
    %3 = vector.load %arg6[%c0_5, %c0_6] : memref<1x768xf32, #tpu.memory_space<vmem>>, vector<1x768xf32>
    %cst = arith.constant 0.000000e+00 : f32
    %4 = vector.broadcast %cst : f32 to vector<2x11x8xf32>
    %c0_7 = arith.constant 0 : index
    %c197 = arith.constant 197 : index
    %c0_8 = arith.constant 0 : index
    %5 = vector.load %arg9[%c0_7, %c197, %c0_8] : memref<2x208x8xf32, #tpu.memory_space<vmem>>, vector<2x11x8xf32>
    tpu.vector_store %arg9[%c0_7, %c197, %c0_8], %4 {strides = array<i32>} : memref<2x208x8xf32, #tpu.memory_space<vmem>>, vector<2x11x8xf32>,
    %c0_9 = arith.constant 0 : index
    %c0_10 = arith.constant 0 : index
    %c0_11 = arith.constant 0 : index
    %6 = vector.load %arg1[%c0_9, %c0_10, %c0_11] : memref<2x197x768xf32, #tpu.memory_space<vmem>>, vector<1x197x768xf32>
    %7 = vector.shape_cast %6 : vector<1x197x768xf32> to vector<197x768xf32>
    %cst_12 = arith.constant dense<0.000000e+00> : vector<197x8xf32>
    %8 = tpu.matmul %7, %0, %cst_12 {dimension_numbers = #tpu.dot_dimension_numbers<[1], [0], [0], [1], [0, 0, 1, 1], [], []>} : vector<197x768xf32>, vector<768x8xf32>, vector<197x8xf32> -> vector<197x8xf32>
    %9 = vector.broadcast %1 : vector<1x8xf32> to vector<197x8xf32>
    %10 = arith.addf %8, %9 : vector<197x8xf32>
    %cst_13 = arith.constant 1.702000e+00 : f32
    %11 = vector.broadcast %cst_13 : f32 to vector<197x8xf32>
    %12 = arith.mulf %11, %10 : vector<197x8xf32>
    %13 = arith.negf %12 : vector<197x8xf32>
    %14 = math.exp %13 : vector<197x8xf32>
    %cst_14 = arith.constant 1.000000e+00 : f32
    %15 = vector.broadcast %cst_14 : f32 to vector<197x8xf32>
    %16 = arith.addf %15, %14 : vector<197x8xf32>
    %17 = arith.divf %15, %16 : vector<197x8xf32>
    %18 = arith.mulf %10, %17 : vector<197x8xf32>
    %c0_15 = arith.constant 0 : index
    %c0_16 = arith.constant 0 : index
    %c0_17 = arith.constant 0 : index
    %19 = vector.load %arg9[%c0_15, %c0_16, %c0_17] : memref<2x208x8xf32, #tpu.memory_space<vmem>>, vector<1x197x8xf32>
    %20 = vector.shape_cast %19 : vector<1x197x8xf32> to vector<197x8xf32>
    %21 = vector.shape_cast %18 : vector<197x8xf32> to vector<1x197x8xf32>
    tpu.vector_store %arg9[%c0_15, %c0_16, %c0_17], %21 {strides = array<i32>} : memref<2x208x8xf32, #tpu.memory_space<vmem>>, vector<1x197x8xf32>,
    %c1 = arith.constant 1 : index
    %c0_18 = arith.constant 0 : index
    %c0_19 = arith.constant 0 : index
    %22 = vector.load %arg1[%c1, %c0_18, %c0_19] : memref<2x197x768xf32, #tpu.memory_space<vmem>>, vector<1x197x768xf32>
    %23 = vector.shape_cast %22 : vector<1x197x768xf32> to vector<197x768xf32>
    %cst_20 = arith.constant dense<0.000000e+00> : vector<197x8xf32>
    %24 = tpu.matmul %23, %0, %cst_20 {dimension_numbers = #tpu.dot_dimension_numbers<[1], [0], [0], [1], [0, 0, 1, 1], [], []>} : vector<197x768xf32>, vector<768x8xf32>, vector<197x8xf32> -> vector<197x8xf32>
    %25 = vector.broadcast %1 : vector<1x8xf32> to vector<197x8xf32>
    %26 = arith.addf %24, %25 : vector<197x8xf32>
    %cst_21 = arith.constant 1.702000e+00 : f32
    %27 = vector.broadcast %cst_21 : f32 to vector<197x8xf32>
    %28 = arith.mulf %27, %26 : vector<197x8xf32>
    %29 = arith.negf %28 : vector<197x8xf32>
    %30 = math.exp %29 : vector<197x8xf32>
    %cst_22 = arith.constant 1.000000e+00 : f32
    %31 = vector.broadcast %cst_22 : f32 to vector<197x8xf32>
    %32 = arith.addf %31, %30 : vector<197x8xf32>
    %33 = arith.divf %31, %32 : vector<197x8xf32>
    %34 = arith.mulf %26, %33 : vector<197x8xf32>
    %c1_23 = arith.constant 1 : index
    %c0_24 = arith.constant 0 : index
    %c0_25 = arith.constant 0 : index
    %35 = vector.load %arg9[%c1_23, %c0_24, %c0_25] : memref<2x208x8xf32, #tpu.memory_space<vmem>>, vector<1x197x8xf32>
    %36 = vector.shape_cast %35 : vector<1x197x8xf32> to vector<197x8xf32>
    %37 = vector.shape_cast %34 : vector<197x8xf32> to vector<1x197x8xf32>
    tpu.vector_store %arg9[%c1_23, %c0_24, %c0_25], %37 {strides = array<i32>} : memref<2x208x8xf32, #tpu.memory_space<vmem>>, vector<1x197x8xf32>,
    %c0_26 = arith.constant 0 : index
    %c0_27 = arith.constant 0 : index
    %c0_28 = arith.constant 0 : index
    %38 = vector.load %arg9[%c0_26, %c0_27, %c0_28] : memref<2x208x8xf32, #tpu.memory_space<vmem>>, vector<1x208x8xf32>
    %39 = vector.shape_cast %38 : vector<1x208x8xf32> to vector<208x8xf32>
    %cst_29 = arith.constant 0.000000e+00 : f32
    %40 = vector.broadcast %cst_29 : f32 to vector<208x8xf32>
    %c15_i32 = arith.constant 15 : i32
    %41 = tpu.dynamic_rotate %39 by %c15_i32 dim 0 : vector<208x8xf32>, i32 -> vector<208x8xf32>
    %c0_30 = arith.constant 0 : index
    %c0_31 = arith.constant 0 : index
    %c0_32 = arith.constant 0 : index
    %42 = vector.load %arg7[%c0_30, %c0_31, %c0_32] : memref<9x208x8xf32, #tpu.memory_space<vmem>>, vector<1x208x8xf32>
    %43 = vector.shape_cast %42 : vector<1x208x8xf32> to vector<208x8xf32>
    %44 = arith.mulf %41, %43 : vector<208x8xf32>
    %c0_33 = arith.constant 0 : index
    %c0_34 = arith.constant 0 : index
    %c0_35 = arith.constant 0 : index
    %45 = vector.load %arg4[%c0_33, %c0_34, %c0_35] : memref<9x8x8xf32, #tpu.memory_space<vmem>>, vector<1x8x8xf32>
    %46 = vector.shape_cast %45 : vector<1x8x8xf32> to vector<8x8xf32>
    %cst_36 = arith.constant dense<0.000000e+00> : vector<208x8xf32>
    %47 = tpu.matmul %44, %46, %cst_36 {dimension_numbers = #tpu.dot_dimension_numbers<[1], [0], [0], [1], [0, 0, 1, 1], [], []>} : vector<208x8xf32>, vector<8x8xf32>, vector<208x8xf32> -> vector<208x8xf32>
    %48 = arith.addf %40, %47 : vector<208x8xf32>
    %c14_i32 = arith.constant 14 : i32
    %49 = tpu.dynamic_rotate %39 by %c14_i32 dim 0 : vector<208x8xf32>, i32 -> vector<208x8xf32>
    %c1_37 = arith.constant 1 : index
    %c0_38 = arith.constant 0 : index
    %c0_39 = arith.constant 0 : index
    %50 = vector.load %arg7[%c1_37, %c0_38, %c0_39] : memref<9x208x8xf32, #tpu.memory_space<vmem>>, vector<1x208x8xf32>
    %51 = vector.shape_cast %50 : vector<1x208x8xf32> to vector<208x8xf32>
    %52 = arith.mulf %49, %51 : vector<208x8xf32>
    %c1_40 = arith.constant 1 : index
    %c0_41 = arith.constant 0 : index
    %c0_42 = arith.constant 0 : index
    %53 = vector.load %arg4[%c1_40, %c0_41, %c0_42] : memref<9x8x8xf32, #tpu.memory_space<vmem>>, vector<1x8x8xf32>
    %54 = vector.shape_cast %53 : vector<1x8x8xf32> to vector<8x8xf32>
    %cst_43 = arith.constant dense<0.000000e+00> : vector<208x8xf32>
    %55 = tpu.matmul %52, %54, %cst_43 {dimension_numbers = #tpu.dot_dimension_numbers<[1], [0], [0], [1], [0, 0, 1, 1], [], []>} : vector<208x8xf32>, vector<8x8xf32>, vector<208x8xf32> -> vector<208x8xf32>
    %56 = arith.addf %48, %55 : vector<208x8xf32>
    %c13_i32 = arith.constant 13 : i32
    %57 = tpu.dynamic_rotate %39 by %c13_i32 dim 0 : vector<208x8xf32>, i32 -> vector<208x8xf32>
    %c2 = arith.constant 2 : index
    %c0_44 = arith.constant 0 : index
    %c0_45 = arith.constant 0 : index
    %58 = vector.load %arg7[%c2, %c0_44, %c0_45] : memref<9x208x8xf32, #tpu.memory_space<vmem>>, vector<1x208x8xf32>
    %59 = vector.shape_cast %58 : vector<1x208x8xf32> to vector<208x8xf32>
    %60 = arith.mulf %57, %59 : vector<208x8xf32>
    %c2_46 = arith.constant 2 : index
    %c0_47 = arith.constant 0 : index
    %c0_48 = arith.constant 0 : index
    %61 = vector.load %arg4[%c2_46, %c0_47, %c0_48] : memref<9x8x8xf32, #tpu.memory_space<vmem>>, vector<1x8x8xf32>
    %62 = vector.shape_cast %61 : vector<1x8x8xf32> to vector<8x8xf32>
    %cst_49 = arith.constant dense<0.000000e+00> : vector<208x8xf32>
    %63 = tpu.matmul %60, %62, %cst_49 {dimension_numbers = #tpu.dot_dimension_numbers<[1], [0], [0], [1], [0, 0, 1, 1], [], []>} : vector<208x8xf32>, vector<8x8xf32>, vector<208x8xf32> -> vector<208x8xf32>
    %64 = arith.addf %56, %63 : vector<208x8xf32>
    %c1_i32 = arith.constant 1 : i32
    %65 = tpu.dynamic_rotate %39 by %c1_i32 dim 0 : vector<208x8xf32>, i32 -> vector<208x8xf32>
    %c3 = arith.constant 3 : index
    %c0_50 = arith.constant 0 : index
    %c0_51 = arith.constant 0 : index
    %66 = vector.load %arg7[%c3, %c0_50, %c0_51] : memref<9x208x8xf32, #tpu.memory_space<vmem>>, vector<1x208x8xf32>
    %67 = vector.shape_cast %66 : vector<1x208x8xf32> to vector<208x8xf32>
    %68 = arith.mulf %65, %67 : vector<208x8xf32>
    %c3_52 = arith.constant 3 : index
    %c0_53 = arith.constant 0 : index
    %c0_54 = arith.constant 0 : index
    %69 = vector.load %arg4[%c3_52, %c0_53, %c0_54] : memref<9x8x8xf32, #tpu.memory_space<vmem>>, vector<1x8x8xf32>
    %70 = vector.shape_cast %69 : vector<1x8x8xf32> to vector<8x8xf32>
    %cst_55 = arith.constant dense<0.000000e+00> : vector<208x8xf32>
    %71 = tpu.matmul %68, %70, %cst_55 {dimension_numbers = #tpu.dot_dimension_numbers<[1], [0], [0], [1], [0, 0, 1, 1], [], []>} : vector<208x8xf32>, vector<8x8xf32>, vector<208x8xf32> -> vector<208x8xf32>
    %72 = arith.addf %64, %71 : vector<208x8xf32>
    %c4 = arith.constant 4 : index
    %c0_56 = arith.constant 0 : index
    %c0_57 = arith.constant 0 : index
    %73 = vector.load %arg7[%c4, %c0_56, %c0_57] : memref<9x208x8xf32, #tpu.memory_space<vmem>>, vector<1x208x8xf32>
    %74 = vector.shape_cast %73 : vector<1x208x8xf32> to vector<208x8xf32>
    %75 = arith.mulf %39, %74 : vector<208x8xf32>
    %c4_58 = arith.constant 4 : index
    %c0_59 = arith.constant 0 : index
    %c0_60 = arith.constant 0 : index
    %76 = vector.load %arg4[%c4_58, %c0_59, %c0_60] : memref<9x8x8xf32, #tpu.memory_space<vmem>>, vector<1x8x8xf32>
    %77 = vector.shape_cast %76 : vector<1x8x8xf32> to vector<8x8xf32>
    %cst_61 = arith.constant dense<0.000000e+00> : vector<208x8xf32>
    %78 = tpu.matmul %75, %77, %cst_61 {dimension_numbers = #tpu.dot_dimension_numbers<[1], [0], [0], [1], [0, 0, 1, 1], [], []>} : vector<208x8xf32>, vector<8x8xf32>, vector<208x8xf32> -> vector<208x8xf32>
    %79 = arith.addf %72, %78 : vector<208x8xf32>
    %c207_i32 = arith.constant 207 : i32
    %80 = tpu.dynamic_rotate %39 by %c207_i32 dim 0 : vector<208x8xf32>, i32 -> vector<208x8xf32>
    %c5 = arith.constant 5 : index
    %c0_62 = arith.constant 0 : index
    %c0_63 = arith.constant 0 : index
    %81 = vector.load %arg7[%c5, %c0_62, %c0_63] : memref<9x208x8xf32, #tpu.memory_space<vmem>>, vector<1x208x8xf32>
    %82 = vector.shape_cast %81 : vector<1x208x8xf32> to vector<208x8xf32>
    %83 = arith.mulf %80, %82 : vector<208x8xf32>
    %c5_64 = arith.constant 5 : index
    %c0_65 = arith.constant 0 : index
    %c0_66 = arith.constant 0 : index
    %84 = vector.load %arg4[%c5_64, %c0_65, %c0_66] : memref<9x8x8xf32, #tpu.memory_space<vmem>>, vector<1x8x8xf32>
    %85 = vector.shape_cast %84 : vector<1x8x8xf32> to vector<8x8xf32>
    %cst_67 = arith.constant dense<0.000000e+00> : vector<208x8xf32>
    %86 = tpu.matmul %83, %85, %cst_67 {dimension_numbers = #tpu.dot_dimension_numbers<[1], [0], [0], [1], [0, 0, 1, 1], [], []>} : vector<208x8xf32>, vector<8x8xf32>, vector<208x8xf32> -> vector<208x8xf32>
    %87 = arith.addf %79, %86 : vector<208x8xf32>
    %c195_i32 = arith.constant 195 : i32
    %88 = tpu.dynamic_rotate %39 by %c195_i32 dim 0 : vector<208x8xf32>, i32 -> vector<208x8xf32>
    %c6 = arith.constant 6 : index
    %c0_68 = arith.constant 0 : index
    %c0_69 = arith.constant 0 : index
    %89 = vector.load %arg7[%c6, %c0_68, %c0_69] : memref<9x208x8xf32, #tpu.memory_space<vmem>>, vector<1x208x8xf32>
    %90 = vector.shape_cast %89 : vector<1x208x8xf32> to vector<208x8xf32>
    %91 = arith.mulf %88, %90 : vector<208x8xf32>
    %c6_70 = arith.constant 6 : index
    %c0_71 = arith.constant 0 : index
    %c0_72 = arith.constant 0 : index
    %92 = vector.load %arg4[%c6_70, %c0_71, %c0_72] : memref<9x8x8xf32, #tpu.memory_space<vmem>>, vector<1x8x8xf32>
    %93 = vector.shape_cast %92 : vector<1x8x8xf32> to vector<8x8xf32>
    %cst_73 = arith.constant dense<0.000000e+00> : vector<208x8xf32>
    %94 = tpu.matmul %91, %93, %cst_73 {dimension_numbers = #tpu.dot_dimension_numbers<[1], [0], [0], [1], [0, 0, 1, 1], [], []>} : vector<208x8xf32>, vector<8x8xf32>, vector<208x8xf32> -> vector<208x8xf32>
    %95 = arith.addf %87, %94 : vector<208x8xf32>
    %c194_i32 = arith.constant 194 : i32
    %96 = tpu.dynamic_rotate %39 by %c194_i32 dim 0 : vector<208x8xf32>, i32 -> vector<208x8xf32>
    %c7 = arith.constant 7 : index
    %c0_74 = arith.constant 0 : index
    %c0_75 = arith.constant 0 : index
    %97 = vector.load %arg7[%c7, %c0_74, %c0_75] : memref<9x208x8xf32, #tpu.memory_space<vmem>>, vector<1x208x8xf32>
    %98 = vector.shape_cast %97 : vector<1x208x8xf32> to vector<208x8xf32>
    %99 = arith.mulf %96, %98 : vector<208x8xf32>
    %c7_76 = arith.constant 7 : index
    %c0_77 = arith.constant 0 : index
    %c0_78 = arith.constant 0 : index
    %100 = vector.load %arg4[%c7_76, %c0_77, %c0_78] : memref<9x8x8xf32, #tpu.memory_space<vmem>>, vector<1x8x8xf32>
    %101 = vector.shape_cast %100 : vector<1x8x8xf32> to vector<8x8xf32>
    %cst_79 = arith.constant dense<0.000000e+00> : vector<208x8xf32>
    %102 = tpu.matmul %99, %101, %cst_79 {dimension_numbers = #tpu.dot_dimension_numbers<[1], [0], [0], [1], [0, 0, 1, 1], [], []>} : vector<208x8xf32>, vector<8x8xf32>, vector<208x8xf32> -> vector<208x8xf32>
    %103 = arith.addf %95, %102 : vector<208x8xf32>
    %c193_i32 = arith.constant 193 : i32
    %104 = tpu.dynamic_rotate %39 by %c193_i32 dim 0 : vector<208x8xf32>, i32 -> vector<208x8xf32>
    %c8 = arith.constant 8 : index
    %c0_80 = arith.constant 0 : index
    %c0_81 = arith.constant 0 : index
    %105 = vector.load %arg7[%c8, %c0_80, %c0_81] : memref<9x208x8xf32, #tpu.memory_space<vmem>>, vector<1x208x8xf32>
    %106 = vector.shape_cast %105 : vector<1x208x8xf32> to vector<208x8xf32>
    %107 = arith.mulf %104, %106 : vector<208x8xf32>
    %c8_82 = arith.constant 8 : index
    %c0_83 = arith.constant 0 : index
    %c0_84 = arith.constant 0 : index
    %108 = vector.load %arg4[%c8_82, %c0_83, %c0_84] : memref<9x8x8xf32, #tpu.memory_space<vmem>>, vector<1x8x8xf32>
    %109 = vector.shape_cast %108 : vector<1x8x8xf32> to vector<8x8xf32>
    %cst_85 = arith.constant dense<0.000000e+00> : vector<208x8xf32>
    %110 = tpu.matmul %107, %109, %cst_85 {dimension_numbers = #tpu.dot_dimension_numbers<[1], [0], [0], [1], [0, 0, 1, 1], [], []>} : vector<208x8xf32>, vector<8x8xf32>, vector<208x8xf32> -> vector<208x8xf32>
    %111 = arith.addf %103, %110 : vector<208x8xf32>
    %112 = vector.extract_strided_slice %111 {offsets = [0, 0], sizes = [197, 8], strides = [1, 1]} : vector<208x8xf32> to vector<197x8xf32>
    %cst_86 = arith.constant 1.702000e+00 : f32
    %113 = vector.broadcast %cst_86 : f32 to vector<197x8xf32>
    %114 = arith.mulf %113, %112 : vector<197x8xf32>
    %115 = arith.negf %114 : vector<197x8xf32>
    %116 = math.exp %115 : vector<197x8xf32>
    %cst_87 = arith.constant 1.000000e+00 : f32
    %117 = vector.broadcast %cst_87 : f32 to vector<197x8xf32>
    %118 = arith.addf %117, %116 : vector<197x8xf32>
    %119 = arith.divf %117, %118 : vector<197x8xf32>
    %120 = arith.mulf %112, %119 : vector<197x8xf32>
    %cst_88 = arith.constant dense<0.000000e+00> : vector<197x768xf32>
    %121 = tpu.matmul %120, %2, %cst_88 {dimension_numbers = #tpu.dot_dimension_numbers<[1], [0], [0], [1], [0, 0, 1, 1], [], []>} : vector<197x8xf32>, vector<8x768xf32>, vector<197x768xf32> -> vector<197x768xf32>
    %122 = vector.broadcast %3 : vector<1x768xf32> to vector<197x768xf32>
    %123 = arith.addf %121, %122 : vector<197x768xf32>
    %c0_89 = arith.constant 0 : index
    %c0_90 = arith.constant 0 : index
    %c0_91 = arith.constant 0 : index
    %124 = vector.load %arg8[%c0_89, %c0_90, %c0_91] : memref<2x197x768xf32, #tpu.memory_space<vmem>>, vector<1x197x768xf32>
    %125 = vector.shape_cast %124 : vector<1x197x768xf32> to vector<197x768xf32>
    %126 = vector.shape_cast %123 : vector<197x768xf32> to vector<1x197x768xf32>
    tpu.vector_store %arg8[%c0_89, %c0_90, %c0_91], %126 {strides = array<i32>} : memref<2x197x768xf32, #tpu.memory_space<vmem>>, vector<1x197x768xf32>,
    %c1_92 = arith.constant 1 : index
    %c0_93 = arith.constant 0 : index
    %c0_94 = arith.constant 0 : index
    %127 = vector.load %arg9[%c1_92, %c0_93, %c0_94] : memref<2x208x8xf32, #tpu.memory_space<vmem>>, vector<1x208x8xf32>
    %128 = vector.shape_cast %127 : vector<1x208x8xf32> to vector<208x8xf32>
    %cst_95 = arith.constant 0.000000e+00 : f32
    %129 = vector.broadcast %cst_95 : f32 to vector<208x8xf32>
    %c15_i32_96 = arith.constant 15 : i32
    %130 = tpu.dynamic_rotate %128 by %c15_i32_96 dim 0 : vector<208x8xf32>, i32 -> vector<208x8xf32>
    %c0_97 = arith.constant 0 : index
    %c0_98 = arith.constant 0 : index
    %c0_99 = arith.constant 0 : index
    %131 = vector.load %arg7[%c0_97, %c0_98, %c0_99] : memref<9x208x8xf32, #tpu.memory_space<vmem>>, vector<1x208x8xf32>
    %132 = vector.shape_cast %131 : vector<1x208x8xf32> to vector<208x8xf32>
    %133 = arith.mulf %130, %132 : vector<208x8xf32>
    %c0_100 = arith.constant 0 : index
    %c0_101 = arith.constant 0 : index
    %c0_102 = arith.constant 0 : index
    %134 = vector.load %arg4[%c0_100, %c0_101, %c0_102] : memref<9x8x8xf32, #tpu.memory_space<vmem>>, vector<1x8x8xf32>
    %135 = vector.shape_cast %134 : vector<1x8x8xf32> to vector<8x8xf32>
    %cst_103 = arith.constant dense<0.000000e+00> : vector<208x8xf32>
    %136 = tpu.matmul %133, %135, %cst_103 {dimension_numbers = #tpu.dot_dimension_numbers<[1], [0], [0], [1], [0, 0, 1, 1], [], []>} : vector<208x8xf32>, vector<8x8xf32>, vector<208x8xf32> -> vector<208x8xf32>
    %137 = arith.addf %129, %136 : vector<208x8xf32>
    %c14_i32_104 = arith.constant 14 : i32
    %138 = tpu.dynamic_rotate %128 by %c14_i32_104 dim 0 : vector<208x8xf32>, i32 -> vector<208x8xf32>
    %c1_105 = arith.constant 1 : index
    %c0_106 = arith.constant 0 : index
    %c0_107 = arith.constant 0 : index
    %139 = vector.load %arg7[%c1_105, %c0_106, %c0_107] : memref<9x208x8xf32, #tpu.memory_space<vmem>>, vector<1x208x8xf32>
    %140 = vector.shape_cast %139 : vector<1x208x8xf32> to vector<208x8xf32>
    %141 = arith.mulf %138, %140 : vector<208x8xf32>
    %c1_108 = arith.constant 1 : index
    %c0_109 = arith.constant 0 : index
    %c0_110 = arith.constant 0 : index
    %142 = vector.load %arg4[%c1_108, %c0_109, %c0_110] : memref<9x8x8xf32, #tpu.memory_space<vmem>>, vector<1x8x8xf32>
    %143 = vector.shape_cast %142 : vector<1x8x8xf32> to vector<8x8xf32>
    %cst_111 = arith.constant dense<0.000000e+00> : vector<208x8xf32>
    %144 = tpu.matmul %141, %143, %cst_111 {dimension_numbers = #tpu.dot_dimension_numbers<[1], [0], [0], [1], [0, 0, 1, 1], [], []>} : vector<208x8xf32>, vector<8x8xf32>, vector<208x8xf32> -> vector<208x8xf32>
    %145 = arith.addf %137, %144 : vector<208x8xf32>
    %c13_i32_112 = arith.constant 13 : i32
    %146 = tpu.dynamic_rotate %128 by %c13_i32_112 dim 0 : vector<208x8xf32>, i32 -> vector<208x8xf32>
    %c2_113 = arith.constant 2 : index
    %c0_114 = arith.constant 0 : index
    %c0_115 = arith.constant 0 : index
    %147 = vector.load %arg7[%c2_113, %c0_114, %c0_115] : memref<9x208x8xf32, #tpu.memory_space<vmem>>, vector<1x208x8xf32>
    %148 = vector.shape_cast %147 : vector<1x208x8xf32> to vector<208x8xf32>
    %149 = arith.mulf %146, %148 : vector<208x8xf32>
    %c2_116 = arith.constant 2 : index
    %c0_117 = arith.constant 0 : index
    %c0_118 = arith.constant 0 : index
    %150 = vector.load %arg4[%c2_116, %c0_117, %c0_118] : memref<9x8x8xf32, #tpu.memory_space<vmem>>, vector<1x8x8xf32>
    %151 = vector.shape_cast %150 : vector<1x8x8xf32> to vector<8x8xf32>
    %cst_119 = arith.constant dense<0.000000e+00> : vector<208x8xf32>
    %152 = tpu.matmul %149, %151, %cst_119 {dimension_numbers = #tpu.dot_dimension_numbers<[1], [0], [0], [1], [0, 0, 1, 1], [], []>} : vector<208x8xf32>, vector<8x8xf32>, vector<208x8xf32> -> vector<208x8xf32>
    %153 = arith.addf %145, %152 : vector<208x8xf32>
    %c1_i32_120 = arith.constant 1 : i32
    %154 = tpu.dynamic_rotate %128 by %c1_i32_120 dim 0 : vector<208x8xf32>, i32 -> vector<208x8xf32>
    %c3_121 = arith.constant 3 : index
    %c0_122 = arith.constant 0 : index
    %c0_123 = arith.constant 0 : index
    %155 = vector.load %arg7[%c3_121, %c0_122, %c0_123] : memref<9x208x8xf32, #tpu.memory_space<vmem>>, vector<1x208x8xf32>
    %156 = vector.shape_cast %155 : vector<1x208x8xf32> to vector<208x8xf32>
    %157 = arith.mulf %154, %156 : vector<208x8xf32>
    %c3_124 = arith.constant 3 : index
    %c0_125 = arith.constant 0 : index
    %c0_126 = arith.constant 0 : index
    %158 = vector.load %arg4[%c3_124, %c0_125, %c0_126] : memref<9x8x8xf32, #tpu.memory_space<vmem>>, vector<1x8x8xf32>
    %159 = vector.shape_cast %158 : vector<1x8x8xf32> to vector<8x8xf32>
    %cst_127 = arith.constant dense<0.000000e+00> : vector<208x8xf32>
    %160 = tpu.matmul %157, %159, %cst_127 {dimension_numbers = #tpu.dot_dimension_numbers<[1], [0], [0], [1], [0, 0, 1, 1], [], []>} : vector<208x8xf32>, vector<8x8xf32>, vector<208x8xf32> -> vector<208x8xf32>
    %161 = arith.addf %153, %160 : vector<208x8xf32>
    %c4_128 = arith.constant 4 : index
    %c0_129 = arith.constant 0 : index
    %c0_130 = arith.constant 0 : index
    %162 = vector.load %arg7[%c4_128, %c0_129, %c0_130] : memref<9x208x8xf32, #tpu.memory_space<vmem>>, vector<1x208x8xf32>
    %163 = vector.shape_cast %162 : vector<1x208x8xf32> to vector<208x8xf32>
    %164 = arith.mulf %128, %163 : vector<208x8xf32>
    %c4_131 = arith.constant 4 : index
    %c0_132 = arith.constant 0 : index
    %c0_133 = arith.constant 0 : index
    %165 = vector.load %arg4[%c4_131, %c0_132, %c0_133] : memref<9x8x8xf32, #tpu.memory_space<vmem>>, vector<1x8x8xf32>
    %166 = vector.shape_cast %165 : vector<1x8x8xf32> to vector<8x8xf32>
    %cst_134 = arith.constant dense<0.000000e+00> : vector<208x8xf32>
    %167 = tpu.matmul %164, %166, %cst_134 {dimension_numbers = #tpu.dot_dimension_numbers<[1], [0], [0], [1], [0, 0, 1, 1], [], []>} : vector<208x8xf32>, vector<8x8xf32>, vector<208x8xf32> -> vector<208x8xf32>
    %168 = arith.addf %161, %167 : vector<208x8xf32>
    %c207_i32_135 = arith.constant 207 : i32
    %169 = tpu.dynamic_rotate %128 by %c207_i32_135 dim 0 : vector<208x8xf32>, i32 -> vector<208x8xf32>
    %c5_136 = arith.constant 5 : index
    %c0_137 = arith.constant 0 : index
    %c0_138 = arith.constant 0 : index
    %170 = vector.load %arg7[%c5_136, %c0_137, %c0_138] : memref<9x208x8xf32, #tpu.memory_space<vmem>>, vector<1x208x8xf32>
    %171 = vector.shape_cast %170 : vector<1x208x8xf32> to vector<208x8xf32>
    %172 = arith.mulf %169, %171 : vector<208x8xf32>
    %c5_139 = arith.constant 5 : index
    %c0_140 = arith.constant 0 : index
    %c0_141 = arith.constant 0 : index
    %173 = vector.load %arg4[%c5_139, %c0_140, %c0_141] : memref<9x8x8xf32, #tpu.memory_space<vmem>>, vector<1x8x8xf32>
    %174 = vector.shape_cast %173 : vector<1x8x8xf32> to vector<8x8xf32>
    %cst_142 = arith.constant dense<0.000000e+00> : vector<208x8xf32>
    %175 = tpu.matmul %172, %174, %cst_142 {dimension_numbers = #tpu.dot_dimension_numbers<[1], [0], [0], [1], [0, 0, 1, 1], [], []>} : vector<208x8xf32>, vector<8x8xf32>, vector<208x8xf32> -> vector<208x8xf32>
    %176 = arith.addf %168, %175 : vector<208x8xf32>
    %c195_i32_143 = arith.constant 195 : i32
    %177 = tpu.dynamic_rotate %128 by %c195_i32_143 dim 0 : vector<208x8xf32>, i32 -> vector<208x8xf32>
    %c6_144 = arith.constant 6 : index
    %c0_145 = arith.constant 0 : index
    %c0_146 = arith.constant 0 : index
    %178 = vector.load %arg7[%c6_144, %c0_145, %c0_146] : memref<9x208x8xf32, #tpu.memory_space<vmem>>, vector<1x208x8xf32>
    %179 = vector.shape_cast %178 : vector<1x208x8xf32> to vector<208x8xf32>
    %180 = arith.mulf %177, %179 : vector<208x8xf32>
    %c6_147 = arith.constant 6 : index
    %c0_148 = arith.constant 0 : index
    %c0_149 = arith.constant 0 : index
    %181 = vector.load %arg4[%c6_147, %c0_148, %c0_149] : memref<9x8x8xf32, #tpu.memory_space<vmem>>, vector<1x8x8xf32>
    %182 = vector.shape_cast %181 : vector<1x8x8xf32> to vector<8x8xf32>
    %cst_150 = arith.constant dense<0.000000e+00> : vector<208x8xf32>
    %183 = tpu.matmul %180, %182, %cst_150 {dimension_numbers = #tpu.dot_dimension_numbers<[1], [0], [0], [1], [0, 0, 1, 1], [], []>} : vector<208x8xf32>, vector<8x8xf32>, vector<208x8xf32> -> vector<208x8xf32>
    %184 = arith.addf %176, %183 : vector<208x8xf32>
    %c194_i32_151 = arith.constant 194 : i32
    %185 = tpu.dynamic_rotate %128 by %c194_i32_151 dim 0 : vector<208x8xf32>, i32 -> vector<208x8xf32>
    %c7_152 = arith.constant 7 : index
    %c0_153 = arith.constant 0 : index
    %c0_154 = arith.constant 0 : index
    %186 = vector.load %arg7[%c7_152, %c0_153, %c0_154] : memref<9x208x8xf32, #tpu.memory_space<vmem>>, vector<1x208x8xf32>
    %187 = vector.shape_cast %186 : vector<1x208x8xf32> to vector<208x8xf32>
    %188 = arith.mulf %185, %187 : vector<208x8xf32>
    %c7_155 = arith.constant 7 : index
    %c0_156 = arith.constant 0 : index
    %c0_157 = arith.constant 0 : index
    %189 = vector.load %arg4[%c7_155, %c0_156, %c0_157] : memref<9x8x8xf32, #tpu.memory_space<vmem>>, vector<1x8x8xf32>
    %190 = vector.shape_cast %189 : vector<1x8x8xf32> to vector<8x8xf32>
    %cst_158 = arith.constant dense<0.000000e+00> : vector<208x8xf32>
    %191 = tpu.matmul %188, %190, %cst_158 {dimension_numbers = #tpu.dot_dimension_numbers<[1], [0], [0], [1], [0, 0, 1, 1], [], []>} : vector<208x8xf32>, vector<8x8xf32>, vector<208x8xf32> -> vector<208x8xf32>
    %192 = arith.addf %184, %191 : vector<208x8xf32>
    %c193_i32_159 = arith.constant 193 : i32
    %193 = tpu.dynamic_rotate %128 by %c193_i32_159 dim 0 : vector<208x8xf32>, i32 -> vector<208x8xf32>
    %c8_160 = arith.constant 8 : index
    %c0_161 = arith.constant 0 : index
    %c0_162 = arith.constant 0 : index
    %194 = vector.load %arg7[%c8_160, %c0_161, %c0_162] : memref<9x208x8xf32, #tpu.memory_space<vmem>>, vector<1x208x8xf32>
    %195 = vector.shape_cast %194 : vector<1x208x8xf32> to vector<208x8xf32>
    %196 = arith.mulf %193, %195 : vector<208x8xf32>
    %c8_163 = arith.constant 8 : index
    %c0_164 = arith.constant 0 : index
    %c0_165 = arith.constant 0 : index
    %197 = vector.load %arg4[%c8_163, %c0_164, %c0_165] : memref<9x8x8xf32, #tpu.memory_space<vmem>>, vector<1x8x8xf32>
    %198 = vector.shape_cast %197 : vector<1x8x8xf32> to vector<8x8xf32>
    %cst_166 = arith.constant dense<0.000000e+00> : vector<208x8xf32>
    %199 = tpu.matmul %196, %198, %cst_166 {dimension_numbers = #tpu.dot_dimension_numbers<[1], [0], [0], [1], [0, 0, 1, 1], [], []>} : vector<208x8xf32>, vector<8x8xf32>, vector<208x8xf32> -> vector<208x8xf32>
    %200 = arith.addf %192, %199 : vector<208x8xf32>
    %201 = vector.extract_strided_slice %200 {offsets = [0, 0], sizes = [197, 8], strides = [1, 1]} : vector<208x8xf32> to vector<197x8xf32>
    %cst_167 = arith.constant 1.702000e+00 : f32
    %202 = vector.broadcast %cst_167 : f32 to vector<197x8xf32>
    %203 = arith.mulf %202, %201 : vector<197x8xf32>
    %204 = arith.negf %203 : vector<197x8xf32>
    %205 = math.exp %204 : vector<197x8xf32>
    %cst_168 = arith.constant 1.000000e+00 : f32
    %206 = vector.broadcast %cst_168 : f32 to vector<197x8xf32>
    %207 = arith.addf %206, %205 : vector<197x8xf32>
    %208 = arith.divf %206, %207 : vector<197x8xf32>
    %209 = arith.mulf %201, %208 : vector<197x8xf32>
    %cst_169 = arith.constant dense<0.000000e+00> : vector<197x768xf32>
    %210 = tpu.matmul %209, %2, %cst_169 {dimension_numbers = #tpu.dot_dimension_numbers<[1], [0], [0], [1], [0, 0, 1, 1], [], []>} : vector<197x8xf32>, vector<8x768xf32>, vector<197x768xf32> -> vector<197x768xf32>
    %211 = vector.broadcast %3 : vector<1x768xf32> to vector<197x768xf32>
    %212 = arith.addf %210, %211 : vector<197x768xf32>
    %c1_170 = arith.constant 1 : index
    %c0_171 = arith.constant 0 : index
    %c0_172 = arith.constant 0 : index
    %213 = vector.load %arg8[%c1_170, %c0_171, %c0_172] : memref<2x197x768xf32, #tpu.memory_space<vmem>>, vector<1x197x768xf32>
    %214 = vector.shape_cast %213 : vector<1x197x768xf32> to vector<197x768xf32>
    %215 = vector.shape_cast %212 : vector<197x768xf32> to vector<1x197x768xf32>
    tpu.vector_store %arg8[%c1_170, %c0_171, %c0_172], %215 {strides = array<i32>} : memref<2x197x768xf32, #tpu.memory_space<vmem>>, vector<1x197x768xf32>,
    return
  }
  func.func @transform_0(%arg0: i32) -> (i32, i32, i32) {
    %c0_i32 = arith.constant 0 : i32
    %c0_i32_0 = arith.constant 0 : i32
    %c0_i32_1 = arith.constant 0 : i32
    return %arg0, %c0_i32, %c0_i32_0 : i32, i32, i32
  }
  func.func @transform_1(%arg0: i32) -> (i32, i32) {
    %c0_i32 = arith.constant 0 : i32
    %c0_i32_0 = arith.constant 0 : i32
    %c0_i32_1 = arith.constant 0 : i32
    return %c0_i32, %c0_i32_0 : i32, i32
  }
  func.func @transform_2(%arg0: i32) -> (i32, i32) {
    %c0_i32 = arith.constant 0 : i32
    %c0_i32_0 = arith.constant 0 : i32
    %c0_i32_1 = arith.constant 0 : i32
    return %c0_i32, %c0_i32_0 : i32, i32
  }
  func.func @transform_3(%arg0: i32) -> (i32, i32, i32) {
    %c0_i32 = arith.constant 0 : i32
    %c0_i32_0 = arith.constant 0 : i32
    %c0_i32_1 = arith.constant 0 : i32
    %c0_i32_2 = arith.constant 0 : i32
    return %c0_i32, %c0_i32_0, %c0_i32_1 : i32, i32, i32
  }
  func.func @transform_4(%arg0: i32) -> (i32, i32) {
    %c0_i32 = arith.constant 0 : i32
    %c0_i32_0 = arith.constant 0 : i32
    %c0_i32_1 = arith.constant 0 : i32
    return %c0_i32, %c0_i32_0 : i32, i32
  }
  func.func @transform_5(%arg0: i32) -> (i32, i32) {
    %c0_i32 = arith.constant 0 : i32
    %c0_i32_0 = arith.constant 0 : i32
    %c0_i32_1 = arith.constant 0 : i32
    return %c0_i32, %c0_i32_0 : i32, i32
  }
  func.func @transform_6(%arg0: i32) -> (i32, i32, i32) {
    %c0_i32 = arith.constant 0 : i32
    %c0_i32_0 = arith.constant 0 : i32
    %c0_i32_1 = arith.constant 0 : i32
    %c0_i32_2 = arith.constant 0 : i32
    return %c0_i32, %c0_i32_0, %c0_i32_1 : i32, i32, i32
  }
  func.func @transform_7(%arg0: i32) -> (i32, i32, i32) {
    %c0_i32 = arith.constant 0 : i32
    %c0_i32_0 = arith.constant 0 : i32
    %c0_i32_1 = arith.constant 0 : i32
    return %arg0, %c0_i32, %c0_i32_0 : i32, i32, i32
  }
}

</mosaic_0001>

<llo_original>
// kernel: tpu_custom_call.1
$region0: #{tpu_custom_call.1}
  #allocation0 [shape = 'u32[]', space=smem, size = 0x4, offset = 0x4, fixed_abs, tag = 'smem constant byte address 0x4 - core index']
  #allocation1 [shape = 'u32[72,128]{1,0:T(1,128)}', space=vmem, size = 0x9000, scoped, tag = 'internal scratch']
  #allocation2 [shape = 'f32[2,208,8]{2,1,0:T(8,128)}', space=vmem, size = 0x34000, scoped, tag = 'scratch operand']
  %s0 = inlined_call_operand.vmem [shape: f32[4,197,768], index: 0, kind: input, shape index: {}]
  %s1 = inlined_call_operand.vmem [shape: f32[768,8], index: 1, kind: input, shape index: {}]
  %s2 = inlined_call_operand.vmem [shape: f32[1,8], index: 2, kind: input, shape index: {}]
  %s3 = inlined_call_operand.vmem [shape: f32[9,8,8], index: 3, kind: input, shape index: {}]
  %s4 = inlined_call_operand.vmem [shape: f32[8,768], index: 4, kind: input, shape index: {}]
  %s5 = inlined_call_operand.vmem [shape: f32[1,768], index: 5, kind: input, shape index: {}]
  %s6 = inlined_call_operand.vmem [shape: f32[9,208,8], index: 6, kind: input, shape index: {}]
  %s7 = inlined_call_operand.vmem [shape: f32[4,197,768], index: 7, kind: output, shape index: {}]
  %s8 = sld [smem:[#allocation0]]
  $region61: #{tpu_custom_call.1} parent=0
    _
  %s10 = ssub.s32 1, %s8
  %s11 = scalar_select 0, %s10, %s8
  loop: start=0, step=1, limit=4
  $region2: #{tpu_custom_call.1} parent=0 // loop_pre_header
    _
  $region3: #{tpu_custom_call.1} parent=0 // loop_header
    %s13 = sphi 0, %s17
    %p14 = scmp.ge.s32.totalorder %s13, 4
    %s23 = sphi 0, %s25
    %s26 = sphi 0, %s23
    %s27 = sphi 0, %s26
    %s43 = sphi 0, %s27
    %s47 = sphi 0, %s47
    %s49 = sphi 0, %s47
    %s50 = sphi 0, %s49
    %s64 = sphi 0, %s50
    %s68 = sphi 0, %s68
    %s70 = sphi 0, %s68
    %s71 = sphi 0, %s70
    %s85 = sphi 0, %s71
    %s89 = sphi 0, %s89
    %s91 = sphi 0, %s89
    %s92 = sphi 0, %s91
    %s106 = sphi 0, %s92
    %s110 = sphi 0, %s110
    %s112 = sphi 0, %s110
    %s113 = sphi 0, %s112
    %s127 = sphi 0, %s113
    %s131 = sphi 0, %s131
    %s133 = sphi 0, %s131
    %s134 = sphi 0, %s133
    %s148 = sphi 0, %s134
    %s152 = sphi 0, %s152
    %s154 = sphi 0, %s152
    %s155 = sphi 0, %s154
    %s169 = sphi 0, %s155
    %s175 = sphi 0, %s177
    %s178 = sphi 0, %s175
    %s179 = sphi 0, %s178
    %s195 = sphi 0, %s179
  $region4: #{tpu_custom_call.1} parent=0 // loop_header_branch
    %16 = sbr.rel (%p14) target = $region8
  $region5: #{tpu_custom_call.1} parent=0 // loop_body
    %s18 = ssub.s32 %s13, 1
    %s19 = ssub.s32 %s13, 2
    %s20 = sadd.s32 %s13, 1
    %s21 = ssub.s32 %s13, %s20
    %p22 = scmp.eq.s32.totalorder %s21, 0
    %s24 = sadd.s32 %s23, 1
    %s25 = scalar_select %p22, %s23, %s24
    %p28 = pneg %p22
    %p29 = scmp.eq.s32.totalorder %s13, 1
    %p30 = por %p28, %p29
    %p31 = scmp.ne.s32.totalorder %s23, %s26
    %p32 = scmp.eq.s32.totalorder %s13, 0
    %p33 = por %p31, %p32
    %p34 = scmp.ne.s32.totalorder %s23, %s26
    %p35 = scmp.eq.s32.totalorder %s18, 1
    %p36 = por %p34, %p35
    %p37 = scmp.ne.s32.totalorder %s26, %s27
    %p38 = scmp.eq.s32.totalorder %s18, 0
    %p39 = por %p37, %p38
    %p40 = scmp.ne.s32.totalorder %s26, %s27
    %p41 = scmp.eq.s32.totalorder %s19, 1
    %p42 = por %p40, %p41
    %p44 = scmp.ne.s32.totalorder %s27, %s43
    %p45 = scmp.eq.s32.totalorder %s19, 0
    %p46 = por %p44, %p45
    %s48 = sadd.s32 %s47, 1
    %p51 = scmp.eq.s32.totalorder %s13, 1
    %p52 = scmp.ne.s32.totalorder %s47, %s49
    %p53 = scmp.eq.s32.totalorder %s13, 0
    %p54 = por %p52, %p53
    %p55 = scmp.ne.s32.totalorder %s47, %s49
    %p56 = scmp.eq.s32.totalorder %s18, 1
    %p57 = por %p55, %p56
    %p58 = scmp.ne.s32.totalorder %s49, %s50
    %p59 = scmp.eq.s32.totalorder %s18, 0
    %p60 = por %p58, %p59
    %p61 = scmp.ne.s32.totalorder %s49, %s50
    %p62 = scmp.eq.s32.totalorder %s19, 1
    %p63 = por %p61, %p62
    %p65 = scmp.ne.s32.totalorder %s50, %s64
    %p66 = scmp.eq.s32.totalorder %s19, 0
    %p67 = por %p65, %p66
    %s69 = sadd.s32 %s68, 1
    %p72 = scmp.eq.s32.totalorder %s13, 1
    %p73 = scmp.ne.s32.totalorder %s68, %s70
    %p74 = scmp.eq.s32.totalorder %s13, 0
    %p75 = por %p73, %p74
    %p76 = scmp.ne.s32.totalorder %s68, %s70
    %p77 = scmp.eq.s32.totalorder %s18, 1
    %p78 = por %p76, %p77
    %p79 = scmp.ne.s32.totalorder %s70, %s71
    %p80 = scmp.eq.s32.totalorder %s18, 0
    %p81 = por %p79, %p80
    %p82 = scmp.ne.s32.totalorder %s70, %s71
    %p83 = scmp.eq.s32.totalorder %s19, 1
    %p84 = por %p82, %p83
    %p86 = scmp.ne.s32.totalorder %s71, %s85
    %p87 = scmp.eq.s32.totalorder %s19, 0
    %p88 = por %p86, %p87
    %s90 = sadd.s32 %s89, 1
    %p93 = scmp.eq.s32.totalorder %s13, 1
    %p94 = scmp.ne.s32.totalorder %s89, %s91
    %p95 = scmp.eq.s32.totalorder %s13, 0
    %p96 = por %p94, %p95
    %p97 = scmp.ne.s32.totalorder %s89, %s91
    %p98 = scmp.eq.s32.totalorder %s18, 1
    %p99 = por %p97, %p98
    %p100 = scmp.ne.s32.totalorder %s91, %s92
    %p101 = scmp.eq.s32.totalorder %s18, 0
    %p102 = por %p100, %p101
    %p103 = scmp.ne.s32.totalorder %s91, %s92
    %p104 = scmp.eq.s32.totalorder %s19, 1
    %p105 = por %p103, %p104
    %p107 = scmp.ne.s32.totalorder %s92, %s106
    %p108 = scmp.eq.s32.totalorder %s19, 0
    %p109 = por %p107, %p108
    %s111 = sadd.s32 %s110, 1
    %p114 = scmp.eq.s32.totalorder %s13, 1
    %p115 = scmp.ne.s32.totalorder %s110, %s112
    %p116 = scmp.eq.s32.totalorder %s13, 0
    %p117 = por %p115, %p116
    %p118 = scmp.ne.s32.totalorder %s110, %s112
    %p119 = scmp.eq.s32.totalorder %s18, 1
    %p120 = por %p118, %p119
    %p121 = scmp.ne.s32.totalorder %s112, %s113
    %p122 = scmp.eq.s32.totalorder %s18, 0
    %p123 = por %p121, %p122
    %p124 = scmp.ne.s32.totalorder %s112, %s113
    %p125 = scmp.eq.s32.totalorder %s19, 1
    %p126 = por %p124, %p125
    %p128 = scmp.ne.s32.totalorder %s113, %s127
    %p129 = scmp.eq.s32.totalorder %s19, 0
    %p130 = por %p128, %p129
    %s132 = sadd.s32 %s131, 1
    %p135 = scmp.eq.s32.totalorder %s13, 1
    %p136 = scmp.ne.s32.totalorder %s131, %s133
    %p137 = scmp.eq.s32.totalorder %s13, 0
    %p138 = por %p136, %p137
    %p139 = scmp.ne.s32.totalorder %s131, %s133
    %p140 = scmp.eq.s32.totalorder %s18, 1
    %p141 = por %p139, %p140
    %p142 = scmp.ne.s32.totalorder %s133, %s134
    %p143 = scmp.eq.s32.totalorder %s18, 0
    %p144 = por %p142, %p143
    %p145 = scmp.ne.s32.totalorder %s133, %s134
    %p146 = scmp.eq.s32.totalorder %s19, 1
    %p147 = por %p145, %p146
    %p149 = scmp.ne.s32.totalorder %s134, %s148
    %p150 = scmp.eq.s32.totalorder %s19, 0
    %p151 = por %p149, %p150
    %s153 = sadd.s32 %s152, 1
    %p156 = scmp.eq.s32.totalorder %s13, 1
    %p157 = scmp.ne.s32.totalorder %s152, %s154
    %p158 = scmp.eq.s32.totalorder %s13, 0
    %p159 = por %p157, %p158
    %p160 = scmp.ne.s32.totalorder %s152, %s154
    %p161 = scmp.eq.s32.totalorder %s18, 1
    %p162 = por %p160, %p161
    %p163 = scmp.ne.s32.totalorder %s154, %s155
    %p164 = scmp.eq.s32.totalorder %s18, 0
    %p165 = por %p163, %p164
    %p166 = scmp.ne.s32.totalorder %s154, %s155
    %p167 = scmp.eq.s32.totalorder %s19, 1
    %p168 = por %p166, %p167
    %p170 = scmp.ne.s32.totalorder %s155, %s169
    %p171 = scmp.eq.s32.totalorder %s19, 0
    %p172 = por %p170, %p171
    %s173 = ssub.s32 %s13, %s20
    %p174 = scmp.eq.s32.totalorder %s173, 0
    %s176 = sadd.s32 %s175, 1
    %s177 = scalar_select %p174, %s175, %s176
    %p180 = pneg %p174
    %p181 = scmp.eq.s32.totalorder %s13, 1
    %p182 = por %p180, %p181
    %p183 = scmp.ne.s32.totalorder %s175, %s178
    %p184 = scmp.eq.s32.totalorder %s13, 0
    %p185 = por %p183, %p184
    %p186 = scmp.ne.s32.totalorder %s175, %s178
    %p187 = scmp.eq.s32.totalorder %s18, 1
    %p188 = por %p186, %p187
    %p189 = scmp.ne.s32.totalorder %s178, %s179
    %p190 = scmp.eq.s32.totalorder %s18, 0
    %p191 = por %p189, %p190
    %p192 = scmp.ne.s32.totalorder %s178, %s179
    %p193 = scmp.eq.s32.totalorder %s19, 1
    %p194 = por %p192, %p193
    %p196 = scmp.ne.s32.totalorder %s179, %s195
    %p197 = scmp.eq.s32.totalorder %s19, 0
    %p198 = por %p196, %p197
    %p199 = scmp.le.s32.totalorder 1, %s13
    %p200 = scmp.lt.s32.totalorder %s13, 3
    %p201 = pnand %p199, %p200
    %p202 = pneg %p201
    // Predicated region
    $region9: #{tpu_custom_call.1} parent=5 // pred_check
      _
    $region10: #{tpu_custom_call.1} parent=5 // pred_check_branch
      %204 = sbr.rel (%p201) target = $region12
    $region11: #{tpu_custom_call.1} parent=5 // pred_region
      %s205 = ssub.s32 %s13, 1
      // Predicated region
      $region13: #{tpu_custom_call.1} parent=11 // pred_check
        %p206 = pneg %p60
      $region14: #{tpu_custom_call.1} parent=11 // pred_check_branch
        %208 = sbr.rel (%p206) target = $region16
      $region15: #{tpu_custom_call.1} parent=11 // pred_region
        _
      $region16: #{tpu_custom_call.1} parent=11 // pred_fallthru
        _
      // Predicated region
      $region17: #{tpu_custom_call.1} parent=11 // pred_check
        %p209 = pneg %p81
      $region18: #{tpu_custom_call.1} parent=11 // pred_check_branch
        %211 = sbr.rel (%p209) target = $region20
      $region19: #{tpu_custom_call.1} parent=11 // pred_region
        _
      $region20: #{tpu_custom_call.1} parent=11 // pred_fallthru
        _
      // Predicated region
      $region21: #{tpu_custom_call.1} parent=11 // pred_check
        %p212 = pneg %p102
      $region22: #{tpu_custom_call.1} parent=11 // pred_check_branch
        %214 = sbr.rel (%p212) target = $region24
      $region23: #{tpu_custom_call.1} parent=11 // pred_region
        _
      $region24: #{tpu_custom_call.1} parent=11 // pred_fallthru
        _
      // Predicated region
      $region25: #{tpu_custom_call.1} parent=11 // pred_check
        %p215 = pneg %p123
      $region26: #{tpu_custom_call.1} parent=11 // pred_check_branch
        %217 = sbr.rel (%p215) target = $region28
      $region27: #{tpu_custom_call.1} parent=11 // pred_region
        _
      $region28: #{tpu_custom_call.1} parent=11 // pred_fallthru
        _
      // Predicated region
      $region29: #{tpu_custom_call.1} parent=11 // pred_check
        %p218 = pneg %p144
      $region30: #{tpu_custom_call.1} parent=11 // pred_check_branch
        %220 = sbr.rel (%p218) target = $region32
      $region31: #{tpu_custom_call.1} parent=11 // pred_region
        _
      $region32: #{tpu_custom_call.1} parent=11 // pred_fallthru
        _
      // Predicated region
      $region33: #{tpu_custom_call.1} parent=11 // pred_check
        %p221 = pneg %p165
      $region34: #{tpu_custom_call.1} parent=11 // pred_check_branch
        %223 = sbr.rel (%p221) target = $region36
      $region35: #{tpu_custom_call.1} parent=11 // pred_region
        _
      $region36: #{tpu_custom_call.1} parent=11 // pred_fallthru
        _
    $region12: #{tpu_custom_call.1} parent=5 // pred_fallthru
      _
    %p224 = scmp.lt.s32.totalorder %s13, 2
    // Predicated region
    $region37: #{tpu_custom_call.1} parent=5 // pred_check
      %p225 = pneg %p224
    $region38: #{tpu_custom_call.1} parent=5 // pred_check_branch
      %227 = sbr.rel (%p225) target = $region40
    $region39: #{tpu_custom_call.1} parent=5 // pred_region
      // Predicated region
      $region41: #{tpu_custom_call.1} parent=39 // pred_check
        %p228 = pneg %p33
      $region42: #{tpu_custom_call.1} parent=39 // pred_check_branch
        %230 = sbr.rel (%p228) target = $region44
      $region43: #{tpu_custom_call.1} parent=39 // pred_region
        %s231 = smul.u32 2, %s13
        %p232 = scmp.lt.s32.totalorder %s231, 3
        %s233 = scalar_select %p232, %s231, 3
        %s234 = smul.addr %s233, 150
        %s235 = smul.addr %s234, 8
        %s236 = scalar_lea.vmem %s0, %s235
        %s237 = smul.u32 2, %s13
      $region44: #{tpu_custom_call.1} parent=39 // pred_fallthru
        _
    $region40: #{tpu_custom_call.1} parent=5 // pred_fallthru
      _
    %p238 = scmp.le.s32.totalorder 1, %s13
    %p239 = scmp.lt.s32.totalorder %s13, 3
    %p240 = pnand %p238, %p239
    %p241 = pneg %p240
    // Predicated region
    $region45: #{tpu_custom_call.1} parent=5 // pred_check
      _
    $region46: #{tpu_custom_call.1} parent=5 // pred_check_branch
      %243 = sbr.rel (%p240) target = $region48
    $region47: #{tpu_custom_call.1} parent=5 // pred_region
      %s244 = ssub.s32 %s13, 1
      %s245 = smul.u32 2, %s18
      %p246 = scmp.lt.s32.totalorder %s245, 3
      %s247 = scalar_select %p246, %s245, 3
      %s248 = smul.addr %s247, 150
      %s249 = smul.addr %s248, 8
      %s250 = scalar_lea.vmem %s0, %s249
      %p251 = pneg %p39
      %p252 = pneg %p36
      %p253 = pneg %p60
      %p254 = pneg %p57
      %p255 = pneg %p81
      %p256 = pneg %p78
      %p257 = pneg %p102
      %p258 = pneg %p99
      %p259 = pneg %p123
      %p260 = pneg %p120
      %p261 = pneg %p144
      %p262 = pneg %p141
      %p263 = pneg %p165
      %p264 = pneg %p162
      %p265 = pneg %p191
      %p266 = pneg %p188
      %s267 = smul.u32 2, %s18
      %p268 = scmp.lt.s32.totalorder %s267, 3
      %s269 = scalar_select %p268, %s267, 3
      %s270 = smul.addr %s269, 150
      %s271 = smul.addr %s270, 8
      %s272 = scalar_lea.vmem %s7, %s271
      %s273 = smul.u32 2, %s18
      %p274 = scmp.lt.s32.totalorder %s273, 3
      %s275 = scalar_select %p274, %s273, 3
      %s276 = smul.addr %s275, 150
      %s277 = smul.addr %s276, 8
      %s278 = scalar_lea.vmem %s0, %s277
      %s279 = smul.u32 2, %s18
      %s280 = smul.u32 2, %s18
      %p281 = scmp.lt.s32.totalorder %s280, 3
      %s282 = scalar_select %p281, %s280, 3
      %s283 = smul.addr %s282, 150
      %s284 = smul.addr %s283, 8
      %s285 = scalar_lea.vmem %s7, %s284
      %s286 = smul.u32 2, %s18
      %v287 = vld [vmem:[%s1] sm:$0xff]
      %v288 = vld [vmem:[%s1 + $0x8] sm:$0xff]
      %v289 = vld [vmem:[%s1 + $0x10] sm:$0xff]
      %v290 = vld [vmem:[%s1 + $0x18] sm:$0xff]
      %v291 = vld [vmem:[%s1 + $0x20] sm:$0xff]
      %v292 = vld [vmem:[%s1 + $0x28] sm:$0xff]
      %v293 = vld [vmem:[%s1 + $0x30] sm:$0xff]
      %v294 = vld [vmem:[%s1 + $0x38] sm:$0xff]
      %v295 = vld [vmem:[%s1 + $0x40] sm:$0xff]
      %v296 = vld [vmem:[%s1 + $0x48] sm:$0xff]
      %v297 = vld [vmem:[%s1 + $0x50] sm:$0xff]
      %v298 = vld [vmem:[%s1 + $0x58] sm:$0xff]
      %v299 = vld [vmem:[%s1 + $0x60] sm:$0xff]
      %v300 = vld [vmem:[%s1 + $0x68] sm:$0xff]
      %v301 = vld [vmem:[%s1 + $0x70] sm:$0xff]
      %v302 = vld [vmem:[%s1 + $0x78] sm:$0xff]
      %v303 = vld [vmem:[%s1 + $0x80] sm:$0xff]
      %v304 = vld [vmem:[%s1 + $0x88] sm:$0xff]
      %v305 = vld [vmem:[%s1 + $0x90] sm:$0xff]
      %v306 = vld [vmem:[%s1 + $0x98] sm:$0xff]
      %v307 = vld [vmem:[%s1 + $0xa0] sm:$0xff]
      %v308 = vld [vmem:[%s1 + $0xa8] sm:$0xff]
      %v309 = vld [vmem:[%s1 + $0xb0] sm:$0xff]
      %v310 = vld [vmem:[%s1 + $0xb8] sm:$0xff]
      %v311 = vld [vmem:[%s1 + $0xc0] sm:$0xff]
      %v312 = vld [vmem:[%s1 + $0xc8] sm:$0xff]
      %v313 = vld [vmem:[%s1 + $0xd0] sm:$0xff]
      %v314 = vld [vmem:[%s1 + $0xd8] sm:$0xff]
      %v315 = vld [vmem:[%s1 + $0xe0] sm:$0xff]
      %v316 = vld [vmem:[%s1 + $0xe8] sm:$0xff]
      %v317 = vld [vmem:[%s1 + $0xf0] sm:$0xff]
      %v318 = vld [vmem:[%s1 + $0xf8] sm:$0xff]
      %v319 = vld [vmem:[%s1 + $0x100] sm:$0xff]
      %v320 = vld [vmem:[%s1 + $0x108] sm:$0xff]
      %v321 = vld [vmem:[%s1 + $0x110] sm:$0xff]
      %v322 = vld [vmem:[%s1 + $0x118] sm:$0xff]
      %v323 = vld [vmem:[%s1 + $0x120] sm:$0xff]
      %v324 = vld [vmem:[%s1 + $0x128] sm:$0xff]
      %v325 = vld [vmem:[%s1 + $0x130] sm:$0xff]
      %v326 = vld [vmem:[%s1 + $0x138] sm:$0xff]
      %v327 = vld [vmem:[%s1 + $0x140] sm:$0xff]
      %v328 = vld [vmem:[%s1 + $0x148] sm:$0xff]
      %v329 = vld [vmem:[%s1 + $0x150] sm:$0xff]
      %v330 = vld [vmem:[%s1 + $0x158] sm:$0xff]
      %v331 = vld [vmem:[%s1 + $0x160] sm:$0xff]
      %v332 = vld [vmem:[%s1 + $0x168] sm:$0xff]
      %v333 = vld [vmem:[%s1 + $0x170] sm:$0xff]
      %v334 = vld [vmem:[%s1 + $0x178] sm:$0xff]
      %v335 = vld [vmem:[%s1 + $0x180] sm:$0xff]
      %v336 = vld [vmem:[%s1 + $0x188] sm:$0xff]
      %v337 = vld [vmem:[%s1 + $0x190] sm:$0xff]
      %v338 = vld [vmem:[%s1 + $0x198] sm:$0xff]
      %v339 = vld [vmem:[%s1 + $0x1a0] sm:$0xff]
      %v340 = vld [vmem:[%s1 + $0x1a8] sm:$0xff]
      %v341 = vld [vmem:[%s1 + $0x1b0] sm:$0xff]
      %v342 = vld [vmem:[%s1 + $0x1b8] sm:$0xff]
      %v343 = vld [vmem:[%s1 + $0x1c0] sm:$0xff]
      %v344 = vld [vmem:[%s1 + $0x1c8] sm:$0xff]
      %v345 = vld [vmem:[%s1 + $0x1d0] sm:$0xff]
      %v346 = vld [vmem:[%s1 + $0x1d8] sm:$0xff]
      %v347 = vld [vmem:[%s1 + $0x1e0] sm:$0xff]
      %v348 = vld [vmem:[%s1 + $0x1e8] sm:$0xff]
      %v349 = vld [vmem:[%s1 + $0x1f0] sm:$0xff]
      %v350 = vld [vmem:[%s1 + $0x1f8] sm:$0xff]
      %v351 = vld [vmem:[%s1 + $0x200] sm:$0xff]
      %v352 = vld [vmem:[%s1 + $0x208] sm:$0xff]
      %v353 = vld [vmem:[%s1 + $0x210] sm:$0xff]
      %v354 = vld [vmem:[%s1 + $0x218] sm:$0xff]
      %v355 = vld [vmem:[%s1 + $0x220] sm:$0xff]
      %v356 = vld [vmem:[%s1 + $0x228] sm:$0xff]
      %v357 = vld [vmem:[%s1 + $0x230] sm:$0xff]
      %v358 = vld [vmem:[%s1 + $0x238] sm:$0xff]
      %v359 = vld [vmem:[%s1 + $0x240] sm:$0xff]
      %v360 = vld [vmem:[%s1 + $0x248] sm:$0xff]
      %v361 = vld [vmem:[%s1 + $0x250] sm:$0xff]
      %v362 = vld [vmem:[%s1 + $0x258] sm:$0xff]
      %v363 = vld [vmem:[%s1 + $0x260] sm:$0xff]
      %v364 = vld [vmem:[%s1 + $0x268] sm:$0xff]
      %v365 = vld [vmem:[%s1 + $0x270] sm:$0xff]
      %v366 = vld [vmem:[%s1 + $0x278] sm:$0xff]
      %v367 = vld [vmem:[%s1 + $0x280] sm:$0xff]
      %v368 = vld [vmem:[%s1 + $0x288] sm:$0xff]
      %v369 = vld [vmem:[%s1 + $0x290] sm:$0xff]
      %v370 = vld [vmem:[%s1 + $0x298] sm:$0xff]
      %v371 = vld [vmem:[%s1 + $0x2a0] sm:$0xff]
      %v372 = vld [vmem:[%s1 + $0x2a8] sm:$0xff]
      %v373 = vld [vmem:[%s1 + $0x2b0] sm:$0xff]
      %v374 = vld [vmem:[%s1 + $0x2b8] sm:$0xff]
      %v375 = vld [vmem:[%s1 + $0x2c0] sm:$0xff]
      %v376 = vld [vmem:[%s1 + $0x2c8] sm:$0xff]
      %v377 = vld [vmem:[%s1 + $0x2d0] sm:$0xff]
      %v378 = vld [vmem:[%s1 + $0x2d8] sm:$0xff]
      %v379 = vld [vmem:[%s1 + $0x2e0] sm:$0xff]
      %v380 = vld [vmem:[%s1 + $0x2e8] sm:$0xff]
      %v381 = vld [vmem:[%s1 + $0x2f0] sm:$0xff]
      %v382 = vld [vmem:[%s1 + $0x2f8] sm:$0xff]
      %v383 = vld [vmem:[%s2] sm:$0x1]
      %v384 = vld [vmem:[%s4] sm:$0xff]
      %v385 = vld [vmem:[%s4 + $0x8] sm:$0xff]
      %v386 = vld [vmem:[%s4 + $0x10] sm:$0xff]
      %v387 = vld [vmem:[%s4 + $0x18] sm:$0xff]
      %v388 = vld [vmem:[%s4 + $0x20] sm:$0xff]
      %v389 = vld [vmem:[%s4 + $0x28] sm:$0xff]
      %v390 = vld [vmem:[%s5] sm:$0x3f]
      %vm391 = vcmask 64512
      %392 = vst.msk [vmem:[#allocation2 + $0xc5] sm:$0xff] %vm391, 0.0
      %vm393 = vcmask 59392
      %394 = vst.msk [vmem:[#allocation2 + $0xcd] sm:$0x7] %vm393, 0.0
      %395 = vst.msk [vmem:[#allocation2 + $0x195] sm:$0xff] %vm391, 0.0
      %396 = vst.msk [vmem:[#allocation2 + $0x19d] sm:$0x7] %vm393, 0.0
      %v397 = vld [vmem:[%s278] sm:$0xff]
      %v398 = vld [vmem:[%s278 + $0x8] sm:$0xff]
      %v399 = vld [vmem:[%s278 + $0x10] sm:$0xff]
      %v400 = vld [vmem:[%s278 + $0x18] sm:$0xff]
      %v401 = vld [vmem:[%s278 + $0x20] sm:$0xff]
      %v402 = vld [vmem:[%s278 + $0x28] sm:$0xff]
      %v403 = vld [vmem:[%s278 + $0x30] sm:$0xff]
      %v404 = vld [vmem:[%s278 + $0x38] sm:$0xff]
      %v405 = vld [vmem:[%s278 + $0x40] sm:$0xff]
      %v406 = vld [vmem:[%s278 + $0x48] sm:$0xff]
      %v407 = vld [vmem:[%s278 + $0x50] sm:$0xff]
      %v408 = vld [vmem:[%s278 + $0x58] sm:$0xff]
      %v409 = vld [vmem:[%s278 + $0x60] sm:$0xff]
      %v410 = vld [vmem:[%s278 + $0x68] sm:$0xff]
      %v411 = vld [vmem:[%s278 + $0x70] sm:$0xff]
      %v412 = vld [vmem:[%s278 + $0x78] sm:$0xff]
      %v413 = vld [vmem:[%s278 + $0x80] sm:$0xff]
      %v414 = vld [vmem:[%s278 + $0x88] sm:$0xff]
      %v415 = vld [vmem:[%s278 + $0x90] sm:$0xff]
      %v416 = vld [vmem:[%s278 + $0x98] sm:$0xff]
      %v417 = vld [vmem:[%s278 + $0xa0] sm:$0xff]
      %v418 = vld [vmem:[%s278 + $0xa8] sm:$0xff]
      %v419 = vld [vmem:[%s278 + $0xb0] sm:$0xff]
      %v420 = vld [vmem:[%s278 + $0xb8] sm:$0xff]
      %v421 = vld [vmem:[%s278 + $0xc0] sm:$0xff]
      %v422 = vld [vmem:[%s278 + $0xc8] sm:$0xff]
      %v423 = vld [vmem:[%s278 + $0xd0] sm:$0xff]
      %v424 = vld [vmem:[%s278 + $0xd8] sm:$0xff]
      %v425 = vld [vmem:[%s278 + $0xe0] sm:$0xff]
      %v426 = vld [vmem:[%s278 + $0xe8] sm:$0xff]
      %v427 = vld [vmem:[%s278 + $0xf0] sm:$0xff]
      %v428 = vld [vmem:[%s278 + $0xf8] sm:$0xff]
      %v429 = vld [vmem:[%s278 + $0x100] sm:$0xff]
      %v430 = vld [vmem:[%s278 + $0x108] sm:$0xff]
      %v431 = vld [vmem:[%s278 + $0x110] sm:$0xff]
      %v432 = vld [vmem:[%s278 + $0x118] sm:$0xff]
      %v433 = vld [vmem:[%s278 + $0x120] sm:$0xff]
      %v434 = vld [vmem:[%s278 + $0x128] sm:$0xff]
      %v435 = vld [vmem:[%s278 + $0x130] sm:$0xff]
      %v436 = vld [vmem:[%s278 + $0x138] sm:$0xff]
      %v437 = vld [vmem:[%s278 + $0x140] sm:$0xff]
      %v438 = vld [vmem:[%s278 + $0x148] sm:$0xff]
      %v439 = vld [vmem:[%s278 + $0x150] sm:$0xff]
      %v440 = vld [vmem:[%s278 + $0x158] sm:$0xff]
      %v441 = vld [vmem:[%s278 + $0x160] sm:$0xff]
      %v442 = vld [vmem:[%s278 + $0x168] sm:$0xff]
      %v443 = vld [vmem:[%s278 + $0x170] sm:$0xff]
      %v444 = vld [vmem:[%s278 + $0x178] sm:$0xff]
      %v445 = vld [vmem:[%s278 + $0x180] sm:$0xff]
      %v446 = vld [vmem:[%s278 + $0x188] sm:$0xff]
      %v447 = vld [vmem:[%s278 + $0x190] sm:$0xff]
      %v448 = vld [vmem:[%s278 + $0x198] sm:$0xff]
      %v449 = vld [vmem:[%s278 + $0x1a0] sm:$0xff]
      %v450 = vld [vmem:[%s278 + $0x1a8] sm:$0xff]
      %v451 = vld [vmem:[%s278 + $0x1b0] sm:$0xff]
      %v452 = vld [vmem:[%s278 + $0x1b8] sm:$0xff]
      %v453 = vld [vmem:[%s278 + $0x1c0] sm:$0xff]
      %v454 = vld [vmem:[%s278 + $0x1c8] sm:$0xff]
      %v455 = vld [vmem:[%s278 + $0x1d0] sm:$0xff]
      %v456 = vld [vmem:[%s278 + $0x1d8] sm:$0xff]
      %v457 = vld [vmem:[%s278 + $0x1e0] sm:$0xff]
      %v458 = vld [vmem:[%s278 + $0x1e8] sm:$0xff]
      %v459 = vld [vmem:[%s278 + $0x1f0] sm:$0xff]
      %v460 = vld [vmem:[%s278 + $0x1f8] sm:$0xff]
      %v461 = vld [vmem:[%s278 + $0x200] sm:$0xff]
      %v462 = vld [vmem:[%s278 + $0x208] sm:$0xff]
      %v463 = vld [vmem:[%s278 + $0x210] sm:$0xff]
      %v464 = vld [vmem:[%s278 + $0x218] sm:$0xff]
      %v465 = vld [vmem:[%s278 + $0x220] sm:$0xff]
      %v466 = vld [vmem:[%s278 + $0x228] sm:$0xff]
      %v467 = vld [vmem:[%s278 + $0x230] sm:$0xff]
      %v468 = vld [vmem:[%s278 + $0x238] sm:$0xff]
      %v469 = vld [vmem:[%s278 + $0x240] sm:$0xff]
      %v470 = vld [vmem:[%s278 + $0x248] sm:$0xff]
      %v471 = vld [vmem:[%s278 + $0x250] sm:$0xff]
      %v472 = vld [vmem:[%s278 + $0x258] sm:$0xff]
      %v473 = vld [vmem:[%s278 + $0x260] sm:$0xff]
      %v474 = vld [vmem:[%s278 + $0x268] sm:$0xff]
      %v475 = vld [vmem:[%s278 + $0x270] sm:$0xff]
      %v476 = vld [vmem:[%s278 + $0x278] sm:$0xff]
      %v477 = vld [vmem:[%s278 + $0x280] sm:$0xff]
      %v478 = vld [vmem:[%s278 + $0x288] sm:$0xff]
      %v479 = vld [vmem:[%s278 + $0x290] sm:$0xff]
      %v480 = vld [vmem:[%s278 + $0x298] sm:$0xff]
      %v481 = vld [vmem:[%s278 + $0x2a0] sm:$0xff]
      %v482 = vld [vmem:[%s278 + $0x2a8] sm:$0xff]
      %v483 = vld [vmem:[%s278 + $0x2b0] sm:$0xff]
      %v484 = vld [vmem:[%s278 + $0x2b8] sm:$0xff]
      %v485 = vld [vmem:[%s278 + $0x2c0] sm:$0xff]
      %v486 = vld [vmem:[%s278 + $0x2c8] sm:$0xff]
      %v487 = vld [vmem:[%s278 + $0x2d0] sm:$0xff]
      %v488 = vld [vmem:[%s278 + $0x2d8] sm:$0xff]
      %v489 = vld [vmem:[%s278 + $0x2e0] sm:$0xff]
      %v490 = vld [vmem:[%s278 + $0x2e8] sm:$0xff]
      %v491 = vld [vmem:[%s278 + $0x2f0] sm:$0xff]
      %v492 = vld [vmem:[%s278 + $0x2f8] sm:$0xff]
      %v493 = vld [vmem:[%s278 + $0x300] sm:$0xff]
      %v494 = vld [vmem:[%s278 + $0x308] sm:$0xff]
      %v495 = vld [vmem:[%s278 + $0x310] sm:$0xff]
      %v496 = vld [vmem:[%s278 + $0x318] sm:$0xff]
      %v497 = vld [vmem:[%s278 + $0x320] sm:$0xff]
      %v498 = vld [vmem:[%s278 + $0x328] sm:$0xff]
      %v499 = vld [vmem:[%s278 + $0x330] sm:$0xff]
      %v500 = vld [vmem:[%s278 + $0x338] sm:$0xff]
      %v501 = vld [vmem:[%s278 + $0x340] sm:$0xff]
      %v502 = vld [vmem:[%s278 + $0x348] sm:$0xff]
      %v503 = vld [vmem:[%s278 + $0x350] sm:$0xff]
      %v504 = vld [vmem:[%s278 + $0x358] sm:$0xff]
      %v505 = vld [vmem:[%s278 + $0x360] sm:$0xff]
      %v506 = vld [vmem:[%s278 + $0x368] sm:$0xff]
      %v507 = vld [vmem:[%s278 + $0x370] sm:$0xff]
      %v508 = vld [vmem:[%s278 + $0x378] sm:$0xff]
      %v509 = vld [vmem:[%s278 + $0x380] sm:$0xff]
      %v510 = vld [vmem:[%s278 + $0x388] sm:$0xff]
      %v511 = vld [vmem:[%s278 + $0x390] sm:$0xff]
      %v512 = vld [vmem:[%s278 + $0x398] sm:$0xff]
      %v513 = vld [vmem:[%s278 + $0x3a0] sm:$0xff]
      %v514 = vld [vmem:[%s278 + $0x3a8] sm:$0xff]
      %v515 = vld [vmem:[%s278 + $0x3b0] sm:$0xff]
      %v516 = vld [vmem:[%s278 + $0x3b8] sm:$0xff]
      %v517 = vld [vmem:[%s278 + $0x3c0] sm:$0xff]
      %v518 = vld [vmem:[%s278 + $0x3c8] sm:$0xff]
      %v519 = vld [vmem:[%s278 + $0x3d0] sm:$0xff]
      %v520 = vld [vmem:[%s278 + $0x3d8] sm:$0xff]
      %v521 = vld [vmem:[%s278 + $0x3e0] sm:$0xff]
      %v522 = vld [vmem:[%s278 + $0x3e8] sm:$0xff]
      %v523 = vld [vmem:[%s278 + $0x3f0] sm:$0xff]
      %v524 = vld [vmem:[%s278 + $0x3f8] sm:$0xff]
      %v525 = vld [vmem:[%s278 + $0x400] sm:$0xff]
      %v526 = vld [vmem:[%s278 + $0x408] sm:$0xff]
      %v527 = vld [vmem:[%s278 + $0x410] sm:$0xff]
      %v528 = vld [vmem:[%s278 + $0x418] sm:$0xff]
      %v529 = vld [vmem:[%s278 + $0x420] sm:$0xff]
      %v530 = vld [vmem:[%s278 + $0x428] sm:$0xff]
      %v531 = vld [vmem:[%s278 + $0x430] sm:$0xff]
      %v532 = vld [vmem:[%s278 + $0x438] sm:$0xff]
      %v533 = vld [vmem:[%s278 + $0x440] sm:$0xff]
      %v534 = vld [vmem:[%s278 + $0x448] sm:$0xff]
      %v535 = vld [vmem:[%s278 + $0x450] sm:$0xff]
      %v536 = vld [vmem:[%s278 + $0x458] sm:$0xff]
      %v537 = vld [vmem:[%s278 + $0x460] sm:$0xff]
      %v538 = vld [vmem:[%s278 + $0x468] sm:$0xff]
      %v539 = vld [vmem:[%s278 + $0x470] sm:$0xff]
      %v540 = vld [vmem:[%s278 + $0x478] sm:$0xff]
      %v541 = vld [vmem:[%s278 + $0x480] sm:$0x1f]
      %v542 = vld [vmem:[%s278 + $0x488] sm:$0x1f]
      %v543 = vld [vmem:[%s278 + $0x490] sm:$0x1f]
      %v544 = vld [vmem:[%s278 + $0x498] sm:$0x1f]
      %v545 = vld [vmem:[%s278 + $0x4a0] sm:$0x1f]
      %v546 = vld [vmem:[%s278 + $0x4a8] sm:$0x1f]
      %v548 = vperm.slane %v383, 0
      %550 = vmatpush.msra.mxu0 %v302
      %551 = vmatpush.msra.mxu0 %v301
      %552 = vmatpush.msra.mxu0 %v300
      %553 = vmatpush.msra.mxu0 %v299
      %554 = vmatpush.msra.mxu0 %v298
      %555 = vmatpush.msra.mxu0 %v297
      %556 = vmatpush.msra.mxu0 %v296
      %557 = vmatpush.msra.mxu0 %v295
      %558 = vmatpush.msra.mxu0 %v294
      %559 = vmatpush.msra.mxu0 %v293
      %560 = vmatpush.msra.mxu0 %v292
      %561 = vmatpush.msra.mxu0 %v291
      %562 = vmatpush.msra.mxu0 %v290
      %563 = vmatpush.msra.mxu0 %v289
      %564 = vmatpush.msra.mxu0 %v288
      %565 = vmatpush.msra.mxu0 %v287
      %566 = vmatmul.f32.gmra.mxu0 %v397
      %v567 = vpop.f32.mrf.mxu0
      %v568 = vadd.f32 %v548, %v567
      %569 = vmatmul.f32.gmra.mxu0 %v403
      %v570 = vpop.f32.mrf.mxu0
      %v571 = vadd.f32 %v548, %v570
      %572 = vmatmul.f32.gmra.mxu0 %v409
      %v573 = vpop.f32.mrf.mxu0
      %v574 = vadd.f32 %v548, %v573
      %575 = vmatmul.f32.gmra.mxu0 %v415
      %v576 = vpop.f32.mrf.mxu0
      %v577 = vadd.f32 %v548, %v576
      %578 = vmatmul.f32.gmra.mxu0 %v421
      %v579 = vpop.f32.mrf.mxu0
      %v580 = vadd.f32 %v548, %v579
      %581 = vmatmul.f32.gmra.mxu0 %v427
      %v582 = vpop.f32.mrf.mxu0
      %v583 = vadd.f32 %v548, %v582
      %584 = vmatmul.f32.gmra.mxu0 %v433
      %v585 = vpop.f32.mrf.mxu0
      %v586 = vadd.f32 %v548, %v585
      %587 = vmatmul.f32.gmra.mxu0 %v439
      %v588 = vpop.f32.mrf.mxu0
      %v589 = vadd.f32 %v548, %v588
      %590 = vmatmul.f32.gmra.mxu0 %v445
      %v591 = vpop.f32.mrf.mxu0
      %v592 = vadd.f32 %v548, %v591
      %593 = vmatmul.f32.gmra.mxu0 %v451
      %v594 = vpop.f32.mrf.mxu0
      %v595 = vadd.f32 %v548, %v594
      %596 = vmatmul.f32.gmra.mxu0 %v457
      %v597 = vpop.f32.mrf.mxu0
      %v598 = vadd.f32 %v548, %v597
      %599 = vmatmul.f32.gmra.mxu0 %v463
      %v600 = vpop.f32.mrf.mxu0
      %v601 = vadd.f32 %v548, %v600
      %602 = vmatmul.f32.gmra.mxu0 %v469
      %v603 = vpop.f32.mrf.mxu0
      %v604 = vadd.f32 %v548, %v603
      %605 = vmatmul.f32.gmra.mxu0 %v475
      %v606 = vpop.f32.mrf.mxu0
      %v607 = vadd.f32 %v548, %v606
      %608 = vmatmul.f32.gmra.mxu0 %v481
      %v609 = vpop.f32.mrf.mxu0
      %v610 = vadd.f32 %v548, %v609
      %611 = vmatmul.f32.gmra.mxu0 %v487
      %v612 = vpop.f32.mrf.mxu0
      %v613 = vadd.f32 %v548, %v612
      %614 = vmatmul.f32.gmra.mxu0 %v493
      %v615 = vpop.f32.mrf.mxu0
      %v616 = vadd.f32 %v548, %v615
      %617 = vmatmul.f32.gmra.mxu0 %v499
      %v618 = vpop.f32.mrf.mxu0
      %v619 = vadd.f32 %v548, %v618
      %620 = vmatmul.f32.gmra.mxu0 %v505
      %v621 = vpop.f32.mrf.mxu0
      %v622 = vadd.f32 %v548, %v621
      %623 = vmatmul.f32.gmra.mxu0 %v511
      %v624 = vpop.f32.mrf.mxu0
      %v625 = vadd.f32 %v548, %v624
      %626 = vmatmul.f32.gmra.mxu0 %v517
      %v627 = vpop.f32.mrf.mxu0
      %v628 = vadd.f32 %v548, %v627
      %629 = vmatmul.f32.gmra.mxu0 %v523
      %v630 = vpop.f32.mrf.mxu0
      %v631 = vadd.f32 %v548, %v630
      %632 = vmatmul.f32.gmra.mxu0 %v529
      %v633 = vpop.f32.mrf.mxu0
      %v634 = vadd.f32 %v548, %v633
      %635 = vmatmul.f32.gmra.mxu0 %v535
      %v636 = vpop.f32.mrf.mxu0
      %v637 = vadd.f32 %v548, %v636
      %638 = vmatmul.f32.gmra.mxu0 %v541
      %v639 = vpop.f32.mrf.mxu0
      %v640 = vadd.f32 %v548, %v639
      %641 = vdwg.mxu0
      %642 = vmatpush.msra.mxu0 %v318
      %643 = vmatpush.msra.mxu0 %v317
      %644 = vmatpush.msra.mxu0 %v316
      %645 = vmatpush.msra.mxu0 %v315
      %646 = vmatpush.msra.mxu0 %v314
      %647 = vmatpush.msra.mxu0 %v313
      %648 = vmatpush.msra.mxu0 %v312
      %649 = vmatpush.msra.mxu0 %v311
      %650 = vmatpush.msra.mxu0 %v310
      %651 = vmatpush.msra.mxu0 %v309
      %652 = vmatpush.msra.mxu0 %v308
      %653 = vmatpush.msra.mxu0 %v307
      %654 = vmatpush.msra.mxu0 %v306
      %655 = vmatpush.msra.mxu0 %v305
      %656 = vmatpush.msra.mxu0 %v304
      %657 = vmatpush.msra.mxu0 %v303
      %658 = vmatmul.f32.gmra.mxu0 %v398
      %v659 = vpop.f32.mrf.mxu0
      %v660 = vadd.f32 %v568, %v659
      %661 = vmatmul.f32.gmra.mxu0 %v404
      %v662 = vpop.f32.mrf.mxu0
      %v663 = vadd.f32 %v571, %v662
      %664 = vmatmul.f32.gmra.mxu0 %v410
      %v665 = vpop.f32.mrf.mxu0
      %v666 = vadd.f32 %v574, %v665
      %667 = vmatmul.f32.gmra.mxu0 %v416
      %v668 = vpop.f32.mrf.mxu0
      %v669 = vadd.f32 %v577, %v668
      %670 = vmatmul.f32.gmra.mxu0 %v422
      %v671 = vpop.f32.mrf.mxu0
      %v672 = vadd.f32 %v580, %v671
      %673 = vmatmul.f32.gmra.mxu0 %v428
      %v674 = vpop.f32.mrf.mxu0
      %v675 = vadd.f32 %v583, %v674
      %676 = vmatmul.f32.gmra.mxu0 %v434
      %v677 = vpop.f32.mrf.mxu0
      %v678 = vadd.f32 %v586, %v677
      %679 = vmatmul.f32.gmra.mxu0 %v440
      %v680 = vpop.f32.mrf.mxu0
      %v681 = vadd.f32 %v589, %v680
      %682 = vmatmul.f32.gmra.mxu0 %v446
      %v683 = vpop.f32.mrf.mxu0
      %v684 = vadd.f32 %v592, %v683
      %685 = vmatmul.f32.gmra.mxu0 %v452
      %v686 = vpop.f32.mrf.mxu0
      %v687 = vadd.f32 %v595, %v686
      %688 = vmatmul.f32.gmra.mxu0 %v458
      %v689 = vpop.f32.mrf.mxu0
      %v690 = vadd.f32 %v598, %v689
      %691 = vmatmul.f32.gmra.mxu0 %v464
      %v692 = vpop.f32.mrf.mxu0
      %v693 = vadd.f32 %v601, %v692
      %694 = vmatmul.f32.gmra.mxu0 %v470
      %v695 = vpop.f32.mrf.mxu0
      %v696 = vadd.f32 %v604, %v695
      %697 = vmatmul.f32.gmra.mxu0 %v476
      %v698 = vpop.f32.mrf.mxu0
      %v699 = vadd.f32 %v607, %v698
      %700 = vmatmul.f32.gmra.mxu0 %v482
      %v701 = vpop.f32.mrf.mxu0
      %v702 = vadd.f32 %v610, %v701
      %703 = vmatmul.f32.gmra.mxu0 %v488
      %v704 = vpop.f32.mrf.mxu0
      %v705 = vadd.f32 %v613, %v704
      %706 = vmatmul.f32.gmra.mxu0 %v494
      %v707 = vpop.f32.mrf.mxu0
      %v708 = vadd.f32 %v616, %v707
      %709 = vmatmul.f32.gmra.mxu0 %v500
      %v710 = vpop.f32.mrf.mxu0
      %v711 = vadd.f32 %v619, %v710
      %712 = vmatmul.f32.gmra.mxu0 %v506
      %v713 = vpop.f32.mrf.mxu0
      %v714 = vadd.f32 %v622, %v713
      %715 = vmatmul.f32.gmra.mxu0 %v512
      %v716 = vpop.f32.mrf.mxu0
      %v717 = vadd.f32 %v625, %v716
      %718 = vmatmul.f32.gmra.mxu0 %v518
      %v719 = vpop.f32.mrf.mxu0
      %v720 = vadd.f32 %v628, %v719
      %721 = vmatmul.f32.gmra.mxu0 %v524
      %v722 = vpop.f32.mrf.mxu0
      %v723 = vadd.f32 %v631, %v722
      %724 = vmatmul.f32.gmra.mxu0 %v530
      %v725 = vpop.f32.mrf.mxu0
      %v726 = vadd.f32 %v634, %v725
      %727 = vmatmul.f32.gmra.mxu0 %v536
      %v728 = vpop.f32.mrf.mxu0
      %v729 = vadd.f32 %v637, %v728
      %730 = vmatmul.f32.gmra.mxu0 %v542
      %v731 = vpop.f32.mrf.mxu0
      %v732 = vadd.f32 %v640, %v731
      %733 = vdwg.mxu0
      %734 = vmatpush.msra.mxu0 %v334
      %735 = vmatpush.msra.mxu0 %v333
      %736 = vmatpush.msra.mxu0 %v332
      %737 = vmatpush.msra.mxu0 %v331
      %738 = vmatpush.msra.mxu0 %v330
      %739 = vmatpush.msra.mxu0 %v329
      %740 = vmatpush.msra.mxu0 %v328
      %741 = vmatpush.msra.mxu0 %v327
      %742 = vmatpush.msra.mxu0 %v326
      %743 = vmatpush.msra.mxu0 %v325
      %744 = vmatpush.msra.mxu0 %v324
      %745 = vmatpush.msra.mxu0 %v323
      %746 = vmatpush.msra.mxu0 %v322
      %747 = vmatpush.msra.mxu0 %v321
      %748 = vmatpush.msra.mxu0 %v320
      %749 = vmatpush.msra.mxu0 %v319
      %750 = vmatmul.f32.gmra.mxu0 %v399
      %v751 = vpop.f32.mrf.mxu0
      %v752 = vadd.f32 %v660, %v751
      %753 = vmatmul.f32.gmra.mxu0 %v405
      %v754 = vpop.f32.mrf.mxu0
      %v755 = vadd.f32 %v663, %v754
      %756 = vmatmul.f32.gmra.mxu0 %v411
      %v757 = vpop.f32.mrf.mxu0
      %v758 = vadd.f32 %v666, %v757
      %759 = vmatmul.f32.gmra.mxu0 %v417
      %v760 = vpop.f32.mrf.mxu0
      %v761 = vadd.f32 %v669, %v760
      %762 = vmatmul.f32.gmra.mxu0 %v423
      %v763 = vpop.f32.mrf.mxu0
      %v764 = vadd.f32 %v672, %v763
      %765 = vmatmul.f32.gmra.mxu0 %v429
      %v766 = vpop.f32.mrf.mxu0
      %v767 = vadd.f32 %v675, %v766
      %768 = vmatmul.f32.gmra.mxu0 %v435
      %v769 = vpop.f32.mrf.mxu0
      %v770 = vadd.f32 %v678, %v769
      %771 = vmatmul.f32.gmra.mxu0 %v441
      %v772 = vpop.f32.mrf.mxu0
      %v773 = vadd.f32 %v681, %v772
      %774 = vmatmul.f32.gmra.mxu0 %v447
      %v775 = vpop.f32.mrf.mxu0
      %v776 = vadd.f32 %v684, %v775
      %777 = vmatmul.f32.gmra.mxu0 %v453
      %v778 = vpop.f32.mrf.mxu0
      %v779 = vadd.f32 %v687, %v778
      %780 = vmatmul.f32.gmra.mxu0 %v459
      %v781 = vpop.f32.mrf.mxu0
      %v782 = vadd.f32 %v690, %v781
      %783 = vmatmul.f32.gmra.mxu0 %v465
      %v784 = vpop.f32.mrf.mxu0
      %v785 = vadd.f32 %v693, %v784
      %786 = vmatmul.f32.gmra.mxu0 %v471
      %v787 = vpop.f32.mrf.mxu0
      %v788 = vadd.f32 %v696, %v787
      %789 = vmatmul.f32.gmra.mxu0 %v477
      %v790 = vpop.f32.mrf.mxu0
      %v791 = vadd.f32 %v699, %v790
      %792 = vmatmul.f32.gmra.mxu0 %v483
      %v793 = vpop.f32.mrf.mxu0
      %v794 = vadd.f32 %v702, %v793
      %795 = vmatmul.f32.gmra.mxu0 %v489
      %v796 = vpop.f32.mrf.mxu0
      %v797 = vadd.f32 %v705, %v796
      %798 = vmatmul.f32.gmra.mxu0 %v495
      %v799 = vpop.f32.mrf.mxu0
      %v800 = vadd.f32 %v708, %v799
      %801 = vmatmul.f32.gmra.mxu0 %v501
      %v802 = vpop.f32.mrf.mxu0
      %v803 = vadd.f32 %v711, %v802
      %804 = vmatmul.f32.gmra.mxu0 %v507
      %v805 = vpop.f32.mrf.mxu0
      %v806 = vadd.f32 %v714, %v805
      %807 = vmatmul.f32.gmra.mxu0 %v513
      %v808 = vpop.f32.mrf.mxu0
      %v809 = vadd.f32 %v717, %v808
      %810 = vmatmul.f32.gmra.mxu0 %v519
      %v811 = vpop.f32.mrf.mxu0
      %v812 = vadd.f32 %v720, %v811
      %813 = vmatmul.f32.gmra.mxu0 %v525
      %v814 = vpop.f32.mrf.mxu0
      %v815 = vadd.f32 %v723, %v814
      %816 = vmatmul.f32.gmra.mxu0 %v531
      %v817 = vpop.f32.mrf.mxu0
      %v818 = vadd.f32 %v726, %v817
      %819 = vmatmul.f32.gmra.mxu0 %v537
      %v820 = vpop.f32.mrf.mxu0
      %v821 = vadd.f32 %v729, %v820
      %822 = vmatmul.f32.gmra.mxu0 %v543
      %v823 = vpop.f32.mrf.mxu0
      %v824 = vadd.f32 %v732, %v823
      %825 = vdwg.mxu0
      %826 = vmatpush.msra.mxu0 %v350
      %827 = vmatpush.msra.mxu0 %v349
      %828 = vmatpush.msra.mxu0 %v348
      %829 = vmatpush.msra.mxu0 %v347
      %830 = vmatpush.msra.mxu0 %v346
      %831 = vmatpush.msra.mxu0 %v345
      %832 = vmatpush.msra.mxu0 %v344
      %833 = vmatpush.msra.mxu0 %v343
      %834 = vmatpush.msra.mxu0 %v342
      %835 = vmatpush.msra.mxu0 %v341
      %836 = vmatpush.msra.mxu0 %v340
      %837 = vmatpush.msra.mxu0 %v339
      %838 = vmatpush.msra.mxu0 %v338
      %839 = vmatpush.msra.mxu0 %v337
      %840 = vmatpush.msra.mxu0 %v336
      %841 = vmatpush.msra.mxu0 %v335
      %842 = vmatmul.f32.gmra.mxu0 %v400
      %v843 = vpop.f32.mrf.mxu0
      %v844 = vadd.f32 %v752, %v843
      %845 = vmatmul.f32.gmra.mxu0 %v406
      %v846 = vpop.f32.mrf.mxu0
      %v847 = vadd.f32 %v755, %v846
      %848 = vmatmul.f32.gmra.mxu0 %v412
      %v849 = vpop.f32.mrf.mxu0
      %v850 = vadd.f32 %v758, %v849
      %851 = vmatmul.f32.gmra.mxu0 %v418
      %v852 = vpop.f32.mrf.mxu0
      %v853 = vadd.f32 %v761, %v852
      %854 = vmatmul.f32.gmra.mxu0 %v424
      %v855 = vpop.f32.mrf.mxu0
      %v856 = vadd.f32 %v764, %v855
      %857 = vmatmul.f32.gmra.mxu0 %v430
      %v858 = vpop.f32.mrf.mxu0
      %v859 = vadd.f32 %v767, %v858
      %860 = vmatmul.f32.gmra.mxu0 %v436
      %v861 = vpop.f32.mrf.mxu0
      %v862 = vadd.f32 %v770, %v861
      %863 = vmatmul.f32.gmra.mxu0 %v442
      %v864 = vpop.f32.mrf.mxu0
      %v865 = vadd.f32 %v773, %v864
      %866 = vmatmul.f32.gmra.mxu0 %v448
      %v867 = vpop.f32.mrf.mxu0
      %v868 = vadd.f32 %v776, %v867
      %869 = vmatmul.f32.gmra.mxu0 %v454
      %v870 = vpop.f32.mrf.mxu0
      %v871 = vadd.f32 %v779, %v870
      %872 = vmatmul.f32.gmra.mxu0 %v460
      %v873 = vpop.f32.mrf.mxu0
      %v874 = vadd.f32 %v782, %v873
      %875 = vmatmul.f32.gmra.mxu0 %v466
      %v876 = vpop.f32.mrf.mxu0
      %v877 = vadd.f32 %v785, %v876
      %878 = vmatmul.f32.gmra.mxu0 %v472
      %v879 = vpop.f32.mrf.mxu0
      %v880 = vadd.f32 %v788, %v879
      %881 = vmatmul.f32.gmra.mxu0 %v478
      %v882 = vpop.f32.mrf.mxu0
      %v883 = vadd.f32 %v791, %v882
      %884 = vmatmul.f32.gmra.mxu0 %v484
      %v885 = vpop.f32.mrf.mxu0
      %v886 = vadd.f32 %v794, %v885
      %887 = vmatmul.f32.gmra.mxu0 %v490
      %v888 = vpop.f32.mrf.mxu0
      %v889 = vadd.f32 %v797, %v888
      %890 = vmatmul.f32.gmra.mxu0 %v496
      %v891 = vpop.f32.mrf.mxu0
      %v892 = vadd.f32 %v800, %v891
      %893 = vmatmul.f32.gmra.mxu0 %v502
      %v894 = vpop.f32.mrf.mxu0
      %v895 = vadd.f32 %v803, %v894
      %896 = vmatmul.f32.gmra.mxu0 %v508
      %v897 = vpop.f32.mrf.mxu0
      %v898 = vadd.f32 %v806, %v897
      %899 = vmatmul.f32.gmra.mxu0 %v514
      %v900 = vpop.f32.mrf.mxu0
      %v901 = vadd.f32 %v809, %v900
      %902 = vmatmul.f32.gmra.mxu0 %v520
      %v903 = vpop.f32.mrf.mxu0
      %v904 = vadd.f32 %v812, %v903
      %905 = vmatmul.f32.gmra.mxu0 %v526
      %v906 = vpop.f32.mrf.mxu0
      %v907 = vadd.f32 %v815, %v906
      %908 = vmatmul.f32.gmra.mxu0 %v532
      %v909 = vpop.f32.mrf.mxu0
      %v910 = vadd.f32 %v818, %v909
      %911 = vmatmul.f32.gmra.mxu0 %v538
      %v912 = vpop.f32.mrf.mxu0
      %v913 = vadd.f32 %v821, %v912
      %914 = vmatmul.f32.gmra.mxu0 %v544
      %v915 = vpop.f32.mrf.mxu0
      %v916 = vadd.f32 %v824, %v915
      %917 = vdwg.mxu0
      %918 = vmatpush.msra.mxu0 %v366
      %919 = vmatpush.msra.mxu0 %v365
      %920 = vmatpush.msra.mxu0 %v364
      %921 = vmatpush.msra.mxu0 %v363
      %922 = vmatpush.msra.mxu0 %v362
      %923 = vmatpush.msra.mxu0 %v361
      %924 = vmatpush.msra.mxu0 %v360
      %925 = vmatpush.msra.mxu0 %v359
      %926 = vmatpush.msra.mxu0 %v358
      %927 = vmatpush.msra.mxu0 %v357
      %928 = vmatpush.msra.mxu0 %v356
      %929 = vmatpush.msra.mxu0 %v355
      %930 = vmatpush.msra.mxu0 %v354
      %931 = vmatpush.msra.mxu0 %v353
      %932 = vmatpush.msra.mxu0 %v352
      %933 = vmatpush.msra.mxu0 %v351
      %934 = vmatmul.f32.gmra.mxu0 %v401
      %v935 = vpop.f32.mrf.mxu0
      %v936 = vadd.f32 %v844, %v935
      %937 = vmatmul.f32.gmra.mxu0 %v407
      %v938 = vpop.f32.mrf.mxu0
      %v939 = vadd.f32 %v847, %v938
      %940 = vmatmul.f32.gmra.mxu0 %v413
      %v941 = vpop.f32.mrf.mxu0
      %v942 = vadd.f32 %v850, %v941
      %943 = vmatmul.f32.gmra.mxu0 %v419
      %v944 = vpop.f32.mrf.mxu0
      %v945 = vadd.f32 %v853, %v944
      %946 = vmatmul.f32.gmra.mxu0 %v425
      %v947 = vpop.f32.mrf.mxu0
      %v948 = vadd.f32 %v856, %v947
      %949 = vmatmul.f32.gmra.mxu0 %v431
      %v950 = vpop.f32.mrf.mxu0
      %v951 = vadd.f32 %v859, %v950
      %952 = vmatmul.f32.gmra.mxu0 %v437
      %v953 = vpop.f32.mrf.mxu0
      %v954 = vadd.f32 %v862, %v953
      %955 = vmatmul.f32.gmra.mxu0 %v443
      %v956 = vpop.f32.mrf.mxu0
      %v957 = vadd.f32 %v865, %v956
      %958 = vmatmul.f32.gmra.mxu0 %v449
      %v959 = vpop.f32.mrf.mxu0
      %v960 = vadd.f32 %v868, %v959
      %961 = vmatmul.f32.gmra.mxu0 %v455
      %v962 = vpop.f32.mrf.mxu0
      %v963 = vadd.f32 %v871, %v962
      %964 = vmatmul.f32.gmra.mxu0 %v461
      %v965 = vpop.f32.mrf.mxu0
      %v966 = vadd.f32 %v874, %v965
      %967 = vmatmul.f32.gmra.mxu0 %v467
      %v968 = vpop.f32.mrf.mxu0
      %v969 = vadd.f32 %v877, %v968
      %970 = vmatmul.f32.gmra.mxu0 %v473
      %v971 = vpop.f32.mrf.mxu0
      %v972 = vadd.f32 %v880, %v971
      %973 = vmatmul.f32.gmra.mxu0 %v479
      %v974 = vpop.f32.mrf.mxu0
      %v975 = vadd.f32 %v883, %v974
      %976 = vmatmul.f32.gmra.mxu0 %v485
      %v977 = vpop.f32.mrf.mxu0
      %v978 = vadd.f32 %v886, %v977
      %979 = vmatmul.f32.gmra.mxu0 %v491
      %v980 = vpop.f32.mrf.mxu0
      %v981 = vadd.f32 %v889, %v980
      %982 = vmatmul.f32.gmra.mxu0 %v497
      %v983 = vpop.f32.mrf.mxu0
      %v984 = vadd.f32 %v892, %v983
      %985 = vmatmul.f32.gmra.mxu0 %v503
      %v986 = vpop.f32.mrf.mxu0
      %v987 = vadd.f32 %v895, %v986
      %988 = vmatmul.f32.gmra.mxu0 %v509
      %v989 = vpop.f32.mrf.mxu0
      %v990 = vadd.f32 %v898, %v989
      %991 = vmatmul.f32.gmra.mxu0 %v515
      %v992 = vpop.f32.mrf.mxu0
      %v993 = vadd.f32 %v901, %v992
      %994 = vmatmul.f32.gmra.mxu0 %v521
      %v995 = vpop.f32.mrf.mxu0
      %v996 = vadd.f32 %v904, %v995
      %997 = vmatmul.f32.gmra.mxu0 %v527
      %v998 = vpop.f32.mrf.mxu0
      %v999 = vadd.f32 %v907, %v998
      %1000 = vmatmul.f32.gmra.mxu0 %v533
      %v1001 = vpop.f32.mrf.mxu0
      %v1002 = vadd.f32 %v910, %v1001
      %1003 = vmatmul.f32.gmra.mxu0 %v539
      %v1004 = vpop.f32.mrf.mxu0
      %v1005 = vadd.f32 %v913, %v1004
      %1006 = vmatmul.f32.gmra.mxu0 %v545
      %v1007 = vpop.f32.mrf.mxu0
      %v1008 = vadd.f32 %v916, %v1007
      %1009 = vdwg.mxu0
      %1010 = vmatpush.msra.mxu0 %v382
      %1011 = vmatpush.msra.mxu0 %v381
      %1012 = vmatpush.msra.mxu0 %v380
      %1013 = vmatpush.msra.mxu0 %v379
      %1014 = vmatpush.msra.mxu0 %v378
      %1015 = vmatpush.msra.mxu0 %v377
      %1016 = vmatpush.msra.mxu0 %v376
      %1017 = vmatpush.msra.mxu0 %v375
      %1018 = vmatpush.msra.mxu0 %v374
      %1019 = vmatpush.msra.mxu0 %v373
      %1020 = vmatpush.msra.mxu0 %v372
      %1021 = vmatpush.msra.mxu0 %v371
      %1022 = vmatpush.msra.mxu0 %v370
      %1023 = vmatpush.msra.mxu0 %v369
      %1024 = vmatpush.msra.mxu0 %v368
      %1025 = vmatpush.msra.mxu0 %v367
      %1026 = vmatmul.f32.gmra.mxu0 %v402
      %v1027 = vpop.f32.mrf.mxu0
      %v1028 = vadd.f32 %v936, %v1027
      %1029 = vmatmul.f32.gmra.mxu0 %v408
      %v1030 = vpop.f32.mrf.mxu0
      %v1031 = vadd.f32 %v939, %v1030
      %1032 = vmatmul.f32.gmra.mxu0 %v414
      %v1033 = vpop.f32.mrf.mxu0
      %v1034 = vadd.f32 %v942, %v1033
      %1035 = vmatmul.f32.gmra.mxu0 %v420
      %v1036 = vpop.f32.mrf.mxu0
      %v1037 = vadd.f32 %v945, %v1036
      %1038 = vmatmul.f32.gmra.mxu0 %v426
      %v1039 = vpop.f32.mrf.mxu0
      %v1040 = vadd.f32 %v948, %v1039
      %1041 = vmatmul.f32.gmra.mxu0 %v432
      %v1042 = vpop.f32.mrf.mxu0
      %v1043 = vadd.f32 %v951, %v1042
      %1044 = vmatmul.f32.gmra.mxu0 %v438
      %v1045 = vpop.f32.mrf.mxu0
      %v1046 = vadd.f32 %v954, %v1045
      %1047 = vmatmul.f32.gmra.mxu0 %v444
      %v1048 = vpop.f32.mrf.mxu0
      %v1049 = vadd.f32 %v957, %v1048
      %1050 = vmatmul.f32.gmra.mxu0 %v450
      %v1051 = vpop.f32.mrf.mxu0
      %v1052 = vadd.f32 %v960, %v1051
      %1053 = vmatmul.f32.gmra.mxu0 %v456
      %v1054 = vpop.f32.mrf.mxu0
      %v1055 = vadd.f32 %v963, %v1054
      %1056 = vmatmul.f32.gmra.mxu0 %v462
      %v1057 = vpop.f32.mrf.mxu0
      %v1058 = vadd.f32 %v966, %v1057
      %1059 = vmatmul.f32.gmra.mxu0 %v468
      %v1060 = vpop.f32.mrf.mxu0
      %v1061 = vadd.f32 %v969, %v1060
      %1062 = vmatmul.f32.gmra.mxu0 %v474
      %v1063 = vpop.f32.mrf.mxu0
      %v1064 = vadd.f32 %v972, %v1063
      %1065 = vmatmul.f32.gmra.mxu0 %v480
      %v1066 = vpop.f32.mrf.mxu0
      %v1067 = vadd.f32 %v975, %v1066
      %1068 = vmatmul.f32.gmra.mxu0 %v486
      %v1069 = vpop.f32.mrf.mxu0
      %v1070 = vadd.f32 %v978, %v1069
      %1071 = vmatmul.f32.gmra.mxu0 %v492
      %v1072 = vpop.f32.mrf.mxu0
      %v1073 = vadd.f32 %v981, %v1072
      %1074 = vmatmul.f32.gmra.mxu0 %v498
      %v1075 = vpop.f32.mrf.mxu0
      %v1076 = vadd.f32 %v984, %v1075
      %1077 = vmatmul.f32.gmra.mxu0 %v504
      %v1078 = vpop.f32.mrf.mxu0
      %v1079 = vadd.f32 %v987, %v1078
      %1080 = vmatmul.f32.gmra.mxu0 %v510
      %v1081 = vpop.f32.mrf.mxu0
      %v1082 = vadd.f32 %v990, %v1081
      %1083 = vmatmul.f32.gmra.mxu0 %v516
      %v1084 = vpop.f32.mrf.mxu0
      %v1085 = vadd.f32 %v993, %v1084
      %1086 = vmatmul.f32.gmra.mxu0 %v522
      %v1087 = vpop.f32.mrf.mxu0
      %v1088 = vadd.f32 %v996, %v1087
      %1089 = vmatmul.f32.gmra.mxu0 %v528
      %v1090 = vpop.f32.mrf.mxu0
      %v1091 = vadd.f32 %v999, %v1090
      %1092 = vmatmul.f32.gmra.mxu0 %v534
      %v1093 = vpop.f32.mrf.mxu0
      %v1094 = vadd.f32 %v1002, %v1093
      %1095 = vmatmul.f32.gmra.mxu0 %v540
      %v1096 = vpop.f32.mrf.mxu0
      %v1097 = vadd.f32 %v1005, %v1096
      %1098 = vmatmul.f32.gmra.mxu0 %v546
      %v1099 = vpop.f32.mrf.mxu0
      %v1100 = vadd.f32 %v1008, %v1099
      %1101 = vdwg.mxu0
      %v1102 = vmul.f32 %v1028, 1.702
      %v1103 = vmul.f32 %v1031, 1.702
      %v1104 = vmul.f32 %v1034, 1.702
      %v1105 = vmul.f32 %v1037, 1.702
      %v1106 = vmul.f32 %v1040, 1.702
      %v1107 = vmul.f32 %v1043, 1.702
      %v1108 = vmul.f32 %v1046, 1.702
      %v1109 = vmul.f32 %v1049, 1.702
      %v1110 = vmul.f32 %v1052, 1.702
      %v1111 = vmul.f32 %v1055, 1.702
      %v1112 = vmul.f32 %v1058, 1.702
      %v1113 = vmul.f32 %v1061, 1.702
      %v1114 = vmul.f32 %v1064, 1.702
      %v1115 = vmul.f32 %v1067, 1.702
      %v1116 = vmul.f32 %v1070, 1.702
      %v1117 = vmul.f32 %v1073, 1.702
      %v1118 = vmul.f32 %v1076, 1.702
      %v1119 = vmul.f32 %v1079, 1.702
      %v1120 = vmul.f32 %v1082, 1.702
      %v1121 = vmul.f32 %v1085, 1.702
      %v1122 = vmul.f32 %v1088, 1.702
      %v1123 = vmul.f32 %v1091, 1.702
      %v1124 = vmul.f32 %v1094, 1.702
      %v1125 = vmul.f32 %v1097, 1.702
      %v1126 = vmul.f32 %v1100, 1.702
      %v1127 = vxor.u32 %v1102, 2147483648
      %v1128 = vxor.u32 %v1103, 2147483648
      %v1129 = vxor.u32 %v1104, 2147483648
      %v1130 = vxor.u32 %v1105, 2147483648
      %v1131 = vxor.u32 %v1106, 2147483648
      %v1132 = vxor.u32 %v1107, 2147483648
      %v1133 = vxor.u32 %v1108, 2147483648
      %v1134 = vxor.u32 %v1109, 2147483648
      %v1135 = vxor.u32 %v1110, 2147483648
      %v1136 = vxor.u32 %v1111, 2147483648
      %v1137 = vxor.u32 %v1112, 2147483648
      %v1138 = vxor.u32 %v1113, 2147483648
      %v1139 = vxor.u32 %v1114, 2147483648
      %v1140 = vxor.u32 %v1115, 2147483648
      %v1141 = vxor.u32 %v1116, 2147483648
      %v1142 = vxor.u32 %v1117, 2147483648
      %v1143 = vxor.u32 %v1118, 2147483648
      %v1144 = vxor.u32 %v1119, 2147483648
      %v1145 = vxor.u32 %v1120, 2147483648
      %v1146 = vxor.u32 %v1121, 2147483648
      %v1147 = vxor.u32 %v1122, 2147483648
      %v1148 = vxor.u32 %v1123, 2147483648
      %v1149 = vxor.u32 %v1124, 2147483648
      %v1150 = vxor.u32 %v1125, 2147483648
      %v1151 = vxor.u32 %v1126, 2147483648
      %v1152 = vmul.f32 %v1127, 1.442695
      %v1153 = vpow.pop %v1152
      %v1154 = vmul.f32 %v1128, 1.442695
      %v1155 = vpow.pop %v1154
      %v1156 = vmul.f32 %v1129, 1.442695
      %v1157 = vpow.pop %v1156
      %v1158 = vmul.f32 %v1130, 1.442695
      %v1159 = vpow.pop %v1158
      %v1160 = vmul.f32 %v1131, 1.442695
      %v1161 = vpow.pop %v1160
      %v1162 = vmul.f32 %v1132, 1.442695
      %v1163 = vpow.pop %v1162
      %v1164 = vmul.f32 %v1133, 1.442695
      %v1165 = vpow.pop %v1164
      %v1166 = vmul.f32 %v1134, 1.442695
      %v1167 = vpow.pop %v1166
      %v1168 = vmul.f32 %v1135, 1.442695
      %v1169 = vpow.pop %v1168
      %v1170 = vmul.f32 %v1136, 1.442695
      %v1171 = vpow.pop %v1170
      %v1172 = vmul.f32 %v1137, 1.442695
      %v1173 = vpow.pop %v1172
      %v1174 = vmul.f32 %v1138, 1.442695
      %v1175 = vpow.pop %v1174
      %v1176 = vmul.f32 %v1139, 1.442695
      %v1177 = vpow.pop %v1176
      %v1178 = vmul.f32 %v1140, 1.442695
      %v1179 = vpow.pop %v1178
      %v1180 = vmul.f32 %v1141, 1.442695
      %v1181 = vpow.pop %v1180
      %v1182 = vmul.f32 %v1142, 1.442695
      %v1183 = vpow.pop %v1182
      %v1184 = vmul.f32 %v1143, 1.442695
      %v1185 = vpow.pop %v1184
      %v1186 = vmul.f32 %v1144, 1.442695
      %v1187 = vpow.pop %v1186
      %v1188 = vmul.f32 %v1145, 1.442695
      %v1189 = vpow.pop %v1188
      %v1190 = vmul.f32 %v1146, 1.442695
      %v1191 = vpow.pop %v1190
      %v1192 = vmul.f32 %v1147, 1.442695
      %v1193 = vpow.pop %v1192
      %v1194 = vmul.f32 %v1148, 1.442695
      %v1195 = vpow.pop %v1194
      %v1196 = vmul.f32 %v1149, 1.442695
      %v1197 = vpow.pop %v1196
      %v1198 = vmul.f32 %v1150, 1.442695
      %v1199 = vpow.pop %v1198
      %v1200 = vmul.f32 %v1151, 1.442695
      %v1201 = vpow.pop %v1200
      %v1202 = vadd.f32 %v1153, 1.0
      %v1203 = vadd.f32 %v1155, 1.0
      %v1204 = vadd.f32 %v1157, 1.0
      %v1205 = vadd.f32 %v1159, 1.0
      %v1206 = vadd.f32 %v1161, 1.0
      %v1207 = vadd.f32 %v1163, 1.0
      %v1208 = vadd.f32 %v1165, 1.0
      %v1209 = vadd.f32 %v1167, 1.0
      %v1210 = vadd.f32 %v1169, 1.0
      %v1211 = vadd.f32 %v1171, 1.0
      %v1212 = vadd.f32 %v1173, 1.0
      %v1213 = vadd.f32 %v1175, 1.0
      %v1214 = vadd.f32 %v1177, 1.0
      %v1215 = vadd.f32 %v1179, 1.0
      %v1216 = vadd.f32 %v1181, 1.0
      %v1217 = vadd.f32 %v1183, 1.0
      %v1218 = vadd.f32 %v1185, 1.0
      %v1219 = vadd.f32 %v1187, 1.0
      %v1220 = vadd.f32 %v1189, 1.0
      %v1221 = vadd.f32 %v1191, 1.0
      %v1222 = vadd.f32 %v1193, 1.0
      %v1223 = vadd.f32 %v1195, 1.0
      %v1224 = vadd.f32 %v1197, 1.0
      %v1225 = vadd.f32 %v1199, 1.0
      %v1226 = vadd.f32 %v1201, 1.0
      %v1227 = vrcp.pop %v1202
      %v1228 = vmul.f32 %v1202, %v1227
      %v1229 = vsub.f32 1.0, %v1228
      %v1230 = vmul.f32 %v1227, %v1229
      %v1231 = vadd.f32 %v1227, %v1230
      %vm1232 = vweird.f32 %v1202
      %vm1233 = vweird.f32 %v1227
      %vm1234 = vmor %vm1232, %vm1233
      %v1235 = vsel %vm1234, %v1227, %v1231
      %v1236 = vand.u32 2147483647, %v1202
      %vm1237 = vcmp.eq.f32.partialorder %v1236, 8.507059e+37
      %v1238 = vand.u32 %v1202, 2147483648
      %v1239 = vor.u32 1.1754944e-38, %v1238
      %v1240 = vsel %vm1237, %v1239, %v1235
      %v1241 = vmul.f32 1.0, %v1240
      %v1242 = vrcp.pop %v1203
      %v1243 = vmul.f32 %v1203, %v1242
      %v1244 = vsub.f32 1.0, %v1243
      %v1245 = vmul.f32 %v1242, %v1244
      %v1246 = vadd.f32 %v1242, %v1245
      %vm1247 = vweird.f32 %v1203
      %vm1248 = vweird.f32 %v1242
      %vm1249 = vmor %vm1247, %vm1248
      %v1250 = vsel %vm1249, %v1242, %v1246
      %v1251 = vand.u32 2147483647, %v1203
      %vm1252 = vcmp.eq.f32.partialorder %v1251, 8.507059e+37
      %v1253 = vand.u32 %v1203, 2147483648
      %v1254 = vor.u32 1.1754944e-38, %v1253
      %v1255 = vsel %vm1252, %v1254, %v1250
      %v1256 = vmul.f32 1.0, %v1255
      %v1257 = vrcp.pop %v1204
      %v1258 = vmul.f32 %v1204, %v1257
      %v1259 = vsub.f32 1.0, %v1258
      %v1260 = vmul.f32 %v1257, %v1259
      %v1261 = vadd.f32 %v1257, %v1260
      %vm1262 = vweird.f32 %v1204
      %vm1263 = vweird.f32 %v1257
      %vm1264 = vmor %vm1262, %vm1263
      %v1265 = vsel %vm1264, %v1257, %v1261
      %v1266 = vand.u32 2147483647, %v1204
      %vm1267 = vcmp.eq.f32.partialorder %v1266, 8.507059e+37
      %v1268 = vand.u32 %v1204, 2147483648
      %v1269 = vor.u32 1.1754944e-38, %v1268
      %v1270 = vsel %vm1267, %v1269, %v1265
      %v1271 = vmul.f32 1.0, %v1270
      %v1272 = vrcp.pop %v1205
      %v1273 = vmul.f32 %v1205, %v1272
      %v1274 = vsub.f32 1.0, %v1273
      %v1275 = vmul.f32 %v1272, %v1274
      %v1276 = vadd.f32 %v1272, %v1275
      %vm1277 = vweird.f32 %v1205
      %vm1278 = vweird.f32 %v1272
      %vm1279 = vmor %vm1277, %vm1278
      %v1280 = vsel %vm1279, %v1272, %v1276
      %v1281 = vand.u32 2147483647, %v1205
      %vm1282 = vcmp.eq.f32.partialorder %v1281, 8.507059e+37
      %v1283 = vand.u32 %v1205, 2147483648
      %v1284 = vor.u32 1.1754944e-38, %v1283
      %v1285 = vsel %vm1282, %v1284, %v1280
      %v1286 = vmul.f32 1.0, %v1285
      %v1287 = vrcp.pop %v1206
      %v1288 = vmul.f32 %v1206, %v1287
      %v1289 = vsub.f32 1.0, %v1288
      %v1290 = vmul.f32 %v1287, %v1289
      %v1291 = vadd.f32 %v1287, %v1290
      %vm1292 = vweird.f32 %v1206
      %vm1293 = vweird.f32 %v1287
      %vm1294 = vmor %vm1292, %vm1293
      %v1295 = vsel %vm1294, %v1287, %v1291
      %v1296 = vand.u32 2147483647, %v1206
      %vm1297 = vcmp.eq.f32.partialorder %v1296, 8.507059e+37
      %v1298 = vand.u32 %v1206, 2147483648
      %v1299 = vor.u32 1.1754944e-38, %v1298
      %v1300 = vsel %vm1297, %v1299, %v1295
      %v1301 = vmul.f32 1.0, %v1300
      %v1302 = vrcp.pop %v1207
      %v1303 = vmul.f32 %v1207, %v1302
      %v1304 = vsub.f32 1.0, %v1303
      %v1305 = vmul.f32 %v1302, %v1304
      %v1306 = vadd.f32 %v1302, %v1305
      %vm1307 = vweird.f32 %v1207
      %vm1308 = vweird.f32 %v1302
      %vm1309 = vmor %vm1307, %vm1308
      %v1310 = vsel %vm1309, %v1302, %v1306
      %v1311 = vand.u32 2147483647, %v1207
      %vm1312 = vcmp.eq.f32.partialorder %v1311, 8.507059e+37
      %v1313 = vand.u32 %v1207, 2147483648
      %v1314 = vor.u32 1.1754944e-38, %v1313
      %v1315 = vsel %vm1312, %v1314, %v1310
      %v1316 = vmul.f32 1.0, %v1315
      %v1317 = vrcp.pop %v1208
      %v1318 = vmul.f32 %v1208, %v1317
      %v1319 = vsub.f32 1.0, %v1318
      %v1320 = vmul.f32 %v1317, %v1319
      %v1321 = vadd.f32 %v1317, %v1320
      %vm1322 = vweird.f32 %v1208
      %vm1323 = vweird.f32 %v1317
      %vm1324 = vmor %vm1322, %vm1323
      %v1325 = vsel %vm1324, %v1317, %v1321
      %v1326 = vand.u32 2147483647, %v1208
      %vm1327 = vcmp.eq.f32.partialorder %v1326, 8.507059e+37
      %v1328 = vand.u32 %v1208, 2147483648
      %v1329 = vor.u32 1.1754944e-38, %v1328
      %v1330 = vsel %vm1327, %v1329, %v1325
      %v1331 = vmul.f32 1.0, %v1330
      %v1332 = vrcp.pop %v1209
      %v1333 = vmul.f32 %v1209, %v1332
      %v1334 = vsub.f32 1.0, %v1333
      %v1335 = vmul.f32 %v1332, %v1334
      %v1336 = vadd.f32 %v1332, %v1335
      %vm1337 = vweird.f32 %v1209
      %vm1338 = vweird.f32 %v1332
      %vm1339 = vmor %vm1337, %vm1338
      %v1340 = vsel %vm1339, %v1332, %v1336
      %v1341 = vand.u32 2147483647, %v1209
      %vm1342 = vcmp.eq.f32.partialorder %v1341, 8.507059e+37
      %v1343 = vand.u32 %v1209, 2147483648
      %v1344 = vor.u32 1.1754944e-38, %v1343
      %v1345 = vsel %vm1342, %v1344, %v1340
      %v1346 = vmul.f32 1.0, %v1345
      %v1347 = vrcp.pop %v1210
      %v1348 = vmul.f32 %v1210, %v1347
      %v1349 = vsub.f32 1.0, %v1348
      %v1350 = vmul.f32 %v1347, %v1349
      %v1351 = vadd.f32 %v1347, %v1350
      %vm1352 = vweird.f32 %v1210
      %vm1353 = vweird.f32 %v1347
      %vm1354 = vmor %vm1352, %vm1353
      %v1355 = vsel %vm1354, %v1347, %v1351
      %v1356 = vand.u32 2147483647, %v1210
      %vm1357 = vcmp.eq.f32.partialorder %v1356, 8.507059e+37
      %v1358 = vand.u32 %v1210, 2147483648
      %v1359 = vor.u32 1.1754944e-38, %v1358
      %v1360 = vsel %vm1357, %v1359, %v1355
      %v1361 = vmul.f32 1.0, %v1360
      %v1362 = vrcp.pop %v1211
      %v1363 = vmul.f32 %v1211, %v1362
      %v1364 = vsub.f32 1.0, %v1363
      %v1365 = vmul.f32 %v1362, %v1364
      %v1366 = vadd.f32 %v1362, %v1365
      %vm1367 = vweird.f32 %v1211
      %vm1368 = vweird.f32 %v1362
      %vm1369 = vmor %vm1367, %vm1368
      %v1370 = vsel %vm1369, %v1362, %v1366
      %v1371 = vand.u32 2147483647, %v1211
      %vm1372 = vcmp.eq.f32.partialorder %v1371, 8.507059e+37
      %v1373 = vand.u32 %v1211, 2147483648
      %v1374 = vor.u32 1.1754944e-38, %v1373
      %v1375 = vsel %vm1372, %v1374, %v1370
      %v1376 = vmul.f32 1.0, %v1375
      %v1377 = vrcp.pop %v1212
      %v1378 = vmul.f32 %v1212, %v1377
      %v1379 = vsub.f32 1.0, %v1378
      %v1380 = vmul.f32 %v1377, %v1379
      %v1381 = vadd.f32 %v1377, %v1380
      %vm1382 = vweird.f32 %v1212
      %vm1383 = vweird.f32 %v1377
      %vm1384 = vmor %vm1382, %vm1383
      %v1385 = vsel %vm1384, %v1377, %v1381
      %v1386 = vand.u32 2147483647, %v1212
      %vm1387 = vcmp.eq.f32.partialorder %v1386, 8.507059e+37
      %v1388 = vand.u32 %v1212, 2147483648
      %v1389 = vor.u32 1.1754944e-38, %v1388
      %v1390 = vsel %vm1387, %v1389, %v1385
      %v1391 = vmul.f32 1.0, %v1390
      %v1392 = vrcp.pop %v1213
      %v1393 = vmul.f32 %v1213, %v1392
      %v1394 = vsub.f32 1.0, %v1393
      %v1395 = vmul.f32 %v1392, %v1394
      %v1396 = vadd.f32 %v1392, %v1395
      %vm1397 = vweird.f32 %v1213
      %vm1398 = vweird.f32 %v1392
      %vm1399 = vmor %vm1397, %vm1398
      %v1400 = vsel %vm1399, %v1392, %v1396
      %v1401 = vand.u32 2147483647, %v1213
      %vm1402 = vcmp.eq.f32.partialorder %v1401, 8.507059e+37
      %v1403 = vand.u32 %v1213, 2147483648
      %v1404 = vor.u32 1.1754944e-38, %v1403
      %v1405 = vsel %vm1402, %v1404, %v1400
      %v1406 = vmul.f32 1.0, %v1405
      %v1407 = vrcp.pop %v1214
      %v1408 = vmul.f32 %v1214, %v1407
      %v1409 = vsub.f32 1.0, %v1408
      %v1410 = vmul.f32 %v1407, %v1409
      %v1411 = vadd.f32 %v1407, %v1410
      %vm1412 = vweird.f32 %v1214
      %vm1413 = vweird.f32 %v1407
      %vm1414 = vmor %vm1412, %vm1413
      %v1415 = vsel %vm1414, %v1407, %v1411
      %v1416 = vand.u32 2147483647, %v1214
      %vm1417 = vcmp.eq.f32.partialorder %v1416, 8.507059e+37
      %v1418 = vand.u32 %v1214, 2147483648
      %v1419 = vor.u32 1.1754944e-38, %v1418
      %v1420 = vsel %vm1417, %v1419, %v1415
      %v1421 = vmul.f32 1.0, %v1420
      %v1422 = vrcp.pop %v1215
      %v1423 = vmul.f32 %v1215, %v1422
      %v1424 = vsub.f32 1.0, %v1423
      %v1425 = vmul.f32 %v1422, %v1424
      %v1426 = vadd.f32 %v1422, %v1425
      %vm1427 = vweird.f32 %v1215
      %vm1428 = vweird.f32 %v1422
      %vm1429 = vmor %vm1427, %vm1428
      %v1430 = vsel %vm1429, %v1422, %v1426
      %v1431 = vand.u32 2147483647, %v1215
      %vm1432 = vcmp.eq.f32.partialorder %v1431, 8.507059e+37
      %v1433 = vand.u32 %v1215, 2147483648
      %v1434 = vor.u32 1.1754944e-38, %v1433
      %v1435 = vsel %vm1432, %v1434, %v1430
      %v1436 = vmul.f32 1.0, %v1435
      %v1437 = vrcp.pop %v1216
      %v1438 = vmul.f32 %v1216, %v1437
      %v1439 = vsub.f32 1.0, %v1438
      %v1440 = vmul.f32 %v1437, %v1439
      %v1441 = vadd.f32 %v1437, %v1440
      %vm1442 = vweird.f32 %v1216
      %vm1443 = vweird.f32 %v1437
      %vm1444 = vmor %vm1442, %vm1443
      %v1445 = vsel %vm1444, %v1437, %v1441
      %v1446 = vand.u32 2147483647, %v1216
      %vm1447 = vcmp.eq.f32.partialorder %v1446, 8.507059e+37
      %v1448 = vand.u32 %v1216, 2147483648
      %v1449 = vor.u32 1.1754944e-38, %v1448
      %v1450 = vsel %vm1447, %v1449, %v1445
      %v1451 = vmul.f32 1.0, %v1450
      %v1452 = vrcp.pop %v1217
      %v1453 = vmul.f32 %v1217, %v1452
      %v1454 = vsub.f32 1.0, %v1453
      %v1455 = vmul.f32 %v1452, %v1454
      %v1456 = vadd.f32 %v1452, %v1455
      %vm1457 = vweird.f32 %v1217
      %vm1458 = vweird.f32 %v1452
      %vm1459 = vmor %vm1457, %vm1458
      %v1460 = vsel %vm1459, %v1452, %v1456
      %v1461 = vand.u32 2147483647, %v1217
      %vm1462 = vcmp.eq.f32.partialorder %v1461, 8.507059e+37
      %v1463 = vand.u32 %v1217, 2147483648
      %v1464 = vor.u32 1.1754944e-38, %v1463
      %v1465 = vsel %vm1462, %v1464, %v1460
      %v1466 = vmul.f32 1.0, %v1465
      %v1467 = vrcp.pop %v1218
      %v1468 = vmul.f32 %v1218, %v1467
      %v1469 = vsub.f32 1.0, %v1468
      %v1470 = vmul.f32 %v1467, %v1469
      %v1471 = vadd.f32 %v1467, %v1470
      %vm1472 = vweird.f32 %v1218
      %vm1473 = vweird.f32 %v1467
      %vm1474 = vmor %vm1472, %vm1473
      %v1475 = vsel %vm1474, %v1467, %v1471
      %v1476 = vand.u32 2147483647, %v1218
      %vm1477 = vcmp.eq.f32.partialorder %v1476, 8.507059e+37
      %v1478 = vand.u32 %v1218, 2147483648
      %v1479 = vor.u32 1.1754944e-38, %v1478
      %v1480 = vsel %vm1477, %v1479, %v1475
      %v1481 = vmul.f32 1.0, %v1480
      %v1482 = vrcp.pop %v1219
      %v1483 = vmul.f32 %v1219, %v1482
      %v1484 = vsub.f32 1.0, %v1483
      %v1485 = vmul.f32 %v1482, %v1484
      %v1486 = vadd.f32 %v1482, %v1485
      %vm1487 = vweird.f32 %v1219
      %vm1488 = vweird.f32 %v1482
      %vm1489 = vmor %vm1487, %vm1488
      %v1490 = vsel %vm1489, %v1482, %v1486
      %v1491 = vand.u32 2147483647, %v1219
      %vm1492 = vcmp.eq.f32.partialorder %v1491, 8.507059e+37
      %v1493 = vand.u32 %v1219, 2147483648
      %v1494 = vor.u32 1.1754944e-38, %v1493
      %v1495 = vsel %vm1492, %v1494, %v1490
      %v1496 = vmul.f32 1.0, %v1495
      %v1497 = vrcp.pop %v1220
      %v1498 = vmul.f32 %v1220, %v1497
      %v1499 = vsub.f32 1.0, %v1498
      %v1500 = vmul.f32 %v1497, %v1499
      %v1501 = vadd.f32 %v1497, %v1500
      %vm1502 = vweird.f32 %v1220
      %vm1503 = vweird.f32 %v1497
      %vm1504 = vmor %vm1502, %vm1503
      %v1505 = vsel %vm1504, %v1497, %v1501
      %v1506 = vand.u32 2147483647, %v1220
      %vm1507 = vcmp.eq.f32.partialorder %v1506, 8.507059e+37
      %v1508 = vand.u32 %v1220, 2147483648
      %v1509 = vor.u32 1.1754944e-38, %v1508
      %v1510 = vsel %vm1507, %v1509, %v1505
      %v1511 = vmul.f32 1.0, %v1510
      %v1512 = vrcp.pop %v1221
      %v1513 = vmul.f32 %v1221, %v1512
      %v1514 = vsub.f32 1.0, %v1513
      %v1515 = vmul.f32 %v1512, %v1514
      %v1516 = vadd.f32 %v1512, %v1515
      %vm1517 = vweird.f32 %v1221
      %vm1518 = vweird.f32 %v1512
      %vm1519 = vmor %vm1517, %vm1518
      %v1520 = vsel %vm1519, %v1512, %v1516
      %v1521 = vand.u32 2147483647, %v1221
      %vm1522 = vcmp.eq.f32.partialorder %v1521, 8.507059e+37
      %v1523 = vand.u32 %v1221, 2147483648
      %v1524 = vor.u32 1.1754944e-38, %v1523
      %v1525 = vsel %vm1522, %v1524, %v1520
      %v1526 = vmul.f32 1.0, %v1525
      %v1527 = vrcp.pop %v1222
      %v1528 = vmul.f32 %v1222, %v1527
      %v1529 = vsub.f32 1.0, %v1528
      %v1530 = vmul.f32 %v1527, %v1529
      %v1531 = vadd.f32 %v1527, %v1530
      %vm1532 = vweird.f32 %v1222
      %vm1533 = vweird.f32 %v1527
      %vm1534 = vmor %vm1532, %vm1533
      %v1535 = vsel %vm1534, %v1527, %v1531
      %v1536 = vand.u32 2147483647, %v1222
      %vm1537 = vcmp.eq.f32.partialorder %v1536, 8.507059e+37
      %v1538 = vand.u32 %v1222, 2147483648
      %v1539 = vor.u32 1.1754944e-38, %v1538
      %v1540 = vsel %vm1537, %v1539, %v1535
      %v1541 = vmul.f32 1.0, %v1540
      %v1542 = vrcp.pop %v1223
      %v1543 = vmul.f32 %v1223, %v1542
      %v1544 = vsub.f32 1.0, %v1543
      %v1545 = vmul.f32 %v1542, %v1544
      %v1546 = vadd.f32 %v1542, %v1545
      %vm1547 = vweird.f32 %v1223
      %vm1548 = vweird.f32 %v1542
      %vm1549 = vmor %vm1547, %vm1548
      %v1550 = vsel %vm1549, %v1542, %v1546
      %v1551 = vand.u32 2147483647, %v1223
      %vm1552 = vcmp.eq.f32.partialorder %v1551, 8.507059e+37
      %v1553 = vand.u32 %v1223, 2147483648
      %v1554 = vor.u32 1.1754944e-38, %v1553
      %v1555 = vsel %vm1552, %v1554, %v1550
      %v1556 = vmul.f32 1.0, %v1555
      %v1557 = vrcp.pop %v1224
      %v1558 = vmul.f32 %v1224, %v1557
      %v1559 = vsub.f32 1.0, %v1558
      %v1560 = vmul.f32 %v1557, %v1559
      %v1561 = vadd.f32 %v1557, %v1560
      %vm1562 = vweird.f32 %v1224
      %vm1563 = vweird.f32 %v1557
      %vm1564 = vmor %vm1562, %vm1563
      %v1565 = vsel %vm1564, %v1557, %v1561
      %v1566 = vand.u32 2147483647, %v1224
      %vm1567 = vcmp.eq.f32.partialorder %v1566, 8.507059e+37
      %v1568 = vand.u32 %v1224, 2147483648
      %v1569 = vor.u32 1.1754944e-38, %v1568
      %v1570 = vsel %vm1567, %v1569, %v1565
      %v1571 = vmul.f32 1.0, %v1570
      %v1572 = vrcp.pop %v1225
      %v1573 = vmul.f32 %v1225, %v1572
      %v1574 = vsub.f32 1.0, %v1573
      %v1575 = vmul.f32 %v1572, %v1574
      %v1576 = vadd.f32 %v1572, %v1575
      %vm1577 = vweird.f32 %v1225
      %vm1578 = vweird.f32 %v1572
      %vm1579 = vmor %vm1577, %vm1578
      %v1580 = vsel %vm1579, %v1572, %v1576
      %v1581 = vand.u32 2147483647, %v1225
      %vm1582 = vcmp.eq.f32.partialorder %v1581, 8.507059e+37
      %v1583 = vand.u32 %v1225, 2147483648
      %v1584 = vor.u32 1.1754944e-38, %v1583
      %v1585 = vsel %vm1582, %v1584, %v1580
      %v1586 = vmul.f32 1.0, %v1585
      %v1587 = vrcp.pop %v1226
      %v1588 = vmul.f32 %v1226, %v1587
      %v1589 = vsub.f32 1.0, %v1588
      %v1590 = vmul.f32 %v1587, %v1589
      %v1591 = vadd.f32 %v1587, %v1590
      %vm1592 = vweird.f32 %v1226
      %vm1593 = vweird.f32 %v1587
      %vm1594 = vmor %vm1592, %vm1593
      %v1595 = vsel %vm1594, %v1587, %v1591
      %v1596 = vand.u32 2147483647, %v1226
      %vm1597 = vcmp.eq.f32.partialorder %v1596, 8.507059e+37
      %v1598 = vand.u32 %v1226, 2147483648
      %v1599 = vor.u32 1.1754944e-38, %v1598
      %v1600 = vsel %vm1597, %v1599, %v1595
      %v1601 = vmul.f32 1.0, %v1600
      %v1602 = vmul.f32 %v1028, %v1241
      %v1603 = vmul.f32 %v1031, %v1256
      %v1604 = vmul.f32 %v1034, %v1271
      %v1605 = vmul.f32 %v1037, %v1286
      %v1606 = vmul.f32 %v1040, %v1301
      %v1607 = vmul.f32 %v1043, %v1316
      %v1608 = vmul.f32 %v1046, %v1331
      %v1609 = vmul.f32 %v1049, %v1346
      %v1610 = vmul.f32 %v1052, %v1361
      %v1611 = vmul.f32 %v1055, %v1376
      %v1612 = vmul.f32 %v1058, %v1391
      %v1613 = vmul.f32 %v1061, %v1406
      %v1614 = vmul.f32 %v1064, %v1421
      %v1615 = vmul.f32 %v1067, %v1436
      %v1616 = vmul.f32 %v1070, %v1451
      %v1617 = vmul.f32 %v1073, %v1466
      %v1618 = vmul.f32 %v1076, %v1481
      %v1619 = vmul.f32 %v1079, %v1496
      %v1620 = vmul.f32 %v1082, %v1511
      %v1621 = vmul.f32 %v1085, %v1526
      %v1622 = vmul.f32 %v1088, %v1541
      %v1623 = vmul.f32 %v1091, %v1556
      %v1624 = vmul.f32 %v1094, %v1571
      %v1625 = vmul.f32 %v1097, %v1586
      %v1626 = vmul.f32 %v1100, %v1601
      %1627 = vst.msk [vmem:[#allocation2] sm:$0xff] %vm391, %v1602
      %1628 = vst.msk [vmem:[#allocation2 + $0x8] sm:$0xff] %vm391, %v1603
      %1629 = vst.msk [vmem:[#allocation2 + $0x10] sm:$0xff] %vm391, %v1604
      %1630 = vst.msk [vmem:[#allocation2 + $0x18] sm:$0xff] %vm391, %v1605
      %1631 = vst.msk [vmem:[#allocation2 + $0x20] sm:$0xff] %vm391, %v1606
      %1632 = vst.msk [vmem:[#allocation2 + $0x28] sm:$0xff] %vm391, %v1607
      %1633 = vst.msk [vmem:[#allocation2 + $0x30] sm:$0xff] %vm391, %v1608
      %1634 = vst.msk [vmem:[#allocation2 + $0x38] sm:$0xff] %vm391, %v1609
      %1635 = vst.msk [vmem:[#allocation2 + $0x40] sm:$0xff] %vm391, %v1610
      %1636 = vst.msk [vmem:[#allocation2 + $0x48] sm:$0xff] %vm391, %v1611
      %1637 = vst.msk [vmem:[#allocation2 + $0x50] sm:$0xff] %vm391, %v1612
      %1638 = vst.msk [vmem:[#allocation2 + $0x58] sm:$0xff] %vm391, %v1613
      %1639 = vst.msk [vmem:[#allocation2 + $0x60] sm:$0xff] %vm391, %v1614
      %1640 = vst.msk [vmem:[#allocation2 + $0x68] sm:$0xff] %vm391, %v1615
      %1641 = vst.msk [vmem:[#allocation2 + $0x70] sm:$0xff] %vm391, %v1616
      %1642 = vst.msk [vmem:[#allocation2 + $0x78] sm:$0xff] %vm391, %v1617
      %1643 = vst.msk [vmem:[#allocation2 + $0x80] sm:$0xff] %vm391, %v1618
      %1644 = vst.msk [vmem:[#allocation2 + $0x88] sm:$0xff] %vm391, %v1619
      %1645 = vst.msk [vmem:[#allocation2 + $0x90] sm:$0xff] %vm391, %v1620
      %1646 = vst.msk [vmem:[#allocation2 + $0x98] sm:$0xff] %vm391, %v1621
      %1647 = vst.msk [vmem:[#allocation2 + $0xa0] sm:$0xff] %vm391, %v1622
      %1648 = vst.msk [vmem:[#allocation2 + $0xa8] sm:$0xff] %vm391, %v1623
      %1649 = vst.msk [vmem:[#allocation2 + $0xb0] sm:$0xff] %vm391, %v1624
      %1650 = vst.msk [vmem:[#allocation2 + $0xb8] sm:$0xff] %vm391, %v1625
      %vm1651 = vcmask 61440
      %1652 = vst.msk [vmem:[#allocation2 + $0xc0] sm:$0x1f] %vm1651, %v1626
      %s1653 = scalar_lea.vmem %s278, 1200
      %v1654 = vld [vmem:[%s1653] sm:$0xff]
      %v1655 = vld [vmem:[%s1653 + $0x8] sm:$0xff]
      %v1656 = vld [vmem:[%s1653 + $0x10] sm:$0xff]
      %v1657 = vld [vmem:[%s1653 + $0x18] sm:$0xff]
      %v1658 = vld [vmem:[%s1653 + $0x20] sm:$0xff]
      %v1659 = vld [vmem:[%s1653 + $0x28] sm:$0xff]
      %v1660 = vld [vmem:[%s1653 + $0x30] sm:$0xff]
      %v1661 = vld [vmem:[%s1653 + $0x38] sm:$0xff]
      %v1662 = vld [vmem:[%s1653 + $0x40] sm:$0xff]
      %v1663 = vld [vmem:[%s1653 + $0x48] sm:$0xff]
      %v1664 = vld [vmem:[%s1653 + $0x50] sm:$0xff]
      %v1665 = vld [vmem:[%s1653 + $0x58] sm:$0xff]
      %v1666 = vld [vmem:[%s1653 + $0x60] sm:$0xff]
      %v1667 = vld [vmem:[%s1653 + $0x68] sm:$0xff]
      %v1668 = vld [vmem:[%s1653 + $0x70] sm:$0xff]
      %v1669 = vld [vmem:[%s1653 + $0x78] sm:$0xff]
      %v1670 = vld [vmem:[%s1653 + $0x80] sm:$0xff]
      %v1671 = vld [vmem:[%s1653 + $0x88] sm:$0xff]
      %v1672 = vld [vmem:[%s1653 + $0x90] sm:$0xff]
      %v1673 = vld [vmem:[%s1653 + $0x98] sm:$0xff]
      %v1674 = vld [vmem:[%s1653 + $0xa0] sm:$0xff]
      %v1675 = vld [vmem:[%s1653 + $0xa8] sm:$0xff]
      %v1676 = vld [vmem:[%s1653 + $0xb0] sm:$0xff]
      %v1677 = vld [vmem:[%s1653 + $0xb8] sm:$0xff]
      %v1678 = vld [vmem:[%s1653 + $0xc0] sm:$0xff]
      %v1679 = vld [vmem:[%s1653 + $0xc8] sm:$0xff]
      %v1680 = vld [vmem:[%s1653 + $0xd0] sm:$0xff]
      %v1681 = vld [vmem:[%s1653 + $0xd8] sm:$0xff]
      %v1682 = vld [vmem:[%s1653 + $0xe0] sm:$0xff]
      %v1683 = vld [vmem:[%s1653 + $0xe8] sm:$0xff]
      %v1684 = vld [vmem:[%s1653 + $0xf0] sm:$0xff]
      %v1685 = vld [vmem:[%s1653 + $0xf8] sm:$0xff]
      %v1686 = vld [vmem:[%s1653 + $0x100] sm:$0xff]
      %v1687 = vld [vmem:[%s1653 + $0x108] sm:$0xff]
      %v1688 = vld [vmem:[%s1653 + $0x110] sm:$0xff]
      %v1689 = vld [vmem:[%s1653 + $0x118] sm:$0xff]
      %v1690 = vld [vmem:[%s1653 + $0x120] sm:$0xff]
      %v1691 = vld [vmem:[%s1653 + $0x128] sm:$0xff]
      %v1692 = vld [vmem:[%s1653 + $0x130] sm:$0xff]
      %v1693 = vld [vmem:[%s1653 + $0x138] sm:$0xff]
      %v1694 = vld [vmem:[%s1653 + $0x140] sm:$0xff]
      %v1695 = vld [vmem:[%s1653 + $0x148] sm:$0xff]
      %v1696 = vld [vmem:[%s1653 + $0x150] sm:$0xff]
      %v1697 = vld [vmem:[%s1653 + $0x158] sm:$0xff]
      %v1698 = vld [vmem:[%s1653 + $0x160] sm:$0xff]
      %v1699 = vld [vmem:[%s1653 + $0x168] sm:$0xff]
      %v1700 = vld [vmem:[%s1653 + $0x170] sm:$0xff]
      %v1701 = vld [vmem:[%s1653 + $0x178] sm:$0xff]
      %v1702 = vld [vmem:[%s1653 + $0x180] sm:$0xff]
      %v1703 = vld [vmem:[%s1653 + $0x188] sm:$0xff]
      %v1704 = vld [vmem:[%s1653 + $0x190] sm:$0xff]
      %v1705 = vld [vmem:[%s1653 + $0x198] sm:$0xff]
      %v1706 = vld [vmem:[%s1653 + $0x1a0] sm:$0xff]
      %v1707 = vld [vmem:[%s1653 + $0x1a8] sm:$0xff]
      %v1708 = vld [vmem:[%s1653 + $0x1b0] sm:$0xff]
      %v1709 = vld [vmem:[%s1653 + $0x1b8] sm:$0xff]
      %v1710 = vld [vmem:[%s1653 + $0x1c0] sm:$0xff]
      %v1711 = vld [vmem:[%s1653 + $0x1c8] sm:$0xff]
      %v1712 = vld [vmem:[%s1653 + $0x1d0] sm:$0xff]
      %v1713 = vld [vmem:[%s1653 + $0x1d8] sm:$0xff]
      %v1714 = vld [vmem:[%s1653 + $0x1e0] sm:$0xff]
      %v1715 = vld [vmem:[%s1653 + $0x1e8] sm:$0xff]
      %v1716 = vld [vmem:[%s1653 + $0x1f0] sm:$0xff]
      %v1717 = vld [vmem:[%s1653 + $0x1f8] sm:$0xff]
      %v1718 = vld [vmem:[%s1653 + $0x200] sm:$0xff]
      %v1719 = vld [vmem:[%s1653 + $0x208] sm:$0xff]
      %v1720 = vld [vmem:[%s1653 + $0x210] sm:$0xff]
      %v1721 = vld [vmem:[%s1653 + $0x218] sm:$0xff]
      %v1722 = vld [vmem:[%s1653 + $0x220] sm:$0xff]
      %v1723 = vld [vmem:[%s1653 + $0x228] sm:$0xff]
      %v1724 = vld [vmem:[%s1653 + $0x230] sm:$0xff]
      %v1725 = vld [vmem:[%s1653 + $0x238] sm:$0xff]
      %v1726 = vld [vmem:[%s1653 + $0x240] sm:$0xff]
      %v1727 = vld [vmem:[%s1653 + $0x248] sm:$0xff]
      %v1728 = vld [vmem:[%s1653 + $0x250] sm:$0xff]
      %v1729 = vld [vmem:[%s1653 + $0x258] sm:$0xff]
      %v1730 = vld [vmem:[%s1653 + $0x260] sm:$0xff]
      %v1731 = vld [vmem:[%s1653 + $0x268] sm:$0xff]
      %v1732 = vld [vmem:[%s1653 + $0x270] sm:$0xff]
      %v1733 = vld [vmem:[%s1653 + $0x278] sm:$0xff]
      %v1734 = vld [vmem:[%s1653 + $0x280] sm:$0xff]
      %v1735 = vld [vmem:[%s1653 + $0x288] sm:$0xff]
      %v1736 = vld [vmem:[%s1653 + $0x290] sm:$0xff]
      %v1737 = vld [vmem:[%s1653 + $0x298] sm:$0xff]
      %v1738 = vld [vmem:[%s1653 + $0x2a0] sm:$0xff]
      %v1739 = vld [vmem:[%s1653 + $0x2a8] sm:$0xff]
      %v1740 = vld [vmem:[%s1653 + $0x2b0] sm:$0xff]
      %v1741 = vld [vmem:[%s1653 + $0x2b8] sm:$0xff]
      %v1742 = vld [vmem:[%s1653 + $0x2c0] sm:$0xff]
      %v1743 = vld [vmem:[%s1653 + $0x2c8] sm:$0xff]
      %v1744 = vld [vmem:[%s1653 + $0x2d0] sm:$0xff]
      %v1745 = vld [vmem:[%s1653 + $0x2d8] sm:$0xff]
      %v1746 = vld [vmem:[%s1653 + $0x2e0] sm:$0xff]
      %v1747 = vld [vmem:[%s1653 + $0x2e8] sm:$0xff]
      %v1748 = vld [vmem:[%s1653 + $0x2f0] sm:$0xff]
      %v1749 = vld [vmem:[%s1653 + $0x2f8] sm:$0xff]
      %v1750 = vld [vmem:[%s1653 + $0x300] sm:$0xff]
      %v1751 = vld [vmem:[%s1653 + $0x308] sm:$0xff]
      %v1752 = vld [vmem:[%s1653 + $0x310] sm:$0xff]
      %v1753 = vld [vmem:[%s1653 + $0x318] sm:$0xff]
      %v1754 = vld [vmem:[%s1653 + $0x320] sm:$0xff]
      %v1755 = vld [vmem:[%s1653 + $0x328] sm:$0xff]
      %v1756 = vld [vmem:[%s1653 + $0x330] sm:$0xff]
      %v1757 = vld [vmem:[%s1653 + $0x338] sm:$0xff]
      %v1758 = vld [vmem:[%s1653 + $0x340] sm:$0xff]
      %v1759 = vld [vmem:[%s1653 + $0x348] sm:$0xff]
      %v1760 = vld [vmem:[%s1653 + $0x350] sm:$0xff]
      %v1761 = vld [vmem:[%s1653 + $0x358] sm:$0xff]
      %v1762 = vld [vmem:[%s1653 + $0x360] sm:$0xff]
      %v1763 = vld [vmem:[%s1653 + $0x368] sm:$0xff]
      %v1764 = vld [vmem:[%s1653 + $0x370] sm:$0xff]
      %v1765 = vld [vmem:[%s1653 + $0x378] sm:$0xff]
      %v1766 = vld [vmem:[%s1653 + $0x380] sm:$0xff]
      %v1767 = vld [vmem:[%s1653 + $0x388] sm:$0xff]
      %v1768 = vld [vmem:[%s1653 + $0x390] sm:$0xff]
      %v1769 = vld [vmem:[%s1653 + $0x398] sm:$0xff]
      %v1770 = vld [vmem:[%s1653 + $0x3a0] sm:$0xff]
      %v1771 = vld [vmem:[%s1653 + $0x3a8] sm:$0xff]
      %v1772 = vld [vmem:[%s1653 + $0x3b0] sm:$0xff]
      %v1773 = vld [vmem:[%s1653 + $0x3b8] sm:$0xff]
      %v1774 = vld [vmem:[%s1653 + $0x3c0] sm:$0xff]
      %v1775 = vld [vmem:[%s1653 + $0x3c8] sm:$0xff]
      %v1776 = vld [vmem:[%s1653 + $0x3d0] sm:$0xff]
      %v1777 = vld [vmem:[%s1653 + $0x3d8] sm:$0xff]
      %v1778 = vld [vmem:[%s1653 + $0x3e0] sm:$0xff]
      %v1779 = vld [vmem:[%s1653 + $0x3e8] sm:$0xff]
      %v1780 = vld [vmem:[%s1653 + $0x3f0] sm:$0xff]
      %v1781 = vld [vmem:[%s1653 + $0x3f8] sm:$0xff]
      %v1782 = vld [vmem:[%s1653 + $0x400] sm:$0xff]
      %v1783 = vld [vmem:[%s1653 + $0x408] sm:$0xff]
      %v1784 = vld [vmem:[%s1653 + $0x410] sm:$0xff]
      %v1785 = vld [vmem:[%s1653 + $0x418] sm:$0xff]
      %v1786 = vld [vmem:[%s1653 + $0x420] sm:$0xff]
      %v1787 = vld [vmem:[%s1653 + $0x428] sm:$0xff]
      %v1788 = vld [vmem:[%s1653 + $0x430] sm:$0xff]
      %v1789 = vld [vmem:[%s1653 + $0x438] sm:$0xff]
      %v1790 = vld [vmem:[%s1653 + $0x440] sm:$0xff]
      %v1791 = vld [vmem:[%s1653 + $0x448] sm:$0xff]
      %v1792 = vld [vmem:[%s1653 + $0x450] sm:$0xff]
      %v1793 = vld [vmem:[%s1653 + $0x458] sm:$0xff]
      %v1794 = vld [vmem:[%s1653 + $0x460] sm:$0xff]
      %v1795 = vld [vmem:[%s1653 + $0x468] sm:$0xff]
      %v1796 = vld [vmem:[%s1653 + $0x470] sm:$0xff]
      %v1797 = vld [vmem:[%s1653 + $0x478] sm:$0xff]
      %v1798 = vld [vmem:[%s1653 + $0x480] sm:$0x1f]
      %v1799 = vld [vmem:[%s1653 + $0x488] sm:$0x1f]
      %v1800 = vld [vmem:[%s1653 + $0x490] sm:$0x1f]
      %v1801 = vld [vmem:[%s1653 + $0x498] sm:$0x1f]
      %v1802 = vld [vmem:[%s1653 + $0x4a0] sm:$0x1f]
      %v1803 = vld [vmem:[%s1653 + $0x4a8] sm:$0x1f]
      %1804 = vmatpush.msra.mxu0 %v302
      %1805 = vmatpush.msra.mxu0 %v301
      %1806 = vmatpush.msra.mxu0 %v300
      %1807 = vmatpush.msra.mxu0 %v299
      %1808 = vmatpush.msra.mxu0 %v298
      %1809 = vmatpush.msra.mxu0 %v297
      %1810 = vmatpush.msra.mxu0 %v296
      %1811 = vmatpush.msra.mxu0 %v295
      %1812 = vmatpush.msra.mxu0 %v294
      %1813 = vmatpush.msra.mxu0 %v293
      %1814 = vmatpush.msra.mxu0 %v292
      %1815 = vmatpush.msra.mxu0 %v291
      %1816 = vmatpush.msra.mxu0 %v290
      %1817 = vmatpush.msra.mxu0 %v289
      %1818 = vmatpush.msra.mxu0 %v288
      %1819 = vmatpush.msra.mxu0 %v287
      %1820 = vmatmul.f32.gmra.mxu0 %v1654
      %v1821 = vpop.f32.mrf.mxu0
      %v1822 = vadd.f32 %v548, %v1821
      %1823 = vmatmul.f32.gmra.mxu0 %v1660
      %v1824 = vpop.f32.mrf.mxu0
      %v1825 = vadd.f32 %v548, %v1824
      %1826 = vmatmul.f32.gmra.mxu0 %v1666
      %v1827 = vpop.f32.mrf.mxu0
      %v1828 = vadd.f32 %v548, %v1827
      %1829 = vmatmul.f32.gmra.mxu0 %v1672
      %v1830 = vpop.f32.mrf.mxu0
      %v1831 = vadd.f32 %v548, %v1830
      %1832 = vmatmul.f32.gmra.mxu0 %v1678
      %v1833 = vpop.f32.mrf.mxu0
      %v1834 = vadd.f32 %v548, %v1833
      %1835 = vmatmul.f32.gmra.mxu0 %v1684
      %v1836 = vpop.f32.mrf.mxu0
      %v1837 = vadd.f32 %v548, %v1836
      %1838 = vmatmul.f32.gmra.mxu0 %v1690
      %v1839 = vpop.f32.mrf.mxu0
      %v1840 = vadd.f32 %v548, %v1839
      %1841 = vmatmul.f32.gmra.mxu0 %v1696
      %v1842 = vpop.f32.mrf.mxu0
      %v1843 = vadd.f32 %v548, %v1842
      %1844 = vmatmul.f32.gmra.mxu0 %v1702
      %v1845 = vpop.f32.mrf.mxu0
      %v1846 = vadd.f32 %v548, %v1845
      %1847 = vmatmul.f32.gmra.mxu0 %v1708
      %v1848 = vpop.f32.mrf.mxu0
      %v1849 = vadd.f32 %v548, %v1848
      %1850 = vmatmul.f32.gmra.mxu0 %v1714
      %v1851 = vpop.f32.mrf.mxu0
      %v1852 = vadd.f32 %v548, %v1851
      %1853 = vmatmul.f32.gmra.mxu0 %v1720
      %v1854 = vpop.f32.mrf.mxu0
      %v1855 = vadd.f32 %v548, %v1854
      %1856 = vmatmul.f32.gmra.mxu0 %v1726
      %v1857 = vpop.f32.mrf.mxu0
      %v1858 = vadd.f32 %v548, %v1857
      %1859 = vmatmul.f32.gmra.mxu0 %v1732
      %v1860 = vpop.f32.mrf.mxu0
      %v1861 = vadd.f32 %v548, %v1860
      %1862 = vmatmul.f32.gmra.mxu0 %v1738
      %v1863 = vpop.f32.mrf.mxu0
      %v1864 = vadd.f32 %v548, %v1863
      %1865 = vmatmul.f32.gmra.mxu0 %v1744
      %v1866 = vpop.f32.mrf.mxu0
      %v1867 = vadd.f32 %v548, %v1866
      %1868 = vmatmul.f32.gmra.mxu0 %v1750
      %v1869 = vpop.f32.mrf.mxu0
      %v1870 = vadd.f32 %v548, %v1869
      %1871 = vmatmul.f32.gmra.mxu0 %v1756
      %v1872 = vpop.f32.mrf.mxu0
      %v1873 = vadd.f32 %v548, %v1872
      %1874 = vmatmul.f32.gmra.mxu0 %v1762
      %v1875 = vpop.f32.mrf.mxu0
      %v1876 = vadd.f32 %v548, %v1875
      %1877 = vmatmul.f32.gmra.mxu0 %v1768
      %v1878 = vpop.f32.mrf.mxu0
      %v1879 = vadd.f32 %v548, %v1878
      %1880 = vmatmul.f32.gmra.mxu0 %v1774
      %v1881 = vpop.f32.mrf.mxu0
      %v1882 = vadd.f32 %v548, %v1881
      %1883 = vmatmul.f32.gmra.mxu0 %v1780
      %v1884 = vpop.f32.mrf.mxu0
      %v1885 = vadd.f32 %v548, %v1884
      %1886 = vmatmul.f32.gmra.mxu0 %v1786
      %v1887 = vpop.f32.mrf.mxu0
      %v1888 = vadd.f32 %v548, %v1887
      %1889 = vmatmul.f32.gmra.mxu0 %v1792
      %v1890 = vpop.f32.mrf.mxu0
      %v1891 = vadd.f32 %v548, %v1890
      %1892 = vmatmul.f32.gmra.mxu0 %v1798
      %v1893 = vpop.f32.mrf.mxu0
      %v1894 = vadd.f32 %v548, %v1893
      %1895 = vdwg.mxu0
      %1896 = vmatpush.msra.mxu0 %v318
      %1897 = vmatpush.msra.mxu0 %v317
      %1898 = vmatpush.msra.mxu0 %v316
      %1899 = vmatpush.msra.mxu0 %v315
      %1900 = vmatpush.msra.mxu0 %v314
      %1901 = vmatpush.msra.mxu0 %v313
      %1902 = vmatpush.msra.mxu0 %v312
      %1903 = vmatpush.msra.mxu0 %v311
      %1904 = vmatpush.msra.mxu0 %v310
      %1905 = vmatpush.msra.mxu0 %v309
      %1906 = vmatpush.msra.mxu0 %v308
      %1907 = vmatpush.msra.mxu0 %v307
      %1908 = vmatpush.msra.mxu0 %v306
      %1909 = vmatpush.msra.mxu0 %v305
      %1910 = vmatpush.msra.mxu0 %v304
      %1911 = vmatpush.msra.mxu0 %v303
      %1912 = vmatmul.f32.gmra.mxu0 %v1655
      %v1913 = vpop.f32.mrf.mxu0
      %v1914 = vadd.f32 %v1822, %v1913
      %1915 = vmatmul.f32.gmra.mxu0 %v1661
      %v1916 = vpop.f32.mrf.mxu0
      %v1917 = vadd.f32 %v1825, %v1916
      %1918 = vmatmul.f32.gmra.mxu0 %v1667
      %v1919 = vpop.f32.mrf.mxu0
      %v1920 = vadd.f32 %v1828, %v1919
      %1921 = vmatmul.f32.gmra.mxu0 %v1673
      %v1922 = vpop.f32.mrf.mxu0
      %v1923 = vadd.f32 %v1831, %v1922
      %1924 = vmatmul.f32.gmra.mxu0 %v1679
      %v1925 = vpop.f32.mrf.mxu0
      %v1926 = vadd.f32 %v1834, %v1925
      %1927 = vmatmul.f32.gmra.mxu0 %v1685
      %v1928 = vpop.f32.mrf.mxu0
      %v1929 = vadd.f32 %v1837, %v1928
      %1930 = vmatmul.f32.gmra.mxu0 %v1691
      %v1931 = vpop.f32.mrf.mxu0
      %v1932 = vadd.f32 %v1840, %v1931
      %1933 = vmatmul.f32.gmra.mxu0 %v1697
      %v1934 = vpop.f32.mrf.mxu0
      %v1935 = vadd.f32 %v1843, %v1934
      %1936 = vmatmul.f32.gmra.mxu0 %v1703
      %v1937 = vpop.f32.mrf.mxu0
      %v1938 = vadd.f32 %v1846, %v1937
      %1939 = vmatmul.f32.gmra.mxu0 %v1709
      %v1940 = vpop.f32.mrf.mxu0
      %v1941 = vadd.f32 %v1849, %v1940
      %1942 = vmatmul.f32.gmra.mxu0 %v1715
      %v1943 = vpop.f32.mrf.mxu0
      %v1944 = vadd.f32 %v1852, %v1943
      %1945 = vmatmul.f32.gmra.mxu0 %v1721
      %v1946 = vpop.f32.mrf.mxu0
      %v1947 = vadd.f32 %v1855, %v1946
      %1948 = vmatmul.f32.gmra.mxu0 %v1727
      %v1949 = vpop.f32.mrf.mxu0
      %v1950 = vadd.f32 %v1858, %v1949
      %1951 = vmatmul.f32.gmra.mxu0 %v1733
      %v1952 = vpop.f32.mrf.mxu0
      %v1953 = vadd.f32 %v1861, %v1952
      %1954 = vmatmul.f32.gmra.mxu0 %v1739
      %v1955 = vpop.f32.mrf.mxu0
      %v1956 = vadd.f32 %v1864, %v1955
      %1957 = vmatmul.f32.gmra.mxu0 %v1745
      %v1958 = vpop.f32.mrf.mxu0
      %v1959 = vadd.f32 %v1867, %v1958
      %1960 = vmatmul.f32.gmra.mxu0 %v1751
      %v1961 = vpop.f32.mrf.mxu0
      %v1962 = vadd.f32 %v1870, %v1961
      %1963 = vmatmul.f32.gmra.mxu0 %v1757
      %v1964 = vpop.f32.mrf.mxu0
      %v1965 = vadd.f32 %v1873, %v1964
      %1966 = vmatmul.f32.gmra.mxu0 %v1763
      %v1967 = vpop.f32.mrf.mxu0
      %v1968 = vadd.f32 %v1876, %v1967
      %1969 = vmatmul.f32.gmra.mxu0 %v1769
      %v1970 = vpop.f32.mrf.mxu0
      %v1971 = vadd.f32 %v1879, %v1970
      %1972 = vmatmul.f32.gmra.mxu0 %v1775
      %v1973 = vpop.f32.mrf.mxu0
      %v1974 = vadd.f32 %v1882, %v1973
      %1975 = vmatmul.f32.gmra.mxu0 %v1781
      %v1976 = vpop.f32.mrf.mxu0
      %v1977 = vadd.f32 %v1885, %v1976
      %1978 = vmatmul.f32.gmra.mxu0 %v1787
      %v1979 = vpop.f32.mrf.mxu0
      %v1980 = vadd.f32 %v1888, %v1979
      %1981 = vmatmul.f32.gmra.mxu0 %v1793
      %v1982 = vpop.f32.mrf.mxu0
      %v1983 = vadd.f32 %v1891, %v1982
      %1984 = vmatmul.f32.gmra.mxu0 %v1799
      %v1985 = vpop.f32.mrf.mxu0
      %v1986 = vadd.f32 %v1894, %v1985
      %1987 = vdwg.mxu0
      %1988 = vmatpush.msra.mxu0 %v334
      %1989 = vmatpush.msra.mxu0 %v333
      %1990 = vmatpush.msra.mxu0 %v332
      %1991 = vmatpush.msra.mxu0 %v331
      %1992 = vmatpush.msra.mxu0 %v330
      %1993 = vmatpush.msra.mxu0 %v329
      %1994 = vmatpush.msra.mxu0 %v328
      %1995 = vmatpush.msra.mxu0 %v327
      %1996 = vmatpush.msra.mxu0 %v326
      %1997 = vmatpush.msra.mxu0 %v325
      %1998 = vmatpush.msra.mxu0 %v324
      %1999 = vmatpush.msra.mxu0 %v323
      %2000 = vmatpush.msra.mxu0 %v322
      %2001 = vmatpush.msra.mxu0 %v321
      %2002 = vmatpush.msra.mxu0 %v320
      %2003 = vmatpush.msra.mxu0 %v319
      %2004 = vmatmul.f32.gmra.mxu0 %v1656
      %v2005 = vpop.f32.mrf.mxu0
      %v2006 = vadd.f32 %v1914, %v2005
      %2007 = vmatmul.f32.gmra.mxu0 %v1662
      %v2008 = vpop.f32.mrf.mxu0
      %v2009 = vadd.f32 %v1917, %v2008
      %2010 = vmatmul.f32.gmra.mxu0 %v1668
      %v2011 = vpop.f32.mrf.mxu0
      %v2012 = vadd.f32 %v1920, %v2011
      %2013 = vmatmul.f32.gmra.mxu0 %v1674
      %v2014 = vpop.f32.mrf.mxu0
      %v2015 = vadd.f32 %v1923, %v2014
      %2016 = vmatmul.f32.gmra.mxu0 %v1680
      %v2017 = vpop.f32.mrf.mxu0
      %v2018 = vadd.f32 %v1926, %v2017
      %2019 = vmatmul.f32.gmra.mxu0 %v1686
      %v2020 = vpop.f32.mrf.mxu0
      %v2021 = vadd.f32 %v1929, %v2020
      %2022 = vmatmul.f32.gmra.mxu0 %v1692
      %v2023 = vpop.f32.mrf.mxu0
      %v2024 = vadd.f32 %v1932, %v2023
      %2025 = vmatmul.f32.gmra.mxu0 %v1698
      %v2026 = vpop.f32.mrf.mxu0
      %v2027 = vadd.f32 %v1935, %v2026
      %2028 = vmatmul.f32.gmra.mxu0 %v1704
      %v2029 = vpop.f32.mrf.mxu0
      %v2030 = vadd.f32 %v1938, %v2029
      %2031 = vmatmul.f32.gmra.mxu0 %v1710
      %v2032 = vpop.f32.mrf.mxu0
      %v2033 = vadd.f32 %v1941, %v2032
      %2034 = vmatmul.f32.gmra.mxu0 %v1716
      %v2035 = vpop.f32.mrf.mxu0
      %v2036 = vadd.f32 %v1944, %v2035
      %2037 = vmatmul.f32.gmra.mxu0 %v1722
      %v2038 = vpop.f32.mrf.mxu0
      %v2039 = vadd.f32 %v1947, %v2038
      %2040 = vmatmul.f32.gmra.mxu0 %v1728
      %v2041 = vpop.f32.mrf.mxu0
      %v2042 = vadd.f32 %v1950, %v2041
      %2043 = vmatmul.f32.gmra.mxu0 %v1734
      %v2044 = vpop.f32.mrf.mxu0
      %v2045 = vadd.f32 %v1953, %v2044
      %2046 = vmatmul.f32.gmra.mxu0 %v1740
      %v2047 = vpop.f32.mrf.mxu0
      %v2048 = vadd.f32 %v1956, %v2047
      %2049 = vmatmul.f32.gmra.mxu0 %v1746
      %v2050 = vpop.f32.mrf.mxu0
      %v2051 = vadd.f32 %v1959, %v2050
      %2052 = vmatmul.f32.gmra.mxu0 %v1752
      %v2053 = vpop.f32.mrf.mxu0
      %v2054 = vadd.f32 %v1962, %v2053
      %2055 = vmatmul.f32.gmra.mxu0 %v1758
      %v2056 = vpop.f32.mrf.mxu0
      %v2057 = vadd.f32 %v1965, %v2056
      %2058 = vmatmul.f32.gmra.mxu0 %v1764
      %v2059 = vpop.f32.mrf.mxu0
      %v2060 = vadd.f32 %v1968, %v2059
      %2061 = vmatmul.f32.gmra.mxu0 %v1770
      %v2062 = vpop.f32.mrf.mxu0
      %v2063 = vadd.f32 %v1971, %v2062
      %2064 = vmatmul.f32.gmra.mxu0 %v1776
      %v2065 = vpop.f32.mrf.mxu0
      %v2066 = vadd.f32 %v1974, %v2065
      %2067 = vmatmul.f32.gmra.mxu0 %v1782
      %v2068 = vpop.f32.mrf.mxu0
      %v2069 = vadd.f32 %v1977, %v2068
      %2070 = vmatmul.f32.gmra.mxu0 %v1788
      %v2071 = vpop.f32.mrf.mxu0
      %v2072 = vadd.f32 %v1980, %v2071
      %2073 = vmatmul.f32.gmra.mxu0 %v1794
      %v2074 = vpop.f32.mrf.mxu0
      %v2075 = vadd.f32 %v1983, %v2074
      %2076 = vmatmul.f32.gmra.mxu0 %v1800
      %v2077 = vpop.f32.mrf.mxu0
      %v2078 = vadd.f32 %v1986, %v2077
      %2079 = vdwg.mxu0
      %2080 = vmatpush.msra.mxu0 %v350
      %2081 = vmatpush.msra.mxu0 %v349
      %2082 = vmatpush.msra.mxu0 %v348
      %2083 = vmatpush.msra.mxu0 %v347
      %2084 = vmatpush.msra.mxu0 %v346
      %2085 = vmatpush.msra.mxu0 %v345
      %2086 = vmatpush.msra.mxu0 %v344
      %2087 = vmatpush.msra.mxu0 %v343
      %2088 = vmatpush.msra.mxu0 %v342
      %2089 = vmatpush.msra.mxu0 %v341
      %2090 = vmatpush.msra.mxu0 %v340
      %2091 = vmatpush.msra.mxu0 %v339
      %2092 = vmatpush.msra.mxu0 %v338
      %2093 = vmatpush.msra.mxu0 %v337
      %2094 = vmatpush.msra.mxu0 %v336
      %2095 = vmatpush.msra.mxu0 %v335
      %2096 = vmatmul.f32.gmra.mxu0 %v1657
      %v2097 = vpop.f32.mrf.mxu0
      %v2098 = vadd.f32 %v2006, %v2097
      %2099 = vmatmul.f32.gmra.mxu0 %v1663
      %v2100 = vpop.f32.mrf.mxu0
      %v2101 = vadd.f32 %v2009, %v2100
      %2102 = vmatmul.f32.gmra.mxu0 %v1669
      %v2103 = vpop.f32.mrf.mxu0
      %v2104 = vadd.f32 %v2012, %v2103
      %2105 = vmatmul.f32.gmra.mxu0 %v1675
      %v2106 = vpop.f32.mrf.mxu0
      %v2107 = vadd.f32 %v2015, %v2106
      %2108 = vmatmul.f32.gmra.mxu0 %v1681
      %v2109 = vpop.f32.mrf.mxu0
      %v2110 = vadd.f32 %v2018, %v2109
      %2111 = vmatmul.f32.gmra.mxu0 %v1687
      %v2112 = vpop.f32.mrf.mxu0
      %v2113 = vadd.f32 %v2021, %v2112
      %2114 = vmatmul.f32.gmra.mxu0 %v1693
      %v2115 = vpop.f32.mrf.mxu0
      %v2116 = vadd.f32 %v2024, %v2115
      %2117 = vmatmul.f32.gmra.mxu0 %v1699
      %v2118 = vpop.f32.mrf.mxu0
      %v2119 = vadd.f32 %v2027, %v2118
      %2120 = vmatmul.f32.gmra.mxu0 %v1705
      %v2121 = vpop.f32.mrf.mxu0
      %v2122 = vadd.f32 %v2030, %v2121
      %2123 = vmatmul.f32.gmra.mxu0 %v1711
      %v2124 = vpop.f32.mrf.mxu0
      %v2125 = vadd.f32 %v2033, %v2124
      %2126 = vmatmul.f32.gmra.mxu0 %v1717
      %v2127 = vpop.f32.mrf.mxu0
      %v2128 = vadd.f32 %v2036, %v2127
      %2129 = vmatmul.f32.gmra.mxu0 %v1723
      %v2130 = vpop.f32.mrf.mxu0
      %v2131 = vadd.f32 %v2039, %v2130
      %2132 = vmatmul.f32.gmra.mxu0 %v1729
      %v2133 = vpop.f32.mrf.mxu0
      %v2134 = vadd.f32 %v2042, %v2133
      %2135 = vmatmul.f32.gmra.mxu0 %v1735
      %v2136 = vpop.f32.mrf.mxu0
      %v2137 = vadd.f32 %v2045, %v2136
      %2138 = vmatmul.f32.gmra.mxu0 %v1741
      %v2139 = vpop.f32.mrf.mxu0
      %v2140 = vadd.f32 %v2048, %v2139
      %2141 = vmatmul.f32.gmra.mxu0 %v1747
      %v2142 = vpop.f32.mrf.mxu0
      %v2143 = vadd.f32 %v2051, %v2142
      %2144 = vmatmul.f32.gmra.mxu0 %v1753
      %v2145 = vpop.f32.mrf.mxu0
      %v2146 = vadd.f32 %v2054, %v2145
      %2147 = vmatmul.f32.gmra.mxu0 %v1759
      %v2148 = vpop.f32.mrf.mxu0
      %v2149 = vadd.f32 %v2057, %v2148
      %2150 = vmatmul.f32.gmra.mxu0 %v1765
      %v2151 = vpop.f32.mrf.mxu0
      %v2152 = vadd.f32 %v2060, %v2151
      %2153 = vmatmul.f32.gmra.mxu0 %v1771
      %v2154 = vpop.f32.mrf.mxu0
      %v2155 = vadd.f32 %v2063, %v2154
      %2156 = vmatmul.f32.gmra.mxu0 %v1777
      %v2157 = vpop.f32.mrf.mxu0
      %v2158 = vadd.f32 %v2066, %v2157
      %2159 = vmatmul.f32.gmra.mxu0 %v1783
      %v2160 = vpop.f32.mrf.mxu0
      %v2161 = vadd.f32 %v2069, %v2160
      %2162 = vmatmul.f32.gmra.mxu0 %v1789
      %v2163 = vpop.f32.mrf.mxu0
      %v2164 = vadd.f32 %v2072, %v2163
      %2165 = vmatmul.f32.gmra.mxu0 %v1795
      %v2166 = vpop.f32.mrf.mxu0
      %v2167 = vadd.f32 %v2075, %v2166
      %2168 = vmatmul.f32.gmra.mxu0 %v1801
      %v2169 = vpop.f32.mrf.mxu0
      %v2170 = vadd.f32 %v2078, %v2169
      %2171 = vdwg.mxu0
      %2172 = vmatpush.msra.mxu0 %v366
      %2173 = vmatpush.msra.mxu0 %v365
      %2174 = vmatpush.msra.mxu0 %v364
      %2175 = vmatpush.msra.mxu0 %v363
      %2176 = vmatpush.msra.mxu0 %v362
      %2177 = vmatpush.msra.mxu0 %v361
      %2178 = vmatpush.msra.mxu0 %v360
      %2179 = vmatpush.msra.mxu0 %v359
      %2180 = vmatpush.msra.mxu0 %v358
      %2181 = vmatpush.msra.mxu0 %v357
      %2182 = vmatpush.msra.mxu0 %v356
      %2183 = vmatpush.msra.mxu0 %v355
      %2184 = vmatpush.msra.mxu0 %v354
      %2185 = vmatpush.msra.mxu0 %v353
      %2186 = vmatpush.msra.mxu0 %v352
      %2187 = vmatpush.msra.mxu0 %v351
      %2188 = vmatmul.f32.gmra.mxu0 %v1658
      %v2189 = vpop.f32.mrf.mxu0
      %v2190 = vadd.f32 %v2098, %v2189
      %2191 = vmatmul.f32.gmra.mxu0 %v1664
      %v2192 = vpop.f32.mrf.mxu0
      %v2193 = vadd.f32 %v2101, %v2192
      %2194 = vmatmul.f32.gmra.mxu0 %v1670
      %v2195 = vpop.f32.mrf.mxu0
      %v2196 = vadd.f32 %v2104, %v2195
      %2197 = vmatmul.f32.gmra.mxu0 %v1676
      %v2198 = vpop.f32.mrf.mxu0
      %v2199 = vadd.f32 %v2107, %v2198
      %2200 = vmatmul.f32.gmra.mxu0 %v1682
      %v2201 = vpop.f32.mrf.mxu0
      %v2202 = vadd.f32 %v2110, %v2201
      %2203 = vmatmul.f32.gmra.mxu0 %v1688
      %v2204 = vpop.f32.mrf.mxu0
      %v2205 = vadd.f32 %v2113, %v2204
      %2206 = vmatmul.f32.gmra.mxu0 %v1694
      %v2207 = vpop.f32.mrf.mxu0
      %v2208 = vadd.f32 %v2116, %v2207
      %2209 = vmatmul.f32.gmra.mxu0 %v1700
      %v2210 = vpop.f32.mrf.mxu0
      %v2211 = vadd.f32 %v2119, %v2210
      %2212 = vmatmul.f32.gmra.mxu0 %v1706
      %v2213 = vpop.f32.mrf.mxu0
      %v2214 = vadd.f32 %v2122, %v2213
      %2215 = vmatmul.f32.gmra.mxu0 %v1712
      %v2216 = vpop.f32.mrf.mxu0
      %v2217 = vadd.f32 %v2125, %v2216
      %2218 = vmatmul.f32.gmra.mxu0 %v1718
      %v2219 = vpop.f32.mrf.mxu0
      %v2220 = vadd.f32 %v2128, %v2219
      %2221 = vmatmul.f32.gmra.mxu0 %v1724
      %v2222 = vpop.f32.mrf.mxu0
      %v2223 = vadd.f32 %v2131, %v2222
      %2224 = vmatmul.f32.gmra.mxu0 %v1730
      %v2225 = vpop.f32.mrf.mxu0
      %v2226 = vadd.f32 %v2134, %v2225
      %2227 = vmatmul.f32.gmra.mxu0 %v1736
      %v2228 = vpop.f32.mrf.mxu0
      %v2229 = vadd.f32 %v2137, %v2228
      %2230 = vmatmul.f32.gmra.mxu0 %v1742
      %v2231 = vpop.f32.mrf.mxu0
      %v2232 = vadd.f32 %v2140, %v2231
      %2233 = vmatmul.f32.gmra.mxu0 %v1748
      %v2234 = vpop.f32.mrf.mxu0
      %v2235 = vadd.f32 %v2143, %v2234
      %2236 = vmatmul.f32.gmra.mxu0 %v1754
      %v2237 = vpop.f32.mrf.mxu0
      %v2238 = vadd.f32 %v2146, %v2237
      %2239 = vmatmul.f32.gmra.mxu0 %v1760
      %v2240 = vpop.f32.mrf.mxu0
      %v2241 = vadd.f32 %v2149, %v2240
      %2242 = vmatmul.f32.gmra.mxu0 %v1766
      %v2243 = vpop.f32.mrf.mxu0
      %v2244 = vadd.f32 %v2152, %v2243
      %2245 = vmatmul.f32.gmra.mxu0 %v1772
      %v2246 = vpop.f32.mrf.mxu0
      %v2247 = vadd.f32 %v2155, %v2246
      %2248 = vmatmul.f32.gmra.mxu0 %v1778
      %v2249 = vpop.f32.mrf.mxu0
      %v2250 = vadd.f32 %v2158, %v2249
      %2251 = vmatmul.f32.gmra.mxu0 %v1784
      %v2252 = vpop.f32.mrf.mxu0
      %v2253 = vadd.f32 %v2161, %v2252
      %2254 = vmatmul.f32.gmra.mxu0 %v1790
      %v2255 = vpop.f32.mrf.mxu0
      %v2256 = vadd.f32 %v2164, %v2255
      %2257 = vmatmul.f32.gmra.mxu0 %v1796
      %v2258 = vpop.f32.mrf.mxu0
      %v2259 = vadd.f32 %v2167, %v2258
      %2260 = vmatmul.f32.gmra.mxu0 %v1802
      %v2261 = vpop.f32.mrf.mxu0
      %v2262 = vadd.f32 %v2170, %v2261
      %2263 = vdwg.mxu0
      %2264 = vmatpush.msra.mxu0 %v382
      %2265 = vmatpush.msra.mxu0 %v381
      %2266 = vmatpush.msra.mxu0 %v380
      %2267 = vmatpush.msra.mxu0 %v379
      %2268 = vmatpush.msra.mxu0 %v378
      %2269 = vmatpush.msra.mxu0 %v377
      %2270 = vmatpush.msra.mxu0 %v376
      %2271 = vmatpush.msra.mxu0 %v375
      %2272 = vmatpush.msra.mxu0 %v374
      %2273 = vmatpush.msra.mxu0 %v373
      %2274 = vmatpush.msra.mxu0 %v372
      %2275 = vmatpush.msra.mxu0 %v371
      %2276 = vmatpush.msra.mxu0 %v370
      %2277 = vmatpush.msra.mxu0 %v369
      %2278 = vmatpush.msra.mxu0 %v368
      %2279 = vmatpush.msra.mxu0 %v367
      %2280 = vmatmul.f32.gmra.mxu0 %v1659
      %v2281 = vpop.f32.mrf.mxu0
      %v2282 = vadd.f32 %v2190, %v2281
      %2283 = vmatmul.f32.gmra.mxu0 %v1665
      %v2284 = vpop.f32.mrf.mxu0
      %v2285 = vadd.f32 %v2193, %v2284
      %2286 = vmatmul.f32.gmra.mxu0 %v1671
      %v2287 = vpop.f32.mrf.mxu0
      %v2288 = vadd.f32 %v2196, %v2287
      %2289 = vmatmul.f32.gmra.mxu0 %v1677
      %v2290 = vpop.f32.mrf.mxu0
      %v2291 = vadd.f32 %v2199, %v2290
      %2292 = vmatmul.f32.gmra.mxu0 %v1683
      %v2293 = vpop.f32.mrf.mxu0
      %v2294 = vadd.f32 %v2202, %v2293
      %2295 = vmatmul.f32.gmra.mxu0 %v1689
      %v2296 = vpop.f32.mrf.mxu0
      %v2297 = vadd.f32 %v2205, %v2296
      %2298 = vmatmul.f32.gmra.mxu0 %v1695
      %v2299 = vpop.f32.mrf.mxu0
      %v2300 = vadd.f32 %v2208, %v2299
      %2301 = vmatmul.f32.gmra.mxu0 %v1701
      %v2302 = vpop.f32.mrf.mxu0
      %v2303 = vadd.f32 %v2211, %v2302
      %2304 = vmatmul.f32.gmra.mxu0 %v1707
      %v2305 = vpop.f32.mrf.mxu0
      %v2306 = vadd.f32 %v2214, %v2305
      %2307 = vmatmul.f32.gmra.mxu0 %v1713
      %v2308 = vpop.f32.mrf.mxu0
      %v2309 = vadd.f32 %v2217, %v2308
      %2310 = vmatmul.f32.gmra.mxu0 %v1719
      %v2311 = vpop.f32.mrf.mxu0
      %v2312 = vadd.f32 %v2220, %v2311
      %2313 = vmatmul.f32.gmra.mxu0 %v1725
      %v2314 = vpop.f32.mrf.mxu0
      %v2315 = vadd.f32 %v2223, %v2314
      %2316 = vmatmul.f32.gmra.mxu0 %v1731
      %v2317 = vpop.f32.mrf.mxu0
      %v2318 = vadd.f32 %v2226, %v2317
      %2319 = vmatmul.f32.gmra.mxu0 %v1737
      %v2320 = vpop.f32.mrf.mxu0
      %v2321 = vadd.f32 %v2229, %v2320
      %2322 = vmatmul.f32.gmra.mxu0 %v1743
      %v2323 = vpop.f32.mrf.mxu0
      %v2324 = vadd.f32 %v2232, %v2323
      %2325 = vmatmul.f32.gmra.mxu0 %v1749
      %v2326 = vpop.f32.mrf.mxu0
      %v2327 = vadd.f32 %v2235, %v2326
      %2328 = vmatmul.f32.gmra.mxu0 %v1755
      %v2329 = vpop.f32.mrf.mxu0
      %v2330 = vadd.f32 %v2238, %v2329
      %2331 = vmatmul.f32.gmra.mxu0 %v1761
      %v2332 = vpop.f32.mrf.mxu0
      %v2333 = vadd.f32 %v2241, %v2332
      %2334 = vmatmul.f32.gmra.mxu0 %v1767
      %v2335 = vpop.f32.mrf.mxu0
      %v2336 = vadd.f32 %v2244, %v2335
      %2337 = vmatmul.f32.gmra.mxu0 %v1773
      %v2338 = vpop.f32.mrf.mxu0
      %v2339 = vadd.f32 %v2247, %v2338
      %2340 = vmatmul.f32.gmra.mxu0 %v1779
      %v2341 = vpop.f32.mrf.mxu0
      %v2342 = vadd.f32 %v2250, %v2341
      %2343 = vmatmul.f32.gmra.mxu0 %v1785
      %v2344 = vpop.f32.mrf.mxu0
      %v2345 = vadd.f32 %v2253, %v2344
      %2346 = vmatmul.f32.gmra.mxu0 %v1791
      %v2347 = vpop.f32.mrf.mxu0
      %v2348 = vadd.f32 %v2256, %v2347
      %2349 = vmatmul.f32.gmra.mxu0 %v1797
      %v2350 = vpop.f32.mrf.mxu0
      %v2351 = vadd.f32 %v2259, %v2350
      %2352 = vmatmul.f32.gmra.mxu0 %v1803
      %v2353 = vpop.f32.mrf.mxu0
      %v2354 = vadd.f32 %v2262, %v2353
      %2355 = vdwg.mxu0
      %v2356 = vmul.f32 %v2282, 1.702
      %v2357 = vmul.f32 %v2285, 1.702
      %v2358 = vmul.f32 %v2288, 1.702
      %v2359 = vmul.f32 %v2291, 1.702
      %v2360 = vmul.f32 %v2294, 1.702
      %v2361 = vmul.f32 %v2297, 1.702
      %v2362 = vmul.f32 %v2300, 1.702
      %v2363 = vmul.f32 %v2303, 1.702
      %v2364 = vmul.f32 %v2306, 1.702
      %v2365 = vmul.f32 %v2309, 1.702
      %v2366 = vmul.f32 %v2312, 1.702
      %v2367 = vmul.f32 %v2315, 1.702
      %v2368 = vmul.f32 %v2318, 1.702
      %v2369 = vmul.f32 %v2321, 1.702
      %v2370 = vmul.f32 %v2324, 1.702
      %v2371 = vmul.f32 %v2327, 1.702
      %v2372 = vmul.f32 %v2330, 1.702
      %v2373 = vmul.f32 %v2333, 1.702
      %v2374 = vmul.f32 %v2336, 1.702
      %v2375 = vmul.f32 %v2339, 1.702
      %v2376 = vmul.f32 %v2342, 1.702
      %v2377 = vmul.f32 %v2345, 1.702
      %v2378 = vmul.f32 %v2348, 1.702
      %v2379 = vmul.f32 %v2351, 1.702
      %v2380 = vmul.f32 %v2354, 1.702
      %v2381 = vxor.u32 %v2356, 2147483648
      %v2382 = vxor.u32 %v2357, 2147483648
      %v2383 = vxor.u32 %v2358, 2147483648
      %v2384 = vxor.u32 %v2359, 2147483648
      %v2385 = vxor.u32 %v2360, 2147483648
      %v2386 = vxor.u32 %v2361, 2147483648
      %v2387 = vxor.u32 %v2362, 2147483648
      %v2388 = vxor.u32 %v2363, 2147483648
      %v2389 = vxor.u32 %v2364, 2147483648
      %v2390 = vxor.u32 %v2365, 2147483648
      %v2391 = vxor.u32 %v2366, 2147483648
      %v2392 = vxor.u32 %v2367, 2147483648
      %v2393 = vxor.u32 %v2368, 2147483648
      %v2394 = vxor.u32 %v2369, 2147483648
      %v2395 = vxor.u32 %v2370, 2147483648
      %v2396 = vxor.u32 %v2371, 2147483648
      %v2397 = vxor.u32 %v2372, 2147483648
      %v2398 = vxor.u32 %v2373, 2147483648
      %v2399 = vxor.u32 %v2374, 2147483648
      %v2400 = vxor.u32 %v2375, 2147483648
      %v2401 = vxor.u32 %v2376, 2147483648
      %v2402 = vxor.u32 %v2377, 2147483648
      %v2403 = vxor.u32 %v2378, 2147483648
      %v2404 = vxor.u32 %v2379, 2147483648
      %v2405 = vxor.u32 %v2380, 2147483648
      %v2406 = vmul.f32 %v2381, 1.442695
      %v2407 = vpow.pop %v2406
      %v2408 = vmul.f32 %v2382, 1.442695
      %v2409 = vpow.pop %v2408
      %v2410 = vmul.f32 %v2383, 1.442695
      %v2411 = vpow.pop %v2410
      %v2412 = vmul.f32 %v2384, 1.442695
      %v2413 = vpow.pop %v2412
      %v2414 = vmul.f32 %v2385, 1.442695
      %v2415 = vpow.pop %v2414
      %v2416 = vmul.f32 %v2386, 1.442695
      %v2417 = vpow.pop %v2416
      %v2418 = vmul.f32 %v2387, 1.442695
      %v2419 = vpow.pop %v2418
      %v2420 = vmul.f32 %v2388, 1.442695
      %v2421 = vpow.pop %v2420
      %v2422 = vmul.f32 %v2389, 1.442695
      %v2423 = vpow.pop %v2422
      %v2424 = vmul.f32 %v2390, 1.442695
      %v2425 = vpow.pop %v2424
      %v2426 = vmul.f32 %v2391, 1.442695
      %v2427 = vpow.pop %v2426
      %v2428 = vmul.f32 %v2392, 1.442695
      %v2429 = vpow.pop %v2428
      %v2430 = vmul.f32 %v2393, 1.442695
      %v2431 = vpow.pop %v2430
      %v2432 = vmul.f32 %v2394, 1.442695
      %v2433 = vpow.pop %v2432
      %v2434 = vmul.f32 %v2395, 1.442695
      %v2435 = vpow.pop %v2434
      %v2436 = vmul.f32 %v2396, 1.442695
      %v2437 = vpow.pop %v2436
      %v2438 = vmul.f32 %v2397, 1.442695
      %v2439 = vpow.pop %v2438
      %v2440 = vmul.f32 %v2398, 1.442695
      %v2441 = vpow.pop %v2440
      %v2442 = vmul.f32 %v2399, 1.442695
      %v2443 = vpow.pop %v2442
      %v2444 = vmul.f32 %v2400, 1.442695
      %v2445 = vpow.pop %v2444
      %v2446 = vmul.f32 %v2401, 1.442695
      %v2447 = vpow.pop %v2446
      %v2448 = vmul.f32 %v2402, 1.442695
      %v2449 = vpow.pop %v2448
      %v2450 = vmul.f32 %v2403, 1.442695
      %v2451 = vpow.pop %v2450
      %v2452 = vmul.f32 %v2404, 1.442695
      %v2453 = vpow.pop %v2452
      %v2454 = vmul.f32 %v2405, 1.442695
      %v2455 = vpow.pop %v2454
      %v2456 = vadd.f32 %v2407, 1.0
      %v2457 = vadd.f32 %v2409, 1.0
      %v2458 = vadd.f32 %v2411, 1.0
      %v2459 = vadd.f32 %v2413, 1.0
      %v2460 = vadd.f32 %v2415, 1.0
      %v2461 = vadd.f32 %v2417, 1.0
      %v2462 = vadd.f32 %v2419, 1.0
      %v2463 = vadd.f32 %v2421, 1.0
      %v2464 = vadd.f32 %v2423, 1.0
      %v2465 = vadd.f32 %v2425, 1.0
      %v2466 = vadd.f32 %v2427, 1.0
      %v2467 = vadd.f32 %v2429, 1.0
      %v2468 = vadd.f32 %v2431, 1.0
      %v2469 = vadd.f32 %v2433, 1.0
      %v2470 = vadd.f32 %v2435, 1.0
      %v2471 = vadd.f32 %v2437, 1.0
      %v2472 = vadd.f32 %v2439, 1.0
      %v2473 = vadd.f32 %v2441, 1.0
      %v2474 = vadd.f32 %v2443, 1.0
      %v2475 = vadd.f32 %v2445, 1.0
      %v2476 = vadd.f32 %v2447, 1.0
      %v2477 = vadd.f32 %v2449, 1.0
      %v2478 = vadd.f32 %v2451, 1.0
      %v2479 = vadd.f32 %v2453, 1.0
      %v2480 = vadd.f32 %v2455, 1.0
      %v2481 = vrcp.pop %v2456
      %v2482 = vmul.f32 %v2456, %v2481
      %v2483 = vsub.f32 1.0, %v2482
      %v2484 = vmul.f32 %v2481, %v2483
      %v2485 = vadd.f32 %v2481, %v2484
      %vm2486 = vweird.f32 %v2456
      %vm2487 = vweird.f32 %v2481
      %vm2488 = vmor %vm2486, %vm2487
      %v2489 = vsel %vm2488, %v2481, %v2485
      %v2490 = vand.u32 2147483647, %v2456
      %vm2491 = vcmp.eq.f32.partialorder %v2490, 8.507059e+37
      %v2492 = vand.u32 %v2456, 2147483648
      %v2493 = vor.u32 1.1754944e-38, %v2492
      %v2494 = vsel %vm2491, %v2493, %v2489
      %v2495 = vmul.f32 1.0, %v2494
      %v2496 = vrcp.pop %v2457
      %v2497 = vmul.f32 %v2457, %v2496
      %v2498 = vsub.f32 1.0, %v2497
      %v2499 = vmul.f32 %v2496, %v2498
      %v2500 = vadd.f32 %v2496, %v2499
      %vm2501 = vweird.f32 %v2457
      %vm2502 = vweird.f32 %v2496
      %vm2503 = vmor %vm2501, %vm2502
      %v2504 = vsel %vm2503, %v2496, %v2500
      %v2505 = vand.u32 2147483647, %v2457
      %vm2506 = vcmp.eq.f32.partialorder %v2505, 8.507059e+37
      %v2507 = vand.u32 %v2457, 2147483648
      %v2508 = vor.u32 1.1754944e-38, %v2507
      %v2509 = vsel %vm2506, %v2508, %v2504
      %v2510 = vmul.f32 1.0, %v2509
      %v2511 = vrcp.pop %v2458
      %v2512 = vmul.f32 %v2458, %v2511
      %v2513 = vsub.f32 1.0, %v2512
      %v2514 = vmul.f32 %v2511, %v2513
      %v2515 = vadd.f32 %v2511, %v2514
      %vm2516 = vweird.f32 %v2458
      %vm2517 = vweird.f32 %v2511
      %vm2518 = vmor %vm2516, %vm2517
      %v2519 = vsel %vm2518, %v2511, %v2515
      %v2520 = vand.u32 2147483647, %v2458
      %vm2521 = vcmp.eq.f32.partialorder %v2520, 8.507059e+37
      %v2522 = vand.u32 %v2458, 2147483648
      %v2523 = vor.u32 1.1754944e-38, %v2522
      %v2524 = vsel %vm2521, %v2523, %v2519
      %v2525 = vmul.f32 1.0, %v2524
      %v2526 = vrcp.pop %v2459
      %v2527 = vmul.f32 %v2459, %v2526
      %v2528 = vsub.f32 1.0, %v2527
      %v2529 = vmul.f32 %v2526, %v2528
      %v2530 = vadd.f32 %v2526, %v2529
      %vm2531 = vweird.f32 %v2459
      %vm2532 = vweird.f32 %v2526
      %vm2533 = vmor %vm2531, %vm2532
      %v2534 = vsel %vm2533, %v2526, %v2530
      %v2535 = vand.u32 2147483647, %v2459
      %vm2536 = vcmp.eq.f32.partialorder %v2535, 8.507059e+37
      %v2537 = vand.u32 %v2459, 2147483648
      %v2538 = vor.u32 1.1754944e-38, %v2537
      %v2539 = vsel %vm2536, %v2538, %v2534
      %v2540 = vmul.f32 1.0, %v2539
      %v2541 = vrcp.pop %v2460
      %v2542 = vmul.f32 %v2460, %v2541
      %v2543 = vsub.f32 1.0, %v2542
      %v2544 = vmul.f32 %v2541, %v2543
      %v2545 = vadd.f32 %v2541, %v2544
      %vm2546 = vweird.f32 %v2460
      %vm2547 = vweird.f32 %v2541
      %vm2548 = vmor %vm2546, %vm2547
      %v2549 = vsel %vm2548, %v2541, %v2545
      %v2550 = vand.u32 2147483647, %v2460
      %vm2551 = vcmp.eq.f32.partialorder %v2550, 8.507059e+37
      %v2552 = vand.u32 %v2460, 2147483648
      %v2553 = vor.u32 1.1754944e-38, %v2552
      %v2554 = vsel %vm2551, %v2553, %v2549
      %v2555 = vmul.f32 1.0, %v2554
      %v2556 = vrcp.pop %v2461
      %v2557 = vmul.f32 %v2461, %v2556
      %v2558 = vsub.f32 1.0, %v2557
      %v2559 = vmul.f32 %v2556, %v2558
      %v2560 = vadd.f32 %v2556, %v2559
      %vm2561 = vweird.f32 %v2461
      %vm2562 = vweird.f32 %v2556
      %vm2563 = vmor %vm2561, %vm2562
      %v2564 = vsel %vm2563, %v2556, %v2560
      %v2565 = vand.u32 2147483647, %v2461
      %vm2566 = vcmp.eq.f32.partialorder %v2565, 8.507059e+37
      %v2567 = vand.u32 %v2461, 2147483648
      %v2568 = vor.u32 1.1754944e-38, %v2567
      %v2569 = vsel %vm2566, %v2568, %v2564
      %v2570 = vmul.f32 1.0, %v2569
      %v2571 = vrcp.pop %v2462
      %v2572 = vmul.f32 %v2462, %v2571
      %v2573 = vsub.f32 1.0, %v2572
      %v2574 = vmul.f32 %v2571, %v2573
      %v2575 = vadd.f32 %v2571, %v2574
      %vm2576 = vweird.f32 %v2462
      %vm2577 = vweird.f32 %v2571
      %vm2578 = vmor %vm2576, %vm2577
      %v2579 = vsel %vm2578, %v2571, %v2575
      %v2580 = vand.u32 2147483647, %v2462
      %vm2581 = vcmp.eq.f32.partialorder %v2580, 8.507059e+37
      %v2582 = vand.u32 %v2462, 2147483648
      %v2583 = vor.u32 1.1754944e-38, %v2582
      %v2584 = vsel %vm2581, %v2583, %v2579
      %v2585 = vmul.f32 1.0, %v2584
      %v2586 = vrcp.pop %v2463
      %v2587 = vmul.f32 %v2463, %v2586
      %v2588 = vsub.f32 1.0, %v2587
      %v2589 = vmul.f32 %v2586, %v2588
      %v2590 = vadd.f32 %v2586, %v2589
      %vm2591 = vweird.f32 %v2463
      %vm2592 = vweird.f32 %v2586
      %vm2593 = vmor %vm2591, %vm2592
      %v2594 = vsel %vm2593, %v2586, %v2590
      %v2595 = vand.u32 2147483647, %v2463
      %vm2596 = vcmp.eq.f32.partialorder %v2595, 8.507059e+37
      %v2597 = vand.u32 %v2463, 2147483648
      %v2598 = vor.u32 1.1754944e-38, %v2597
      %v2599 = vsel %vm2596, %v2598, %v2594
      %v2600 = vmul.f32 1.0, %v2599
      %v2601 = vrcp.pop %v2464
      %v2602 = vmul.f32 %v2464, %v2601
      %v2603 = vsub.f32 1.0, %v2602
      %v2604 = vmul.f32 %v2601, %v2603
      %v2605 = vadd.f32 %v2601, %v2604
      %vm2606 = vweird.f32 %v2464
      %vm2607 = vweird.f32 %v2601
      %vm2608 = vmor %vm2606, %vm2607
      %v2609 = vsel %vm2608, %v2601, %v2605
      %v2610 = vand.u32 2147483647, %v2464
      %vm2611 = vcmp.eq.f32.partialorder %v2610, 8.507059e+37
      %v2612 = vand.u32 %v2464, 2147483648
      %v2613 = vor.u32 1.1754944e-38, %v2612
      %v2614 = vsel %vm2611, %v2613, %v2609
      %v2615 = vmul.f32 1.0, %v2614
      %v2616 = vrcp.pop %v2465
      %v2617 = vmul.f32 %v2465, %v2616
      %v2618 = vsub.f32 1.0, %v2617
      %v2619 = vmul.f32 %v2616, %v2618
      %v2620 = vadd.f32 %v2616, %v2619
      %vm2621 = vweird.f32 %v2465
      %vm2622 = vweird.f32 %v2616
      %vm2623 = vmor %vm2621, %vm2622
      %v2624 = vsel %vm2623, %v2616, %v2620
      %v2625 = vand.u32 2147483647, %v2465
      %vm2626 = vcmp.eq.f32.partialorder %v2625, 8.507059e+37
      %v2627 = vand.u32 %v2465, 2147483648
      %v2628 = vor.u32 1.1754944e-38, %v2627
      %v2629 = vsel %vm2626, %v2628, %v2624
      %v2630 = vmul.f32 1.0, %v2629
      %v2631 = vrcp.pop %v2466
      %v2632 = vmul.f32 %v2466, %v2631
      %v2633 = vsub.f32 1.0, %v2632
      %v2634 = vmul.f32 %v2631, %v2633
      %v2635 = vadd.f32 %v2631, %v2634
      %vm2636 = vweird.f32 %v2466
      %vm2637 = vweird.f32 %v2631
      %vm2638 = vmor %vm2636, %vm2637
      %v2639 = vsel %vm2638, %v2631, %v2635
      %v2640 = vand.u32 2147483647, %v2466
      %vm2641 = vcmp.eq.f32.partialorder %v2640, 8.507059e+37
      %v2642 = vand.u32 %v2466, 2147483648
      %v2643 = vor.u32 1.1754944e-38, %v2642
      %v2644 = vsel %vm2641, %v2643, %v2639
      %v2645 = vmul.f32 1.0, %v2644
      %v2646 = vrcp.pop %v2467
      %v2647 = vmul.f32 %v2467, %v2646
      %v2648 = vsub.f32 1.0, %v2647
      %v2649 = vmul.f32 %v2646, %v2648
      %v2650 = vadd.f32 %v2646, %v2649
      %vm2651 = vweird.f32 %v2467
      %vm2652 = vweird.f32 %v2646
      %vm2653 = vmor %vm2651, %vm2652
      %v2654 = vsel %vm2653, %v2646, %v2650
      %v2655 = vand.u32 2147483647, %v2467
      %vm2656 = vcmp.eq.f32.partialorder %v2655, 8.507059e+37
      %v2657 = vand.u32 %v2467, 2147483648
      %v2658 = vor.u32 1.1754944e-38, %v2657
      %v2659 = vsel %vm2656, %v2658, %v2654
      %v2660 = vmul.f32 1.0, %v2659
      %v2661 = vrcp.pop %v2468
      %v2662 = vmul.f32 %v2468, %v2661
      %v2663 = vsub.f32 1.0, %v2662
      %v2664 = vmul.f32 %v2661, %v2663
      %v2665 = vadd.f32 %v2661, %v2664
      %vm2666 = vweird.f32 %v2468
      %vm2667 = vweird.f32 %v2661
      %vm2668 = vmor %vm2666, %vm2667
      %v2669 = vsel %vm2668, %v2661, %v2665
      %v2670 = vand.u32 2147483647, %v2468
      %vm2671 = vcmp.eq.f32.partialorder %v2670, 8.507059e+37
      %v2672 = vand.u32 %v2468, 2147483648
      %v2673 = vor.u32 1.1754944e-38, %v2672
      %v2674 = vsel %vm2671, %v2673, %v2669
      %v2675 = vmul.f32 1.0, %v2674
      %v2676 = vrcp.pop %v2469
      %v2677 = vmul.f32 %v2469, %v2676
      %v2678 = vsub.f32 1.0, %v2677
      %v2679 = vmul.f32 %v2676, %v2678
      %v2680 = vadd.f32 %v2676, %v2679
      %vm2681 = vweird.f32 %v2469
      %vm2682 = vweird.f32 %v2676
      %vm2683 = vmor %vm2681, %vm2682
      %v2684 = vsel %vm2683, %v2676, %v2680
      %v2685 = vand.u32 2147483647, %v2469
      %vm2686 = vcmp.eq.f32.partialorder %v2685, 8.507059e+37
      %v2687 = vand.u32 %v2469, 2147483648
      %v2688 = vor.u32 1.1754944e-38, %v2687
      %v2689 = vsel %vm2686, %v2688, %v2684
      %v2690 = vmul.f32 1.0, %v2689
      %v2691 = vrcp.pop %v2470
      %v2692 = vmul.f32 %v2470, %v2691
      %v2693 = vsub.f32 1.0, %v2692
      %v2694 = vmul.f32 %v2691, %v2693
      %v2695 = vadd.f32 %v2691, %v2694
      %vm2696 = vweird.f32 %v2470
      %vm2697 = vweird.f32 %v2691
      %vm2698 = vmor %vm2696, %vm2697
      %v2699 = vsel %vm2698, %v2691, %v2695
      %v2700 = vand.u32 2147483647, %v2470
      %vm2701 = vcmp.eq.f32.partialorder %v2700, 8.507059e+37
      %v2702 = vand.u32 %v2470, 2147483648
      %v2703 = vor.u32 1.1754944e-38, %v2702
      %v2704 = vsel %vm2701, %v2703, %v2699
      %v2705 = vmul.f32 1.0, %v2704
      %v2706 = vrcp.pop %v2471
      %v2707 = vmul.f32 %v2471, %v2706
      %v2708 = vsub.f32 1.0, %v2707
      %v2709 = vmul.f32 %v2706, %v2708
      %v2710 = vadd.f32 %v2706, %v2709
      %vm2711 = vweird.f32 %v2471
      %vm2712 = vweird.f32 %v2706
      %vm2713 = vmor %vm2711, %vm2712
      %v2714 = vsel %vm2713, %v2706, %v2710
      %v2715 = vand.u32 2147483647, %v2471
      %vm2716 = vcmp.eq.f32.partialorder %v2715, 8.507059e+37
      %v2717 = vand.u32 %v2471, 2147483648
      %v2718 = vor.u32 1.1754944e-38, %v2717
      %v2719 = vsel %vm2716, %v2718, %v2714
      %v2720 = vmul.f32 1.0, %v2719
      %v2721 = vrcp.pop %v2472
      %v2722 = vmul.f32 %v2472, %v2721
      %v2723 = vsub.f32 1.0, %v2722
      %v2724 = vmul.f32 %v2721, %v2723
      %v2725 = vadd.f32 %v2721, %v2724
      %vm2726 = vweird.f32 %v2472
      %vm2727 = vweird.f32 %v2721
      %vm2728 = vmor %vm2726, %vm2727
      %v2729 = vsel %vm2728, %v2721, %v2725
      %v2730 = vand.u32 2147483647, %v2472
      %vm2731 = vcmp.eq.f32.partialorder %v2730, 8.507059e+37
      %v2732 = vand.u32 %v2472, 2147483648
      %v2733 = vor.u32 1.1754944e-38, %v2732
      %v2734 = vsel %vm2731, %v2733, %v2729
      %v2735 = vmul.f32 1.0, %v2734
      %v2736 = vrcp.pop %v2473
      %v2737 = vmul.f32 %v2473, %v2736
      %v2738 = vsub.f32 1.0, %v2737
      %v2739 = vmul.f32 %v2736, %v2738
      %v2740 = vadd.f32 %v2736, %v2739
      %vm2741 = vweird.f32 %v2473
      %vm2742 = vweird.f32 %v2736
      %vm2743 = vmor %vm2741, %vm2742
      %v2744 = vsel %vm2743, %v2736, %v2740
      %v2745 = vand.u32 2147483647, %v2473
      %vm2746 = vcmp.eq.f32.partialorder %v2745, 8.507059e+37
      %v2747 = vand.u32 %v2473, 2147483648
      %v2748 = vor.u32 1.1754944e-38, %v2747
      %v2749 = vsel %vm2746, %v2748, %v2744
      %v2750 = vmul.f32 1.0, %v2749
      %v2751 = vrcp.pop %v2474
      %v2752 = vmul.f32 %v2474, %v2751
      %v2753 = vsub.f32 1.0, %v2752
      %v2754 = vmul.f32 %v2751, %v2753
      %v2755 = vadd.f32 %v2751, %v2754
      %vm2756 = vweird.f32 %v2474
      %vm2757 = vweird.f32 %v2751
      %vm2758 = vmor %vm2756, %vm2757
      %v2759 = vsel %vm2758, %v2751, %v2755
      %v2760 = vand.u32 2147483647, %v2474
      %vm2761 = vcmp.eq.f32.partialorder %v2760, 8.507059e+37
      %v2762 = vand.u32 %v2474, 2147483648
      %v2763 = vor.u32 1.1754944e-38, %v2762
      %v2764 = vsel %vm2761, %v2763, %v2759
      %v2765 = vmul.f32 1.0, %v2764
      %v2766 = vrcp.pop %v2475
      %v2767 = vmul.f32 %v2475, %v2766
      %v2768 = vsub.f32 1.0, %v2767
      %v2769 = vmul.f32 %v2766, %v2768
      %v2770 = vadd.f32 %v2766, %v2769
      %vm2771 = vweird.f32 %v2475
      %vm2772 = vweird.f32 %v2766
      %vm2773 = vmor %vm2771, %vm2772
      %v2774 = vsel %vm2773, %v2766, %v2770
      %v2775 = vand.u32 2147483647, %v2475
      %vm2776 = vcmp.eq.f32.partialorder %v2775, 8.507059e+37
      %v2777 = vand.u32 %v2475, 2147483648
      %v2778 = vor.u32 1.1754944e-38, %v2777
      %v2779 = vsel %vm2776, %v2778, %v2774
      %v2780 = vmul.f32 1.0, %v2779
      %v2781 = vrcp.pop %v2476
      %v2782 = vmul.f32 %v2476, %v2781
      %v2783 = vsub.f32 1.0, %v2782
      %v2784 = vmul.f32 %v2781, %v2783
      %v2785 = vadd.f32 %v2781, %v2784
      %vm2786 = vweird.f32 %v2476
      %vm2787 = vweird.f32 %v2781
      %vm2788 = vmor %vm2786, %vm2787
      %v2789 = vsel %vm2788, %v2781, %v2785
      %v2790 = vand.u32 2147483647, %v2476
      %vm2791 = vcmp.eq.f32.partialorder %v2790, 8.507059e+37
      %v2792 = vand.u32 %v2476, 2147483648
      %v2793 = vor.u32 1.1754944e-38, %v2792
      %v2794 = vsel %vm2791, %v2793, %v2789
      %v2795 = vmul.f32 1.0, %v2794
      %v2796 = vrcp.pop %v2477
      %v2797 = vmul.f32 %v2477, %v2796
      %v2798 = vsub.f32 1.0, %v2797
      %v2799 = vmul.f32 %v2796, %v2798
      %v2800 = vadd.f32 %v2796, %v2799
      %vm2801 = vweird.f32 %v2477
      %vm2802 = vweird.f32 %v2796
      %vm2803 = vmor %vm2801, %vm2802
      %v2804 = vsel %vm2803, %v2796, %v2800
      %v2805 = vand.u32 2147483647, %v2477
      %vm2806 = vcmp.eq.f32.partialorder %v2805, 8.507059e+37
      %v2807 = vand.u32 %v2477, 2147483648
      %v2808 = vor.u32 1.1754944e-38, %v2807
      %v2809 = vsel %vm2806, %v2808, %v2804
      %v2810 = vmul.f32 1.0, %v2809
      %v2811 = vrcp.pop %v2478
      %v2812 = vmul.f32 %v2478, %v2811
      %v2813 = vsub.f32 1.0, %v2812
      %v2814 = vmul.f32 %v2811, %v2813
      %v2815 = vadd.f32 %v2811, %v2814
      %vm2816 = vweird.f32 %v2478
      %vm2817 = vweird.f32 %v2811
      %vm2818 = vmor %vm2816, %vm2817
      %v2819 = vsel %vm2818, %v2811, %v2815
      %v2820 = vand.u32 2147483647, %v2478
      %vm2821 = vcmp.eq.f32.partialorder %v2820, 8.507059e+37
      %v2822 = vand.u32 %v2478, 2147483648
      %v2823 = vor.u32 1.1754944e-38, %v2822
      %v2824 = vsel %vm2821, %v2823, %v2819
      %v2825 = vmul.f32 1.0, %v2824
      %v2826 = vrcp.pop %v2479
      %v2827 = vmul.f32 %v2479, %v2826
      %v2828 = vsub.f32 1.0, %v2827
      %v2829 = vmul.f32 %v2826, %v2828
      %v2830 = vadd.f32 %v2826, %v2829
      %vm2831 = vweird.f32 %v2479
      %vm2832 = vweird.f32 %v2826
      %vm2833 = vmor %vm2831, %vm2832
      %v2834 = vsel %vm2833, %v2826, %v2830
      %v2835 = vand.u32 2147483647, %v2479
      %vm2836 = vcmp.eq.f32.partialorder %v2835, 8.507059e+37
      %v2837 = vand.u32 %v2479, 2147483648
      %v2838 = vor.u32 1.1754944e-38, %v2837
      %v2839 = vsel %vm2836, %v2838, %v2834
      %v2840 = vmul.f32 1.0, %v2839
      %v2841 = vrcp.pop %v2480
      %v2842 = vmul.f32 %v2480, %v2841
      %v2843 = vsub.f32 1.0, %v2842
      %v2844 = vmul.f32 %v2841, %v2843
      %v2845 = vadd.f32 %v2841, %v2844
      %vm2846 = vweird.f32 %v2480
      %vm2847 = vweird.f32 %v2841
      %vm2848 = vmor %vm2846, %vm2847
      %v2849 = vsel %vm2848, %v2841, %v2845
      %v2850 = vand.u32 2147483647, %v2480
      %vm2851 = vcmp.eq.f32.partialorder %v2850, 8.507059e+37
      %v2852 = vand.u32 %v2480, 2147483648
      %v2853 = vor.u32 1.1754944e-38, %v2852
      %v2854 = vsel %vm2851, %v2853, %v2849
      %v2855 = vmul.f32 1.0, %v2854
      %v2856 = vmul.f32 %v2282, %v2495
      %v2857 = vmul.f32 %v2285, %v2510
      %v2858 = vmul.f32 %v2288, %v2525
      %v2859 = vmul.f32 %v2291, %v2540
      %v2860 = vmul.f32 %v2294, %v2555
      %v2861 = vmul.f32 %v2297, %v2570
      %v2862 = vmul.f32 %v2300, %v2585
      %v2863 = vmul.f32 %v2303, %v2600
      %v2864 = vmul.f32 %v2306, %v2615
      %v2865 = vmul.f32 %v2309, %v2630
      %v2866 = vmul.f32 %v2312, %v2645
      %v2867 = vmul.f32 %v2315, %v2660
      %v2868 = vmul.f32 %v2318, %v2675
      %v2869 = vmul.f32 %v2321, %v2690
      %v2870 = vmul.f32 %v2324, %v2705
      %v2871 = vmul.f32 %v2327, %v2720
      %v2872 = vmul.f32 %v2330, %v2735
      %v2873 = vmul.f32 %v2333, %v2750
      %v2874 = vmul.f32 %v2336, %v2765
      %v2875 = vmul.f32 %v2339, %v2780
      %v2876 = vmul.f32 %v2342, %v2795
      %v2877 = vmul.f32 %v2345, %v2810
      %v2878 = vmul.f32 %v2348, %v2825
      %v2879 = vmul.f32 %v2351, %v2840
      %v2880 = vmul.f32 %v2354, %v2855
      %s2881 = scalar_lea.vmem [#allocation2], 208
      %2882 = vst.msk [vmem:[%s2881] sm:$0xff] %vm391, %v2856
      %2883 = vst.msk [vmem:[%s2881 + $0x8] sm:$0xff] %vm391, %v2857
      %2884 = vst.msk [vmem:[%s2881 + $0x10] sm:$0xff] %vm391, %v2858
      %2885 = vst.msk [vmem:[%s2881 + $0x18] sm:$0xff] %vm391, %v2859
      %2886 = vst.msk [vmem:[%s2881 + $0x20] sm:$0xff] %vm391, %v2860
      %2887 = vst.msk [vmem:[%s2881 + $0x28] sm:$0xff] %vm391, %v2861
      %2888 = vst.msk [vmem:[%s2881 + $0x30] sm:$0xff] %vm391, %v2862
      %2889 = vst.msk [vmem:[%s2881 + $0x38] sm:$0xff] %vm391, %v2863
      %2890 = vst.msk [vmem:[%s2881 + $0x40] sm:$0xff] %vm391, %v2864
      %2891 = vst.msk [vmem:[%s2881 + $0x48] sm:$0xff] %vm391, %v2865
      %2892 = vst.msk [vmem:[%s2881 + $0x50] sm:$0xff] %vm391, %v2866
      %2893 = vst.msk [vmem:[%s2881 + $0x58] sm:$0xff] %vm391, %v2867
      %2894 = vst.msk [vmem:[%s2881 + $0x60] sm:$0xff] %vm391, %v2868
      %2895 = vst.msk [vmem:[%s2881 + $0x68] sm:$0xff] %vm391, %v2869
      %2896 = vst.msk [vmem:[%s2881 + $0x70] sm:$0xff] %vm391, %v2870
      %2897 = vst.msk [vmem:[%s2881 + $0x78] sm:$0xff] %vm391, %v2871
      %2898 = vst.msk [vmem:[%s2881 + $0x80] sm:$0xff] %vm391, %v2872
      %2899 = vst.msk [vmem:[%s2881 + $0x88] sm:$0xff] %vm391, %v2873
      %2900 = vst.msk [vmem:[%s2881 + $0x90] sm:$0xff] %vm391, %v2874
      %2901 = vst.msk [vmem:[%s2881 + $0x98] sm:$0xff] %vm391, %v2875
      %2902 = vst.msk [vmem:[%s2881 + $0xa0] sm:$0xff] %vm391, %v2876
      %2903 = vst.msk [vmem:[%s2881 + $0xa8] sm:$0xff] %vm391, %v2877
      %2904 = vst.msk [vmem:[%s2881 + $0xb0] sm:$0xff] %vm391, %v2878
      %2905 = vst.msk [vmem:[%s2881 + $0xb8] sm:$0xff] %vm391, %v2879
      %2906 = vst.msk [vmem:[%s2881 + $0xc0] sm:$0x1f] %vm1651, %v2880
      %v2907 = vld [vmem:[#allocation2] sm:$0xff]
      %v2908 = vld [vmem:[#allocation2 + $0x8] sm:$0xff]
      %v2909 = vld [vmem:[#allocation2 + $0x10] sm:$0xff]
      %v2910 = vld [vmem:[#allocation2 + $0x18] sm:$0xff]
      %v2911 = vld [vmem:[#allocation2 + $0x20] sm:$0xff]
      %v2912 = vld [vmem:[#allocation2 + $0x28] sm:$0xff]
      %v2913 = vld [vmem:[#allocation2 + $0x30] sm:$0xff]
      %v2914 = vld [vmem:[#allocation2 + $0x38] sm:$0xff]
      %v2915 = vld [vmem:[#allocation2 + $0x40] sm:$0xff]
      %v2916 = vld [vmem:[#allocation2 + $0x48] sm:$0xff]
      %v2917 = vld [vmem:[#allocation2 + $0x50] sm:$0xff]
      %v2918 = vld [vmem:[#allocation2 + $0x58] sm:$0xff]
      %v2919 = vld [vmem:[#allocation2 + $0x60] sm:$0xff]
      %v2920 = vld [vmem:[#allocation2 + $0x68] sm:$0xff]
      %v2921 = vld [vmem:[#allocation2 + $0x70] sm:$0xff]
      %v2922 = vld [vmem:[#allocation2 + $0x78] sm:$0xff]
      %v2923 = vld [vmem:[#allocation2 + $0x80] sm:$0xff]
      %v2924 = vld [vmem:[#allocation2 + $0x88] sm:$0xff]
      %v2925 = vld [vmem:[#allocation2 + $0x90] sm:$0xff]
      %v2926 = vld [vmem:[#allocation2 + $0x98] sm:$0xff]
      %v2927 = vld [vmem:[#allocation2 + $0xa0] sm:$0xff]
      %v2928 = vld [vmem:[#allocation2 + $0xa8] sm:$0xff]
      %v2929 = vld [vmem:[#allocation2 + $0xb0] sm:$0xff]
      %v2930 = vld [vmem:[#allocation2 + $0xb8] sm:$0xff]
      %v2931 = vld [vmem:[#allocation2 + $0xc0] sm:$0xff]
      %v2932 = vld [vmem:[#allocation2 + $0xc8] sm:$0xff]
      %v2933 = vrot.slane %v2907, 1
      %v2934 = vrot.slane %v2908, 1
      %v2935 = vrot.slane %v2909, 1
      %v2936 = vrot.slane %v2910, 1
      %v2937 = vrot.slane %v2911, 1
      %v2938 = vrot.slane %v2912, 1
      %v2939 = vrot.slane %v2913, 1
      %v2940 = vrot.slane %v2914, 1
      %v2941 = vrot.slane %v2915, 1
      %v2942 = vrot.slane %v2916, 1
      %v2943 = vrot.slane %v2917, 1
      %v2944 = vrot.slane %v2918, 1
      %v2945 = vrot.slane %v2919, 1
      %v2946 = vrot.slane %v2920, 1
      %v2947 = vrot.slane %v2921, 1
      %v2948 = vrot.slane %v2922, 1
      %v2949 = vrot.slane %v2923, 1
      %v2950 = vrot.slane %v2924, 1
      %v2951 = vrot.slane %v2925, 1
      %v2952 = vrot.slane %v2926, 1
      %v2953 = vrot.slane %v2927, 1
      %v2954 = vrot.slane %v2928, 1
      %v2955 = vrot.slane %v2929, 1
      %v2956 = vrot.slane %v2930, 1
      %v2957 = vrot.slane %v2931, 1
      %v2958 = vrot.slane %v2932, 1
      %v2959 = vlaneseq
      %v2960 = vshrl.u32 %v2959, 7
      %vm2961 = vcmp.lt.s32.totalorder %v2960, 7
      %v2962 = vsel %vm2961, %v2957, %v2958
      %v2963 = vsel %vm2961, %v2956, %v2957
      %v2964 = vsel %vm2961, %v2955, %v2956
      %v2965 = vsel %vm2961, %v2954, %v2955
      %v2966 = vsel %vm2961, %v2953, %v2954
      %v2967 = vsel %vm2961, %v2952, %v2953
      %v2968 = vsel %vm2961, %v2951, %v2952
      %v2969 = vsel %vm2961, %v2950, %v2951
      %v2970 = vsel %vm2961, %v2949, %v2950
      %v2971 = vsel %vm2961, %v2948, %v2949
      %v2972 = vsel %vm2961, %v2947, %v2948
      %v2973 = vsel %vm2961, %v2946, %v2947
      %v2974 = vsel %vm2961, %v2945, %v2946
      %v2975 = vsel %vm2961, %v2944, %v2945
      %v2976 = vsel %vm2961, %v2943, %v2944
      %v2977 = vsel %vm2961, %v2942, %v2943
      %v2978 = vsel %vm2961, %v2941, %v2942
      %v2979 = vsel %vm2961, %v2940, %v2941
      %v2980 = vsel %vm2961, %v2939, %v2940
      %v2981 = vsel %vm2961, %v2938, %v2939
      %v2982 = vsel %vm2961, %v2937, %v2938
      %v2983 = vsel %vm2961, %v2936, %v2937
      %v2984 = vsel %vm2961, %v2935, %v2936
      %v2985 = vsel %vm2961, %v2934, %v2935
      %v2986 = vsel %vm2961, %v2933, %v2934
      %v2987 = vsel %vm2961, %v2958, %v2933
      %v2988 = vld [vmem:[%s6] sm:$0xff]
      %v2989 = vld [vmem:[%s6 + $0x8] sm:$0xff]
      %v2990 = vld [vmem:[%s6 + $0x10] sm:$0xff]
      %v2991 = vld [vmem:[%s6 + $0x18] sm:$0xff]
      %v2992 = vld [vmem:[%s6 + $0x20] sm:$0xff]
      %v2993 = vld [vmem:[%s6 + $0x28] sm:$0xff]
      %v2994 = vld [vmem:[%s6 + $0x30] sm:$0xff]
      %v2995 = vld [vmem:[%s6 + $0x38] sm:$0xff]
      %v2996 = vld [vmem:[%s6 + $0x40] sm:$0xff]
      %v2997 = vld [vmem:[%s6 + $0x48] sm:$0xff]
      %v2998 = vld [vmem:[%s6 + $0x50] sm:$0xff]
      %v2999 = vld [vmem:[%s6 + $0x58] sm:$0xff]
      %v3000 = vld [vmem:[%s6 + $0x60] sm:$0xff]
      %v3001 = vld [vmem:[%s6 + $0x68] sm:$0xff]
      %v3002 = vld [vmem:[%s6 + $0x70] sm:$0xff]
      %v3003 = vld [vmem:[%s6 + $0x78] sm:$0xff]
      %v3004 = vld [vmem:[%s6 + $0x80] sm:$0xff]
      %v3005 = vld [vmem:[%s6 + $0x88] sm:$0xff]
      %v3006 = vld [vmem:[%s6 + $0x90] sm:$0xff]
      %v3007 = vld [vmem:[%s6 + $0x98] sm:$0xff]
      %v3008 = vld [vmem:[%s6 + $0xa0] sm:$0xff]
      %v3009 = vld [vmem:[%s6 + $0xa8] sm:$0xff]
      %v3010 = vld [vmem:[%s6 + $0xb0] sm:$0xff]
      %v3011 = vld [vmem:[%s6 + $0xb8] sm:$0xff]
      %v3012 = vld [vmem:[%s6 + $0xc0] sm:$0xff]
      %v3013 = vld [vmem:[%s6 + $0xc8] sm:$0xff]
      %v3014 = vmul.f32 %v2962, %v2988
      %v3015 = vmul.f32 %v2987, %v2989
      %v3016 = vmul.f32 %v2986, %v2990
      %v3017 = vmul.f32 %v2985, %v2991
      %v3018 = vmul.f32 %v2984, %v2992
      %v3019 = vmul.f32 %v2983, %v2993
      %v3020 = vmul.f32 %v2982, %v2994
      %v3021 = vmul.f32 %v2981, %v2995
      %v3022 = vmul.f32 %v2980, %v2996
      %v3023 = vmul.f32 %v2979, %v2997
      %v3024 = vmul.f32 %v2978, %v2998
      %v3025 = vmul.f32 %v2977, %v2999
      %v3026 = vmul.f32 %v2976, %v3000
      %v3027 = vmul.f32 %v2975, %v3001
      %v3028 = vmul.f32 %v2974, %v3002
      %v3029 = vmul.f32 %v2973, %v3003
      %v3030 = vmul.f32 %v2972, %v3004
      %v3031 = vmul.f32 %v2971, %v3005
      %v3032 = vmul.f32 %v2970, %v3006
      %v3033 = vmul.f32 %v2969, %v3007
      %v3034 = vmul.f32 %v2968, %v3008
      %v3035 = vmul.f32 %v2967, %v3009
      %v3036 = vmul.f32 %v2966, %v3010
      %v3037 = vmul.f32 %v2965, %v3011
      %v3038 = vmul.f32 %v2964, %v3012
      %v3039 = vmul.f32 %v2963, %v3013
      %v3040 = vld [vmem:[%s3] sm:$0xff]
      %v3041 = vrot.slane %v2907, 2
      %v3042 = vrot.slane %v2908, 2
      %v3043 = vrot.slane %v2909, 2
      %v3044 = vrot.slane %v2910, 2
      %v3045 = vrot.slane %v2911, 2
      %v3046 = vrot.slane %v2912, 2
      %v3047 = vrot.slane %v2913, 2
      %v3048 = vrot.slane %v2914, 2
      %v3049 = vrot.slane %v2915, 2
      %v3050 = vrot.slane %v2916, 2
      %v3051 = vrot.slane %v2917, 2
      %v3052 = vrot.slane %v2918, 2
      %v3053 = vrot.slane %v2919, 2
      %v3054 = vrot.slane %v2920, 2
      %v3055 = vrot.slane %v2921, 2
      %v3056 = vrot.slane %v2922, 2
      %v3057 = vrot.slane %v2923, 2
      %v3058 = vrot.slane %v2924, 2
      %v3059 = vrot.slane %v2925, 2
      %v3060 = vrot.slane %v2926, 2
      %v3061 = vrot.slane %v2927, 2
      %v3062 = vrot.slane %v2928, 2
      %v3063 = vrot.slane %v2929, 2
      %v3064 = vrot.slane %v2930, 2
      %v3065 = vrot.slane %v2931, 2
      %v3066 = vrot.slane %v2932, 2
      %vm3067 = vcmp.lt.s32.totalorder %v2960, 6
      %v3068 = vsel %vm3067, %v3065, %v3066
      %v3069 = vsel %vm3067, %v3064, %v3065
      %v3070 = vsel %vm3067, %v3063, %v3064
      %v3071 = vsel %vm3067, %v3062, %v3063
      %v3072 = vsel %vm3067, %v3061, %v3062
      %v3073 = vsel %vm3067, %v3060, %v3061
      %v3074 = vsel %vm3067, %v3059, %v3060
      %v3075 = vsel %vm3067, %v3058, %v3059
      %v3076 = vsel %vm3067, %v3057, %v3058
      %v3077 = vsel %vm3067, %v3056, %v3057
      %v3078 = vsel %vm3067, %v3055, %v3056
      %v3079 = vsel %vm3067, %v3054, %v3055
      %v3080 = vsel %vm3067, %v3053, %v3054
      %v3081 = vsel %vm3067, %v3052, %v3053
      %v3082 = vsel %vm3067, %v3051, %v3052
      %v3083 = vsel %vm3067, %v3050, %v3051
      %v3084 = vsel %vm3067, %v3049, %v3050
      %v3085 = vsel %vm3067, %v3048, %v3049
      %v3086 = vsel %vm3067, %v3047, %v3048
      %v3087 = vsel %vm3067, %v3046, %v3047
      %v3088 = vsel %vm3067, %v3045, %v3046
      %v3089 = vsel %vm3067, %v3044, %v3045
      %v3090 = vsel %vm3067, %v3043, %v3044
      %v3091 = vsel %vm3067, %v3042, %v3043
      %v3092 = vsel %vm3067, %v3041, %v3042
      %v3093 = vsel %vm3067, %v3066, %v3041
      %s3094 = scalar_lea.vmem %s6, 208
      %v3095 = vld [vmem:[%s3094] sm:$0xff]
      %v3096 = vld [vmem:[%s3094 + $0x8] sm:$0xff]
      %v3097 = vld [vmem:[%s3094 + $0x10] sm:$0xff]
      %v3098 = vld [vmem:[%s3094 + $0x18] sm:$0xff]
      %v3099 = vld [vmem:[%s3094 + $0x20] sm:$0xff]
      %v3100 = vld [vmem:[%s3094 + $0x28] sm:$0xff]
      %v3101 = vld [vmem:[%s3094 + $0x30] sm:$0xff]
      %v3102 = vld [vmem:[%s3094 + $0x38] sm:$0xff]
      %v3103 = vld [vmem:[%s3094 + $0x40] sm:$0xff]
      %v3104 = vld [vmem:[%s3094 + $0x48] sm:$0xff]
      %v3105 = vld [vmem:[%s3094 + $0x50] sm:$0xff]
      %v3106 = vld [vmem:[%s3094 + $0x58] sm:$0xff]
      %v3107 = vld [vmem:[%s3094 + $0x60] sm:$0xff]
      %v3108 = vld [vmem:[%s3094 + $0x68] sm:$0xff]
      %v3109 = vld [vmem:[%s3094 + $0x70] sm:$0xff]
      %v3110 = vld [vmem:[%s3094 + $0x78] sm:$0xff]
      %v3111 = vld [vmem:[%s3094 + $0x80] sm:$0xff]
      %v3112 = vld [vmem:[%s3094 + $0x88] sm:$0xff]
      %v3113 = vld [vmem:[%s3094 + $0x90] sm:$0xff]
      %v3114 = vld [vmem:[%s3094 + $0x98] sm:$0xff]
      %v3115 = vld [vmem:[%s3094 + $0xa0] sm:$0xff]
      %v3116 = vld [vmem:[%s3094 + $0xa8] sm:$0xff]
      %v3117 = vld [vmem:[%s3094 + $0xb0] sm:$0xff]
      %v3118 = vld [vmem:[%s3094 + $0xb8] sm:$0xff]
      %v3119 = vld [vmem:[%s3094 + $0xc0] sm:$0xff]
      %v3120 = vld [vmem:[%s3094 + $0xc8] sm:$0xff]
      %v3121 = vmul.f32 %v3068, %v3095
      %v3122 = vmul.f32 %v3093, %v3096
      %v3123 = vmul.f32 %v3092, %v3097
      %v3124 = vmul.f32 %v3091, %v3098
      %v3125 = vmul.f32 %v3090, %v3099
      %v3126 = vmul.f32 %v3089, %v3100
      %v3127 = vmul.f32 %v3088, %v3101
      %v3128 = vmul.f32 %v3087, %v3102
      %v3129 = vmul.f32 %v3086, %v3103
      %v3130 = vmul.f32 %v3085, %v3104
      %v3131 = vmul.f32 %v3084, %v3105
      %v3132 = vmul.f32 %v3083, %v3106
      %v3133 = vmul.f32 %v3082, %v3107
      %v3134 = vmul.f32 %v3081, %v3108
      %v3135 = vmul.f32 %v3080, %v3109
      %v3136 = vmul.f32 %v3079, %v3110
      %v3137 = vmul.f32 %v3078, %v3111
      %v3138 = vmul.f32 %v3077, %v3112
      %v3139 = vmul.f32 %v3076, %v3113
      %v3140 = vmul.f32 %v3075, %v3114
      %v3141 = vmul.f32 %v3074, %v3115
      %v3142 = vmul.f32 %v3073, %v3116
      %v3143 = vmul.f32 %v3072, %v3117
      %v3144 = vmul.f32 %v3071, %v3118
      %v3145 = vmul.f32 %v3070, %v3119
      %v3146 = vmul.f32 %v3069, %v3120
      %s3147 = scalar_lea.vmem %s3, 8
      %v3148 = vld [vmem:[%s3147] sm:$0xff]
      %v3150 = vsel %vm391, %v3121, 0
      %v3153 = vsel %vm391, %v3122, 0
      %v3156 = vsel %vm391, %v3123, 0
      %v3159 = vsel %vm391, %v3124, 0
      %v3162 = vsel %vm391, %v3125, 0
      %v3165 = vsel %vm391, %v3126, 0
      %v3168 = vsel %vm391, %v3127, 0
      %v3171 = vsel %vm391, %v3128, 0
      %v3174 = vsel %vm391, %v3129, 0
      %v3177 = vsel %vm391, %v3130, 0
      %v3180 = vsel %vm391, %v3131, 0
      %v3183 = vsel %vm391, %v3132, 0
      %v3186 = vsel %vm391, %v3133, 0
      %v3189 = vsel %vm391, %v3134, 0
      %v3192 = vsel %vm391, %v3135, 0
      %v3195 = vsel %vm391, %v3136, 0
      %v3198 = vsel %vm391, %v3137, 0
      %v3201 = vsel %vm391, %v3138, 0
      %v3204 = vsel %vm391, %v3139, 0
      %v3207 = vsel %vm391, %v3140, 0
      %v3210 = vsel %vm391, %v3141, 0
      %v3213 = vsel %vm391, %v3142, 0
      %v3216 = vsel %vm391, %v3143, 0
      %v3219 = vsel %vm391, %v3144, 0
      %v3222 = vsel %vm391, %v3145, 0
      %v3225 = vsel %vm391, %v3146, 0
      %3227 = vmatpush.msra.mxu0 0.0
      %3228 = vmatpush.msra.mxu0 0.0
      %3229 = vmatpush.msra.mxu0 0.0
      %3230 = vmatpush.msra.mxu0 0.0
      %3231 = vmatpush.msra.mxu0 0.0
      %3232 = vmatpush.msra.mxu0 0.0
      %3233 = vmatpush.msra.mxu0 0.0
      %3234 = vmatpush.msra.mxu0 0.0
      %3235 = vmatpush.msra.mxu0 0.0
      %3236 = vmatpush.msra.mxu0 0.0
      %3237 = vmatpush.msra.mxu0 0.0
      %3238 = vmatpush.msra.mxu0 0.0
      %3239 = vmatpush.msra.mxu0 0.0
      %3240 = vmatpush.msra.mxu0 0.0
      %3241 = vmatpush.msra.mxu0 0.0
      %3242 = vmatpush.msra.mxu0 %v3148
      %3243 = vmatmul.f32.gmra.mxu0 %v3150
      %v3244 = vpop.f32.mrf.mxu0
      %v3245 = vadd.f32 0.0, %v3244
      %3246 = vmatmul.f32.gmra.mxu0 %v3153
      %v3247 = vpop.f32.mrf.mxu0
      %v3248 = vadd.f32 0.0, %v3247
      %3249 = vmatmul.f32.gmra.mxu0 %v3156
      %v3250 = vpop.f32.mrf.mxu0
      %v3251 = vadd.f32 0.0, %v3250
      %3252 = vmatmul.f32.gmra.mxu0 %v3159
      %v3253 = vpop.f32.mrf.mxu0
      %v3254 = vadd.f32 0.0, %v3253
      %3255 = vmatmul.f32.gmra.mxu0 %v3162
      %v3256 = vpop.f32.mrf.mxu0
      %v3257 = vadd.f32 0.0, %v3256
      %3258 = vmatmul.f32.gmra.mxu0 %v3165
      %v3259 = vpop.f32.mrf.mxu0
      %v3260 = vadd.f32 0.0, %v3259
      %3261 = vmatmul.f32.gmra.mxu0 %v3168
      %v3262 = vpop.f32.mrf.mxu0
      %v3263 = vadd.f32 0.0, %v3262
      %3264 = vmatmul.f32.gmra.mxu0 %v3171
      %v3265 = vpop.f32.mrf.mxu0
      %v3266 = vadd.f32 0.0, %v3265
      %3267 = vmatmul.f32.gmra.mxu0 %v3174
      %v3268 = vpop.f32.mrf.mxu0
      %v3269 = vadd.f32 0.0, %v3268
      %3270 = vmatmul.f32.gmra.mxu0 %v3177
      %v3271 = vpop.f32.mrf.mxu0
      %v3272 = vadd.f32 0.0, %v3271
      %3273 = vmatmul.f32.gmra.mxu0 %v3180
      %v3274 = vpop.f32.mrf.mxu0
      %v3275 = vadd.f32 0.0, %v3274
      %3276 = vmatmul.f32.gmra.mxu0 %v3183
      %v3277 = vpop.f32.mrf.mxu0
      %v3278 = vadd.f32 0.0, %v3277
      %3279 = vmatmul.f32.gmra.mxu0 %v3186
      %v3280 = vpop.f32.mrf.mxu0
      %v3281 = vadd.f32 0.0, %v3280
      %3282 = vmatmul.f32.gmra.mxu0 %v3189
      %v3283 = vpop.f32.mrf.mxu0
      %v3284 = vadd.f32 0.0, %v3283
      %3285 = vmatmul.f32.gmra.mxu0 %v3192
      %v3286 = vpop.f32.mrf.mxu0
      %v3287 = vadd.f32 0.0, %v3286
      %3288 = vmatmul.f32.gmra.mxu0 %v3195
      %v3289 = vpop.f32.mrf.mxu0
      %v3290 = vadd.f32 0.0, %v3289
      %3291 = vmatmul.f32.gmra.mxu0 %v3198
      %v3292 = vpop.f32.mrf.mxu0
      %v3293 = vadd.f32 0.0, %v3292
      %3294 = vmatmul.f32.gmra.mxu0 %v3201
      %v3295 = vpop.f32.mrf.mxu0
      %v3296 = vadd.f32 0.0, %v3295
      %3297 = vmatmul.f32.gmra.mxu0 %v3204
      %v3298 = vpop.f32.mrf.mxu0
      %v3299 = vadd.f32 0.0, %v3298
      %3300 = vmatmul.f32.gmra.mxu0 %v3207
      %v3301 = vpop.f32.mrf.mxu0
      %v3302 = vadd.f32 0.0, %v3301
      %3303 = vmatmul.f32.gmra.mxu0 %v3210
      %v3304 = vpop.f32.mrf.mxu0
      %v3305 = vadd.f32 0.0, %v3304
      %3306 = vmatmul.f32.gmra.mxu0 %v3213
      %v3307 = vpop.f32.mrf.mxu0
      %v3308 = vadd.f32 0.0, %v3307
      %3309 = vmatmul.f32.gmra.mxu0 %v3216
      %v3310 = vpop.f32.mrf.mxu0
      %v3311 = vadd.f32 0.0, %v3310
      %3312 = vmatmul.f32.gmra.mxu0 %v3219
      %v3313 = vpop.f32.mrf.mxu0
      %v3314 = vadd.f32 0.0, %v3313
      %3315 = vmatmul.f32.gmra.mxu0 %v3222
      %v3316 = vpop.f32.mrf.mxu0
      %v3317 = vadd.f32 0.0, %v3316
      %3318 = vmatmul.f32.gmra.mxu0 %v3225
      %v3319 = vpop.f32.mrf.mxu0
      %3320 = vdwg.mxu0
      %v3322 = vsel %vm391, %v3014, 0
      %v3325 = vsel %vm391, %v3015, 0
      %v3328 = vsel %vm391, %v3016, 0
      %v3331 = vsel %vm391, %v3017, 0
      %v3334 = vsel %vm391, %v3018, 0
      %v3337 = vsel %vm391, %v3019, 0
      %v3340 = vsel %vm391, %v3020, 0
      %v3343 = vsel %vm391, %v3021, 0
      %v3346 = vsel %vm391, %v3022, 0
      %v3349 = vsel %vm391, %v3023, 0
      %v3352 = vsel %vm391, %v3024, 0
      %v3355 = vsel %vm391, %v3025, 0
      %v3358 = vsel %vm391, %v3026, 0
      %v3361 = vsel %vm391, %v3027, 0
      %v3364 = vsel %vm391, %v3028, 0
      %v3367 = vsel %vm391, %v3029, 0
      %v3370 = vsel %vm391, %v3030, 0
      %v3373 = vsel %vm391, %v3031, 0
      %v3376 = vsel %vm391, %v3032, 0
      %v3379 = vsel %vm391, %v3033, 0
      %v3382 = vsel %vm391, %v3034, 0
      %v3385 = vsel %vm391, %v3035, 0
      %v3388 = vsel %vm391, %v3036, 0
      %v3391 = vsel %vm391, %v3037, 0
      %v3394 = vsel %vm391, %v3038, 0
      %v3397 = vsel %vm391, %v3039, 0
      %3399 = vmatpush.msra.mxu0 0.0
      %3400 = vmatpush.msra.mxu0 0.0
      %3401 = vmatpush.msra.mxu0 0.0
      %3402 = vmatpush.msra.mxu0 0.0
      %3403 = vmatpush.msra.mxu0 0.0
      %3404 = vmatpush.msra.mxu0 0.0
      %3405 = vmatpush.msra.mxu0 0.0
      %3406 = vmatpush.msra.mxu0 0.0
      %3407 = vmatpush.msra.mxu0 0.0
      %3408 = vmatpush.msra.mxu0 0.0
      %3409 = vmatpush.msra.mxu0 0.0
      %3410 = vmatpush.msra.mxu0 0.0
      %3411 = vmatpush.msra.mxu0 0.0
      %3412 = vmatpush.msra.mxu0 0.0
      %3413 = vmatpush.msra.mxu0 0.0
      %3414 = vmatpush.msra.mxu0 %v3040
      %3415 = vmatmul.f32.gmra.mxu0 %v3322
      %v3416 = vpop.f32.mrf.mxu0
      %v3417 = vadd.f32 %v3245, %v3416
      %3418 = vmatmul.f32.gmra.mxu0 %v3325
      %v3419 = vpop.f32.mrf.mxu0
      %v3420 = vadd.f32 %v3248, %v3419
      %3421 = vmatmul.f32.gmra.mxu0 %v3328
      %v3422 = vpop.f32.mrf.mxu0
      %v3423 = vadd.f32 %v3251, %v3422
      %3424 = vmatmul.f32.gmra.mxu0 %v3331
      %v3425 = vpop.f32.mrf.mxu0
      %v3426 = vadd.f32 %v3254, %v3425
      %3427 = vmatmul.f32.gmra.mxu0 %v3334
      %v3428 = vpop.f32.mrf.mxu0
      %v3429 = vadd.f32 %v3257, %v3428
      %3430 = vmatmul.f32.gmra.mxu0 %v3337
      %v3431 = vpop.f32.mrf.mxu0
      %v3432 = vadd.f32 %v3260, %v3431
      %3433 = vmatmul.f32.gmra.mxu0 %v3340
      %v3434 = vpop.f32.mrf.mxu0
      %v3435 = vadd.f32 %v3263, %v3434
      %3436 = vmatmul.f32.gmra.mxu0 %v3343
      %v3437 = vpop.f32.mrf.mxu0
      %v3438 = vadd.f32 %v3266, %v3437
      %3439 = vmatmul.f32.gmra.mxu0 %v3346
      %v3440 = vpop.f32.mrf.mxu0
      %v3441 = vadd.f32 %v3269, %v3440
      %3442 = vmatmul.f32.gmra.mxu0 %v3349
      %v3443 = vpop.f32.mrf.mxu0
      %v3444 = vadd.f32 %v3272, %v3443
      %3445 = vmatmul.f32.gmra.mxu0 %v3352
      %v3446 = vpop.f32.mrf.mxu0
      %v3447 = vadd.f32 %v3275, %v3446
      %3448 = vmatmul.f32.gmra.mxu0 %v3355
      %v3449 = vpop.f32.mrf.mxu0
      %v3450 = vadd.f32 %v3278, %v3449
      %3451 = vmatmul.f32.gmra.mxu0 %v3358
      %v3452 = vpop.f32.mrf.mxu0
      %v3453 = vadd.f32 %v3281, %v3452
      %3454 = vmatmul.f32.gmra.mxu0 %v3361
      %v3455 = vpop.f32.mrf.mxu0
      %v3456 = vadd.f32 %v3284, %v3455
      %3457 = vmatmul.f32.gmra.mxu0 %v3364
      %v3458 = vpop.f32.mrf.mxu0
      %v3459 = vadd.f32 %v3287, %v3458
      %3460 = vmatmul.f32.gmra.mxu0 %v3367
      %v3461 = vpop.f32.mrf.mxu0
      %v3462 = vadd.f32 %v3290, %v3461
      %3463 = vmatmul.f32.gmra.mxu0 %v3370
      %v3464 = vpop.f32.mrf.mxu0
      %v3465 = vadd.f32 %v3293, %v3464
      %3466 = vmatmul.f32.gmra.mxu0 %v3373
      %v3467 = vpop.f32.mrf.mxu0
      %v3468 = vadd.f32 %v3296, %v3467
      %3469 = vmatmul.f32.gmra.mxu0 %v3376
      %v3470 = vpop.f32.mrf.mxu0
      %v3471 = vadd.f32 %v3299, %v3470
      %3472 = vmatmul.f32.gmra.mxu0 %v3379
      %v3473 = vpop.f32.mrf.mxu0
      %v3474 = vadd.f32 %v3302, %v3473
      %3475 = vmatmul.f32.gmra.mxu0 %v3382
      %v3476 = vpop.f32.mrf.mxu0
      %v3477 = vadd.f32 %v3305, %v3476
      %3478 = vmatmul.f32.gmra.mxu0 %v3385
      %v3479 = vpop.f32.mrf.mxu0
      %v3480 = vadd.f32 %v3308, %v3479
      %3481 = vmatmul.f32.gmra.mxu0 %v3388
      %v3482 = vpop.f32.mrf.mxu0
      %v3483 = vadd.f32 %v3311, %v3482
      %3484 = vmatmul.f32.gmra.mxu0 %v3391
      %v3485 = vpop.f32.mrf.mxu0
      %v3486 = vadd.f32 %v3314, %v3485
      %3487 = vmatmul.f32.gmra.mxu0 %v3394
      %v3488 = vpop.f32.mrf.mxu0
      %v3489 = vadd.f32 %v3317, %v3488
      %3490 = vmatmul.f32.gmra.mxu0 %v3397
      %v3491 = vpop.f32.mrf.mxu0
      %3492 = vdwg.mxu0
      %v3493 = vrot.slane %v2907, 3
      %v3494 = vrot.slane %v2908, 3
      %v3495 = vrot.slane %v2909, 3
      %v3496 = vrot.slane %v2910, 3
      %v3497 = vrot.slane %v2911, 3
      %v3498 = vrot.slane %v2912, 3
      %v3499 = vrot.slane %v2913, 3
      %v3500 = vrot.slane %v2914, 3
      %v3501 = vrot.slane %v2915, 3
      %v3502 = vrot.slane %v2916, 3
      %v3503 = vrot.slane %v2917, 3
      %v3504 = vrot.slane %v2918, 3
      %v3505 = vrot.slane %v2919, 3
      %v3506 = vrot.slane %v2920, 3
      %v3507 = vrot.slane %v2921, 3
      %v3508 = vrot.slane %v2922, 3
      %v3509 = vrot.slane %v2923, 3
      %v3510 = vrot.slane %v2924, 3
      %v3511 = vrot.slane %v2925, 3
      %v3512 = vrot.slane %v2926, 3
      %v3513 = vrot.slane %v2927, 3
      %v3514 = vrot.slane %v2928, 3
      %v3515 = vrot.slane %v2929, 3
      %v3516 = vrot.slane %v2930, 3
      %v3517 = vrot.slane %v2931, 3
      %v3518 = vrot.slane %v2932, 3
      %vm3519 = vcmp.lt.s32.totalorder %v2960, 5
      %v3520 = vsel %vm3519, %v3517, %v3518
      %v3521 = vsel %vm3519, %v3516, %v3517
      %v3522 = vsel %vm3519, %v3515, %v3516
      %v3523 = vsel %vm3519, %v3514, %v3515
      %v3524 = vsel %vm3519, %v3513, %v3514
      %v3525 = vsel %vm3519, %v3512, %v3513
      %v3526 = vsel %vm3519, %v3511, %v3512
      %v3527 = vsel %vm3519, %v3510, %v3511
      %v3528 = vsel %vm3519, %v3509, %v3510
      %v3529 = vsel %vm3519, %v3508, %v3509
      %v3530 = vsel %vm3519, %v3507, %v3508
      %v3531 = vsel %vm3519, %v3506, %v3507
      %v3532 = vsel %vm3519, %v3505, %v3506
      %v3533 = vsel %vm3519, %v3504, %v3505
      %v3534 = vsel %vm3519, %v3503, %v3504
      %v3535 = vsel %vm3519, %v3502, %v3503
      %v3536 = vsel %vm3519, %v3501, %v3502
      %v3537 = vsel %vm3519, %v3500, %v3501
      %v3538 = vsel %vm3519, %v3499, %v3500
      %v3539 = vsel %vm3519, %v3498, %v3499
      %v3540 = vsel %vm3519, %v3497, %v3498
      %v3541 = vsel %vm3519, %v3496, %v3497
      %v3542 = vsel %vm3519, %v3495, %v3496
      %v3543 = vsel %vm3519, %v3494, %v3495
      %v3544 = vsel %vm3519, %v3493, %v3494
      %v3545 = vsel %vm3519, %v3518, %v3493
      %s3546 = scalar_lea.vmem %s6, 416
      %v3547 = vld [vmem:[%s3546] sm:$0xff]
      %v3548 = vld [vmem:[%s3546 + $0x8] sm:$0xff]
      %v3549 = vld [vmem:[%s3546 + $0x10] sm:$0xff]
      %v3550 = vld [vmem:[%s3546 + $0x18] sm:$0xff]
      %v3551 = vld [vmem:[%s3546 + $0x20] sm:$0xff]
      %v3552 = vld [vmem:[%s3546 + $0x28] sm:$0xff]
      %v3553 = vld [vmem:[%s3546 + $0x30] sm:$0xff]
      %v3554 = vld [vmem:[%s3546 + $0x38] sm:$0xff]
      %v3555 = vld [vmem:[%s3546 + $0x40] sm:$0xff]
      %v3556 = vld [vmem:[%s3546 + $0x48] sm:$0xff]
      %v3557 = vld [vmem:[%s3546 + $0x50] sm:$0xff]
      %v3558 = vld [vmem:[%s3546 + $0x58] sm:$0xff]
      %v3559 = vld [vmem:[%s3546 + $0x60] sm:$0xff]
      %v3560 = vld [vmem:[%s3546 + $0x68] sm:$0xff]
      %v3561 = vld [vmem:[%s3546 + $0x70] sm:$0xff]
      %v3562 = vld [vmem:[%s3546 + $0x78] sm:$0xff]
      %v3563 = vld [vmem:[%s3546 + $0x80] sm:$0xff]
      %v3564 = vld [vmem:[%s3546 + $0x88] sm:$0xff]
      %v3565 = vld [vmem:[%s3546 + $0x90] sm:$0xff]
      %v3566 = vld [vmem:[%s3546 + $0x98] sm:$0xff]
      %v3567 = vld [vmem:[%s3546 + $0xa0] sm:$0xff]
      %v3568 = vld [vmem:[%s3546 + $0xa8] sm:$0xff]
      %v3569 = vld [vmem:[%s3546 + $0xb0] sm:$0xff]
      %v3570 = vld [vmem:[%s3546 + $0xb8] sm:$0xff]
      %v3571 = vld [vmem:[%s3546 + $0xc0] sm:$0xff]
      %v3572 = vld [vmem:[%s3546 + $0xc8] sm:$0xff]
      %v3573 = vmul.f32 %v3520, %v3547
      %v3574 = vmul.f32 %v3545, %v3548
      %v3575 = vmul.f32 %v3544, %v3549
      %v3576 = vmul.f32 %v3543, %v3550
      %v3577 = vmul.f32 %v3542, %v3551
      %v3578 = vmul.f32 %v3541, %v3552
      %v3579 = vmul.f32 %v3540, %v3553
      %v3580 = vmul.f32 %v3539, %v3554
      %v3581 = vmul.f32 %v3538, %v3555
      %v3582 = vmul.f32 %v3537, %v3556
      %v3583 = vmul.f32 %v3536, %v3557
      %v3584 = vmul.f32 %v3535, %v3558
      %v3585 = vmul.f32 %v3534, %v3559
      %v3586 = vmul.f32 %v3533, %v3560
      %v3587 = vmul.f32 %v3532, %v3561
      %v3588 = vmul.f32 %v3531, %v3562
      %v3589 = vmul.f32 %v3530, %v3563
      %v3590 = vmul.f32 %v3529, %v3564
      %v3591 = vmul.f32 %v3528, %v3565
      %v3592 = vmul.f32 %v3527, %v3566
      %v3593 = vmul.f32 %v3526, %v3567
      %v3594 = vmul.f32 %v3525, %v3568
      %v3595 = vmul.f32 %v3524, %v3569
      %v3596 = vmul.f32 %v3523, %v3570
      %v3597 = vmul.f32 %v3522, %v3571
      %v3598 = vmul.f32 %v3521, %v3572
      %s3599 = scalar_lea.vmem %s3, 16
      %v3600 = vld [vmem:[%s3599] sm:$0xff]
      %v3602 = vsel %vm391, %v3573, 0
      %v3605 = vsel %vm391, %v3574, 0
      %v3608 = vsel %vm391, %v3575, 0
      %v3611 = vsel %vm391, %v3576, 0
      %v3614 = vsel %vm391, %v3577, 0
      %v3617 = vsel %vm391, %v3578, 0
      %v3620 = vsel %vm391, %v3579, 0
      %v3623 = vsel %vm391, %v3580, 0
      %v3626 = vsel %vm391, %v3581, 0
      %v3629 = vsel %vm391, %v3582, 0
      %v3632 = vsel %vm391, %v3583, 0
      %v3635 = vsel %vm391, %v3584, 0
      %v3638 = vsel %vm391, %v3585, 0
      %v3641 = vsel %vm391, %v3586, 0
      %v3644 = vsel %vm391, %v3587, 0
      %v3647 = vsel %vm391, %v3588, 0
      %v3650 = vsel %vm391, %v3589, 0
      %v3653 = vsel %vm391, %v3590, 0
      %v3656 = vsel %vm391, %v3591, 0
      %v3659 = vsel %vm391, %v3592, 0
      %v3662 = vsel %vm391, %v3593, 0
      %v3665 = vsel %vm391, %v3594, 0
      %v3668 = vsel %vm391, %v3595, 0
      %v3671 = vsel %vm391, %v3596, 0
      %v3674 = vsel %vm391, %v3597, 0
      %v3677 = vsel %vm391, %v3598, 0
      %3679 = vmatpush.msra.mxu0 0.0
      %3680 = vmatpush.msra.mxu0 0.0
      %3681 = vmatpush.msra.mxu0 0.0
      %3682 = vmatpush.msra.mxu0 0.0
      %3683 = vmatpush.msra.mxu0 0.0
      %3684 = vmatpush.msra.mxu0 0.0
      %3685 = vmatpush.msra.mxu0 0.0
      %3686 = vmatpush.msra.mxu0 0.0
      %3687 = vmatpush.msra.mxu0 0.0
      %3688 = vmatpush.msra.mxu0 0.0
      %3689 = vmatpush.msra.mxu0 0.0
      %3690 = vmatpush.msra.mxu0 0.0
      %3691 = vmatpush.msra.mxu0 0.0
      %3692 = vmatpush.msra.mxu0 0.0
      %3693 = vmatpush.msra.mxu0 0.0
      %3694 = vmatpush.msra.mxu0 %v3600
      %3695 = vmatmul.f32.gmra.mxu0 %v3602
      %v3696 = vpop.f32.mrf.mxu0
      %v3697 = vadd.f32 0.0, %v3696
      %3698 = vmatmul.f32.gmra.mxu0 %v3605
      %v3699 = vpop.f32.mrf.mxu0
      %v3700 = vadd.f32 0.0, %v3699
      %3701 = vmatmul.f32.gmra.mxu0 %v3608
      %v3702 = vpop.f32.mrf.mxu0
      %v3703 = vadd.f32 0.0, %v3702
      %3704 = vmatmul.f32.gmra.mxu0 %v3611
      %v3705 = vpop.f32.mrf.mxu0
      %v3706 = vadd.f32 0.0, %v3705
      %3707 = vmatmul.f32.gmra.mxu0 %v3614
      %v3708 = vpop.f32.mrf.mxu0
      %v3709 = vadd.f32 0.0, %v3708
      %3710 = vmatmul.f32.gmra.mxu0 %v3617
      %v3711 = vpop.f32.mrf.mxu0
      %v3712 = vadd.f32 0.0, %v3711
      %3713 = vmatmul.f32.gmra.mxu0 %v3620
      %v3714 = vpop.f32.mrf.mxu0
      %v3715 = vadd.f32 0.0, %v3714
      %3716 = vmatmul.f32.gmra.mxu0 %v3623
      %v3717 = vpop.f32.mrf.mxu0
      %v3718 = vadd.f32 0.0, %v3717
      %3719 = vmatmul.f32.gmra.mxu0 %v3626
      %v3720 = vpop.f32.mrf.mxu0
      %v3721 = vadd.f32 0.0, %v3720
      %3722 = vmatmul.f32.gmra.mxu0 %v3629
      %v3723 = vpop.f32.mrf.mxu0
      %v3724 = vadd.f32 0.0, %v3723
      %3725 = vmatmul.f32.gmra.mxu0 %v3632
      %v3726 = vpop.f32.mrf.mxu0
      %v3727 = vadd.f32 0.0, %v3726
      %3728 = vmatmul.f32.gmra.mxu0 %v3635
      %v3729 = vpop.f32.mrf.mxu0
      %v3730 = vadd.f32 0.0, %v3729
      %3731 = vmatmul.f32.gmra.mxu0 %v3638
      %v3732 = vpop.f32.mrf.mxu0
      %v3733 = vadd.f32 0.0, %v3732
      %3734 = vmatmul.f32.gmra.mxu0 %v3641
      %v3735 = vpop.f32.mrf.mxu0
      %v3736 = vadd.f32 0.0, %v3735
      %3737 = vmatmul.f32.gmra.mxu0 %v3644
      %v3738 = vpop.f32.mrf.mxu0
      %v3739 = vadd.f32 0.0, %v3738
      %3740 = vmatmul.f32.gmra.mxu0 %v3647
      %v3741 = vpop.f32.mrf.mxu0
      %v3742 = vadd.f32 0.0, %v3741
      %3743 = vmatmul.f32.gmra.mxu0 %v3650
      %v3744 = vpop.f32.mrf.mxu0
      %v3745 = vadd.f32 0.0, %v3744
      %3746 = vmatmul.f32.gmra.mxu0 %v3653
      %v3747 = vpop.f32.mrf.mxu0
      %v3748 = vadd.f32 0.0, %v3747
      %3749 = vmatmul.f32.gmra.mxu0 %v3656
      %v3750 = vpop.f32.mrf.mxu0
      %v3751 = vadd.f32 0.0, %v3750
      %3752 = vmatmul.f32.gmra.mxu0 %v3659
      %v3753 = vpop.f32.mrf.mxu0
      %v3754 = vadd.f32 0.0, %v3753
      %3755 = vmatmul.f32.gmra.mxu0 %v3662
      %v3756 = vpop.f32.mrf.mxu0
      %v3757 = vadd.f32 0.0, %v3756
      %3758 = vmatmul.f32.gmra.mxu0 %v3665
      %v3759 = vpop.f32.mrf.mxu0
      %v3760 = vadd.f32 0.0, %v3759
      %3761 = vmatmul.f32.gmra.mxu0 %v3668
      %v3762 = vpop.f32.mrf.mxu0
      %v3763 = vadd.f32 0.0, %v3762
      %3764 = vmatmul.f32.gmra.mxu0 %v3671
      %v3765 = vpop.f32.mrf.mxu0
      %v3766 = vadd.f32 0.0, %v3765
      %3767 = vmatmul.f32.gmra.mxu0 %v3674
      %v3768 = vpop.f32.mrf.mxu0
      %v3769 = vadd.f32 0.0, %v3768
      %3770 = vmatmul.f32.gmra.mxu0 %v3677
      %v3771 = vpop.f32.mrf.mxu0
      %3772 = vdwg.mxu0
      %v3773 = vadd.f32 %v3417, %v3697
      %v3774 = vadd.f32 %v3420, %v3700
      %v3775 = vadd.f32 %v3423, %v3703
      %v3776 = vadd.f32 %v3426, %v3706
      %v3777 = vadd.f32 %v3429, %v3709
      %v3778 = vadd.f32 %v3432, %v3712
      %v3779 = vadd.f32 %v3435, %v3715
      %v3780 = vadd.f32 %v3438, %v3718
      %v3781 = vadd.f32 %v3441, %v3721
      %v3782 = vadd.f32 %v3444, %v3724
      %v3783 = vadd.f32 %v3447, %v3727
      %v3784 = vadd.f32 %v3450, %v3730
      %v3785 = vadd.f32 %v3453, %v3733
      %v3786 = vadd.f32 %v3456, %v3736
      %v3787 = vadd.f32 %v3459, %v3739
      %v3788 = vadd.f32 %v3462, %v3742
      %v3789 = vadd.f32 %v3465, %v3745
      %v3790 = vadd.f32 %v3468, %v3748
      %v3791 = vadd.f32 %v3471, %v3751
      %v3792 = vadd.f32 %v3474, %v3754
      %v3793 = vadd.f32 %v3477, %v3757
      %v3794 = vadd.f32 %v3480, %v3760
      %v3795 = vadd.f32 %v3483, %v3763
      %v3796 = vadd.f32 %v3486, %v3766
      %v3797 = vadd.f32 %v3489, %v3769
      %v3798 = vrot.slane %v2907, 7
      %v3799 = vrot.slane %v2908, 7
      %v3800 = vrot.slane %v2909, 7
      %v3801 = vrot.slane %v2910, 7
      %v3802 = vrot.slane %v2911, 7
      %v3803 = vrot.slane %v2912, 7
      %v3804 = vrot.slane %v2913, 7
      %v3805 = vrot.slane %v2914, 7
      %v3806 = vrot.slane %v2915, 7
      %v3807 = vrot.slane %v2916, 7
      %v3808 = vrot.slane %v2917, 7
      %v3809 = vrot.slane %v2918, 7
      %v3810 = vrot.slane %v2919, 7
      %v3811 = vrot.slane %v2920, 7
      %v3812 = vrot.slane %v2921, 7
      %v3813 = vrot.slane %v2922, 7
      %v3814 = vrot.slane %v2923, 7
      %v3815 = vrot.slane %v2924, 7
      %v3816 = vrot.slane %v2925, 7
      %v3817 = vrot.slane %v2926, 7
      %v3818 = vrot.slane %v2927, 7
      %v3819 = vrot.slane %v2928, 7
      %v3820 = vrot.slane %v2929, 7
      %v3821 = vrot.slane %v2930, 7
      %v3822 = vrot.slane %v2931, 7
      %v3823 = vrot.slane %v2932, 7
      %vm3824 = vcmp.lt.s32.totalorder %v2960, 1
      %v3825 = vsel %vm3824, %v3822, %v3823
      %v3826 = vsel %vm3824, %v3821, %v3822
      %v3827 = vsel %vm3824, %v3820, %v3821
      %v3828 = vsel %vm3824, %v3819, %v3820
      %v3829 = vsel %vm3824, %v3818, %v3819
      %v3830 = vsel %vm3824, %v3817, %v3818
      %v3831 = vsel %vm3824, %v3816, %v3817
      %v3832 = vsel %vm3824, %v3815, %v3816
      %v3833 = vsel %vm3824, %v3814, %v3815
      %v3834 = vsel %vm3824, %v3813, %v3814
      %v3835 = vsel %vm3824, %v3812, %v3813
      %v3836 = vsel %vm3824, %v3811, %v3812
      %v3837 = vsel %vm3824, %v3810, %v3811
      %v3838 = vsel %vm3824, %v3809, %v3810
      %v3839 = vsel %vm3824, %v3808, %v3809
      %v3840 = vsel %vm3824, %v3807, %v3808
      %v3841 = vsel %vm3824, %v3806, %v3807
      %v3842 = vsel %vm3824, %v3805, %v3806
      %v3843 = vsel %vm3824, %v3804, %v3805
      %v3844 = vsel %vm3824, %v3803, %v3804
      %v3845 = vsel %vm3824, %v3802, %v3803
      %v3846 = vsel %vm3824, %v3801, %v3802
      %v3847 = vsel %vm3824, %v3800, %v3801
      %v3848 = vsel %vm3824, %v3799, %v3800
      %v3849 = vsel %vm3824, %v3798, %v3799
      %v3850 = vsel %vm3824, %v3823, %v3798
      %s3851 = scalar_lea.vmem %s6, 624
      %v3852 = vld [vmem:[%s3851] sm:$0xff]
      %v3853 = vld [vmem:[%s3851 + $0x8] sm:$0xff]
      %v3854 = vld [vmem:[%s3851 + $0x10] sm:$0xff]
      %v3855 = vld [vmem:[%s3851 + $0x18] sm:$0xff]
      %v3856 = vld [vmem:[%s3851 + $0x20] sm:$0xff]
      %v3857 = vld [vmem:[%s3851 + $0x28] sm:$0xff]
      %v3858 = vld [vmem:[%s3851 + $0x30] sm:$0xff]
      %v3859 = vld [vmem:[%s3851 + $0x38] sm:$0xff]
      %v3860 = vld [vmem:[%s3851 + $0x40] sm:$0xff]
      %v3861 = vld [vmem:[%s3851 + $0x48] sm:$0xff]
      %v3862 = vld [vmem:[%s3851 + $0x50] sm:$0xff]
      %v3863 = vld [vmem:[%s3851 + $0x58] sm:$0xff]
      %v3864 = vld [vmem:[%s3851 + $0x60] sm:$0xff]
      %v3865 = vld [vmem:[%s3851 + $0x68] sm:$0xff]
      %v3866 = vld [vmem:[%s3851 + $0x70] sm:$0xff]
      %v3867 = vld [vmem:[%s3851 + $0x78] sm:$0xff]
      %v3868 = vld [vmem:[%s3851 + $0x80] sm:$0xff]
      %v3869 = vld [vmem:[%s3851 + $0x88] sm:$0xff]
      %v3870 = vld [vmem:[%s3851 + $0x90] sm:$0xff]
      %v3871 = vld [vmem:[%s3851 + $0x98] sm:$0xff]
      %v3872 = vld [vmem:[%s3851 + $0xa0] sm:$0xff]
      %v3873 = vld [vmem:[%s3851 + $0xa8] sm:$0xff]
      %v3874 = vld [vmem:[%s3851 + $0xb0] sm:$0xff]
      %v3875 = vld [vmem:[%s3851 + $0xb8] sm:$0xff]
      %v3876 = vld [vmem:[%s3851 + $0xc0] sm:$0xff]
      %v3877 = vld [vmem:[%s3851 + $0xc8] sm:$0xff]
      %v3878 = vmul.f32 %v3850, %v3852
      %v3879 = vmul.f32 %v3849, %v3853
      %v3880 = vmul.f32 %v3848, %v3854
      %v3881 = vmul.f32 %v3847, %v3855
      %v3882 = vmul.f32 %v3846, %v3856
      %v3883 = vmul.f32 %v3845, %v3857
      %v3884 = vmul.f32 %v3844, %v3858
      %v3885 = vmul.f32 %v3843, %v3859
      %v3886 = vmul.f32 %v3842, %v3860
      %v3887 = vmul.f32 %v3841, %v3861
      %v3888 = vmul.f32 %v3840, %v3862
      %v3889 = vmul.f32 %v3839, %v3863
      %v3890 = vmul.f32 %v3838, %v3864
      %v3891 = vmul.f32 %v3837, %v3865
      %v3892 = vmul.f32 %v3836, %v3866
      %v3893 = vmul.f32 %v3835, %v3867
      %v3894 = vmul.f32 %v3834, %v3868
      %v3895 = vmul.f32 %v3833, %v3869
      %v3896 = vmul.f32 %v3832, %v3870
      %v3897 = vmul.f32 %v3831, %v3871
      %v3898 = vmul.f32 %v3830, %v3872
      %v3899 = vmul.f32 %v3829, %v3873
      %v3900 = vmul.f32 %v3828, %v3874
      %v3901 = vmul.f32 %v3827, %v3875
      %v3902 = vmul.f32 %v3826, %v3876
      %v3903 = vmul.f32 %v3825, %v3877
      %s3904 = scalar_lea.vmem %s3, 24
      %v3905 = vld [vmem:[%s3904] sm:$0xff]
      %v3907 = vsel %vm391, %v3878, 0
      %v3910 = vsel %vm391, %v3879, 0
      %v3913 = vsel %vm391, %v3880, 0
      %v3916 = vsel %vm391, %v3881, 0
      %v3919 = vsel %vm391, %v3882, 0
      %v3922 = vsel %vm391, %v3883, 0
      %v3925 = vsel %vm391, %v3884, 0
      %v3928 = vsel %vm391, %v3885, 0
      %v3931 = vsel %vm391, %v3886, 0
      %v3934 = vsel %vm391, %v3887, 0
      %v3937 = vsel %vm391, %v3888, 0
      %v3940 = vsel %vm391, %v3889, 0
      %v3943 = vsel %vm391, %v3890, 0
      %v3946 = vsel %vm391, %v3891, 0
      %v3949 = vsel %vm391, %v3892, 0
      %v3952 = vsel %vm391, %v3893, 0
      %v3955 = vsel %vm391, %v3894, 0
      %v3958 = vsel %vm391, %v3895, 0
      %v3961 = vsel %vm391, %v3896, 0
      %v3964 = vsel %vm391, %v3897, 0
      %v3967 = vsel %vm391, %v3898, 0
      %v3970 = vsel %vm391, %v3899, 0
      %v3973 = vsel %vm391, %v3900, 0
      %v3976 = vsel %vm391, %v3901, 0
      %v3979 = vsel %vm391, %v3902, 0
      %v3982 = vsel %vm391, %v3903, 0
      %3984 = vmatpush.msra.mxu0 0.0
      %3985 = vmatpush.msra.mxu0 0.0
      %3986 = vmatpush.msra.mxu0 0.0
      %3987 = vmatpush.msra.mxu0 0.0
      %3988 = vmatpush.msra.mxu0 0.0
      %3989 = vmatpush.msra.mxu0 0.0
      %3990 = vmatpush.msra.mxu0 0.0
      %3991 = vmatpush.msra.mxu0 0.0
      %3992 = vmatpush.msra.mxu0 0.0
      %3993 = vmatpush.msra.mxu0 0.0
      %3994 = vmatpush.msra.mxu0 0.0
      %3995 = vmatpush.msra.mxu0 0.0
      %3996 = vmatpush.msra.mxu0 0.0
      %3997 = vmatpush.msra.mxu0 0.0
      %3998 = vmatpush.msra.mxu0 0.0
      %3999 = vmatpush.msra.mxu0 %v3905
      %4000 = vmatmul.f32.gmra.mxu0 %v3907
      %v4001 = vpop.f32.mrf.mxu0
      %v4002 = vadd.f32 0.0, %v4001
      %4003 = vmatmul.f32.gmra.mxu0 %v3910
      %v4004 = vpop.f32.mrf.mxu0
      %v4005 = vadd.f32 0.0, %v4004
      %4006 = vmatmul.f32.gmra.mxu0 %v3913
      %v4007 = vpop.f32.mrf.mxu0
      %v4008 = vadd.f32 0.0, %v4007
      %4009 = vmatmul.f32.gmra.mxu0 %v3916
      %v4010 = vpop.f32.mrf.mxu0
      %v4011 = vadd.f32 0.0, %v4010
      %4012 = vmatmul.f32.gmra.mxu0 %v3919
      %v4013 = vpop.f32.mrf.mxu0
      %v4014 = vadd.f32 0.0, %v4013
      %4015 = vmatmul.f32.gmra.mxu0 %v3922
      %v4016 = vpop.f32.mrf.mxu0
      %v4017 = vadd.f32 0.0, %v4016
      %4018 = vmatmul.f32.gmra.mxu0 %v3925
      %v4019 = vpop.f32.mrf.mxu0
      %v4020 = vadd.f32 0.0, %v4019
      %4021 = vmatmul.f32.gmra.mxu0 %v3928
      %v4022 = vpop.f32.mrf.mxu0
      %v4023 = vadd.f32 0.0, %v4022
      %4024 = vmatmul.f32.gmra.mxu0 %v3931
      %v4025 = vpop.f32.mrf.mxu0
      %v4026 = vadd.f32 0.0, %v4025
      %4027 = vmatmul.f32.gmra.mxu0 %v3934
      %v4028 = vpop.f32.mrf.mxu0
      %v4029 = vadd.f32 0.0, %v4028
      %4030 = vmatmul.f32.gmra.mxu0 %v3937
      %v4031 = vpop.f32.mrf.mxu0
      %v4032 = vadd.f32 0.0, %v4031
      %4033 = vmatmul.f32.gmra.mxu0 %v3940
      %v4034 = vpop.f32.mrf.mxu0
      %v4035 = vadd.f32 0.0, %v4034
      %4036 = vmatmul.f32.gmra.mxu0 %v3943
      %v4037 = vpop.f32.mrf.mxu0
      %v4038 = vadd.f32 0.0, %v4037
      %4039 = vmatmul.f32.gmra.mxu0 %v3946
      %v4040 = vpop.f32.mrf.mxu0
      %v4041 = vadd.f32 0.0, %v4040
      %4042 = vmatmul.f32.gmra.mxu0 %v3949
      %v4043 = vpop.f32.mrf.mxu0
      %v4044 = vadd.f32 0.0, %v4043
      %4045 = vmatmul.f32.gmra.mxu0 %v3952
      %v4046 = vpop.f32.mrf.mxu0
      %v4047 = vadd.f32 0.0, %v4046
      %4048 = vmatmul.f32.gmra.mxu0 %v3955
      %v4049 = vpop.f32.mrf.mxu0
      %v4050 = vadd.f32 0.0, %v4049
      %4051 = vmatmul.f32.gmra.mxu0 %v3958
      %v4052 = vpop.f32.mrf.mxu0
      %v4053 = vadd.f32 0.0, %v4052
      %4054 = vmatmul.f32.gmra.mxu0 %v3961
      %v4055 = vpop.f32.mrf.mxu0
      %v4056 = vadd.f32 0.0, %v4055
      %4057 = vmatmul.f32.gmra.mxu0 %v3964
      %v4058 = vpop.f32.mrf.mxu0
      %v4059 = vadd.f32 0.0, %v4058
      %4060 = vmatmul.f32.gmra.mxu0 %v3967
      %v4061 = vpop.f32.mrf.mxu0
      %v4062 = vadd.f32 0.0, %v4061
      %4063 = vmatmul.f32.gmra.mxu0 %v3970
      %v4064 = vpop.f32.mrf.mxu0
      %v4065 = vadd.f32 0.0, %v4064
      %4066 = vmatmul.f32.gmra.mxu0 %v3973
      %v4067 = vpop.f32.mrf.mxu0
      %v4068 = vadd.f32 0.0, %v4067
      %4069 = vmatmul.f32.gmra.mxu0 %v3976
      %v4070 = vpop.f32.mrf.mxu0
      %v4071 = vadd.f32 0.0, %v4070
      %4072 = vmatmul.f32.gmra.mxu0 %v3979
      %v4073 = vpop.f32.mrf.mxu0
      %v4074 = vadd.f32 0.0, %v4073
      %4075 = vmatmul.f32.gmra.mxu0 %v3982
      %v4076 = vpop.f32.mrf.mxu0
      %4077 = vdwg.mxu0
      %v4078 = vadd.f32 %v3773, %v4002
      %v4079 = vadd.f32 %v3774, %v4005
      %v4080 = vadd.f32 %v3775, %v4008
      %v4081 = vadd.f32 %v3776, %v4011
      %v4082 = vadd.f32 %v3777, %v4014
      %v4083 = vadd.f32 %v3778, %v4017
      %v4084 = vadd.f32 %v3779, %v4020
      %v4085 = vadd.f32 %v3780, %v4023
      %v4086 = vadd.f32 %v3781, %v4026
      %v4087 = vadd.f32 %v3782, %v4029
      %v4088 = vadd.f32 %v3783, %v4032
      %v4089 = vadd.f32 %v3784, %v4035
      %v4090 = vadd.f32 %v3785, %v4038
      %v4091 = vadd.f32 %v3786, %v4041
      %v4092 = vadd.f32 %v3787, %v4044
      %v4093 = vadd.f32 %v3788, %v4047
      %v4094 = vadd.f32 %v3789, %v4050
      %v4095 = vadd.f32 %v3790, %v4053
      %v4096 = vadd.f32 %v3791, %v4056
      %v4097 = vadd.f32 %v3792, %v4059
      %v4098 = vadd.f32 %v3793, %v4062
      %v4099 = vadd.f32 %v3794, %v4065
      %v4100 = vadd.f32 %v3795, %v4068
      %v4101 = vadd.f32 %v3796, %v4071
      %v4102 = vadd.f32 %v3797, %v4074
      %s4103 = scalar_lea.vmem %s6, 832
      %v4104 = vld [vmem:[%s4103] sm:$0xff]
      %v4105 = vld [vmem:[%s4103 + $0x8] sm:$0xff]
      %v4106 = vld [vmem:[%s4103 + $0x10] sm:$0xff]
      %v4107 = vld [vmem:[%s4103 + $0x18] sm:$0xff]
      %v4108 = vld [vmem:[%s4103 + $0x20] sm:$0xff]
      %v4109 = vld [vmem:[%s4103 + $0x28] sm:$0xff]
      %v4110 = vld [vmem:[%s4103 + $0x30] sm:$0xff]
      %v4111 = vld [vmem:[%s4103 + $0x38] sm:$0xff]
      %v4112 = vld [vmem:[%s4103 + $0x40] sm:$0xff]
      %v4113 = vld [vmem:[%s4103 + $0x48] sm:$0xff]
      %v4114 = vld [vmem:[%s4103 + $0x50] sm:$0xff]
      %v4115 = vld [vmem:[%s4103 + $0x58] sm:$0xff]
      %v4116 = vld [vmem:[%s4103 + $0x60] sm:$0xff]
      %v4117 = vld [vmem:[%s4103 + $0x68] sm:$0xff]
      %v4118 = vld [vmem:[%s4103 + $0x70] sm:$0xff]
      %v4119 = vld [vmem:[%s4103 + $0x78] sm:$0xff]
      %v4120 = vld [vmem:[%s4103 + $0x80] sm:$0xff]
      %v4121 = vld [vmem:[%s4103 + $0x88] sm:$0xff]
      %v4122 = vld [vmem:[%s4103 + $0x90] sm:$0xff]
      %v4123 = vld [vmem:[%s4103 + $0x98] sm:$0xff]
      %v4124 = vld [vmem:[%s4103 + $0xa0] sm:$0xff]
      %v4125 = vld [vmem:[%s4103 + $0xa8] sm:$0xff]
      %v4126 = vld [vmem:[%s4103 + $0xb0] sm:$0xff]
      %v4127 = vld [vmem:[%s4103 + $0xb8] sm:$0xff]
      %v4128 = vld [vmem:[%s4103 + $0xc0] sm:$0xff]
      %v4129 = vld [vmem:[%s4103 + $0xc8] sm:$0xff]
      %v4130 = vmul.f32 %v2907, %v4104
      %v4131 = vmul.f32 %v2908, %v4105
      %v4132 = vmul.f32 %v2909, %v4106
      %v4133 = vmul.f32 %v2910, %v4107
      %v4134 = vmul.f32 %v2911, %v4108
      %v4135 = vmul.f32 %v2912, %v4109
      %v4136 = vmul.f32 %v2913, %v4110
      %v4137 = vmul.f32 %v2914, %v4111
      %v4138 = vmul.f32 %v2915, %v4112
      %v4139 = vmul.f32 %v2916, %v4113
      %v4140 = vmul.f32 %v2917, %v4114
      %v4141 = vmul.f32 %v2918, %v4115
      %v4142 = vmul.f32 %v2919, %v4116
      %v4143 = vmul.f32 %v2920, %v4117
      %v4144 = vmul.f32 %v2921, %v4118
      %v4145 = vmul.f32 %v2922, %v4119
      %v4146 = vmul.f32 %v2923, %v4120
      %v4147 = vmul.f32 %v2924, %v4121
      %v4148 = vmul.f32 %v2925, %v4122
      %v4149 = vmul.f32 %v2926, %v4123
      %v4150 = vmul.f32 %v2927, %v4124
      %v4151 = vmul.f32 %v2928, %v4125
      %v4152 = vmul.f32 %v2929, %v4126
      %v4153 = vmul.f32 %v2930, %v4127
      %v4154 = vmul.f32 %v2931, %v4128
      %v4155 = vmul.f32 %v2932, %v4129
      %s4156 = scalar_lea.vmem %s3, 32
      %v4157 = vld [vmem:[%s4156] sm:$0xff]
      %v4159 = vsel %vm391, %v4130, 0
      %v4162 = vsel %vm391, %v4131, 0
      %v4165 = vsel %vm391, %v4132, 0
      %v4168 = vsel %vm391, %v4133, 0
      %v4171 = vsel %vm391, %v4134, 0
      %v4174 = vsel %vm391, %v4135, 0
      %v4177 = vsel %vm391, %v4136, 0
      %v4180 = vsel %vm391, %v4137, 0
      %v4183 = vsel %vm391, %v4138, 0
      %v4186 = vsel %vm391, %v4139, 0
      %v4189 = vsel %vm391, %v4140, 0
      %v4192 = vsel %vm391, %v4141, 0
      %v4195 = vsel %vm391, %v4142, 0
      %v4198 = vsel %vm391, %v4143, 0
      %v4201 = vsel %vm391, %v4144, 0
      %v4204 = vsel %vm391, %v4145, 0
      %v4207 = vsel %vm391, %v4146, 0
      %v4210 = vsel %vm391, %v4147, 0
      %v4213 = vsel %vm391, %v4148, 0
      %v4216 = vsel %vm391, %v4149, 0
      %v4219 = vsel %vm391, %v4150, 0
      %v4222 = vsel %vm391, %v4151, 0
      %v4225 = vsel %vm391, %v4152, 0
      %v4228 = vsel %vm391, %v4153, 0
      %v4231 = vsel %vm391, %v4154, 0
      %v4234 = vsel %vm391, %v4155, 0
      %4236 = vmatpush.msra.mxu0 0.0
      %4237 = vmatpush.msra.mxu0 0.0
      %4238 = vmatpush.msra.mxu0 0.0
      %4239 = vmatpush.msra.mxu0 0.0
      %4240 = vmatpush.msra.mxu0 0.0
      %4241 = vmatpush.msra.mxu0 0.0
      %4242 = vmatpush.msra.mxu0 0.0
      %4243 = vmatpush.msra.mxu0 0.0
      %4244 = vmatpush.msra.mxu0 0.0
      %4245 = vmatpush.msra.mxu0 0.0
      %4246 = vmatpush.msra.mxu0 0.0
      %4247 = vmatpush.msra.mxu0 0.0
      %4248 = vmatpush.msra.mxu0 0.0
      %4249 = vmatpush.msra.mxu0 0.0
      %4250 = vmatpush.msra.mxu0 0.0
      %4251 = vmatpush.msra.mxu0 %v4157
      %4252 = vmatmul.f32.gmra.mxu0 %v4159
      %v4253 = vpop.f32.mrf.mxu0
      %v4254 = vadd.f32 0.0, %v4253
      %4255 = vmatmul.f32.gmra.mxu0 %v4162
      %v4256 = vpop.f32.mrf.mxu0
      %v4257 = vadd.f32 0.0, %v4256
      %4258 = vmatmul.f32.gmra.mxu0 %v4165
      %v4259 = vpop.f32.mrf.mxu0
      %v4260 = vadd.f32 0.0, %v4259
      %4261 = vmatmul.f32.gmra.mxu0 %v4168
      %v4262 = vpop.f32.mrf.mxu0
      %v4263 = vadd.f32 0.0, %v4262
      %4264 = vmatmul.f32.gmra.mxu0 %v4171
      %v4265 = vpop.f32.mrf.mxu0
      %v4266 = vadd.f32 0.0, %v4265
      %4267 = vmatmul.f32.gmra.mxu0 %v4174
      %v4268 = vpop.f32.mrf.mxu0
      %v4269 = vadd.f32 0.0, %v4268
      %4270 = vmatmul.f32.gmra.mxu0 %v4177
      %v4271 = vpop.f32.mrf.mxu0
      %v4272 = vadd.f32 0.0, %v4271
      %4273 = vmatmul.f32.gmra.mxu0 %v4180
      %v4274 = vpop.f32.mrf.mxu0
      %v4275 = vadd.f32 0.0, %v4274
      %4276 = vmatmul.f32.gmra.mxu0 %v4183
      %v4277 = vpop.f32.mrf.mxu0
      %v4278 = vadd.f32 0.0, %v4277
      %4279 = vmatmul.f32.gmra.mxu0 %v4186
      %v4280 = vpop.f32.mrf.mxu0
      %v4281 = vadd.f32 0.0, %v4280
      %4282 = vmatmul.f32.gmra.mxu0 %v4189
      %v4283 = vpop.f32.mrf.mxu0
      %v4284 = vadd.f32 0.0, %v4283
      %4285 = vmatmul.f32.gmra.mxu0 %v4192
      %v4286 = vpop.f32.mrf.mxu0
      %v4287 = vadd.f32 0.0, %v4286
      %4288 = vmatmul.f32.gmra.mxu0 %v4195
      %v4289 = vpop.f32.mrf.mxu0
      %v4290 = vadd.f32 0.0, %v4289
      %4291 = vmatmul.f32.gmra.mxu0 %v4198
      %v4292 = vpop.f32.mrf.mxu0
      %v4293 = vadd.f32 0.0, %v4292
      %4294 = vmatmul.f32.gmra.mxu0 %v4201
      %v4295 = vpop.f32.mrf.mxu0
      %v4296 = vadd.f32 0.0, %v4295
      %4297 = vmatmul.f32.gmra.mxu0 %v4204
      %v4298 = vpop.f32.mrf.mxu0
      %v4299 = vadd.f32 0.0, %v4298
      %4300 = vmatmul.f32.gmra.mxu0 %v4207
      %v4301 = vpop.f32.mrf.mxu0
      %v4302 = vadd.f32 0.0, %v4301
      %4303 = vmatmul.f32.gmra.mxu0 %v4210
      %v4304 = vpop.f32.mrf.mxu0
      %v4305 = vadd.f32 0.0, %v4304
      %4306 = vmatmul.f32.gmra.mxu0 %v4213
      %v4307 = vpop.f32.mrf.mxu0
      %v4308 = vadd.f32 0.0, %v4307
      %4309 = vmatmul.f32.gmra.mxu0 %v4216
      %v4310 = vpop.f32.mrf.mxu0
      %v4311 = vadd.f32 0.0, %v4310
      %4312 = vmatmul.f32.gmra.mxu0 %v4219
      %v4313 = vpop.f32.mrf.mxu0
      %v4314 = vadd.f32 0.0, %v4313
      %4315 = vmatmul.f32.gmra.mxu0 %v4222
      %v4316 = vpop.f32.mrf.mxu0
      %v4317 = vadd.f32 0.0, %v4316
      %4318 = vmatmul.f32.gmra.mxu0 %v4225
      %v4319 = vpop.f32.mrf.mxu0
      %v4320 = vadd.f32 0.0, %v4319
      %4321 = vmatmul.f32.gmra.mxu0 %v4228
      %v4322 = vpop.f32.mrf.mxu0
      %v4323 = vadd.f32 0.0, %v4322
      %4324 = vmatmul.f32.gmra.mxu0 %v4231
      %v4325 = vpop.f32.mrf.mxu0
      %v4326 = vadd.f32 0.0, %v4325
      %4327 = vmatmul.f32.gmra.mxu0 %v4234
      %v4328 = vpop.f32.mrf.mxu0
      %4329 = vdwg.mxu0
      %v4330 = vadd.f32 %v4078, %v4254
      %v4331 = vadd.f32 %v4079, %v4257
      %v4332 = vadd.f32 %v4080, %v4260
      %v4333 = vadd.f32 %v4081, %v4263
      %v4334 = vadd.f32 %v4082, %v4266
      %v4335 = vadd.f32 %v4083, %v4269
      %v4336 = vadd.f32 %v4084, %v4272
      %v4337 = vadd.f32 %v4085, %v4275
      %v4338 = vadd.f32 %v4086, %v4278
      %v4339 = vadd.f32 %v4087, %v4281
      %v4340 = vadd.f32 %v4088, %v4284
      %v4341 = vadd.f32 %v4089, %v4287
      %v4342 = vadd.f32 %v4090, %v4290
      %v4343 = vadd.f32 %v4091, %v4293
      %v4344 = vadd.f32 %v4092, %v4296
      %v4345 = vadd.f32 %v4093, %v4299
      %v4346 = vadd.f32 %v4094, %v4302
      %v4347 = vadd.f32 %v4095, %v4305
      %v4348 = vadd.f32 %v4096, %v4308
      %v4349 = vadd.f32 %v4097, %v4311
      %v4350 = vadd.f32 %v4098, %v4314
      %v4351 = vadd.f32 %v4099, %v4317
      %v4352 = vadd.f32 %v4100, %v4320
      %v4353 = vadd.f32 %v4101, %v4323
      %v4354 = vadd.f32 %v4102, %v4326
      %s4355 = scalar_lea.vmem %s6, 1040
      %v4356 = vld [vmem:[%s4355] sm:$0xff]
      %v4357 = vld [vmem:[%s4355 + $0x8] sm:$0xff]
      %v4358 = vld [vmem:[%s4355 + $0x10] sm:$0xff]
      %v4359 = vld [vmem:[%s4355 + $0x18] sm:$0xff]
      %v4360 = vld [vmem:[%s4355 + $0x20] sm:$0xff]
      %v4361 = vld [vmem:[%s4355 + $0x28] sm:$0xff]
      %v4362 = vld [vmem:[%s4355 + $0x30] sm:$0xff]
      %v4363 = vld [vmem:[%s4355 + $0x38] sm:$0xff]
      %v4364 = vld [vmem:[%s4355 + $0x40] sm:$0xff]
      %v4365 = vld [vmem:[%s4355 + $0x48] sm:$0xff]
      %v4366 = vld [vmem:[%s4355 + $0x50] sm:$0xff]
      %v4367 = vld [vmem:[%s4355 + $0x58] sm:$0xff]
      %v4368 = vld [vmem:[%s4355 + $0x60] sm:$0xff]
      %v4369 = vld [vmem:[%s4355 + $0x68] sm:$0xff]
      %v4370 = vld [vmem:[%s4355 + $0x70] sm:$0xff]
      %v4371 = vld [vmem:[%s4355 + $0x78] sm:$0xff]
      %v4372 = vld [vmem:[%s4355 + $0x80] sm:$0xff]
      %v4373 = vld [vmem:[%s4355 + $0x88] sm:$0xff]
      %v4374 = vld [vmem:[%s4355 + $0x90] sm:$0xff]
      %v4375 = vld [vmem:[%s4355 + $0x98] sm:$0xff]
      %v4376 = vld [vmem:[%s4355 + $0xa0] sm:$0xff]
      %v4377 = vld [vmem:[%s4355 + $0xa8] sm:$0xff]
      %v4378 = vld [vmem:[%s4355 + $0xb0] sm:$0xff]
      %v4379 = vld [vmem:[%s4355 + $0xb8] sm:$0xff]
      %v4380 = vld [vmem:[%s4355 + $0xc0] sm:$0xff]
      %v4381 = vld [vmem:[%s4355 + $0xc8] sm:$0xff]
      %v4382 = vmul.f32 %v2986, %v4356
      %v4383 = vmul.f32 %v2985, %v4357
      %v4384 = vmul.f32 %v2984, %v4358
      %v4385 = vmul.f32 %v2983, %v4359
      %v4386 = vmul.f32 %v2982, %v4360
      %v4387 = vmul.f32 %v2981, %v4361
      %v4388 = vmul.f32 %v2980, %v4362
      %v4389 = vmul.f32 %v2979, %v4363
      %v4390 = vmul.f32 %v2978, %v4364
      %v4391 = vmul.f32 %v2977, %v4365
      %v4392 = vmul.f32 %v2976, %v4366
      %v4393 = vmul.f32 %v2975, %v4367
      %v4394 = vmul.f32 %v2974, %v4368
      %v4395 = vmul.f32 %v2973, %v4369
      %v4396 = vmul.f32 %v2972, %v4370
      %v4397 = vmul.f32 %v2971, %v4371
      %v4398 = vmul.f32 %v2970, %v4372
      %v4399 = vmul.f32 %v2969, %v4373
      %v4400 = vmul.f32 %v2968, %v4374
      %v4401 = vmul.f32 %v2967, %v4375
      %v4402 = vmul.f32 %v2966, %v4376
      %v4403 = vmul.f32 %v2965, %v4377
      %v4404 = vmul.f32 %v2964, %v4378
      %v4405 = vmul.f32 %v2963, %v4379
      %v4406 = vmul.f32 %v2962, %v4380
      %v4407 = vmul.f32 %v2987, %v4381
      %s4408 = scalar_lea.vmem %s3, 40
      %v4409 = vld [vmem:[%s4408] sm:$0xff]
      %v4411 = vsel %vm391, %v4382, 0
      %v4414 = vsel %vm391, %v4383, 0
      %v4417 = vsel %vm391, %v4384, 0
      %v4420 = vsel %vm391, %v4385, 0
      %v4423 = vsel %vm391, %v4386, 0
      %v4426 = vsel %vm391, %v4387, 0
      %v4429 = vsel %vm391, %v4388, 0
      %v4432 = vsel %vm391, %v4389, 0
      %v4435 = vsel %vm391, %v4390, 0
      %v4438 = vsel %vm391, %v4391, 0
      %v4441 = vsel %vm391, %v4392, 0
      %v4444 = vsel %vm391, %v4393, 0
      %v4447 = vsel %vm391, %v4394, 0
      %v4450 = vsel %vm391, %v4395, 0
      %v4453 = vsel %vm391, %v4396, 0
      %v4456 = vsel %vm391, %v4397, 0
      %v4459 = vsel %vm391, %v4398, 0
      %v4462 = vsel %vm391, %v4399, 0
      %v4465 = vsel %vm391, %v4400, 0
      %v4468 = vsel %vm391, %v4401, 0
      %v4471 = vsel %vm391, %v4402, 0
      %v4474 = vsel %vm391, %v4403, 0
      %v4477 = vsel %vm391, %v4404, 0
      %v4480 = vsel %vm391, %v4405, 0
      %v4483 = vsel %vm391, %v4406, 0
      %v4486 = vsel %vm391, %v4407, 0
      %4488 = vmatpush.msra.mxu0 0.0
      %4489 = vmatpush.msra.mxu0 0.0
      %4490 = vmatpush.msra.mxu0 0.0
      %4491 = vmatpush.msra.mxu0 0.0
      %4492 = vmatpush.msra.mxu0 0.0
      %4493 = vmatpush.msra.mxu0 0.0
      %4494 = vmatpush.msra.mxu0 0.0
      %4495 = vmatpush.msra.mxu0 0.0
      %4496 = vmatpush.msra.mxu0 0.0
      %4497 = vmatpush.msra.mxu0 0.0
      %4498 = vmatpush.msra.mxu0 0.0
      %4499 = vmatpush.msra.mxu0 0.0
      %4500 = vmatpush.msra.mxu0 0.0
      %4501 = vmatpush.msra.mxu0 0.0
      %4502 = vmatpush.msra.mxu0 0.0
      %4503 = vmatpush.msra.mxu0 %v4409
      %4504 = vmatmul.f32.gmra.mxu0 %v4411
      %v4505 = vpop.f32.mrf.mxu0
      %v4506 = vadd.f32 0.0, %v4505
      %4507 = vmatmul.f32.gmra.mxu0 %v4414
      %v4508 = vpop.f32.mrf.mxu0
      %v4509 = vadd.f32 0.0, %v4508
      %4510 = vmatmul.f32.gmra.mxu0 %v4417
      %v4511 = vpop.f32.mrf.mxu0
      %v4512 = vadd.f32 0.0, %v4511
      %4513 = vmatmul.f32.gmra.mxu0 %v4420
      %v4514 = vpop.f32.mrf.mxu0
      %v4515 = vadd.f32 0.0, %v4514
      %4516 = vmatmul.f32.gmra.mxu0 %v4423
      %v4517 = vpop.f32.mrf.mxu0
      %v4518 = vadd.f32 0.0, %v4517
      %4519 = vmatmul.f32.gmra.mxu0 %v4426
      %v4520 = vpop.f32.mrf.mxu0
      %v4521 = vadd.f32 0.0, %v4520
      %4522 = vmatmul.f32.gmra.mxu0 %v4429
      %v4523 = vpop.f32.mrf.mxu0
      %v4524 = vadd.f32 0.0, %v4523
      %4525 = vmatmul.f32.gmra.mxu0 %v4432
      %v4526 = vpop.f32.mrf.mxu0
      %v4527 = vadd.f32 0.0, %v4526
      %4528 = vmatmul.f32.gmra.mxu0 %v4435
      %v4529 = vpop.f32.mrf.mxu0
      %v4530 = vadd.f32 0.0, %v4529
      %4531 = vmatmul.f32.gmra.mxu0 %v4438
      %v4532 = vpop.f32.mrf.mxu0
      %v4533 = vadd.f32 0.0, %v4532
      %4534 = vmatmul.f32.gmra.mxu0 %v4441
      %v4535 = vpop.f32.mrf.mxu0
      %v4536 = vadd.f32 0.0, %v4535
      %4537 = vmatmul.f32.gmra.mxu0 %v4444
      %v4538 = vpop.f32.mrf.mxu0
      %v4539 = vadd.f32 0.0, %v4538
      %4540 = vmatmul.f32.gmra.mxu0 %v4447
      %v4541 = vpop.f32.mrf.mxu0
      %v4542 = vadd.f32 0.0, %v4541
      %4543 = vmatmul.f32.gmra.mxu0 %v4450
      %v4544 = vpop.f32.mrf.mxu0
      %v4545 = vadd.f32 0.0, %v4544
      %4546 = vmatmul.f32.gmra.mxu0 %v4453
      %v4547 = vpop.f32.mrf.mxu0
      %v4548 = vadd.f32 0.0, %v4547
      %4549 = vmatmul.f32.gmra.mxu0 %v4456
      %v4550 = vpop.f32.mrf.mxu0
      %v4551 = vadd.f32 0.0, %v4550
      %4552 = vmatmul.f32.gmra.mxu0 %v4459
      %v4553 = vpop.f32.mrf.mxu0
      %v4554 = vadd.f32 0.0, %v4553
      %4555 = vmatmul.f32.gmra.mxu0 %v4462
      %v4556 = vpop.f32.mrf.mxu0
      %v4557 = vadd.f32 0.0, %v4556
      %4558 = vmatmul.f32.gmra.mxu0 %v4465
      %v4559 = vpop.f32.mrf.mxu0
      %v4560 = vadd.f32 0.0, %v4559
      %4561 = vmatmul.f32.gmra.mxu0 %v4468
      %v4562 = vpop.f32.mrf.mxu0
      %v4563 = vadd.f32 0.0, %v4562
      %4564 = vmatmul.f32.gmra.mxu0 %v4471
      %v4565 = vpop.f32.mrf.mxu0
      %v4566 = vadd.f32 0.0, %v4565
      %4567 = vmatmul.f32.gmra.mxu0 %v4474
      %v4568 = vpop.f32.mrf.mxu0
      %v4569 = vadd.f32 0.0, %v4568
      %4570 = vmatmul.f32.gmra.mxu0 %v4477
      %v4571 = vpop.f32.mrf.mxu0
      %v4572 = vadd.f32 0.0, %v4571
      %4573 = vmatmul.f32.gmra.mxu0 %v4480
      %v4574 = vpop.f32.mrf.mxu0
      %v4575 = vadd.f32 0.0, %v4574
      %4576 = vmatmul.f32.gmra.mxu0 %v4483
      %v4577 = vpop.f32.mrf.mxu0
      %v4578 = vadd.f32 0.0, %v4577
      %4579 = vmatmul.f32.gmra.mxu0 %v4486
      %v4580 = vpop.f32.mrf.mxu0
      %4581 = vdwg.mxu0
      %v4582 = vadd.f32 %v4330, %v4506
      %v4583 = vadd.f32 %v4331, %v4509
      %v4584 = vadd.f32 %v4332, %v4512
      %v4585 = vadd.f32 %v4333, %v4515
      %v4586 = vadd.f32 %v4334, %v4518
      %v4587 = vadd.f32 %v4335, %v4521
      %v4588 = vadd.f32 %v4336, %v4524
      %v4589 = vadd.f32 %v4337, %v4527
      %v4590 = vadd.f32 %v4338, %v4530
      %v4591 = vadd.f32 %v4339, %v4533
      %v4592 = vadd.f32 %v4340, %v4536
      %v4593 = vadd.f32 %v4341, %v4539
      %v4594 = vadd.f32 %v4342, %v4542
      %v4595 = vadd.f32 %v4343, %v4545
      %v4596 = vadd.f32 %v4344, %v4548
      %v4597 = vadd.f32 %v4345, %v4551
      %v4598 = vadd.f32 %v4346, %v4554
      %v4599 = vadd.f32 %v4347, %v4557
      %v4600 = vadd.f32 %v4348, %v4560
      %v4601 = vadd.f32 %v4349, %v4563
      %v4602 = vadd.f32 %v4350, %v4566
      %v4603 = vadd.f32 %v4351, %v4569
      %v4604 = vadd.f32 %v4352, %v4572
      %v4605 = vadd.f32 %v4353, %v4575
      %v4606 = vadd.f32 %v4354, %v4578
      %v4607 = vrot.slane %v2907, 5
      %v4608 = vrot.slane %v2908, 5
      %v4609 = vrot.slane %v2909, 5
      %v4610 = vrot.slane %v2910, 5
      %v4611 = vrot.slane %v2911, 5
      %v4612 = vrot.slane %v2912, 5
      %v4613 = vrot.slane %v2913, 5
      %v4614 = vrot.slane %v2914, 5
      %v4615 = vrot.slane %v2915, 5
      %v4616 = vrot.slane %v2916, 5
      %v4617 = vrot.slane %v2917, 5
      %v4618 = vrot.slane %v2918, 5
      %v4619 = vrot.slane %v2919, 5
      %v4620 = vrot.slane %v2920, 5
      %v4621 = vrot.slane %v2921, 5
      %v4622 = vrot.slane %v2922, 5
      %v4623 = vrot.slane %v2923, 5
      %v4624 = vrot.slane %v2924, 5
      %v4625 = vrot.slane %v2925, 5
      %v4626 = vrot.slane %v2926, 5
      %v4627 = vrot.slane %v2927, 5
      %v4628 = vrot.slane %v2928, 5
      %v4629 = vrot.slane %v2929, 5
      %v4630 = vrot.slane %v2930, 5
      %v4631 = vrot.slane %v2931, 5
      %v4632 = vrot.slane %v2932, 5
      %vm4633 = vcmp.lt.s32.totalorder %v2960, 3
      %v4634 = vsel %vm4633, %v4631, %v4632
      %v4635 = vsel %vm4633, %v4630, %v4631
      %v4636 = vsel %vm4633, %v4629, %v4630
      %v4637 = vsel %vm4633, %v4628, %v4629
      %v4638 = vsel %vm4633, %v4627, %v4628
      %v4639 = vsel %vm4633, %v4626, %v4627
      %v4640 = vsel %vm4633, %v4625, %v4626
      %v4641 = vsel %vm4633, %v4624, %v4625
      %v4642 = vsel %vm4633, %v4623, %v4624
      %v4643 = vsel %vm4633, %v4622, %v4623
      %v4644 = vsel %vm4633, %v4621, %v4622
      %v4645 = vsel %vm4633, %v4620, %v4621
      %v4646 = vsel %vm4633, %v4619, %v4620
      %v4647 = vsel %vm4633, %v4618, %v4619
      %v4648 = vsel %vm4633, %v4617, %v4618
      %v4649 = vsel %vm4633, %v4616, %v4617
      %v4650 = vsel %vm4633, %v4615, %v4616
      %v4651 = vsel %vm4633, %v4614, %v4615
      %v4652 = vsel %vm4633, %v4613, %v4614
      %v4653 = vsel %vm4633, %v4612, %v4613
      %v4654 = vsel %vm4633, %v4611, %v4612
      %v4655 = vsel %vm4633, %v4610, %v4611
      %v4656 = vsel %vm4633, %v4609, %v4610
      %v4657 = vsel %vm4633, %v4608, %v4609
      %v4658 = vsel %vm4633, %v4607, %v4608
      %v4659 = vsel %vm4633, %v4632, %v4607
      %s4660 = scalar_lea.vmem %s6, 1248
      %v4661 = vld [vmem:[%s4660] sm:$0xff]
      %v4662 = vld [vmem:[%s4660 + $0x8] sm:$0xff]
      %v4663 = vld [vmem:[%s4660 + $0x10] sm:$0xff]
      %v4664 = vld [vmem:[%s4660 + $0x18] sm:$0xff]
      %v4665 = vld [vmem:[%s4660 + $0x20] sm:$0xff]
      %v4666 = vld [vmem:[%s4660 + $0x28] sm:$0xff]
      %v4667 = vld [vmem:[%s4660 + $0x30] sm:$0xff]
      %v4668 = vld [vmem:[%s4660 + $0x38] sm:$0xff]
      %v4669 = vld [vmem:[%s4660 + $0x40] sm:$0xff]
      %v4670 = vld [vmem:[%s4660 + $0x48] sm:$0xff]
      %v4671 = vld [vmem:[%s4660 + $0x50] sm:$0xff]
      %v4672 = vld [vmem:[%s4660 + $0x58] sm:$0xff]
      %v4673 = vld [vmem:[%s4660 + $0x60] sm:$0xff]
      %v4674 = vld [vmem:[%s4660 + $0x68] sm:$0xff]
      %v4675 = vld [vmem:[%s4660 + $0x70] sm:$0xff]
      %v4676 = vld [vmem:[%s4660 + $0x78] sm:$0xff]
      %v4677 = vld [vmem:[%s4660 + $0x80] sm:$0xff]
      %v4678 = vld [vmem:[%s4660 + $0x88] sm:$0xff]
      %v4679 = vld [vmem:[%s4660 + $0x90] sm:$0xff]
      %v4680 = vld [vmem:[%s4660 + $0x98] sm:$0xff]
      %v4681 = vld [vmem:[%s4660 + $0xa0] sm:$0xff]
      %v4682 = vld [vmem:[%s4660 + $0xa8] sm:$0xff]
      %v4683 = vld [vmem:[%s4660 + $0xb0] sm:$0xff]
      %v4684 = vld [vmem:[%s4660 + $0xb8] sm:$0xff]
      %v4685 = vld [vmem:[%s4660 + $0xc0] sm:$0xff]
      %v4686 = vld [vmem:[%s4660 + $0xc8] sm:$0xff]
      %v4687 = vmul.f32 %v4657, %v4661
      %v4688 = vmul.f32 %v4656, %v4662
      %v4689 = vmul.f32 %v4655, %v4663
      %v4690 = vmul.f32 %v4654, %v4664
      %v4691 = vmul.f32 %v4653, %v4665
      %v4692 = vmul.f32 %v4652, %v4666
      %v4693 = vmul.f32 %v4651, %v4667
      %v4694 = vmul.f32 %v4650, %v4668
      %v4695 = vmul.f32 %v4649, %v4669
      %v4696 = vmul.f32 %v4648, %v4670
      %v4697 = vmul.f32 %v4647, %v4671
      %v4698 = vmul.f32 %v4646, %v4672
      %v4699 = vmul.f32 %v4645, %v4673
      %v4700 = vmul.f32 %v4644, %v4674
      %v4701 = vmul.f32 %v4643, %v4675
      %v4702 = vmul.f32 %v4642, %v4676
      %v4703 = vmul.f32 %v4641, %v4677
      %v4704 = vmul.f32 %v4640, %v4678
      %v4705 = vmul.f32 %v4639, %v4679
      %v4706 = vmul.f32 %v4638, %v4680
      %v4707 = vmul.f32 %v4637, %v4681
      %v4708 = vmul.f32 %v4636, %v4682
      %v4709 = vmul.f32 %v4635, %v4683
      %v4710 = vmul.f32 %v4634, %v4684
      %v4711 = vmul.f32 %v4659, %v4685
      %v4712 = vmul.f32 %v4658, %v4686
      %s4713 = scalar_lea.vmem %s3, 48
      %v4714 = vld [vmem:[%s4713] sm:$0xff]
      %v4716 = vsel %vm391, %v4687, 0
      %v4719 = vsel %vm391, %v4688, 0
      %v4722 = vsel %vm391, %v4689, 0
      %v4725 = vsel %vm391, %v4690, 0
      %v4728 = vsel %vm391, %v4691, 0
      %v4731 = vsel %vm391, %v4692, 0
      %v4734 = vsel %vm391, %v4693, 0
      %v4737 = vsel %vm391, %v4694, 0
      %v4740 = vsel %vm391, %v4695, 0
      %v4743 = vsel %vm391, %v4696, 0
      %v4746 = vsel %vm391, %v4697, 0
      %v4749 = vsel %vm391, %v4698, 0
      %v4752 = vsel %vm391, %v4699, 0
      %v4755 = vsel %vm391, %v4700, 0
      %v4758 = vsel %vm391, %v4701, 0
      %v4761 = vsel %vm391, %v4702, 0
      %v4764 = vsel %vm391, %v4703, 0
      %v4767 = vsel %vm391, %v4704, 0
      %v4770 = vsel %vm391, %v4705, 0
      %v4773 = vsel %vm391, %v4706, 0
      %v4776 = vsel %vm391, %v4707, 0
      %v4779 = vsel %vm391, %v4708, 0
      %v4782 = vsel %vm391, %v4709, 0
      %v4785 = vsel %vm391, %v4710, 0
      %v4788 = vsel %vm391, %v4711, 0
      %v4791 = vsel %vm391, %v4712, 0
      %4793 = vmatpush.msra.mxu0 0.0
      %4794 = vmatpush.msra.mxu0 0.0
      %4795 = vmatpush.msra.mxu0 0.0
      %4796 = vmatpush.msra.mxu0 0.0
      %4797 = vmatpush.msra.mxu0 0.0
      %4798 = vmatpush.msra.mxu0 0.0
      %4799 = vmatpush.msra.mxu0 0.0
      %4800 = vmatpush.msra.mxu0 0.0
      %4801 = vmatpush.msra.mxu0 0.0
      %4802 = vmatpush.msra.mxu0 0.0
      %4803 = vmatpush.msra.mxu0 0.0
      %4804 = vmatpush.msra.mxu0 0.0
      %4805 = vmatpush.msra.mxu0 0.0
      %4806 = vmatpush.msra.mxu0 0.0
      %4807 = vmatpush.msra.mxu0 0.0
      %4808 = vmatpush.msra.mxu0 %v4714
      %4809 = vmatmul.f32.gmra.mxu0 %v4716
      %v4810 = vpop.f32.mrf.mxu0
      %v4811 = vadd.f32 0.0, %v4810
      %4812 = vmatmul.f32.gmra.mxu0 %v4719
      %v4813 = vpop.f32.mrf.mxu0
      %v4814 = vadd.f32 0.0, %v4813
      %4815 = vmatmul.f32.gmra.mxu0 %v4722
      %v4816 = vpop.f32.mrf.mxu0
      %v4817 = vadd.f32 0.0, %v4816
      %4818 = vmatmul.f32.gmra.mxu0 %v4725
      %v4819 = vpop.f32.mrf.mxu0
      %v4820 = vadd.f32 0.0, %v4819
      %4821 = vmatmul.f32.gmra.mxu0 %v4728
      %v4822 = vpop.f32.mrf.mxu0
      %v4823 = vadd.f32 0.0, %v4822
      %4824 = vmatmul.f32.gmra.mxu0 %v4731
      %v4825 = vpop.f32.mrf.mxu0
      %v4826 = vadd.f32 0.0, %v4825
      %4827 = vmatmul.f32.gmra.mxu0 %v4734
      %v4828 = vpop.f32.mrf.mxu0
      %v4829 = vadd.f32 0.0, %v4828
      %4830 = vmatmul.f32.gmra.mxu0 %v4737
      %v4831 = vpop.f32.mrf.mxu0
      %v4832 = vadd.f32 0.0, %v4831
      %4833 = vmatmul.f32.gmra.mxu0 %v4740
      %v4834 = vpop.f32.mrf.mxu0
      %v4835 = vadd.f32 0.0, %v4834
      %4836 = vmatmul.f32.gmra.mxu0 %v4743
      %v4837 = vpop.f32.mrf.mxu0
      %v4838 = vadd.f32 0.0, %v4837
      %4839 = vmatmul.f32.gmra.mxu0 %v4746
      %v4840 = vpop.f32.mrf.mxu0
      %v4841 = vadd.f32 0.0, %v4840
      %4842 = vmatmul.f32.gmra.mxu0 %v4749
      %v4843 = vpop.f32.mrf.mxu0
      %v4844 = vadd.f32 0.0, %v4843
      %4845 = vmatmul.f32.gmra.mxu0 %v4752
      %v4846 = vpop.f32.mrf.mxu0
      %v4847 = vadd.f32 0.0, %v4846
      %4848 = vmatmul.f32.gmra.mxu0 %v4755
      %v4849 = vpop.f32.mrf.mxu0
      %v4850 = vadd.f32 0.0, %v4849
      %4851 = vmatmul.f32.gmra.mxu0 %v4758
      %v4852 = vpop.f32.mrf.mxu0
      %v4853 = vadd.f32 0.0, %v4852
      %4854 = vmatmul.f32.gmra.mxu0 %v4761
      %v4855 = vpop.f32.mrf.mxu0
      %v4856 = vadd.f32 0.0, %v4855
      %4857 = vmatmul.f32.gmra.mxu0 %v4764
      %v4858 = vpop.f32.mrf.mxu0
      %v4859 = vadd.f32 0.0, %v4858
      %4860 = vmatmul.f32.gmra.mxu0 %v4767
      %v4861 = vpop.f32.mrf.mxu0
      %v4862 = vadd.f32 0.0, %v4861
      %4863 = vmatmul.f32.gmra.mxu0 %v4770
      %v4864 = vpop.f32.mrf.mxu0
      %v4865 = vadd.f32 0.0, %v4864
      %4866 = vmatmul.f32.gmra.mxu0 %v4773
      %v4867 = vpop.f32.mrf.mxu0
      %v4868 = vadd.f32 0.0, %v4867
      %4869 = vmatmul.f32.gmra.mxu0 %v4776
      %v4870 = vpop.f32.mrf.mxu0
      %v4871 = vadd.f32 0.0, %v4870
      %4872 = vmatmul.f32.gmra.mxu0 %v4779
      %v4873 = vpop.f32.mrf.mxu0
      %v4874 = vadd.f32 0.0, %v4873
      %4875 = vmatmul.f32.gmra.mxu0 %v4782
      %v4876 = vpop.f32.mrf.mxu0
      %v4877 = vadd.f32 0.0, %v4876
      %4878 = vmatmul.f32.gmra.mxu0 %v4785
      %v4879 = vpop.f32.mrf.mxu0
      %v4880 = vadd.f32 0.0, %v4879
      %4881 = vmatmul.f32.gmra.mxu0 %v4788
      %v4882 = vpop.f32.mrf.mxu0
      %v4883 = vadd.f32 0.0, %v4882
      %4884 = vmatmul.f32.gmra.mxu0 %v4791
      %v4885 = vpop.f32.mrf.mxu0
      %4886 = vdwg.mxu0
      %v4887 = vadd.f32 %v4582, %v4811
      %v4888 = vadd.f32 %v4583, %v4814
      %v4889 = vadd.f32 %v4584, %v4817
      %v4890 = vadd.f32 %v4585, %v4820
      %v4891 = vadd.f32 %v4586, %v4823
      %v4892 = vadd.f32 %v4587, %v4826
      %v4893 = vadd.f32 %v4588, %v4829
      %v4894 = vadd.f32 %v4589, %v4832
      %v4895 = vadd.f32 %v4590, %v4835
      %v4896 = vadd.f32 %v4591, %v4838
      %v4897 = vadd.f32 %v4592, %v4841
      %v4898 = vadd.f32 %v4593, %v4844
      %v4899 = vadd.f32 %v4594, %v4847
      %v4900 = vadd.f32 %v4595, %v4850
      %v4901 = vadd.f32 %v4596, %v4853
      %v4902 = vadd.f32 %v4597, %v4856
      %v4903 = vadd.f32 %v4598, %v4859
      %v4904 = vadd.f32 %v4599, %v4862
      %v4905 = vadd.f32 %v4600, %v4865
      %v4906 = vadd.f32 %v4601, %v4868
      %v4907 = vadd.f32 %v4602, %v4871
      %v4908 = vadd.f32 %v4603, %v4874
      %v4909 = vadd.f32 %v4604, %v4877
      %v4910 = vadd.f32 %v4605, %v4880
      %v4911 = vadd.f32 %v4606, %v4883
      %v4912 = vrot.slane %v2907, 6
      %v4913 = vrot.slane %v2908, 6
      %v4914 = vrot.slane %v2909, 6
      %v4915 = vrot.slane %v2910, 6
      %v4916 = vrot.slane %v2911, 6
      %v4917 = vrot.slane %v2912, 6
      %v4918 = vrot.slane %v2913, 6
      %v4919 = vrot.slane %v2914, 6
      %v4920 = vrot.slane %v2915, 6
      %v4921 = vrot.slane %v2916, 6
      %v4922 = vrot.slane %v2917, 6
      %v4923 = vrot.slane %v2918, 6
      %v4924 = vrot.slane %v2919, 6
      %v4925 = vrot.slane %v2920, 6
      %v4926 = vrot.slane %v2921, 6
      %v4927 = vrot.slane %v2922, 6
      %v4928 = vrot.slane %v2923, 6
      %v4929 = vrot.slane %v2924, 6
      %v4930 = vrot.slane %v2925, 6
      %v4931 = vrot.slane %v2926, 6
      %v4932 = vrot.slane %v2927, 6
      %v4933 = vrot.slane %v2928, 6
      %v4934 = vrot.slane %v2929, 6
      %v4935 = vrot.slane %v2930, 6
      %v4936 = vrot.slane %v2931, 6
      %v4937 = vrot.slane %v2932, 6
      %vm4938 = vcmp.lt.s32.totalorder %v2960, 2
      %v4939 = vsel %vm4938, %v4936, %v4937
      %v4940 = vsel %vm4938, %v4935, %v4936
      %v4941 = vsel %vm4938, %v4934, %v4935
      %v4942 = vsel %vm4938, %v4933, %v4934
      %v4943 = vsel %vm4938, %v4932, %v4933
      %v4944 = vsel %vm4938, %v4931, %v4932
      %v4945 = vsel %vm4938, %v4930, %v4931
      %v4946 = vsel %vm4938, %v4929, %v4930
      %v4947 = vsel %vm4938, %v4928, %v4929
      %v4948 = vsel %vm4938, %v4927, %v4928
      %v4949 = vsel %vm4938, %v4926, %v4927
      %v4950 = vsel %vm4938, %v4925, %v4926
      %v4951 = vsel %vm4938, %v4924, %v4925
      %v4952 = vsel %vm4938, %v4923, %v4924
      %v4953 = vsel %vm4938, %v4922, %v4923
      %v4954 = vsel %vm4938, %v4921, %v4922
      %v4955 = vsel %vm4938, %v4920, %v4921
      %v4956 = vsel %vm4938, %v4919, %v4920
      %v4957 = vsel %vm4938, %v4918, %v4919
      %v4958 = vsel %vm4938, %v4917, %v4918
      %v4959 = vsel %vm4938, %v4916, %v4917
      %v4960 = vsel %vm4938, %v4915, %v4916
      %v4961 = vsel %vm4938, %v4914, %v4915
      %v4962 = vsel %vm4938, %v4913, %v4914
      %v4963 = vsel %vm4938, %v4912, %v4913
      %v4964 = vsel %vm4938, %v4937, %v4912
      %s4965 = scalar_lea.vmem %s6, 1456
      %v4966 = vld [vmem:[%s4965] sm:$0xff]
      %v4967 = vld [vmem:[%s4965 + $0x8] sm:$0xff]
      %v4968 = vld [vmem:[%s4965 + $0x10] sm:$0xff]
      %v4969 = vld [vmem:[%s4965 + $0x18] sm:$0xff]
      %v4970 = vld [vmem:[%s4965 + $0x20] sm:$0xff]
      %v4971 = vld [vmem:[%s4965 + $0x28] sm:$0xff]
      %v4972 = vld [vmem:[%s4965 + $0x30] sm:$0xff]
      %v4973 = vld [vmem:[%s4965 + $0x38] sm:$0xff]
      %v4974 = vld [vmem:[%s4965 + $0x40] sm:$0xff]
      %v4975 = vld [vmem:[%s4965 + $0x48] sm:$0xff]
      %v4976 = vld [vmem:[%s4965 + $0x50] sm:$0xff]
      %v4977 = vld [vmem:[%s4965 + $0x58] sm:$0xff]
      %v4978 = vld [vmem:[%s4965 + $0x60] sm:$0xff]
      %v4979 = vld [vmem:[%s4965 + $0x68] sm:$0xff]
      %v4980 = vld [vmem:[%s4965 + $0x70] sm:$0xff]
      %v4981 = vld [vmem:[%s4965 + $0x78] sm:$0xff]
      %v4982 = vld [vmem:[%s4965 + $0x80] sm:$0xff]
      %v4983 = vld [vmem:[%s4965 + $0x88] sm:$0xff]
      %v4984 = vld [vmem:[%s4965 + $0x90] sm:$0xff]
      %v4985 = vld [vmem:[%s4965 + $0x98] sm:$0xff]
      %v4986 = vld [vmem:[%s4965 + $0xa0] sm:$0xff]
      %v4987 = vld [vmem:[%s4965 + $0xa8] sm:$0xff]
      %v4988 = vld [vmem:[%s4965 + $0xb0] sm:$0xff]
      %v4989 = vld [vmem:[%s4965 + $0xb8] sm:$0xff]
      %v4990 = vld [vmem:[%s4965 + $0xc0] sm:$0xff]
      %v4991 = vld [vmem:[%s4965 + $0xc8] sm:$0xff]
      %v4992 = vmul.f32 %v4962, %v4966
      %v4993 = vmul.f32 %v4961, %v4967
      %v4994 = vmul.f32 %v4960, %v4968
      %v4995 = vmul.f32 %v4959, %v4969
      %v4996 = vmul.f32 %v4958, %v4970
      %v4997 = vmul.f32 %v4957, %v4971
      %v4998 = vmul.f32 %v4956, %v4972
      %v4999 = vmul.f32 %v4955, %v4973
      %v5000 = vmul.f32 %v4954, %v4974
      %v5001 = vmul.f32 %v4953, %v4975
      %v5002 = vmul.f32 %v4952, %v4976
      %v5003 = vmul.f32 %v4951, %v4977
      %v5004 = vmul.f32 %v4950, %v4978
      %v5005 = vmul.f32 %v4949, %v4979
      %v5006 = vmul.f32 %v4948, %v4980
      %v5007 = vmul.f32 %v4947, %v4981
      %v5008 = vmul.f32 %v4946, %v4982
      %v5009 = vmul.f32 %v4945, %v4983
      %v5010 = vmul.f32 %v4944, %v4984
      %v5011 = vmul.f32 %v4943, %v4985
      %v5012 = vmul.f32 %v4942, %v4986
      %v5013 = vmul.f32 %v4941, %v4987
      %v5014 = vmul.f32 %v4940, %v4988
      %v5015 = vmul.f32 %v4939, %v4989
      %v5016 = vmul.f32 %v4964, %v4990
      %v5017 = vmul.f32 %v4963, %v4991
      %s5018 = scalar_lea.vmem %s3, 56
      %v5019 = vld [vmem:[%s5018] sm:$0xff]
      %v5021 = vsel %vm391, %v4992, 0
      %v5024 = vsel %vm391, %v4993, 0
      %v5027 = vsel %vm391, %v4994, 0
      %v5030 = vsel %vm391, %v4995, 0
      %v5033 = vsel %vm391, %v4996, 0
      %v5036 = vsel %vm391, %v4997, 0
      %v5039 = vsel %vm391, %v4998, 0
      %v5042 = vsel %vm391, %v4999, 0
      %v5045 = vsel %vm391, %v5000, 0
      %v5048 = vsel %vm391, %v5001, 0
      %v5051 = vsel %vm391, %v5002, 0
      %v5054 = vsel %vm391, %v5003, 0
      %v5057 = vsel %vm391, %v5004, 0
      %v5060 = vsel %vm391, %v5005, 0
      %v5063 = vsel %vm391, %v5006, 0
      %v5066 = vsel %vm391, %v5007, 0
      %v5069 = vsel %vm391, %v5008, 0
      %v5072 = vsel %vm391, %v5009, 0
      %v5075 = vsel %vm391, %v5010, 0
      %v5078 = vsel %vm391, %v5011, 0
      %v5081 = vsel %vm391, %v5012, 0
      %v5084 = vsel %vm391, %v5013, 0
      %v5087 = vsel %vm391, %v5014, 0
      %v5090 = vsel %vm391, %v5015, 0
      %v5093 = vsel %vm391, %v5016, 0
      %v5096 = vsel %vm391, %v5017, 0
      %5098 = vmatpush.msra.mxu0 0.0
      %5099 = vmatpush.msra.mxu0 0.0
      %5100 = vmatpush.msra.mxu0 0.0
      %5101 = vmatpush.msra.mxu0 0.0
      %5102 = vmatpush.msra.mxu0 0.0
      %5103 = vmatpush.msra.mxu0 0.0
      %5104 = vmatpush.msra.mxu0 0.0
      %5105 = vmatpush.msra.mxu0 0.0
      %5106 = vmatpush.msra.mxu0 0.0
      %5107 = vmatpush.msra.mxu0 0.0
      %5108 = vmatpush.msra.mxu0 0.0
      %5109 = vmatpush.msra.mxu0 0.0
      %5110 = vmatpush.msra.mxu0 0.0
      %5111 = vmatpush.msra.mxu0 0.0
      %5112 = vmatpush.msra.mxu0 0.0
      %5113 = vmatpush.msra.mxu0 %v5019
      %5114 = vmatmul.f32.gmra.mxu0 %v5021
      %v5115 = vpop.f32.mrf.mxu0
      %v5116 = vadd.f32 0.0, %v5115
      %5117 = vmatmul.f32.gmra.mxu0 %v5024
      %v5118 = vpop.f32.mrf.mxu0
      %v5119 = vadd.f32 0.0, %v5118
      %5120 = vmatmul.f32.gmra.mxu0 %v5027
      %v5121 = vpop.f32.mrf.mxu0
      %v5122 = vadd.f32 0.0, %v5121
      %5123 = vmatmul.f32.gmra.mxu0 %v5030
      %v5124 = vpop.f32.mrf.mxu0
      %v5125 = vadd.f32 0.0, %v5124
      %5126 = vmatmul.f32.gmra.mxu0 %v5033
      %v5127 = vpop.f32.mrf.mxu0
      %v5128 = vadd.f32 0.0, %v5127
      %5129 = vmatmul.f32.gmra.mxu0 %v5036
      %v5130 = vpop.f32.mrf.mxu0
      %v5131 = vadd.f32 0.0, %v5130
      %5132 = vmatmul.f32.gmra.mxu0 %v5039
      %v5133 = vpop.f32.mrf.mxu0
      %v5134 = vadd.f32 0.0, %v5133
      %5135 = vmatmul.f32.gmra.mxu0 %v5042
      %v5136 = vpop.f32.mrf.mxu0
      %v5137 = vadd.f32 0.0, %v5136
      %5138 = vmatmul.f32.gmra.mxu0 %v5045
      %v5139 = vpop.f32.mrf.mxu0
      %v5140 = vadd.f32 0.0, %v5139
      %5141 = vmatmul.f32.gmra.mxu0 %v5048
      %v5142 = vpop.f32.mrf.mxu0
      %v5143 = vadd.f32 0.0, %v5142
      %5144 = vmatmul.f32.gmra.mxu0 %v5051
      %v5145 = vpop.f32.mrf.mxu0
      %v5146 = vadd.f32 0.0, %v5145
      %5147 = vmatmul.f32.gmra.mxu0 %v5054
      %v5148 = vpop.f32.mrf.mxu0
      %v5149 = vadd.f32 0.0, %v5148
      %5150 = vmatmul.f32.gmra.mxu0 %v5057
      %v5151 = vpop.f32.mrf.mxu0
      %v5152 = vadd.f32 0.0, %v5151
      %5153 = vmatmul.f32.gmra.mxu0 %v5060
      %v5154 = vpop.f32.mrf.mxu0
      %v5155 = vadd.f32 0.0, %v5154
      %5156 = vmatmul.f32.gmra.mxu0 %v5063
      %v5157 = vpop.f32.mrf.mxu0
      %v5158 = vadd.f32 0.0, %v5157
      %5159 = vmatmul.f32.gmra.mxu0 %v5066
      %v5160 = vpop.f32.mrf.mxu0
      %v5161 = vadd.f32 0.0, %v5160
      %5162 = vmatmul.f32.gmra.mxu0 %v5069
      %v5163 = vpop.f32.mrf.mxu0
      %v5164 = vadd.f32 0.0, %v5163
      %5165 = vmatmul.f32.gmra.mxu0 %v5072
      %v5166 = vpop.f32.mrf.mxu0
      %v5167 = vadd.f32 0.0, %v5166
      %5168 = vmatmul.f32.gmra.mxu0 %v5075
      %v5169 = vpop.f32.mrf.mxu0
      %v5170 = vadd.f32 0.0, %v5169
      %5171 = vmatmul.f32.gmra.mxu0 %v5078
      %v5172 = vpop.f32.mrf.mxu0
      %v5173 = vadd.f32 0.0, %v5172
      %5174 = vmatmul.f32.gmra.mxu0 %v5081
      %v5175 = vpop.f32.mrf.mxu0
      %v5176 = vadd.f32 0.0, %v5175
      %5177 = vmatmul.f32.gmra.mxu0 %v5084
      %v5178 = vpop.f32.mrf.mxu0
      %v5179 = vadd.f32 0.0, %v5178
      %5180 = vmatmul.f32.gmra.mxu0 %v5087
      %v5181 = vpop.f32.mrf.mxu0
      %v5182 = vadd.f32 0.0, %v5181
      %5183 = vmatmul.f32.gmra.mxu0 %v5090
      %v5184 = vpop.f32.mrf.mxu0
      %v5185 = vadd.f32 0.0, %v5184
      %5186 = vmatmul.f32.gmra.mxu0 %v5093
      %v5187 = vpop.f32.mrf.mxu0
      %v5188 = vadd.f32 0.0, %v5187
      %5189 = vmatmul.f32.gmra.mxu0 %v5096
      %v5190 = vpop.f32.mrf.mxu0
      %5191 = vdwg.mxu0
      %v5192 = vadd.f32 %v4887, %v5116
      %v5193 = vadd.f32 %v4888, %v5119
      %v5194 = vadd.f32 %v4889, %v5122
      %v5195 = vadd.f32 %v4890, %v5125
      %v5196 = vadd.f32 %v4891, %v5128
      %v5197 = vadd.f32 %v4892, %v5131
      %v5198 = vadd.f32 %v4893, %v5134
      %v5199 = vadd.f32 %v4894, %v5137
      %v5200 = vadd.f32 %v4895, %v5140
      %v5201 = vadd.f32 %v4896, %v5143
      %v5202 = vadd.f32 %v4897, %v5146
      %v5203 = vadd.f32 %v4898, %v5149
      %v5204 = vadd.f32 %v4899, %v5152
      %v5205 = vadd.f32 %v4900, %v5155
      %v5206 = vadd.f32 %v4901, %v5158
      %v5207 = vadd.f32 %v4902, %v5161
      %v5208 = vadd.f32 %v4903, %v5164
      %v5209 = vadd.f32 %v4904, %v5167
      %v5210 = vadd.f32 %v4905, %v5170
      %v5211 = vadd.f32 %v4906, %v5173
      %v5212 = vadd.f32 %v4907, %v5176
      %v5213 = vadd.f32 %v4908, %v5179
      %v5214 = vadd.f32 %v4909, %v5182
      %v5215 = vadd.f32 %v4910, %v5185
      %v5216 = vadd.f32 %v4911, %v5188
      %s5217 = scalar_lea.vmem %s6, 1664
      %v5218 = vld [vmem:[%s5217] sm:$0xff]
      %v5219 = vld [vmem:[%s5217 + $0x8] sm:$0xff]
      %v5220 = vld [vmem:[%s5217 + $0x10] sm:$0xff]
      %v5221 = vld [vmem:[%s5217 + $0x18] sm:$0xff]
      %v5222 = vld [vmem:[%s5217 + $0x20] sm:$0xff]
      %v5223 = vld [vmem:[%s5217 + $0x28] sm:$0xff]
      %v5224 = vld [vmem:[%s5217 + $0x30] sm:$0xff]
      %v5225 = vld [vmem:[%s5217 + $0x38] sm:$0xff]
      %v5226 = vld [vmem:[%s5217 + $0x40] sm:$0xff]
      %v5227 = vld [vmem:[%s5217 + $0x48] sm:$0xff]
      %v5228 = vld [vmem:[%s5217 + $0x50] sm:$0xff]
      %v5229 = vld [vmem:[%s5217 + $0x58] sm:$0xff]
      %v5230 = vld [vmem:[%s5217 + $0x60] sm:$0xff]
      %v5231 = vld [vmem:[%s5217 + $0x68] sm:$0xff]
      %v5232 = vld [vmem:[%s5217 + $0x70] sm:$0xff]
      %v5233 = vld [vmem:[%s5217 + $0x78] sm:$0xff]
      %v5234 = vld [vmem:[%s5217 + $0x80] sm:$0xff]
      %v5235 = vld [vmem:[%s5217 + $0x88] sm:$0xff]
      %v5236 = vld [vmem:[%s5217 + $0x90] sm:$0xff]
      %v5237 = vld [vmem:[%s5217 + $0x98] sm:$0xff]
      %v5238 = vld [vmem:[%s5217 + $0xa0] sm:$0xff]
      %v5239 = vld [vmem:[%s5217 + $0xa8] sm:$0xff]
      %v5240 = vld [vmem:[%s5217 + $0xb0] sm:$0xff]
      %v5241 = vld [vmem:[%s5217 + $0xb8] sm:$0xff]
      %v5242 = vld [vmem:[%s5217 + $0xc0] sm:$0xff]
      %v5243 = vld [vmem:[%s5217 + $0xc8] sm:$0xff]
      %v5244 = vmul.f32 %v3848, %v5218
      %v5245 = vmul.f32 %v3847, %v5219
      %v5246 = vmul.f32 %v3846, %v5220
      %v5247 = vmul.f32 %v3845, %v5221
      %v5248 = vmul.f32 %v3844, %v5222
      %v5249 = vmul.f32 %v3843, %v5223
      %v5250 = vmul.f32 %v3842, %v5224
      %v5251 = vmul.f32 %v3841, %v5225
      %v5252 = vmul.f32 %v3840, %v5226
      %v5253 = vmul.f32 %v3839, %v5227
      %v5254 = vmul.f32 %v3838, %v5228
      %v5255 = vmul.f32 %v3837, %v5229
      %v5256 = vmul.f32 %v3836, %v5230
      %v5257 = vmul.f32 %v3835, %v5231
      %v5258 = vmul.f32 %v3834, %v5232
      %v5259 = vmul.f32 %v3833, %v5233
      %v5260 = vmul.f32 %v3832, %v5234
      %v5261 = vmul.f32 %v3831, %v5235
      %v5262 = vmul.f32 %v3830, %v5236
      %v5263 = vmul.f32 %v3829, %v5237
      %v5264 = vmul.f32 %v3828, %v5238
      %v5265 = vmul.f32 %v3827, %v5239
      %v5266 = vmul.f32 %v3826, %v5240
      %v5267 = vmul.f32 %v3825, %v5241
      %v5268 = vmul.f32 %v3850, %v5242
      %v5269 = vmul.f32 %v3849, %v5243
      %s5270 = scalar_lea.vmem %s3, 64
      %v5271 = vld [vmem:[%s5270] sm:$0xff]
      %v5273 = vsel %vm391, %v5244, 0
      %v5276 = vsel %vm391, %v5245, 0
      %v5279 = vsel %vm391, %v5246, 0
      %v5282 = vsel %vm391, %v5247, 0
      %v5285 = vsel %vm391, %v5248, 0
      %v5288 = vsel %vm391, %v5249, 0
      %v5291 = vsel %vm391, %v5250, 0
      %v5294 = vsel %vm391, %v5251, 0
      %v5297 = vsel %vm391, %v5252, 0
      %v5300 = vsel %vm391, %v5253, 0
      %v5303 = vsel %vm391, %v5254, 0
      %v5306 = vsel %vm391, %v5255, 0
      %v5309 = vsel %vm391, %v5256, 0
      %v5312 = vsel %vm391, %v5257, 0
      %v5315 = vsel %vm391, %v5258, 0
      %v5318 = vsel %vm391, %v5259, 0
      %v5321 = vsel %vm391, %v5260, 0
      %v5324 = vsel %vm391, %v5261, 0
      %v5327 = vsel %vm391, %v5262, 0
      %v5330 = vsel %vm391, %v5263, 0
      %v5333 = vsel %vm391, %v5264, 0
      %v5336 = vsel %vm391, %v5265, 0
      %v5339 = vsel %vm391, %v5266, 0
      %v5342 = vsel %vm391, %v5267, 0
      %v5345 = vsel %vm391, %v5268, 0
      %v5348 = vsel %vm391, %v5269, 0
      %5350 = vmatpush.msra.mxu0 0.0
      %5351 = vmatpush.msra.mxu0 0.0
      %5352 = vmatpush.msra.mxu0 0.0
      %5353 = vmatpush.msra.mxu0 0.0
      %5354 = vmatpush.msra.mxu0 0.0
      %5355 = vmatpush.msra.mxu0 0.0
      %5356 = vmatpush.msra.mxu0 0.0
      %5357 = vmatpush.msra.mxu0 0.0
      %5358 = vmatpush.msra.mxu0 0.0
      %5359 = vmatpush.msra.mxu0 0.0
      %5360 = vmatpush.msra.mxu0 0.0
      %5361 = vmatpush.msra.mxu0 0.0
      %5362 = vmatpush.msra.mxu0 0.0
      %5363 = vmatpush.msra.mxu0 0.0
      %5364 = vmatpush.msra.mxu0 0.0
      %5365 = vmatpush.msra.mxu0 %v5271
      %5366 = vmatmul.f32.gmra.mxu0 %v5273
      %v5367 = vpop.f32.mrf.mxu0
      %v5368 = vadd.f32 0.0, %v5367
      %5369 = vmatmul.f32.gmra.mxu0 %v5276
      %v5370 = vpop.f32.mrf.mxu0
      %v5371 = vadd.f32 0.0, %v5370
      %5372 = vmatmul.f32.gmra.mxu0 %v5279
      %v5373 = vpop.f32.mrf.mxu0
      %v5374 = vadd.f32 0.0, %v5373
      %5375 = vmatmul.f32.gmra.mxu0 %v5282
      %v5376 = vpop.f32.mrf.mxu0
      %v5377 = vadd.f32 0.0, %v5376
      %5378 = vmatmul.f32.gmra.mxu0 %v5285
      %v5379 = vpop.f32.mrf.mxu0
      %v5380 = vadd.f32 0.0, %v5379
      %5381 = vmatmul.f32.gmra.mxu0 %v5288
      %v5382 = vpop.f32.mrf.mxu0
      %v5383 = vadd.f32 0.0, %v5382
      %5384 = vmatmul.f32.gmra.mxu0 %v5291
      %v5385 = vpop.f32.mrf.mxu0
      %v5386 = vadd.f32 0.0, %v5385
      %5387 = vmatmul.f32.gmra.mxu0 %v5294
      %v5388 = vpop.f32.mrf.mxu0
      %v5389 = vadd.f32 0.0, %v5388
      %5390 = vmatmul.f32.gmra.mxu0 %v5297
      %v5391 = vpop.f32.mrf.mxu0
      %v5392 = vadd.f32 0.0, %v5391
      %5393 = vmatmul.f32.gmra.mxu0 %v5300
      %v5394 = vpop.f32.mrf.mxu0
      %v5395 = vadd.f32 0.0, %v5394
      %5396 = vmatmul.f32.gmra.mxu0 %v5303
      %v5397 = vpop.f32.mrf.mxu0
      %v5398 = vadd.f32 0.0, %v5397
      %5399 = vmatmul.f32.gmra.mxu0 %v5306
      %v5400 = vpop.f32.mrf.mxu0
      %v5401 = vadd.f32 0.0, %v5400
      %5402 = vmatmul.f32.gmra.mxu0 %v5309
      %v5403 = vpop.f32.mrf.mxu0
      %v5404 = vadd.f32 0.0, %v5403
      %5405 = vmatmul.f32.gmra.mxu0 %v5312
      %v5406 = vpop.f32.mrf.mxu0
      %v5407 = vadd.f32 0.0, %v5406
      %5408 = vmatmul.f32.gmra.mxu0 %v5315
      %v5409 = vpop.f32.mrf.mxu0
      %v5410 = vadd.f32 0.0, %v5409
      %5411 = vmatmul.f32.gmra.mxu0 %v5318
      %v5412 = vpop.f32.mrf.mxu0
      %v5413 = vadd.f32 0.0, %v5412
      %5414 = vmatmul.f32.gmra.mxu0 %v5321
      %v5415 = vpop.f32.mrf.mxu0
      %v5416 = vadd.f32 0.0, %v5415
      %5417 = vmatmul.f32.gmra.mxu0 %v5324
      %v5418 = vpop.f32.mrf.mxu0
      %v5419 = vadd.f32 0.0, %v5418
      %5420 = vmatmul.f32.gmra.mxu0 %v5327
      %v5421 = vpop.f32.mrf.mxu0
      %v5422 = vadd.f32 0.0, %v5421
      %5423 = vmatmul.f32.gmra.mxu0 %v5330
      %v5424 = vpop.f32.mrf.mxu0
      %v5425 = vadd.f32 0.0, %v5424
      %5426 = vmatmul.f32.gmra.mxu0 %v5333
      %v5427 = vpop.f32.mrf.mxu0
      %v5428 = vadd.f32 0.0, %v5427
      %5429 = vmatmul.f32.gmra.mxu0 %v5336
      %v5430 = vpop.f32.mrf.mxu0
      %v5431 = vadd.f32 0.0, %v5430
      %5432 = vmatmul.f32.gmra.mxu0 %v5339
      %v5433 = vpop.f32.mrf.mxu0
      %v5434 = vadd.f32 0.0, %v5433
      %5435 = vmatmul.f32.gmra.mxu0 %v5342
      %v5436 = vpop.f32.mrf.mxu0
      %v5437 = vadd.f32 0.0, %v5436
      %5438 = vmatmul.f32.gmra.mxu0 %v5345
      %v5439 = vpop.f32.mrf.mxu0
      %v5440 = vadd.f32 0.0, %v5439
      %5441 = vmatmul.f32.gmra.mxu0 %v5348
      %v5442 = vpop.f32.mrf.mxu0
      %5443 = vdwg.mxu0
      %v5444 = vadd.f32 %v5192, %v5368
      %v5445 = vadd.f32 %v5193, %v5371
      %v5446 = vadd.f32 %v5194, %v5374
      %v5447 = vadd.f32 %v5195, %v5377
      %v5448 = vadd.f32 %v5196, %v5380
      %v5449 = vadd.f32 %v5197, %v5383
      %v5450 = vadd.f32 %v5198, %v5386
      %v5451 = vadd.f32 %v5199, %v5389
      %v5452 = vadd.f32 %v5200, %v5392
      %v5453 = vadd.f32 %v5201, %v5395
      %v5454 = vadd.f32 %v5202, %v5398
      %v5455 = vadd.f32 %v5203, %v5401
      %v5456 = vadd.f32 %v5204, %v5404
      %v5457 = vadd.f32 %v5205, %v5407
      %v5458 = vadd.f32 %v5206, %v5410
      %v5459 = vadd.f32 %v5207, %v5413
      %v5460 = vadd.f32 %v5208, %v5416
      %v5461 = vadd.f32 %v5209, %v5419
      %v5462 = vadd.f32 %v5210, %v5422
      %v5463 = vadd.f32 %v5211, %v5425
      %v5464 = vadd.f32 %v5212, %v5428
      %v5465 = vadd.f32 %v5213, %v5431
      %v5466 = vadd.f32 %v5214, %v5434
      %v5467 = vadd.f32 %v5215, %v5437
      %v5468 = vadd.f32 %v5216, %v5440
      %v5469 = vmul.f32 %v5444, 1.702
      %v5470 = vmul.f32 %v5445, 1.702
      %v5471 = vmul.f32 %v5446, 1.702
      %v5472 = vmul.f32 %v5447, 1.702
      %v5473 = vmul.f32 %v5448, 1.702
      %v5474 = vmul.f32 %v5449, 1.702
      %v5475 = vmul.f32 %v5450, 1.702
      %v5476 = vmul.f32 %v5451, 1.702
      %v5477 = vmul.f32 %v5452, 1.702
      %v5478 = vmul.f32 %v5453, 1.702
      %v5479 = vmul.f32 %v5454, 1.702
      %v5480 = vmul.f32 %v5455, 1.702
      %v5481 = vmul.f32 %v5456, 1.702
      %v5482 = vmul.f32 %v5457, 1.702
      %v5483 = vmul.f32 %v5458, 1.702
      %v5484 = vmul.f32 %v5459, 1.702
      %v5485 = vmul.f32 %v5460, 1.702
      %v5486 = vmul.f32 %v5461, 1.702
      %v5487 = vmul.f32 %v5462, 1.702
      %v5488 = vmul.f32 %v5463, 1.702
      %v5489 = vmul.f32 %v5464, 1.702
      %v5490 = vmul.f32 %v5465, 1.702
      %v5491 = vmul.f32 %v5466, 1.702
      %v5492 = vmul.f32 %v5467, 1.702
      %v5493 = vmul.f32 %v5468, 1.702
      %v5494 = vxor.u32 %v5469, 2147483648
      %v5495 = vxor.u32 %v5470, 2147483648
      %v5496 = vxor.u32 %v5471, 2147483648
      %v5497 = vxor.u32 %v5472, 2147483648
      %v5498 = vxor.u32 %v5473, 2147483648
      %v5499 = vxor.u32 %v5474, 2147483648
      %v5500 = vxor.u32 %v5475, 2147483648
      %v5501 = vxor.u32 %v5476, 2147483648
      %v5502 = vxor.u32 %v5477, 2147483648
      %v5503 = vxor.u32 %v5478, 2147483648
      %v5504 = vxor.u32 %v5479, 2147483648
      %v5505 = vxor.u32 %v5480, 2147483648
      %v5506 = vxor.u32 %v5481, 2147483648
      %v5507 = vxor.u32 %v5482, 2147483648
      %v5508 = vxor.u32 %v5483, 2147483648
      %v5509 = vxor.u32 %v5484, 2147483648
      %v5510 = vxor.u32 %v5485, 2147483648
      %v5511 = vxor.u32 %v5486, 2147483648
      %v5512 = vxor.u32 %v5487, 2147483648
      %v5513 = vxor.u32 %v5488, 2147483648
      %v5514 = vxor.u32 %v5489, 2147483648
      %v5515 = vxor.u32 %v5490, 2147483648
      %v5516 = vxor.u32 %v5491, 2147483648
      %v5517 = vxor.u32 %v5492, 2147483648
      %v5518 = vxor.u32 %v5493, 2147483648
      %v5519 = vmul.f32 %v5494, 1.442695
      %v5520 = vpow.pop %v5519
      %v5521 = vmul.f32 %v5495, 1.442695
      %v5522 = vpow.pop %v5521
      %v5523 = vmul.f32 %v5496, 1.442695
      %v5524 = vpow.pop %v5523
      %v5525 = vmul.f32 %v5497, 1.442695
      %v5526 = vpow.pop %v5525
      %v5527 = vmul.f32 %v5498, 1.442695
      %v5528 = vpow.pop %v5527
      %v5529 = vmul.f32 %v5499, 1.442695
      %v5530 = vpow.pop %v5529
      %v5531 = vmul.f32 %v5500, 1.442695
      %v5532 = vpow.pop %v5531
      %v5533 = vmul.f32 %v5501, 1.442695
      %v5534 = vpow.pop %v5533
      %v5535 = vmul.f32 %v5502, 1.442695
      %v5536 = vpow.pop %v5535
      %v5537 = vmul.f32 %v5503, 1.442695
      %v5538 = vpow.pop %v5537
      %v5539 = vmul.f32 %v5504, 1.442695
      %v5540 = vpow.pop %v5539
      %v5541 = vmul.f32 %v5505, 1.442695
      %v5542 = vpow.pop %v5541
      %v5543 = vmul.f32 %v5506, 1.442695
      %v5544 = vpow.pop %v5543
      %v5545 = vmul.f32 %v5507, 1.442695
      %v5546 = vpow.pop %v5545
      %v5547 = vmul.f32 %v5508, 1.442695
      %v5548 = vpow.pop %v5547
      %v5549 = vmul.f32 %v5509, 1.442695
      %v5550 = vpow.pop %v5549
      %v5551 = vmul.f32 %v5510, 1.442695
      %v5552 = vpow.pop %v5551
      %v5553 = vmul.f32 %v5511, 1.442695
      %v5554 = vpow.pop %v5553
      %v5555 = vmul.f32 %v5512, 1.442695
      %v5556 = vpow.pop %v5555
      %v5557 = vmul.f32 %v5513, 1.442695
      %v5558 = vpow.pop %v5557
      %v5559 = vmul.f32 %v5514, 1.442695
      %v5560 = vpow.pop %v5559
      %v5561 = vmul.f32 %v5515, 1.442695
      %v5562 = vpow.pop %v5561
      %v5563 = vmul.f32 %v5516, 1.442695
      %v5564 = vpow.pop %v5563
      %v5565 = vmul.f32 %v5517, 1.442695
      %v5566 = vpow.pop %v5565
      %v5567 = vmul.f32 %v5518, 1.442695
      %v5568 = vpow.pop %v5567
      %v5569 = vadd.f32 %v5520, 1.0
      %v5570 = vadd.f32 %v5522, 1.0
      %v5571 = vadd.f32 %v5524, 1.0
      %v5572 = vadd.f32 %v5526, 1.0
      %v5573 = vadd.f32 %v5528, 1.0
      %v5574 = vadd.f32 %v5530, 1.0
      %v5575 = vadd.f32 %v5532, 1.0
      %v5576 = vadd.f32 %v5534, 1.0
      %v5577 = vadd.f32 %v5536, 1.0
      %v5578 = vadd.f32 %v5538, 1.0
      %v5579 = vadd.f32 %v5540, 1.0
      %v5580 = vadd.f32 %v5542, 1.0
      %v5581 = vadd.f32 %v5544, 1.0
      %v5582 = vadd.f32 %v5546, 1.0
      %v5583 = vadd.f32 %v5548, 1.0
      %v5584 = vadd.f32 %v5550, 1.0
      %v5585 = vadd.f32 %v5552, 1.0
      %v5586 = vadd.f32 %v5554, 1.0
      %v5587 = vadd.f32 %v5556, 1.0
      %v5588 = vadd.f32 %v5558, 1.0
      %v5589 = vadd.f32 %v5560, 1.0
      %v5590 = vadd.f32 %v5562, 1.0
      %v5591 = vadd.f32 %v5564, 1.0
      %v5592 = vadd.f32 %v5566, 1.0
      %v5593 = vadd.f32 %v5568, 1.0
      %v5594 = vrcp.pop %v5569
      %v5595 = vmul.f32 %v5569, %v5594
      %v5596 = vsub.f32 1.0, %v5595
      %v5597 = vmul.f32 %v5594, %v5596
      %v5598 = vadd.f32 %v5594, %v5597
      %vm5599 = vweird.f32 %v5569
      %vm5600 = vweird.f32 %v5594
      %vm5601 = vmor %vm5599, %vm5600
      %v5602 = vsel %vm5601, %v5594, %v5598
      %v5603 = vand.u32 2147483647, %v5569
      %vm5604 = vcmp.eq.f32.partialorder %v5603, 8.507059e+37
      %v5605 = vand.u32 %v5569, 2147483648
      %v5606 = vor.u32 1.1754944e-38, %v5605
      %v5607 = vsel %vm5604, %v5606, %v5602
      %v5608 = vmul.f32 1.0, %v5607
      %v5609 = vrcp.pop %v5570
      %v5610 = vmul.f32 %v5570, %v5609
      %v5611 = vsub.f32 1.0, %v5610
      %v5612 = vmul.f32 %v5609, %v5611
      %v5613 = vadd.f32 %v5609, %v5612
      %vm5614 = vweird.f32 %v5570
      %vm5615 = vweird.f32 %v5609
      %vm5616 = vmor %vm5614, %vm5615
      %v5617 = vsel %vm5616, %v5609, %v5613
      %v5618 = vand.u32 2147483647, %v5570
      %vm5619 = vcmp.eq.f32.partialorder %v5618, 8.507059e+37
      %v5620 = vand.u32 %v5570, 2147483648
      %v5621 = vor.u32 1.1754944e-38, %v5620
      %v5622 = vsel %vm5619, %v5621, %v5617
      %v5623 = vmul.f32 1.0, %v5622
      %v5624 = vrcp.pop %v5571
      %v5625 = vmul.f32 %v5571, %v5624
      %v5626 = vsub.f32 1.0, %v5625
      %v5627 = vmul.f32 %v5624, %v5626
      %v5628 = vadd.f32 %v5624, %v5627
      %vm5629 = vweird.f32 %v5571
      %vm5630 = vweird.f32 %v5624
      %vm5631 = vmor %vm5629, %vm5630
      %v5632 = vsel %vm5631, %v5624, %v5628
      %v5633 = vand.u32 2147483647, %v5571
      %vm5634 = vcmp.eq.f32.partialorder %v5633, 8.507059e+37
      %v5635 = vand.u32 %v5571, 2147483648
      %v5636 = vor.u32 1.1754944e-38, %v5635
      %v5637 = vsel %vm5634, %v5636, %v5632
      %v5638 = vmul.f32 1.0, %v5637
      %v5639 = vrcp.pop %v5572
      %v5640 = vmul.f32 %v5572, %v5639
      %v5641 = vsub.f32 1.0, %v5640
      %v5642 = vmul.f32 %v5639, %v5641
      %v5643 = vadd.f32 %v5639, %v5642
      %vm5644 = vweird.f32 %v5572
      %vm5645 = vweird.f32 %v5639
      %vm5646 = vmor %vm5644, %vm5645
      %v5647 = vsel %vm5646, %v5639, %v5643
      %v5648 = vand.u32 2147483647, %v5572
      %vm5649 = vcmp.eq.f32.partialorder %v5648, 8.507059e+37
      %v5650 = vand.u32 %v5572, 2147483648
      %v5651 = vor.u32 1.1754944e-38, %v5650
      %v5652 = vsel %vm5649, %v5651, %v5647
      %v5653 = vmul.f32 1.0, %v5652
      %v5654 = vrcp.pop %v5573
      %v5655 = vmul.f32 %v5573, %v5654
      %v5656 = vsub.f32 1.0, %v5655
      %v5657 = vmul.f32 %v5654, %v5656
      %v5658 = vadd.f32 %v5654, %v5657
      %vm5659 = vweird.f32 %v5573
      %vm5660 = vweird.f32 %v5654
      %vm5661 = vmor %vm5659, %vm5660
      %v5662 = vsel %vm5661, %v5654, %v5658
      %v5663 = vand.u32 2147483647, %v5573
      %vm5664 = vcmp.eq.f32.partialorder %v5663, 8.507059e+37
      %v5665 = vand.u32 %v5573, 2147483648
      %v5666 = vor.u32 1.1754944e-38, %v5665
      %v5667 = vsel %vm5664, %v5666, %v5662
      %v5668 = vmul.f32 1.0, %v5667
      %v5669 = vrcp.pop %v5574
      %v5670 = vmul.f32 %v5574, %v5669
      %v5671 = vsub.f32 1.0, %v5670
      %v5672 = vmul.f32 %v5669, %v5671
      %v5673 = vadd.f32 %v5669, %v5672
      %vm5674 = vweird.f32 %v5574
      %vm5675 = vweird.f32 %v5669
      %vm5676 = vmor %vm5674, %vm5675
      %v5677 = vsel %vm5676, %v5669, %v5673
      %v5678 = vand.u32 2147483647, %v5574
      %vm5679 = vcmp.eq.f32.partialorder %v5678, 8.507059e+37
      %v5680 = vand.u32 %v5574, 2147483648
      %v5681 = vor.u32 1.1754944e-38, %v5680
      %v5682 = vsel %vm5679, %v5681, %v5677
      %v5683 = vmul.f32 1.0, %v5682
      %v5684 = vrcp.pop %v5575
      %v5685 = vmul.f32 %v5575, %v5684
      %v5686 = vsub.f32 1.0, %v5685
      %v5687 = vmul.f32 %v5684, %v5686
      %v5688 = vadd.f32 %v5684, %v5687
      %vm5689 = vweird.f32 %v5575
      %vm5690 = vweird.f32 %v5684
      %vm5691 = vmor %vm5689, %vm5690
      %v5692 = vsel %vm5691, %v5684, %v5688
      %v5693 = vand.u32 2147483647, %v5575
      %vm5694 = vcmp.eq.f32.partialorder %v5693, 8.507059e+37
      %v5695 = vand.u32 %v5575, 2147483648
      %v5696 = vor.u32 1.1754944e-38, %v5695
      %v5697 = vsel %vm5694, %v5696, %v5692
      %v5698 = vmul.f32 1.0, %v5697
      %v5699 = vrcp.pop %v5576
      %v5700 = vmul.f32 %v5576, %v5699
      %v5701 = vsub.f32 1.0, %v5700
      %v5702 = vmul.f32 %v5699, %v5701
      %v5703 = vadd.f32 %v5699, %v5702
      %vm5704 = vweird.f32 %v5576
      %vm5705 = vweird.f32 %v5699
      %vm5706 = vmor %vm5704, %vm5705
      %v5707 = vsel %vm5706, %v5699, %v5703
      %v5708 = vand.u32 2147483647, %v5576
      %vm5709 = vcmp.eq.f32.partialorder %v5708, 8.507059e+37
      %v5710 = vand.u32 %v5576, 2147483648
      %v5711 = vor.u32 1.1754944e-38, %v5710
      %v5712 = vsel %vm5709, %v5711, %v5707
      %v5713 = vmul.f32 1.0, %v5712
      %v5714 = vrcp.pop %v5577
      %v5715 = vmul.f32 %v5577, %v5714
      %v5716 = vsub.f32 1.0, %v5715
      %v5717 = vmul.f32 %v5714, %v5716
      %v5718 = vadd.f32 %v5714, %v5717
      %vm5719 = vweird.f32 %v5577
      %vm5720 = vweird.f32 %v5714
      %vm5721 = vmor %vm5719, %vm5720
      %v5722 = vsel %vm5721, %v5714, %v5718
      %v5723 = vand.u32 2147483647, %v5577
      %vm5724 = vcmp.eq.f32.partialorder %v5723, 8.507059e+37
      %v5725 = vand.u32 %v5577, 2147483648
      %v5726 = vor.u32 1.1754944e-38, %v5725
      %v5727 = vsel %vm5724, %v5726, %v5722
      %v5728 = vmul.f32 1.0, %v5727
      %v5729 = vrcp.pop %v5578
      %v5730 = vmul.f32 %v5578, %v5729
      %v5731 = vsub.f32 1.0, %v5730
      %v5732 = vmul.f32 %v5729, %v5731
      %v5733 = vadd.f32 %v5729, %v5732
      %vm5734 = vweird.f32 %v5578
      %vm5735 = vweird.f32 %v5729
      %vm5736 = vmor %vm5734, %vm5735
      %v5737 = vsel %vm5736, %v5729, %v5733
      %v5738 = vand.u32 2147483647, %v5578
      %vm5739 = vcmp.eq.f32.partialorder %v5738, 8.507059e+37
      %v5740 = vand.u32 %v5578, 2147483648
      %v5741 = vor.u32 1.1754944e-38, %v5740
      %v5742 = vsel %vm5739, %v5741, %v5737
      %v5743 = vmul.f32 1.0, %v5742
      %v5744 = vrcp.pop %v5579
      %v5745 = vmul.f32 %v5579, %v5744
      %v5746 = vsub.f32 1.0, %v5745
      %v5747 = vmul.f32 %v5744, %v5746
      %v5748 = vadd.f32 %v5744, %v5747
      %vm5749 = vweird.f32 %v5579
      %vm5750 = vweird.f32 %v5744
      %vm5751 = vmor %vm5749, %vm5750
      %v5752 = vsel %vm5751, %v5744, %v5748
      %v5753 = vand.u32 2147483647, %v5579
      %vm5754 = vcmp.eq.f32.partialorder %v5753, 8.507059e+37
      %v5755 = vand.u32 %v5579, 2147483648
      %v5756 = vor.u32 1.1754944e-38, %v5755
      %v5757 = vsel %vm5754, %v5756, %v5752
      %v5758 = vmul.f32 1.0, %v5757
      %v5759 = vrcp.pop %v5580
      %v5760 = vmul.f32 %v5580, %v5759
      %v5761 = vsub.f32 1.0, %v5760
      %v5762 = vmul.f32 %v5759, %v5761
      %v5763 = vadd.f32 %v5759, %v5762
      %vm5764 = vweird.f32 %v5580
      %vm5765 = vweird.f32 %v5759
      %vm5766 = vmor %vm5764, %vm5765
      %v5767 = vsel %vm5766, %v5759, %v5763
      %v5768 = vand.u32 2147483647, %v5580
      %vm5769 = vcmp.eq.f32.partialorder %v5768, 8.507059e+37
      %v5770 = vand.u32 %v5580, 2147483648
      %v5771 = vor.u32 1.1754944e-38, %v5770
      %v5772 = vsel %vm5769, %v5771, %v5767
      %v5773 = vmul.f32 1.0, %v5772
      %v5774 = vrcp.pop %v5581
      %v5775 = vmul.f32 %v5581, %v5774
      %v5776 = vsub.f32 1.0, %v5775
      %v5777 = vmul.f32 %v5774, %v5776
      %v5778 = vadd.f32 %v5774, %v5777
      %vm5779 = vweird.f32 %v5581
      %vm5780 = vweird.f32 %v5774
      %vm5781 = vmor %vm5779, %vm5780
      %v5782 = vsel %vm5781, %v5774, %v5778
      %v5783 = vand.u32 2147483647, %v5581
      %vm5784 = vcmp.eq.f32.partialorder %v5783, 8.507059e+37
      %v5785 = vand.u32 %v5581, 2147483648
      %v5786 = vor.u32 1.1754944e-38, %v5785
      %v5787 = vsel %vm5784, %v5786, %v5782
      %v5788 = vmul.f32 1.0, %v5787
      %v5789 = vrcp.pop %v5582
      %v5790 = vmul.f32 %v5582, %v5789
      %v5791 = vsub.f32 1.0, %v5790
      %v5792 = vmul.f32 %v5789, %v5791
      %v5793 = vadd.f32 %v5789, %v5792
      %vm5794 = vweird.f32 %v5582
      %vm5795 = vweird.f32 %v5789
      %vm5796 = vmor %vm5794, %vm5795
      %v5797 = vsel %vm5796, %v5789, %v5793
      %v5798 = vand.u32 2147483647, %v5582
      %vm5799 = vcmp.eq.f32.partialorder %v5798, 8.507059e+37
      %v5800 = vand.u32 %v5582, 2147483648
      %v5801 = vor.u32 1.1754944e-38, %v5800
      %v5802 = vsel %vm5799, %v5801, %v5797
      %v5803 = vmul.f32 1.0, %v5802
      %v5804 = vrcp.pop %v5583
      %v5805 = vmul.f32 %v5583, %v5804
      %v5806 = vsub.f32 1.0, %v5805
      %v5807 = vmul.f32 %v5804, %v5806
      %v5808 = vadd.f32 %v5804, %v5807
      %vm5809 = vweird.f32 %v5583
      %vm5810 = vweird.f32 %v5804
      %vm5811 = vmor %vm5809, %vm5810
      %v5812 = vsel %vm5811, %v5804, %v5808
      %v5813 = vand.u32 2147483647, %v5583
      %vm5814 = vcmp.eq.f32.partialorder %v5813, 8.507059e+37
      %v5815 = vand.u32 %v5583, 2147483648
      %v5816 = vor.u32 1.1754944e-38, %v5815
      %v5817 = vsel %vm5814, %v5816, %v5812
      %v5818 = vmul.f32 1.0, %v5817
      %v5819 = vrcp.pop %v5584
      %v5820 = vmul.f32 %v5584, %v5819
      %v5821 = vsub.f32 1.0, %v5820
      %v5822 = vmul.f32 %v5819, %v5821
      %v5823 = vadd.f32 %v5819, %v5822
      %vm5824 = vweird.f32 %v5584
      %vm5825 = vweird.f32 %v5819
      %vm5826 = vmor %vm5824, %vm5825
      %v5827 = vsel %vm5826, %v5819, %v5823
      %v5828 = vand.u32 2147483647, %v5584
      %vm5829 = vcmp.eq.f32.partialorder %v5828, 8.507059e+37
      %v5830 = vand.u32 %v5584, 2147483648
      %v5831 = vor.u32 1.1754944e-38, %v5830
      %v5832 = vsel %vm5829, %v5831, %v5827
      %v5833 = vmul.f32 1.0, %v5832
      %v5834 = vrcp.pop %v5585
      %v5835 = vmul.f32 %v5585, %v5834
      %v5836 = vsub.f32 1.0, %v5835
      %v5837 = vmul.f32 %v5834, %v5836
      %v5838 = vadd.f32 %v5834, %v5837
      %vm5839 = vweird.f32 %v5585
      %vm5840 = vweird.f32 %v5834
      %vm5841 = vmor %vm5839, %vm5840
      %v5842 = vsel %vm5841, %v5834, %v5838
      %v5843 = vand.u32 2147483647, %v5585
      %vm5844 = vcmp.eq.f32.partialorder %v5843, 8.507059e+37
      %v5845 = vand.u32 %v5585, 2147483648
      %v5846 = vor.u32 1.1754944e-38, %v5845
      %v5847 = vsel %vm5844, %v5846, %v5842
      %v5848 = vmul.f32 1.0, %v5847
      %v5849 = vrcp.pop %v5586
      %v5850 = vmul.f32 %v5586, %v5849
      %v5851 = vsub.f32 1.0, %v5850
      %v5852 = vmul.f32 %v5849, %v5851
      %v5853 = vadd.f32 %v5849, %v5852
      %vm5854 = vweird.f32 %v5586
      %vm5855 = vweird.f32 %v5849
      %vm5856 = vmor %vm5854, %vm5855
      %v5857 = vsel %vm5856, %v5849, %v5853
      %v5858 = vand.u32 2147483647, %v5586
      %vm5859 = vcmp.eq.f32.partialorder %v5858, 8.507059e+37
      %v5860 = vand.u32 %v5586, 2147483648
      %v5861 = vor.u32 1.1754944e-38, %v5860
      %v5862 = vsel %vm5859, %v5861, %v5857
      %v5863 = vmul.f32 1.0, %v5862
      %v5864 = vrcp.pop %v5587
      %v5865 = vmul.f32 %v5587, %v5864
      %v5866 = vsub.f32 1.0, %v5865
      %v5867 = vmul.f32 %v5864, %v5866
      %v5868 = vadd.f32 %v5864, %v5867
      %vm5869 = vweird.f32 %v5587
      %vm5870 = vweird.f32 %v5864
      %vm5871 = vmor %vm5869, %vm5870
      %v5872 = vsel %vm5871, %v5864, %v5868
      %v5873 = vand.u32 2147483647, %v5587
      %vm5874 = vcmp.eq.f32.partialorder %v5873, 8.507059e+37
      %v5875 = vand.u32 %v5587, 2147483648
      %v5876 = vor.u32 1.1754944e-38, %v5875
      %v5877 = vsel %vm5874, %v5876, %v5872
      %v5878 = vmul.f32 1.0, %v5877
      %v5879 = vrcp.pop %v5588
      %v5880 = vmul.f32 %v5588, %v5879
      %v5881 = vsub.f32 1.0, %v5880
      %v5882 = vmul.f32 %v5879, %v5881
      %v5883 = vadd.f32 %v5879, %v5882
      %vm5884 = vweird.f32 %v5588
      %vm5885 = vweird.f32 %v5879
      %vm5886 = vmor %vm5884, %vm5885
      %v5887 = vsel %vm5886, %v5879, %v5883
      %v5888 = vand.u32 2147483647, %v5588
      %vm5889 = vcmp.eq.f32.partialorder %v5888, 8.507059e+37
      %v5890 = vand.u32 %v5588, 2147483648
      %v5891 = vor.u32 1.1754944e-38, %v5890
      %v5892 = vsel %vm5889, %v5891, %v5887
      %v5893 = vmul.f32 1.0, %v5892
      %v5894 = vrcp.pop %v5589
      %v5895 = vmul.f32 %v5589, %v5894
      %v5896 = vsub.f32 1.0, %v5895
      %v5897 = vmul.f32 %v5894, %v5896
      %v5898 = vadd.f32 %v5894, %v5897
      %vm5899 = vweird.f32 %v5589
      %vm5900 = vweird.f32 %v5894
      %vm5901 = vmor %vm5899, %vm5900
      %v5902 = vsel %vm5901, %v5894, %v5898
      %v5903 = vand.u32 2147483647, %v5589
      %vm5904 = vcmp.eq.f32.partialorder %v5903, 8.507059e+37
      %v5905 = vand.u32 %v5589, 2147483648
      %v5906 = vor.u32 1.1754944e-38, %v5905
      %v5907 = vsel %vm5904, %v5906, %v5902
      %v5908 = vmul.f32 1.0, %v5907
      %v5909 = vrcp.pop %v5590
      %v5910 = vmul.f32 %v5590, %v5909
      %v5911 = vsub.f32 1.0, %v5910
      %v5912 = vmul.f32 %v5909, %v5911
      %v5913 = vadd.f32 %v5909, %v5912
      %vm5914 = vweird.f32 %v5590
      %vm5915 = vweird.f32 %v5909
      %vm5916 = vmor %vm5914, %vm5915
      %v5917 = vsel %vm5916, %v5909, %v5913
      %v5918 = vand.u32 2147483647, %v5590
      %vm5919 = vcmp.eq.f32.partialorder %v5918, 8.507059e+37
      %v5920 = vand.u32 %v5590, 2147483648
      %v5921 = vor.u32 1.1754944e-38, %v5920
      %v5922 = vsel %vm5919, %v5921, %v5917
      %v5923 = vmul.f32 1.0, %v5922
      %v5924 = vrcp.pop %v5591
      %v5925 = vmul.f32 %v5591, %v5924
      %v5926 = vsub.f32 1.0, %v5925
      %v5927 = vmul.f32 %v5924, %v5926
      %v5928 = vadd.f32 %v5924, %v5927
      %vm5929 = vweird.f32 %v5591
      %vm5930 = vweird.f32 %v5924
      %vm5931 = vmor %vm5929, %vm5930
      %v5932 = vsel %vm5931, %v5924, %v5928
      %v5933 = vand.u32 2147483647, %v5591
      %vm5934 = vcmp.eq.f32.partialorder %v5933, 8.507059e+37
      %v5935 = vand.u32 %v5591, 2147483648
      %v5936 = vor.u32 1.1754944e-38, %v5935
      %v5937 = vsel %vm5934, %v5936, %v5932
      %v5938 = vmul.f32 1.0, %v5937
      %v5939 = vrcp.pop %v5592
      %v5940 = vmul.f32 %v5592, %v5939
      %v5941 = vsub.f32 1.0, %v5940
      %v5942 = vmul.f32 %v5939, %v5941
      %v5943 = vadd.f32 %v5939, %v5942
      %vm5944 = vweird.f32 %v5592
      %vm5945 = vweird.f32 %v5939
      %vm5946 = vmor %vm5944, %vm5945
      %v5947 = vsel %vm5946, %v5939, %v5943
      %v5948 = vand.u32 2147483647, %v5592
      %vm5949 = vcmp.eq.f32.partialorder %v5948, 8.507059e+37
      %v5950 = vand.u32 %v5592, 2147483648
      %v5951 = vor.u32 1.1754944e-38, %v5950
      %v5952 = vsel %vm5949, %v5951, %v5947
      %v5953 = vmul.f32 1.0, %v5952
      %v5954 = vrcp.pop %v5593
      %v5955 = vmul.f32 %v5593, %v5954
      %v5956 = vsub.f32 1.0, %v5955
      %v5957 = vmul.f32 %v5954, %v5956
      %v5958 = vadd.f32 %v5954, %v5957
      %vm5959 = vweird.f32 %v5593
      %vm5960 = vweird.f32 %v5954
      %vm5961 = vmor %vm5959, %vm5960
      %v5962 = vsel %vm5961, %v5954, %v5958
      %v5963 = vand.u32 2147483647, %v5593
      %vm5964 = vcmp.eq.f32.partialorder %v5963, 8.507059e+37
      %v5965 = vand.u32 %v5593, 2147483648
      %v5966 = vor.u32 1.1754944e-38, %v5965
      %v5967 = vsel %vm5964, %v5966, %v5962
      %v5968 = vmul.f32 1.0, %v5967
      %v5969 = vmul.f32 %v5444, %v5608
      %v5970 = vmul.f32 %v5445, %v5623
      %v5971 = vmul.f32 %v5446, %v5638
      %v5972 = vmul.f32 %v5447, %v5653
      %v5973 = vmul.f32 %v5448, %v5668
      %v5974 = vmul.f32 %v5449, %v5683
      %v5975 = vmul.f32 %v5450, %v5698
      %v5976 = vmul.f32 %v5451, %v5713
      %v5977 = vmul.f32 %v5452, %v5728
      %v5978 = vmul.f32 %v5453, %v5743
      %v5979 = vmul.f32 %v5454, %v5758
      %v5980 = vmul.f32 %v5455, %v5773
      %v5981 = vmul.f32 %v5456, %v5788
      %v5982 = vmul.f32 %v5457, %v5803
      %v5983 = vmul.f32 %v5458, %v5818
      %v5984 = vmul.f32 %v5459, %v5833
      %v5985 = vmul.f32 %v5460, %v5848
      %v5986 = vmul.f32 %v5461, %v5863
      %v5987 = vmul.f32 %v5462, %v5878
      %v5988 = vmul.f32 %v5463, %v5893
      %v5989 = vmul.f32 %v5464, %v5908
      %v5990 = vmul.f32 %v5465, %v5923
      %v5991 = vmul.f32 %v5466, %v5938
      %v5992 = vmul.f32 %v5467, %v5953
      %v5993 = vmul.f32 %v5468, %v5968
      %v5995 = vperm.slane %v390, 0
      %v5996 = vperm.slane %v390, 1
      %v5997 = vperm.slane %v390, 2
      %v5998 = vperm.slane %v390, 3
      %v5999 = vperm.slane %v390, 4
      %v6000 = vperm.slane %v390, 5
      %v6008 = vsel %vm391, %v5969, 0
      %v6011 = vsel %vm391, %v5970, 0
      %v6014 = vsel %vm391, %v5971, 0
      %v6017 = vsel %vm391, %v5972, 0
      %v6020 = vsel %vm391, %v5973, 0
      %v6023 = vsel %vm391, %v5974, 0
      %v6026 = vsel %vm391, %v5975, 0
      %v6029 = vsel %vm391, %v5976, 0
      %v6032 = vsel %vm391, %v5977, 0
      %v6035 = vsel %vm391, %v5978, 0
      %v6038 = vsel %vm391, %v5979, 0
      %v6041 = vsel %vm391, %v5980, 0
      %v6044 = vsel %vm391, %v5981, 0
      %v6047 = vsel %vm391, %v5982, 0
      %v6050 = vsel %vm391, %v5983, 0
      %v6053 = vsel %vm391, %v5984, 0
      %v6056 = vsel %vm391, %v5985, 0
      %v6059 = vsel %vm391, %v5986, 0
      %v6062 = vsel %vm391, %v5987, 0
      %v6065 = vsel %vm391, %v5988, 0
      %v6068 = vsel %vm391, %v5989, 0
      %v6071 = vsel %vm391, %v5990, 0
      %v6074 = vsel %vm391, %v5991, 0
      %v6077 = vsel %vm391, %v5992, 0
      %v6080 = vsel %vm391, %v5993, 0
      %6082 = vmatpush.msra.mxu0 0.0
      %6083 = vmatpush.msra.mxu0 0.0
      %6084 = vmatpush.msra.mxu0 0.0
      %6085 = vmatpush.msra.mxu0 0.0
      %6086 = vmatpush.msra.mxu0 0.0
      %6087 = vmatpush.msra.mxu0 0.0
      %6088 = vmatpush.msra.mxu0 0.0
      %6089 = vmatpush.msra.mxu0 0.0
      %6090 = vmatpush.msra.mxu0 0.0
      %6091 = vmatpush.msra.mxu0 0.0
      %6092 = vmatpush.msra.mxu0 0.0
      %6093 = vmatpush.msra.mxu0 0.0
      %6094 = vmatpush.msra.mxu0 0.0
      %6095 = vmatpush.msra.mxu0 0.0
      %6096 = vmatpush.msra.mxu0 0.0
      %6097 = vmatpush.msra.mxu0 %v384
      %6098 = vmatmul.f32.gmra.mxu0 %v6008
      %v6099 = vpop.f32.mrf.mxu0
      %v6100 = vadd.f32 %v5995, %v6099
      %6101 = vmatmul.f32.gmra.mxu0 %v6011
      %v6102 = vpop.f32.mrf.mxu0
      %v6103 = vadd.f32 %v5995, %v6102
      %6104 = vmatmul.f32.gmra.mxu0 %v6014
      %v6105 = vpop.f32.mrf.mxu0
      %v6106 = vadd.f32 %v5995, %v6105
      %6107 = vmatmul.f32.gmra.mxu0 %v6017
      %v6108 = vpop.f32.mrf.mxu0
      %v6109 = vadd.f32 %v5995, %v6108
      %6110 = vmatmul.f32.gmra.mxu0 %v6020
      %v6111 = vpop.f32.mrf.mxu0
      %v6112 = vadd.f32 %v5995, %v6111
      %6113 = vmatmul.f32.gmra.mxu0 %v6023
      %v6114 = vpop.f32.mrf.mxu0
      %v6115 = vadd.f32 %v5995, %v6114
      %6116 = vmatmul.f32.gmra.mxu0 %v6026
      %v6117 = vpop.f32.mrf.mxu0
      %v6118 = vadd.f32 %v5995, %v6117
      %6119 = vmatmul.f32.gmra.mxu0 %v6029
      %v6120 = vpop.f32.mrf.mxu0
      %v6121 = vadd.f32 %v5995, %v6120
      %6122 = vmatmul.f32.gmra.mxu0 %v6032
      %v6123 = vpop.f32.mrf.mxu0
      %v6124 = vadd.f32 %v5995, %v6123
      %6125 = vmatmul.f32.gmra.mxu0 %v6035
      %v6126 = vpop.f32.mrf.mxu0
      %v6127 = vadd.f32 %v5995, %v6126
      %6128 = vmatmul.f32.gmra.mxu0 %v6038
      %v6129 = vpop.f32.mrf.mxu0
      %v6130 = vadd.f32 %v5995, %v6129
      %6131 = vmatmul.f32.gmra.mxu0 %v6041
      %v6132 = vpop.f32.mrf.mxu0
      %v6133 = vadd.f32 %v5995, %v6132
      %6134 = vmatmul.f32.gmra.mxu0 %v6044
      %v6135 = vpop.f32.mrf.mxu0
      %v6136 = vadd.f32 %v5995, %v6135
      %6137 = vmatmul.f32.gmra.mxu0 %v6047
      %v6138 = vpop.f32.mrf.mxu0
      %v6139 = vadd.f32 %v5995, %v6138
      %6140 = vmatmul.f32.gmra.mxu0 %v6050
      %v6141 = vpop.f32.mrf.mxu0
      %v6142 = vadd.f32 %v5995, %v6141
      %6143 = vmatmul.f32.gmra.mxu0 %v6053
      %v6144 = vpop.f32.mrf.mxu0
      %v6145 = vadd.f32 %v5995, %v6144
      %6146 = vmatmul.f32.gmra.mxu0 %v6056
      %v6147 = vpop.f32.mrf.mxu0
      %v6148 = vadd.f32 %v5995, %v6147
      %6149 = vmatmul.f32.gmra.mxu0 %v6059
      %v6150 = vpop.f32.mrf.mxu0
      %v6151 = vadd.f32 %v5995, %v6150
      %6152 = vmatmul.f32.gmra.mxu0 %v6062
      %v6153 = vpop.f32.mrf.mxu0
      %v6154 = vadd.f32 %v5995, %v6153
      %6155 = vmatmul.f32.gmra.mxu0 %v6065
      %v6156 = vpop.f32.mrf.mxu0
      %v6157 = vadd.f32 %v5995, %v6156
      %6158 = vmatmul.f32.gmra.mxu0 %v6068
      %v6159 = vpop.f32.mrf.mxu0
      %v6160 = vadd.f32 %v5995, %v6159
      %6161 = vmatmul.f32.gmra.mxu0 %v6071
      %v6162 = vpop.f32.mrf.mxu0
      %v6163 = vadd.f32 %v5995, %v6162
      %6164 = vmatmul.f32.gmra.mxu0 %v6074
      %v6165 = vpop.f32.mrf.mxu0
      %v6166 = vadd.f32 %v5995, %v6165
      %6167 = vmatmul.f32.gmra.mxu0 %v6077
      %v6168 = vpop.f32.mrf.mxu0
      %v6169 = vadd.f32 %v5995, %v6168
      %6170 = vmatmul.f32.gmra.mxu0 %v6080
      %v6171 = vpop.f32.mrf.mxu0
      %v6172 = vadd.f32 %v5995, %v6171
      %6173 = vdwg.mxu0
      %6174 = vmatpush.msra.mxu0 0.0
      %6175 = vmatpush.msra.mxu0 0.0
      %6176 = vmatpush.msra.mxu0 0.0
      %6177 = vmatpush.msra.mxu0 0.0
      %6178 = vmatpush.msra.mxu0 0.0
      %6179 = vmatpush.msra.mxu0 0.0
      %6180 = vmatpush.msra.mxu0 0.0
      %6181 = vmatpush.msra.mxu0 0.0
      %6182 = vmatpush.msra.mxu0 0.0
      %6183 = vmatpush.msra.mxu0 0.0
      %6184 = vmatpush.msra.mxu0 0.0
      %6185 = vmatpush.msra.mxu0 0.0
      %6186 = vmatpush.msra.mxu0 0.0
      %6187 = vmatpush.msra.mxu0 0.0
      %6188 = vmatpush.msra.mxu0 0.0
      %6189 = vmatpush.msra.mxu0 %v385
      %6190 = vmatmul.f32.gmra.mxu0 %v6008
      %v6191 = vpop.f32.mrf.mxu0
      %v6192 = vadd.f32 %v5996, %v6191
      %6193 = vmatmul.f32.gmra.mxu0 %v6011
      %v6194 = vpop.f32.mrf.mxu0
      %v6195 = vadd.f32 %v5996, %v6194
      %6196 = vmatmul.f32.gmra.mxu0 %v6014
      %v6197 = vpop.f32.mrf.mxu0
      %v6198 = vadd.f32 %v5996, %v6197
      %6199 = vmatmul.f32.gmra.mxu0 %v6017
      %v6200 = vpop.f32.mrf.mxu0
      %v6201 = vadd.f32 %v5996, %v6200
      %6202 = vmatmul.f32.gmra.mxu0 %v6020
      %v6203 = vpop.f32.mrf.mxu0
      %v6204 = vadd.f32 %v5996, %v6203
      %6205 = vmatmul.f32.gmra.mxu0 %v6023
      %v6206 = vpop.f32.mrf.mxu0
      %v6207 = vadd.f32 %v5996, %v6206
      %6208 = vmatmul.f32.gmra.mxu0 %v6026
      %v6209 = vpop.f32.mrf.mxu0
      %v6210 = vadd.f32 %v5996, %v6209
      %6211 = vmatmul.f32.gmra.mxu0 %v6029
      %v6212 = vpop.f32.mrf.mxu0
      %v6213 = vadd.f32 %v5996, %v6212
      %6214 = vmatmul.f32.gmra.mxu0 %v6032
      %v6215 = vpop.f32.mrf.mxu0
      %v6216 = vadd.f32 %v5996, %v6215
      %6217 = vmatmul.f32.gmra.mxu0 %v6035
      %v6218 = vpop.f32.mrf.mxu0
      %v6219 = vadd.f32 %v5996, %v6218
      %6220 = vmatmul.f32.gmra.mxu0 %v6038
      %v6221 = vpop.f32.mrf.mxu0
      %v6222 = vadd.f32 %v5996, %v6221
      %6223 = vmatmul.f32.gmra.mxu0 %v6041
      %v6224 = vpop.f32.mrf.mxu0
      %v6225 = vadd.f32 %v5996, %v6224
      %6226 = vmatmul.f32.gmra.mxu0 %v6044
      %v6227 = vpop.f32.mrf.mxu0
      %v6228 = vadd.f32 %v5996, %v6227
      %6229 = vmatmul.f32.gmra.mxu0 %v6047
      %v6230 = vpop.f32.mrf.mxu0
      %v6231 = vadd.f32 %v5996, %v6230
      %6232 = vmatmul.f32.gmra.mxu0 %v6050
      %v6233 = vpop.f32.mrf.mxu0
      %v6234 = vadd.f32 %v5996, %v6233
      %6235 = vmatmul.f32.gmra.mxu0 %v6053
      %v6236 = vpop.f32.mrf.mxu0
      %v6237 = vadd.f32 %v5996, %v6236
      %6238 = vmatmul.f32.gmra.mxu0 %v6056
      %v6239 = vpop.f32.mrf.mxu0
      %v6240 = vadd.f32 %v5996, %v6239
      %6241 = vmatmul.f32.gmra.mxu0 %v6059
      %v6242 = vpop.f32.mrf.mxu0
      %v6243 = vadd.f32 %v5996, %v6242
      %6244 = vmatmul.f32.gmra.mxu0 %v6062
      %v6245 = vpop.f32.mrf.mxu0
      %v6246 = vadd.f32 %v5996, %v6245
      %6247 = vmatmul.f32.gmra.mxu0 %v6065
      %v6248 = vpop.f32.mrf.mxu0
      %v6249 = vadd.f32 %v5996, %v6248
      %6250 = vmatmul.f32.gmra.mxu0 %v6068
      %v6251 = vpop.f32.mrf.mxu0
      %v6252 = vadd.f32 %v5996, %v6251
      %6253 = vmatmul.f32.gmra.mxu0 %v6071
      %v6254 = vpop.f32.mrf.mxu0
      %v6255 = vadd.f32 %v5996, %v6254
      %6256 = vmatmul.f32.gmra.mxu0 %v6074
      %v6257 = vpop.f32.mrf.mxu0
      %v6258 = vadd.f32 %v5996, %v6257
      %6259 = vmatmul.f32.gmra.mxu0 %v6077
      %v6260 = vpop.f32.mrf.mxu0
      %v6261 = vadd.f32 %v5996, %v6260
      %6262 = vmatmul.f32.gmra.mxu0 %v6080
      %v6263 = vpop.f32.mrf.mxu0
      %v6264 = vadd.f32 %v5996, %v6263
      %6265 = vdwg.mxu0
      %6266 = vmatpush.msra.mxu0 0.0
      %6267 = vmatpush.msra.mxu0 0.0
      %6268 = vmatpush.msra.mxu0 0.0
      %6269 = vmatpush.msra.mxu0 0.0
      %6270 = vmatpush.msra.mxu0 0.0
      %6271 = vmatpush.msra.mxu0 0.0
      %6272 = vmatpush.msra.mxu0 0.0
      %6273 = vmatpush.msra.mxu0 0.0
      %6274 = vmatpush.msra.mxu0 0.0
      %6275 = vmatpush.msra.mxu0 0.0
      %6276 = vmatpush.msra.mxu0 0.0
      %6277 = vmatpush.msra.mxu0 0.0
      %6278 = vmatpush.msra.mxu0 0.0
      %6279 = vmatpush.msra.mxu0 0.0
      %6280 = vmatpush.msra.mxu0 0.0
      %6281 = vmatpush.msra.mxu0 %v386
      %6282 = vmatmul.f32.gmra.mxu0 %v6008
      %v6283 = vpop.f32.mrf.mxu0
      %v6284 = vadd.f32 %v5997, %v6283
      %6285 = vmatmul.f32.gmra.mxu0 %v6011
      %v6286 = vpop.f32.mrf.mxu0
      %v6287 = vadd.f32 %v5997, %v6286
      %6288 = vmatmul.f32.gmra.mxu0 %v6014
      %v6289 = vpop.f32.mrf.mxu0
      %v6290 = vadd.f32 %v5997, %v6289
      %6291 = vmatmul.f32.gmra.mxu0 %v6017
      %v6292 = vpop.f32.mrf.mxu0
      %v6293 = vadd.f32 %v5997, %v6292
      %6294 = vmatmul.f32.gmra.mxu0 %v6020
      %v6295 = vpop.f32.mrf.mxu0
      %v6296 = vadd.f32 %v5997, %v6295
      %6297 = vmatmul.f32.gmra.mxu0 %v6023
      %v6298 = vpop.f32.mrf.mxu0
      %v6299 = vadd.f32 %v5997, %v6298
      %6300 = vmatmul.f32.gmra.mxu0 %v6026
      %v6301 = vpop.f32.mrf.mxu0
      %v6302 = vadd.f32 %v5997, %v6301
      %6303 = vmatmul.f32.gmra.mxu0 %v6029
      %v6304 = vpop.f32.mrf.mxu0
      %v6305 = vadd.f32 %v5997, %v6304
      %6306 = vmatmul.f32.gmra.mxu0 %v6032
      %v6307 = vpop.f32.mrf.mxu0
      %v6308 = vadd.f32 %v5997, %v6307
      %6309 = vmatmul.f32.gmra.mxu0 %v6035
      %v6310 = vpop.f32.mrf.mxu0
      %v6311 = vadd.f32 %v5997, %v6310
      %6312 = vmatmul.f32.gmra.mxu0 %v6038
      %v6313 = vpop.f32.mrf.mxu0
      %v6314 = vadd.f32 %v5997, %v6313
      %6315 = vmatmul.f32.gmra.mxu0 %v6041
      %v6316 = vpop.f32.mrf.mxu0
      %v6317 = vadd.f32 %v5997, %v6316
      %6318 = vmatmul.f32.gmra.mxu0 %v6044
      %v6319 = vpop.f32.mrf.mxu0
      %v6320 = vadd.f32 %v5997, %v6319
      %6321 = vmatmul.f32.gmra.mxu0 %v6047
      %v6322 = vpop.f32.mrf.mxu0
      %v6323 = vadd.f32 %v5997, %v6322
      %6324 = vmatmul.f32.gmra.mxu0 %v6050
      %v6325 = vpop.f32.mrf.mxu0
      %v6326 = vadd.f32 %v5997, %v6325
      %6327 = vmatmul.f32.gmra.mxu0 %v6053
      %v6328 = vpop.f32.mrf.mxu0
      %v6329 = vadd.f32 %v5997, %v6328
      %6330 = vmatmul.f32.gmra.mxu0 %v6056
      %v6331 = vpop.f32.mrf.mxu0
      %v6332 = vadd.f32 %v5997, %v6331
      %6333 = vmatmul.f32.gmra.mxu0 %v6059
      %v6334 = vpop.f32.mrf.mxu0
      %v6335 = vadd.f32 %v5997, %v6334
      %6336 = vmatmul.f32.gmra.mxu0 %v6062
      %v6337 = vpop.f32.mrf.mxu0
      %v6338 = vadd.f32 %v5997, %v6337
      %6339 = vmatmul.f32.gmra.mxu0 %v6065
      %v6340 = vpop.f32.mrf.mxu0
      %v6341 = vadd.f32 %v5997, %v6340
      %6342 = vmatmul.f32.gmra.mxu0 %v6068
      %v6343 = vpop.f32.mrf.mxu0
      %v6344 = vadd.f32 %v5997, %v6343
      %6345 = vmatmul.f32.gmra.mxu0 %v6071
      %v6346 = vpop.f32.mrf.mxu0
      %v6347 = vadd.f32 %v5997, %v6346
      %6348 = vmatmul.f32.gmra.mxu0 %v6074
      %v6349 = vpop.f32.mrf.mxu0
      %v6350 = vadd.f32 %v5997, %v6349
      %6351 = vmatmul.f32.gmra.mxu0 %v6077
      %v6352 = vpop.f32.mrf.mxu0
      %v6353 = vadd.f32 %v5997, %v6352
      %6354 = vmatmul.f32.gmra.mxu0 %v6080
      %v6355 = vpop.f32.mrf.mxu0
      %v6356 = vadd.f32 %v5997, %v6355
      %6357 = vdwg.mxu0
      %6358 = vmatpush.msra.mxu0 0.0
      %6359 = vmatpush.msra.mxu0 0.0
      %6360 = vmatpush.msra.mxu0 0.0
      %6361 = vmatpush.msra.mxu0 0.0
      %6362 = vmatpush.msra.mxu0 0.0
      %6363 = vmatpush.msra.mxu0 0.0
      %6364 = vmatpush.msra.mxu0 0.0
      %6365 = vmatpush.msra.mxu0 0.0
      %6366 = vmatpush.msra.mxu0 0.0
      %6367 = vmatpush.msra.mxu0 0.0
      %6368 = vmatpush.msra.mxu0 0.0
      %6369 = vmatpush.msra.mxu0 0.0
      %6370 = vmatpush.msra.mxu0 0.0
      %6371 = vmatpush.msra.mxu0 0.0
      %6372 = vmatpush.msra.mxu0 0.0
      %6373 = vmatpush.msra.mxu0 %v387
      %6374 = vmatmul.f32.gmra.mxu0 %v6008
      %v6375 = vpop.f32.mrf.mxu0
      %v6376 = vadd.f32 %v5998, %v6375
      %6377 = vmatmul.f32.gmra.mxu0 %v6011
      %v6378 = vpop.f32.mrf.mxu0
      %v6379 = vadd.f32 %v5998, %v6378
      %6380 = vmatmul.f32.gmra.mxu0 %v6014
      %v6381 = vpop.f32.mrf.mxu0
      %v6382 = vadd.f32 %v5998, %v6381
      %6383 = vmatmul.f32.gmra.mxu0 %v6017
      %v6384 = vpop.f32.mrf.mxu0
      %v6385 = vadd.f32 %v5998, %v6384
      %6386 = vmatmul.f32.gmra.mxu0 %v6020
      %v6387 = vpop.f32.mrf.mxu0
      %v6388 = vadd.f32 %v5998, %v6387
      %6389 = vmatmul.f32.gmra.mxu0 %v6023
      %v6390 = vpop.f32.mrf.mxu0
      %v6391 = vadd.f32 %v5998, %v6390
      %6392 = vmatmul.f32.gmra.mxu0 %v6026
      %v6393 = vpop.f32.mrf.mxu0
      %v6394 = vadd.f32 %v5998, %v6393
      %6395 = vmatmul.f32.gmra.mxu0 %v6029
      %v6396 = vpop.f32.mrf.mxu0
      %v6397 = vadd.f32 %v5998, %v6396
      %6398 = vmatmul.f32.gmra.mxu0 %v6032
      %v6399 = vpop.f32.mrf.mxu0
      %v6400 = vadd.f32 %v5998, %v6399
      %6401 = vmatmul.f32.gmra.mxu0 %v6035
      %v6402 = vpop.f32.mrf.mxu0
      %v6403 = vadd.f32 %v5998, %v6402
      %6404 = vmatmul.f32.gmra.mxu0 %v6038
      %v6405 = vpop.f32.mrf.mxu0
      %v6406 = vadd.f32 %v5998, %v6405
      %6407 = vmatmul.f32.gmra.mxu0 %v6041
      %v6408 = vpop.f32.mrf.mxu0
      %v6409 = vadd.f32 %v5998, %v6408
      %6410 = vmatmul.f32.gmra.mxu0 %v6044
      %v6411 = vpop.f32.mrf.mxu0
      %v6412 = vadd.f32 %v5998, %v6411
      %6413 = vmatmul.f32.gmra.mxu0 %v6047
      %v6414 = vpop.f32.mrf.mxu0
      %v6415 = vadd.f32 %v5998, %v6414
      %6416 = vmatmul.f32.gmra.mxu0 %v6050
      %v6417 = vpop.f32.mrf.mxu0
      %v6418 = vadd.f32 %v5998, %v6417
      %6419 = vmatmul.f32.gmra.mxu0 %v6053
      %v6420 = vpop.f32.mrf.mxu0
      %v6421 = vadd.f32 %v5998, %v6420
      %6422 = vmatmul.f32.gmra.mxu0 %v6056
      %v6423 = vpop.f32.mrf.mxu0
      %v6424 = vadd.f32 %v5998, %v6423
      %6425 = vmatmul.f32.gmra.mxu0 %v6059
      %v6426 = vpop.f32.mrf.mxu0
      %v6427 = vadd.f32 %v5998, %v6426
      %6428 = vmatmul.f32.gmra.mxu0 %v6062
      %v6429 = vpop.f32.mrf.mxu0
      %v6430 = vadd.f32 %v5998, %v6429
      %6431 = vmatmul.f32.gmra.mxu0 %v6065
      %v6432 = vpop.f32.mrf.mxu0
      %v6433 = vadd.f32 %v5998, %v6432
      %6434 = vmatmul.f32.gmra.mxu0 %v6068
      %v6435 = vpop.f32.mrf.mxu0
      %v6436 = vadd.f32 %v5998, %v6435
      %6437 = vmatmul.f32.gmra.mxu0 %v6071
      %v6438 = vpop.f32.mrf.mxu0
      %v6439 = vadd.f32 %v5998, %v6438
      %6440 = vmatmul.f32.gmra.mxu0 %v6074
      %v6441 = vpop.f32.mrf.mxu0
      %v6442 = vadd.f32 %v5998, %v6441
      %6443 = vmatmul.f32.gmra.mxu0 %v6077
      %v6444 = vpop.f32.mrf.mxu0
      %v6445 = vadd.f32 %v5998, %v6444
      %6446 = vmatmul.f32.gmra.mxu0 %v6080
      %v6447 = vpop.f32.mrf.mxu0
      %v6448 = vadd.f32 %v5998, %v6447
      %6449 = vdwg.mxu0
      %6450 = vmatpush.msra.mxu0 0.0
      %6451 = vmatpush.msra.mxu0 0.0
      %6452 = vmatpush.msra.mxu0 0.0
      %6453 = vmatpush.msra.mxu0 0.0
      %6454 = vmatpush.msra.mxu0 0.0
      %6455 = vmatpush.msra.mxu0 0.0
      %6456 = vmatpush.msra.mxu0 0.0
      %6457 = vmatpush.msra.mxu0 0.0
      %6458 = vmatpush.msra.mxu0 0.0
      %6459 = vmatpush.msra.mxu0 0.0
      %6460 = vmatpush.msra.mxu0 0.0
      %6461 = vmatpush.msra.mxu0 0.0
      %6462 = vmatpush.msra.mxu0 0.0
      %6463 = vmatpush.msra.mxu0 0.0
      %6464 = vmatpush.msra.mxu0 0.0
      %6465 = vmatpush.msra.mxu0 %v388
      %6466 = vmatmul.f32.gmra.mxu0 %v6008
      %v6467 = vpop.f32.mrf.mxu0
      %v6468 = vadd.f32 %v5999, %v6467
      %6469 = vmatmul.f32.gmra.mxu0 %v6011
      %v6470 = vpop.f32.mrf.mxu0
      %v6471 = vadd.f32 %v5999, %v6470
      %6472 = vmatmul.f32.gmra.mxu0 %v6014
      %v6473 = vpop.f32.mrf.mxu0
      %v6474 = vadd.f32 %v5999, %v6473
      %6475 = vmatmul.f32.gmra.mxu0 %v6017
      %v6476 = vpop.f32.mrf.mxu0
      %v6477 = vadd.f32 %v5999, %v6476
      %6478 = vmatmul.f32.gmra.mxu0 %v6020
      %v6479 = vpop.f32.mrf.mxu0
      %v6480 = vadd.f32 %v5999, %v6479
      %6481 = vmatmul.f32.gmra.mxu0 %v6023
      %v6482 = vpop.f32.mrf.mxu0
      %v6483 = vadd.f32 %v5999, %v6482
      %6484 = vmatmul.f32.gmra.mxu0 %v6026
      %v6485 = vpop.f32.mrf.mxu0
      %v6486 = vadd.f32 %v5999, %v6485
      %6487 = vmatmul.f32.gmra.mxu0 %v6029
      %v6488 = vpop.f32.mrf.mxu0
      %v6489 = vadd.f32 %v5999, %v6488
      %6490 = vmatmul.f32.gmra.mxu0 %v6032
      %v6491 = vpop.f32.mrf.mxu0
      %v6492 = vadd.f32 %v5999, %v6491
      %6493 = vmatmul.f32.gmra.mxu0 %v6035
      %v6494 = vpop.f32.mrf.mxu0
      %v6495 = vadd.f32 %v5999, %v6494
      %6496 = vmatmul.f32.gmra.mxu0 %v6038
      %v6497 = vpop.f32.mrf.mxu0
      %v6498 = vadd.f32 %v5999, %v6497
      %6499 = vmatmul.f32.gmra.mxu0 %v6041
      %v6500 = vpop.f32.mrf.mxu0
      %v6501 = vadd.f32 %v5999, %v6500
      %6502 = vmatmul.f32.gmra.mxu0 %v6044
      %v6503 = vpop.f32.mrf.mxu0
      %v6504 = vadd.f32 %v5999, %v6503
      %6505 = vmatmul.f32.gmra.mxu0 %v6047
      %v6506 = vpop.f32.mrf.mxu0
      %v6507 = vadd.f32 %v5999, %v6506
      %6508 = vmatmul.f32.gmra.mxu0 %v6050
      %v6509 = vpop.f32.mrf.mxu0
      %v6510 = vadd.f32 %v5999, %v6509
      %6511 = vmatmul.f32.gmra.mxu0 %v6053
      %v6512 = vpop.f32.mrf.mxu0
      %v6513 = vadd.f32 %v5999, %v6512
      %6514 = vmatmul.f32.gmra.mxu0 %v6056
      %v6515 = vpop.f32.mrf.mxu0
      %v6516 = vadd.f32 %v5999, %v6515
      %6517 = vmatmul.f32.gmra.mxu0 %v6059
      %v6518 = vpop.f32.mrf.mxu0
      %v6519 = vadd.f32 %v5999, %v6518
      %6520 = vmatmul.f32.gmra.mxu0 %v6062
      %v6521 = vpop.f32.mrf.mxu0
      %v6522 = vadd.f32 %v5999, %v6521
      %6523 = vmatmul.f32.gmra.mxu0 %v6065
      %v6524 = vpop.f32.mrf.mxu0
      %v6525 = vadd.f32 %v5999, %v6524
      %6526 = vmatmul.f32.gmra.mxu0 %v6068
      %v6527 = vpop.f32.mrf.mxu0
      %v6528 = vadd.f32 %v5999, %v6527
      %6529 = vmatmul.f32.gmra.mxu0 %v6071
      %v6530 = vpop.f32.mrf.mxu0
      %v6531 = vadd.f32 %v5999, %v6530
      %6532 = vmatmul.f32.gmra.mxu0 %v6074
      %v6533 = vpop.f32.mrf.mxu0
      %v6534 = vadd.f32 %v5999, %v6533
      %6535 = vmatmul.f32.gmra.mxu0 %v6077
      %v6536 = vpop.f32.mrf.mxu0
      %v6537 = vadd.f32 %v5999, %v6536
      %6538 = vmatmul.f32.gmra.mxu0 %v6080
      %v6539 = vpop.f32.mrf.mxu0
      %v6540 = vadd.f32 %v5999, %v6539
      %6541 = vdwg.mxu0
      %6542 = vmatpush.msra.mxu0 0.0
      %6543 = vmatpush.msra.mxu0 0.0
      %6544 = vmatpush.msra.mxu0 0.0
      %6545 = vmatpush.msra.mxu0 0.0
      %6546 = vmatpush.msra.mxu0 0.0
      %6547 = vmatpush.msra.mxu0 0.0
      %6548 = vmatpush.msra.mxu0 0.0
      %6549 = vmatpush.msra.mxu0 0.0
      %6550 = vmatpush.msra.mxu0 0.0
      %6551 = vmatpush.msra.mxu0 0.0
      %6552 = vmatpush.msra.mxu0 0.0
      %6553 = vmatpush.msra.mxu0 0.0
      %6554 = vmatpush.msra.mxu0 0.0
      %6555 = vmatpush.msra.mxu0 0.0
      %6556 = vmatpush.msra.mxu0 0.0
      %6557 = vmatpush.msra.mxu0 %v389
      %6558 = vmatmul.f32.gmra.mxu0 %v6008
      %v6559 = vpop.f32.mrf.mxu0
      %v6560 = vadd.f32 %v6000, %v6559
      %6561 = vmatmul.f32.gmra.mxu0 %v6011
      %v6562 = vpop.f32.mrf.mxu0
      %v6563 = vadd.f32 %v6000, %v6562
      %6564 = vmatmul.f32.gmra.mxu0 %v6014
      %v6565 = vpop.f32.mrf.mxu0
      %v6566 = vadd.f32 %v6000, %v6565
      %6567 = vmatmul.f32.gmra.mxu0 %v6017
      %v6568 = vpop.f32.mrf.mxu0
      %v6569 = vadd.f32 %v6000, %v6568
      %6570 = vmatmul.f32.gmra.mxu0 %v6020
      %v6571 = vpop.f32.mrf.mxu0
      %v6572 = vadd.f32 %v6000, %v6571
      %6573 = vmatmul.f32.gmra.mxu0 %v6023
      %v6574 = vpop.f32.mrf.mxu0
      %v6575 = vadd.f32 %v6000, %v6574
      %6576 = vmatmul.f32.gmra.mxu0 %v6026
      %v6577 = vpop.f32.mrf.mxu0
      %v6578 = vadd.f32 %v6000, %v6577
      %6579 = vmatmul.f32.gmra.mxu0 %v6029
      %v6580 = vpop.f32.mrf.mxu0
      %v6581 = vadd.f32 %v6000, %v6580
      %6582 = vmatmul.f32.gmra.mxu0 %v6032
      %v6583 = vpop.f32.mrf.mxu0
      %v6584 = vadd.f32 %v6000, %v6583
      %6585 = vmatmul.f32.gmra.mxu0 %v6035
      %v6586 = vpop.f32.mrf.mxu0
      %v6587 = vadd.f32 %v6000, %v6586
      %6588 = vmatmul.f32.gmra.mxu0 %v6038
      %v6589 = vpop.f32.mrf.mxu0
      %v6590 = vadd.f32 %v6000, %v6589
      %6591 = vmatmul.f32.gmra.mxu0 %v6041
      %v6592 = vpop.f32.mrf.mxu0
      %v6593 = vadd.f32 %v6000, %v6592
      %6594 = vmatmul.f32.gmra.mxu0 %v6044
      %v6595 = vpop.f32.mrf.mxu0
      %v6596 = vadd.f32 %v6000, %v6595
      %6597 = vmatmul.f32.gmra.mxu0 %v6047
      %v6598 = vpop.f32.mrf.mxu0
      %v6599 = vadd.f32 %v6000, %v6598
      %6600 = vmatmul.f32.gmra.mxu0 %v6050
      %v6601 = vpop.f32.mrf.mxu0
      %v6602 = vadd.f32 %v6000, %v6601
      %6603 = vmatmul.f32.gmra.mxu0 %v6053
      %v6604 = vpop.f32.mrf.mxu0
      %v6605 = vadd.f32 %v6000, %v6604
      %6606 = vmatmul.f32.gmra.mxu0 %v6056
      %v6607 = vpop.f32.mrf.mxu0
      %v6608 = vadd.f32 %v6000, %v6607
      %6609 = vmatmul.f32.gmra.mxu0 %v6059
      %v6610 = vpop.f32.mrf.mxu0
      %v6611 = vadd.f32 %v6000, %v6610
      %6612 = vmatmul.f32.gmra.mxu0 %v6062
      %v6613 = vpop.f32.mrf.mxu0
      %v6614 = vadd.f32 %v6000, %v6613
      %6615 = vmatmul.f32.gmra.mxu0 %v6065
      %v6616 = vpop.f32.mrf.mxu0
      %v6617 = vadd.f32 %v6000, %v6616
      %6618 = vmatmul.f32.gmra.mxu0 %v6068
      %v6619 = vpop.f32.mrf.mxu0
      %v6620 = vadd.f32 %v6000, %v6619
      %6621 = vmatmul.f32.gmra.mxu0 %v6071
      %v6622 = vpop.f32.mrf.mxu0
      %v6623 = vadd.f32 %v6000, %v6622
      %6624 = vmatmul.f32.gmra.mxu0 %v6074
      %v6625 = vpop.f32.mrf.mxu0
      %v6626 = vadd.f32 %v6000, %v6625
      %6627 = vmatmul.f32.gmra.mxu0 %v6077
      %v6628 = vpop.f32.mrf.mxu0
      %v6629 = vadd.f32 %v6000, %v6628
      %6630 = vmatmul.f32.gmra.mxu0 %v6080
      %v6631 = vpop.f32.mrf.mxu0
      %v6632 = vadd.f32 %v6000, %v6631
      %6633 = vdwg.mxu0
      %6634 = vst [vmem:[%s285] sm:$0xff] %v6100
      %6635 = vst [vmem:[%s285 + $0x8] sm:$0xff] %v6192
      %6636 = vst [vmem:[%s285 + $0x10] sm:$0xff] %v6284
      %6637 = vst [vmem:[%s285 + $0x18] sm:$0xff] %v6376
      %6638 = vst [vmem:[%s285 + $0x20] sm:$0xff] %v6468
      %6639 = vst [vmem:[%s285 + $0x28] sm:$0xff] %v6560
      %6640 = vst [vmem:[%s285 + $0x30] sm:$0xff] %v6103
      %6641 = vst [vmem:[%s285 + $0x38] sm:$0xff] %v6195
      %6642 = vst [vmem:[%s285 + $0x40] sm:$0xff] %v6287
      %6643 = vst [vmem:[%s285 + $0x48] sm:$0xff] %v6379
      %6644 = vst [vmem:[%s285 + $0x50] sm:$0xff] %v6471
      %6645 = vst [vmem:[%s285 + $0x58] sm:$0xff] %v6563
      %6646 = vst [vmem:[%s285 + $0x60] sm:$0xff] %v6106
      %6647 = vst [vmem:[%s285 + $0x68] sm:$0xff] %v6198
      %6648 = vst [vmem:[%s285 + $0x70] sm:$0xff] %v6290
      %6649 = vst [vmem:[%s285 + $0x78] sm:$0xff] %v6382
      %6650 = vst [vmem:[%s285 + $0x80] sm:$0xff] %v6474
      %6651 = vst [vmem:[%s285 + $0x88] sm:$0xff] %v6566
      %6652 = vst [vmem:[%s285 + $0x90] sm:$0xff] %v6109
      %6653 = vst [vmem:[%s285 + $0x98] sm:$0xff] %v6201
      %6654 = vst [vmem:[%s285 + $0xa0] sm:$0xff] %v6293
      %6655 = vst [vmem:[%s285 + $0xa8] sm:$0xff] %v6385
      %6656 = vst [vmem:[%s285 + $0xb0] sm:$0xff] %v6477
      %6657 = vst [vmem:[%s285 + $0xb8] sm:$0xff] %v6569
      %6658 = vst [vmem:[%s285 + $0xc0] sm:$0xff] %v6112
      %6659 = vst [vmem:[%s285 + $0xc8] sm:$0xff] %v6204
      %6660 = vst [vmem:[%s285 + $0xd0] sm:$0xff] %v6296
      %6661 = vst [vmem:[%s285 + $0xd8] sm:$0xff] %v6388
      %6662 = vst [vmem:[%s285 + $0xe0] sm:$0xff] %v6480
      %6663 = vst [vmem:[%s285 + $0xe8] sm:$0xff] %v6572
      %6664 = vst [vmem:[%s285 + $0xf0] sm:$0xff] %v6115
      %6665 = vst [vmem:[%s285 + $0xf8] sm:$0xff] %v6207
      %6666 = vst [vmem:[%s285 + $0x100] sm:$0xff] %v6299
      %6667 = vst [vmem:[%s285 + $0x108] sm:$0xff] %v6391
      %6668 = vst [vmem:[%s285 + $0x110] sm:$0xff] %v6483
      %6669 = vst [vmem:[%s285 + $0x118] sm:$0xff] %v6575
      %6670 = vst [vmem:[%s285 + $0x120] sm:$0xff] %v6118
      %6671 = vst [vmem:[%s285 + $0x128] sm:$0xff] %v6210
      %6672 = vst [vmem:[%s285 + $0x130] sm:$0xff] %v6302
      %6673 = vst [vmem:[%s285 + $0x138] sm:$0xff] %v6394
      %6674 = vst [vmem:[%s285 + $0x140] sm:$0xff] %v6486
      %6675 = vst [vmem:[%s285 + $0x148] sm:$0xff] %v6578
      %6676 = vst [vmem:[%s285 + $0x150] sm:$0xff] %v6121
      %6677 = vst [vmem:[%s285 + $0x158] sm:$0xff] %v6213
      %6678 = vst [vmem:[%s285 + $0x160] sm:$0xff] %v6305
      %6679 = vst [vmem:[%s285 + $0x168] sm:$0xff] %v6397
      %6680 = vst [vmem:[%s285 + $0x170] sm:$0xff] %v6489
      %6681 = vst [vmem:[%s285 + $0x178] sm:$0xff] %v6581
      %6682 = vst [vmem:[%s285 + $0x180] sm:$0xff] %v6124
      %6683 = vst [vmem:[%s285 + $0x188] sm:$0xff] %v6216
      %6684 = vst [vmem:[%s285 + $0x190] sm:$0xff] %v6308
      %6685 = vst [vmem:[%s285 + $0x198] sm:$0xff] %v6400
      %6686 = vst [vmem:[%s285 + $0x1a0] sm:$0xff] %v6492
      %6687 = vst [vmem:[%s285 + $0x1a8] sm:$0xff] %v6584
      %6688 = vst [vmem:[%s285 + $0x1b0] sm:$0xff] %v6127
      %6689 = vst [vmem:[%s285 + $0x1b8] sm:$0xff] %v6219
      %6690 = vst [vmem:[%s285 + $0x1c0] sm:$0xff] %v6311
      %6691 = vst [vmem:[%s285 + $0x1c8] sm:$0xff] %v6403
      %6692 = vst [vmem:[%s285 + $0x1d0] sm:$0xff] %v6495
      %6693 = vst [vmem:[%s285 + $0x1d8] sm:$0xff] %v6587
      %6694 = vst [vmem:[%s285 + $0x1e0] sm:$0xff] %v6130
      %6695 = vst [vmem:[%s285 + $0x1e8] sm:$0xff] %v6222
      %6696 = vst [vmem:[%s285 + $0x1f0] sm:$0xff] %v6314
      %6697 = vst [vmem:[%s285 + $0x1f8] sm:$0xff] %v6406
      %6698 = vst [vmem:[%s285 + $0x200] sm:$0xff] %v6498
      %6699 = vst [vmem:[%s285 + $0x208] sm:$0xff] %v6590
      %6700 = vst [vmem:[%s285 + $0x210] sm:$0xff] %v6133
      %6701 = vst [vmem:[%s285 + $0x218] sm:$0xff] %v6225
      %6702 = vst [vmem:[%s285 + $0x220] sm:$0xff] %v6317
      %6703 = vst [vmem:[%s285 + $0x228] sm:$0xff] %v6409
      %6704 = vst [vmem:[%s285 + $0x230] sm:$0xff] %v6501
      %6705 = vst [vmem:[%s285 + $0x238] sm:$0xff] %v6593
      %6706 = vst [vmem:[%s285 + $0x240] sm:$0xff] %v6136
      %6707 = vst [vmem:[%s285 + $0x248] sm:$0xff] %v6228
      %6708 = vst [vmem:[%s285 + $0x250] sm:$0xff] %v6320
      %6709 = vst [vmem:[%s285 + $0x258] sm:$0xff] %v6412
      %6710 = vst [vmem:[%s285 + $0x260] sm:$0xff] %v6504
      %6711 = vst [vmem:[%s285 + $0x268] sm:$0xff] %v6596
      %6712 = vst [vmem:[%s285 + $0x270] sm:$0xff] %v6139
      %6713 = vst [vmem:[%s285 + $0x278] sm:$0xff] %v6231
      %6714 = vst [vmem:[%s285 + $0x280] sm:$0xff] %v6323
      %6715 = vst [vmem:[%s285 + $0x288] sm:$0xff] %v6415
      %6716 = vst [vmem:[%s285 + $0x290] sm:$0xff] %v6507
      %6717 = vst [vmem:[%s285 + $0x298] sm:$0xff] %v6599
      %6718 = vst [vmem:[%s285 + $0x2a0] sm:$0xff] %v6142
      %6719 = vst [vmem:[%s285 + $0x2a8] sm:$0xff] %v6234
      %6720 = vst [vmem:[%s285 + $0x2b0] sm:$0xff] %v6326
      %6721 = vst [vmem:[%s285 + $0x2b8] sm:$0xff] %v6418
      %6722 = vst [vmem:[%s285 + $0x2c0] sm:$0xff] %v6510
      %6723 = vst [vmem:[%s285 + $0x2c8] sm:$0xff] %v6602
      %6724 = vst [vmem:[%s285 + $0x2d0] sm:$0xff] %v6145
      %6725 = vst [vmem:[%s285 + $0x2d8] sm:$0xff] %v6237
      %6726 = vst [vmem:[%s285 + $0x2e0] sm:$0xff] %v6329
      %6727 = vst [vmem:[%s285 + $0x2e8] sm:$0xff] %v6421
      %6728 = vst [vmem:[%s285 + $0x2f0] sm:$0xff] %v6513
      %6729 = vst [vmem:[%s285 + $0x2f8] sm:$0xff] %v6605
      %6730 = vst [vmem:[%s285 + $0x300] sm:$0xff] %v6148
      %6731 = vst [vmem:[%s285 + $0x308] sm:$0xff] %v6240
      %6732 = vst [vmem:[%s285 + $0x310] sm:$0xff] %v6332
      %6733 = vst [vmem:[%s285 + $0x318] sm:$0xff] %v6424
      %6734 = vst [vmem:[%s285 + $0x320] sm:$0xff] %v6516
      %6735 = vst [vmem:[%s285 + $0x328] sm:$0xff] %v6608
      %6736 = vst [vmem:[%s285 + $0x330] sm:$0xff] %v6151
      %6737 = vst [vmem:[%s285 + $0x338] sm:$0xff] %v6243
      %6738 = vst [vmem:[%s285 + $0x340] sm:$0xff] %v6335
      %6739 = vst [vmem:[%s285 + $0x348] sm:$0xff] %v6427
      %6740 = vst [vmem:[%s285 + $0x350] sm:$0xff] %v6519
      %6741 = vst [vmem:[%s285 + $0x358] sm:$0xff] %v6611
      %6742 = vst [vmem:[%s285 + $0x360] sm:$0xff] %v6154
      %6743 = vst [vmem:[%s285 + $0x368] sm:$0xff] %v6246
      %6744 = vst [vmem:[%s285 + $0x370] sm:$0xff] %v6338
      %6745 = vst [vmem:[%s285 + $0x378] sm:$0xff] %v6430
      %6746 = vst [vmem:[%s285 + $0x380] sm:$0xff] %v6522
      %6747 = vst [vmem:[%s285 + $0x388] sm:$0xff] %v6614
      %6748 = vst [vmem:[%s285 + $0x390] sm:$0xff] %v6157
      %6749 = vst [vmem:[%s285 + $0x398] sm:$0xff] %v6249
      %6750 = vst [vmem:[%s285 + $0x3a0] sm:$0xff] %v6341
      %6751 = vst [vmem:[%s285 + $0x3a8] sm:$0xff] %v6433
      %6752 = vst [vmem:[%s285 + $0x3b0] sm:$0xff] %v6525
      %6753 = vst [vmem:[%s285 + $0x3b8] sm:$0xff] %v6617
      %6754 = vst [vmem:[%s285 + $0x3c0] sm:$0xff] %v6160
      %6755 = vst [vmem:[%s285 + $0x3c8] sm:$0xff] %v6252
      %6756 = vst [vmem:[%s285 + $0x3d0] sm:$0xff] %v6344
      %6757 = vst [vmem:[%s285 + $0x3d8] sm:$0xff] %v6436
      %6758 = vst [vmem:[%s285 + $0x3e0] sm:$0xff] %v6528
      %6759 = vst [vmem:[%s285 + $0x3e8] sm:$0xff] %v6620
      %6760 = vst [vmem:[%s285 + $0x3f0] sm:$0xff] %v6163
      %6761 = vst [vmem:[%s285 + $0x3f8] sm:$0xff] %v6255
      %6762 = vst [vmem:[%s285 + $0x400] sm:$0xff] %v6347
      %6763 = vst [vmem:[%s285 + $0x408] sm:$0xff] %v6439
      %6764 = vst [vmem:[%s285 + $0x410] sm:$0xff] %v6531
      %6765 = vst [vmem:[%s285 + $0x418] sm:$0xff] %v6623
      %6766 = vst [vmem:[%s285 + $0x420] sm:$0xff] %v6166
      %6767 = vst [vmem:[%s285 + $0x428] sm:$0xff] %v6258
      %6768 = vst [vmem:[%s285 + $0x430] sm:$0xff] %v6350
      %6769 = vst [vmem:[%s285 + $0x438] sm:$0xff] %v6442
      %6770 = vst [vmem:[%s285 + $0x440] sm:$0xff] %v6534
      %6771 = vst [vmem:[%s285 + $0x448] sm:$0xff] %v6626
      %6772 = vst [vmem:[%s285 + $0x450] sm:$0xff] %v6169
      %6773 = vst [vmem:[%s285 + $0x458] sm:$0xff] %v6261
      %6774 = vst [vmem:[%s285 + $0x460] sm:$0xff] %v6353
      %6775 = vst [vmem:[%s285 + $0x468] sm:$0xff] %v6445
      %6776 = vst [vmem:[%s285 + $0x470] sm:$0xff] %v6537
      %6777 = vst [vmem:[%s285 + $0x478] sm:$0xff] %v6629
      %6778 = vst [vmem:[%s285 + $0x480] sm:$0x1f] %v6172
      %6779 = vst [vmem:[%s285 + $0x488] sm:$0x1f] %v6264
      %6780 = vst [vmem:[%s285 + $0x490] sm:$0x1f] %v6356
      %6781 = vst [vmem:[%s285 + $0x498] sm:$0x1f] %v6448
      %6782 = vst [vmem:[%s285 + $0x4a0] sm:$0x1f] %v6540
      %6783 = vst [vmem:[%s285 + $0x4a8] sm:$0x1f] %v6632
      %v6784 = vld [vmem:[%s2881] sm:$0xff]
      %v6785 = vld [vmem:[%s2881 + $0x8] sm:$0xff]
      %v6786 = vld [vmem:[%s2881 + $0x10] sm:$0xff]
      %v6787 = vld [vmem:[%s2881 + $0x18] sm:$0xff]
      %v6788 = vld [vmem:[%s2881 + $0x20] sm:$0xff]
      %v6789 = vld [vmem:[%s2881 + $0x28] sm:$0xff]
      %v6790 = vld [vmem:[%s2881 + $0x30] sm:$0xff]
      %v6791 = vld [vmem:[%s2881 + $0x38] sm:$0xff]
      %v6792 = vld [vmem:[%s2881 + $0x40] sm:$0xff]
      %v6793 = vld [vmem:[%s2881 + $0x48] sm:$0xff]
      %v6794 = vld [vmem:[%s2881 + $0x50] sm:$0xff]
      %v6795 = vld [vmem:[%s2881 + $0x58] sm:$0xff]
      %v6796 = vld [vmem:[%s2881 + $0x60] sm:$0xff]
      %v6797 = vld [vmem:[%s2881 + $0x68] sm:$0xff]
      %v6798 = vld [vmem:[%s2881 + $0x70] sm:$0xff]
      %v6799 = vld [vmem:[%s2881 + $0x78] sm:$0xff]
      %v6800 = vld [vmem:[%s2881 + $0x80] sm:$0xff]
      %v6801 = vld [vmem:[%s2881 + $0x88] sm:$0xff]
      %v6802 = vld [vmem:[%s2881 + $0x90] sm:$0xff]
      %v6803 = vld [vmem:[%s2881 + $0x98] sm:$0xff]
      %v6804 = vld [vmem:[%s2881 + $0xa0] sm:$0xff]
      %v6805 = vld [vmem:[%s2881 + $0xa8] sm:$0xff]
      %v6806 = vld [vmem:[%s2881 + $0xb0] sm:$0xff]
      %v6807 = vld [vmem:[%s2881 + $0xb8] sm:$0xff]
      %v6808 = vld [vmem:[%s2881 + $0xc0] sm:$0xff]
      %v6809 = vld [vmem:[%s2881 + $0xc8] sm:$0xff]
      %v6810 = vrot.slane %v6784, 1
      %v6811 = vrot.slane %v6785, 1
      %v6812 = vrot.slane %v6786, 1
      %v6813 = vrot.slane %v6787, 1
      %v6814 = vrot.slane %v6788, 1
      %v6815 = vrot.slane %v6789, 1
      %v6816 = vrot.slane %v6790, 1
      %v6817 = vrot.slane %v6791, 1
      %v6818 = vrot.slane %v6792, 1
      %v6819 = vrot.slane %v6793, 1
      %v6820 = vrot.slane %v6794, 1
      %v6821 = vrot.slane %v6795, 1
      %v6822 = vrot.slane %v6796, 1
      %v6823 = vrot.slane %v6797, 1
      %v6824 = vrot.slane %v6798, 1
      %v6825 = vrot.slane %v6799, 1
      %v6826 = vrot.slane %v6800, 1
      %v6827 = vrot.slane %v6801, 1
      %v6828 = vrot.slane %v6802, 1
      %v6829 = vrot.slane %v6803, 1
      %v6830 = vrot.slane %v6804, 1
      %v6831 = vrot.slane %v6805, 1
      %v6832 = vrot.slane %v6806, 1
      %v6833 = vrot.slane %v6807, 1
      %v6834 = vrot.slane %v6808, 1
      %v6835 = vrot.slane %v6809, 1
      %v6836 = vsel %vm2961, %v6834, %v6835
      %v6837 = vsel %vm2961, %v6833, %v6834
      %v6838 = vsel %vm2961, %v6832, %v6833
      %v6839 = vsel %vm2961, %v6831, %v6832
      %v6840 = vsel %vm2961, %v6830, %v6831
      %v6841 = vsel %vm2961, %v6829, %v6830
      %v6842 = vsel %vm2961, %v6828, %v6829
      %v6843 = vsel %vm2961, %v6827, %v6828
      %v6844 = vsel %vm2961, %v6826, %v6827
      %v6845 = vsel %vm2961, %v6825, %v6826
      %v6846 = vsel %vm2961, %v6824, %v6825
      %v6847 = vsel %vm2961, %v6823, %v6824
      %v6848 = vsel %vm2961, %v6822, %v6823
      %v6849 = vsel %vm2961, %v6821, %v6822
      %v6850 = vsel %vm2961, %v6820, %v6821
      %v6851 = vsel %vm2961, %v6819, %v6820
      %v6852 = vsel %vm2961, %v6818, %v6819
      %v6853 = vsel %vm2961, %v6817, %v6818
      %v6854 = vsel %vm2961, %v6816, %v6817
      %v6855 = vsel %vm2961, %v6815, %v6816
      %v6856 = vsel %vm2961, %v6814, %v6815
      %v6857 = vsel %vm2961, %v6813, %v6814
      %v6858 = vsel %vm2961, %v6812, %v6813
      %v6859 = vsel %vm2961, %v6811, %v6812
      %v6860 = vsel %vm2961, %v6810, %v6811
      %v6861 = vsel %vm2961, %v6835, %v6810
      %v6862 = vld [vmem:[%s6] sm:$0xff]
      %v6863 = vld [vmem:[%s6 + $0x8] sm:$0xff]
      %v6864 = vld [vmem:[%s6 + $0x10] sm:$0xff]
      %v6865 = vld [vmem:[%s6 + $0x18] sm:$0xff]
      %v6866 = vld [vmem:[%s6 + $0x20] sm:$0xff]
      %v6867 = vld [vmem:[%s6 + $0x28] sm:$0xff]
      %v6868 = vld [vmem:[%s6 + $0x30] sm:$0xff]
      %v6869 = vld [vmem:[%s6 + $0x38] sm:$0xff]
      %v6870 = vld [vmem:[%s6 + $0x40] sm:$0xff]
      %v6871 = vld [vmem:[%s6 + $0x48] sm:$0xff]
      %v6872 = vld [vmem:[%s6 + $0x50] sm:$0xff]
      %v6873 = vld [vmem:[%s6 + $0x58] sm:$0xff]
      %v6874 = vld [vmem:[%s6 + $0x60] sm:$0xff]
      %v6875 = vld [vmem:[%s6 + $0x68] sm:$0xff]
      %v6876 = vld [vmem:[%s6 + $0x70] sm:$0xff]
      %v6877 = vld [vmem:[%s6 + $0x78] sm:$0xff]
      %v6878 = vld [vmem:[%s6 + $0x80] sm:$0xff]
      %v6879 = vld [vmem:[%s6 + $0x88] sm:$0xff]
      %v6880 = vld [vmem:[%s6 + $0x90] sm:$0xff]
      %v6881 = vld [vmem:[%s6 + $0x98] sm:$0xff]
      %v6882 = vld [vmem:[%s6 + $0xa0] sm:$0xff]
      %v6883 = vld [vmem:[%s6 + $0xa8] sm:$0xff]
      %v6884 = vld [vmem:[%s6 + $0xb0] sm:$0xff]
      %v6885 = vld [vmem:[%s6 + $0xb8] sm:$0xff]
      %v6886 = vld [vmem:[%s6 + $0xc0] sm:$0xff]
      %v6887 = vld [vmem:[%s6 + $0xc8] sm:$0xff]
      %v6888 = vmul.f32 %v6836, %v6862
      %v6889 = vmul.f32 %v6861, %v6863
      %v6890 = vmul.f32 %v6860, %v6864
      %v6891 = vmul.f32 %v6859, %v6865
      %v6892 = vmul.f32 %v6858, %v6866
      %v6893 = vmul.f32 %v6857, %v6867
      %v6894 = vmul.f32 %v6856, %v6868
      %v6895 = vmul.f32 %v6855, %v6869
      %v6896 = vmul.f32 %v6854, %v6870
      %v6897 = vmul.f32 %v6853, %v6871
      %v6898 = vmul.f32 %v6852, %v6872
      %v6899 = vmul.f32 %v6851, %v6873
      %v6900 = vmul.f32 %v6850, %v6874
      %v6901 = vmul.f32 %v6849, %v6875
      %v6902 = vmul.f32 %v6848, %v6876
      %v6903 = vmul.f32 %v6847, %v6877
      %v6904 = vmul.f32 %v6846, %v6878
      %v6905 = vmul.f32 %v6845, %v6879
      %v6906 = vmul.f32 %v6844, %v6880
      %v6907 = vmul.f32 %v6843, %v6881
      %v6908 = vmul.f32 %v6842, %v6882
      %v6909 = vmul.f32 %v6841, %v6883
      %v6910 = vmul.f32 %v6840, %v6884
      %v6911 = vmul.f32 %v6839, %v6885
      %v6912 = vmul.f32 %v6838, %v6886
      %v6913 = vmul.f32 %v6837, %v6887
      %v6914 = vld [vmem:[%s3] sm:$0xff]
      %v6915 = vrot.slane %v6784, 2
      %v6916 = vrot.slane %v6785, 2
      %v6917 = vrot.slane %v6786, 2
      %v6918 = vrot.slane %v6787, 2
      %v6919 = vrot.slane %v6788, 2
      %v6920 = vrot.slane %v6789, 2
      %v6921 = vrot.slane %v6790, 2
      %v6922 = vrot.slane %v6791, 2
      %v6923 = vrot.slane %v6792, 2
      %v6924 = vrot.slane %v6793, 2
      %v6925 = vrot.slane %v6794, 2
      %v6926 = vrot.slane %v6795, 2
      %v6927 = vrot.slane %v6796, 2
      %v6928 = vrot.slane %v6797, 2
      %v6929 = vrot.slane %v6798, 2
      %v6930 = vrot.slane %v6799, 2
      %v6931 = vrot.slane %v6800, 2
      %v6932 = vrot.slane %v6801, 2
      %v6933 = vrot.slane %v6802, 2
      %v6934 = vrot.slane %v6803, 2
      %v6935 = vrot.slane %v6804, 2
      %v6936 = vrot.slane %v6805, 2
      %v6937 = vrot.slane %v6806, 2
      %v6938 = vrot.slane %v6807, 2
      %v6939 = vrot.slane %v6808, 2
      %v6940 = vrot.slane %v6809, 2
      %v6941 = vsel %vm3067, %v6939, %v6940
      %v6942 = vsel %vm3067, %v6938, %v6939
      %v6943 = vsel %vm3067, %v6937, %v6938
      %v6944 = vsel %vm3067, %v6936, %v6937
      %v6945 = vsel %vm3067, %v6935, %v6936
      %v6946 = vsel %vm3067, %v6934, %v6935
      %v6947 = vsel %vm3067, %v6933, %v6934
      %v6948 = vsel %vm3067, %v6932, %v6933
      %v6949 = vsel %vm3067, %v6931, %v6932
      %v6950 = vsel %vm3067, %v6930, %v6931
      %v6951 = vsel %vm3067, %v6929, %v6930
      %v6952 = vsel %vm3067, %v6928, %v6929
      %v6953 = vsel %vm3067, %v6927, %v6928
      %v6954 = vsel %vm3067, %v6926, %v6927
      %v6955 = vsel %vm3067, %v6925, %v6926
      %v6956 = vsel %vm3067, %v6924, %v6925
      %v6957 = vsel %vm3067, %v6923, %v6924
      %v6958 = vsel %vm3067, %v6922, %v6923
      %v6959 = vsel %vm3067, %v6921, %v6922
      %v6960 = vsel %vm3067, %v6920, %v6921
      %v6961 = vsel %vm3067, %v6919, %v6920
      %v6962 = vsel %vm3067, %v6918, %v6919
      %v6963 = vsel %vm3067, %v6917, %v6918
      %v6964 = vsel %vm3067, %v6916, %v6917
      %v6965 = vsel %vm3067, %v6915, %v6916
      %v6966 = vsel %vm3067, %v6940, %v6915
      %v6967 = vld [vmem:[%s3094] sm:$0xff]
      %v6968 = vld [vmem:[%s3094 + $0x8] sm:$0xff]
      %v6969 = vld [vmem:[%s3094 + $0x10] sm:$0xff]
      %v6970 = vld [vmem:[%s3094 + $0x18] sm:$0xff]
      %v6971 = vld [vmem:[%s3094 + $0x20] sm:$0xff]
      %v6972 = vld [vmem:[%s3094 + $0x28] sm:$0xff]
      %v6973 = vld [vmem:[%s3094 + $0x30] sm:$0xff]
      %v6974 = vld [vmem:[%s3094 + $0x38] sm:$0xff]
      %v6975 = vld [vmem:[%s3094 + $0x40] sm:$0xff]
      %v6976 = vld [vmem:[%s3094 + $0x48] sm:$0xff]
      %v6977 = vld [vmem:[%s3094 + $0x50] sm:$0xff]
      %v6978 = vld [vmem:[%s3094 + $0x58] sm:$0xff]
      %v6979 = vld [vmem:[%s3094 + $0x60] sm:$0xff]
      %v6980 = vld [vmem:[%s3094 + $0x68] sm:$0xff]
      %v6981 = vld [vmem:[%s3094 + $0x70] sm:$0xff]
      %v6982 = vld [vmem:[%s3094 + $0x78] sm:$0xff]
      %v6983 = vld [vmem:[%s3094 + $0x80] sm:$0xff]
      %v6984 = vld [vmem:[%s3094 + $0x88] sm:$0xff]
      %v6985 = vld [vmem:[%s3094 + $0x90] sm:$0xff]
      %v6986 = vld [vmem:[%s3094 + $0x98] sm:$0xff]
      %v6987 = vld [vmem:[%s3094 + $0xa0] sm:$0xff]
      %v6988 = vld [vmem:[%s3094 + $0xa8] sm:$0xff]
      %v6989 = vld [vmem:[%s3094 + $0xb0] sm:$0xff]
      %v6990 = vld [vmem:[%s3094 + $0xb8] sm:$0xff]
      %v6991 = vld [vmem:[%s3094 + $0xc0] sm:$0xff]
      %v6992 = vld [vmem:[%s3094 + $0xc8] sm:$0xff]
      %v6993 = vmul.f32 %v6941, %v6967
      %v6994 = vmul.f32 %v6966, %v6968
      %v6995 = vmul.f32 %v6965, %v6969
      %v6996 = vmul.f32 %v6964, %v6970
      %v6997 = vmul.f32 %v6963, %v6971
      %v6998 = vmul.f32 %v6962, %v6972
      %v6999 = vmul.f32 %v6961, %v6973
      %v7000 = vmul.f32 %v6960, %v6974
      %v7001 = vmul.f32 %v6959, %v6975
      %v7002 = vmul.f32 %v6958, %v6976
      %v7003 = vmul.f32 %v6957, %v6977
      %v7004 = vmul.f32 %v6956, %v6978
      %v7005 = vmul.f32 %v6955, %v6979
      %v7006 = vmul.f32 %v6954, %v6980
      %v7007 = vmul.f32 %v6953, %v6981
      %v7008 = vmul.f32 %v6952, %v6982
      %v7009 = vmul.f32 %v6951, %v6983
      %v7010 = vmul.f32 %v6950, %v6984
      %v7011 = vmul.f32 %v6949, %v6985
      %v7012 = vmul.f32 %v6948, %v6986
      %v7013 = vmul.f32 %v6947, %v6987
      %v7014 = vmul.f32 %v6946, %v6988
      %v7015 = vmul.f32 %v6945, %v6989
      %v7016 = vmul.f32 %v6944, %v6990
      %v7017 = vmul.f32 %v6943, %v6991
      %v7018 = vmul.f32 %v6942, %v6992
      %v7019 = vld [vmem:[%s3147] sm:$0xff]
      %v7021 = vsel %vm391, %v6993, 0
      %v7024 = vsel %vm391, %v6994, 0
      %v7027 = vsel %vm391, %v6995, 0
      %v7030 = vsel %vm391, %v6996, 0
      %v7033 = vsel %vm391, %v6997, 0
      %v7036 = vsel %vm391, %v6998, 0
      %v7039 = vsel %vm391, %v6999, 0
      %v7042 = vsel %vm391, %v7000, 0
      %v7045 = vsel %vm391, %v7001, 0
      %v7048 = vsel %vm391, %v7002, 0
      %v7051 = vsel %vm391, %v7003, 0
      %v7054 = vsel %vm391, %v7004, 0
      %v7057 = vsel %vm391, %v7005, 0
      %v7060 = vsel %vm391, %v7006, 0
      %v7063 = vsel %vm391, %v7007, 0
      %v7066 = vsel %vm391, %v7008, 0
      %v7069 = vsel %vm391, %v7009, 0
      %v7072 = vsel %vm391, %v7010, 0
      %v7075 = vsel %vm391, %v7011, 0
      %v7078 = vsel %vm391, %v7012, 0
      %v7081 = vsel %vm391, %v7013, 0
      %v7084 = vsel %vm391, %v7014, 0
      %v7087 = vsel %vm391, %v7015, 0
      %v7090 = vsel %vm391, %v7016, 0
      %v7093 = vsel %vm391, %v7017, 0
      %v7096 = vsel %vm391, %v7018, 0
      %7098 = vmatpush.msra.mxu0 0.0
      %7099 = vmatpush.msra.mxu0 0.0
      %7100 = vmatpush.msra.mxu0 0.0
      %7101 = vmatpush.msra.mxu0 0.0
      %7102 = vmatpush.msra.mxu0 0.0
      %7103 = vmatpush.msra.mxu0 0.0
      %7104 = vmatpush.msra.mxu0 0.0
      %7105 = vmatpush.msra.mxu0 0.0
      %7106 = vmatpush.msra.mxu0 0.0
      %7107 = vmatpush.msra.mxu0 0.0
      %7108 = vmatpush.msra.mxu0 0.0
      %7109 = vmatpush.msra.mxu0 0.0
      %7110 = vmatpush.msra.mxu0 0.0
      %7111 = vmatpush.msra.mxu0 0.0
      %7112 = vmatpush.msra.mxu0 0.0
      %7113 = vmatpush.msra.mxu0 %v7019
      %7114 = vmatmul.f32.gmra.mxu0 %v7021
      %v7115 = vpop.f32.mrf.mxu0
      %v7116 = vadd.f32 0.0, %v7115
      %7117 = vmatmul.f32.gmra.mxu0 %v7024
      %v7118 = vpop.f32.mrf.mxu0
      %v7119 = vadd.f32 0.0, %v7118
      %7120 = vmatmul.f32.gmra.mxu0 %v7027
      %v7121 = vpop.f32.mrf.mxu0
      %v7122 = vadd.f32 0.0, %v7121
      %7123 = vmatmul.f32.gmra.mxu0 %v7030
      %v7124 = vpop.f32.mrf.mxu0
      %v7125 = vadd.f32 0.0, %v7124
      %7126 = vmatmul.f32.gmra.mxu0 %v7033
      %v7127 = vpop.f32.mrf.mxu0
      %v7128 = vadd.f32 0.0, %v7127
      %7129 = vmatmul.f32.gmra.mxu0 %v7036
      %v7130 = vpop.f32.mrf.mxu0
      %v7131 = vadd.f32 0.0, %v7130
      %7132 = vmatmul.f32.gmra.mxu0 %v7039
      %v7133 = vpop.f32.mrf.mxu0
      %v7134 = vadd.f32 0.0, %v7133
      %7135 = vmatmul.f32.gmra.mxu0 %v7042
      %v7136 = vpop.f32.mrf.mxu0
      %v7137 = vadd.f32 0.0, %v7136
      %7138 = vmatmul.f32.gmra.mxu0 %v7045
      %v7139 = vpop.f32.mrf.mxu0
      %v7140 = vadd.f32 0.0, %v7139
      %7141 = vmatmul.f32.gmra.mxu0 %v7048
      %v7142 = vpop.f32.mrf.mxu0
      %v7143 = vadd.f32 0.0, %v7142
      %7144 = vmatmul.f32.gmra.mxu0 %v7051
      %v7145 = vpop.f32.mrf.mxu0
      %v7146 = vadd.f32 0.0, %v7145
      %7147 = vmatmul.f32.gmra.mxu0 %v7054
      %v7148 = vpop.f32.mrf.mxu0
      %v7149 = vadd.f32 0.0, %v7148
      %7150 = vmatmul.f32.gmra.mxu0 %v7057
      %v7151 = vpop.f32.mrf.mxu0
      %v7152 = vadd.f32 0.0, %v7151
      %7153 = vmatmul.f32.gmra.mxu0 %v7060
      %v7154 = vpop.f32.mrf.mxu0
      %v7155 = vadd.f32 0.0, %v7154
      %7156 = vmatmul.f32.gmra.mxu0 %v7063
      %v7157 = vpop.f32.mrf.mxu0
      %v7158 = vadd.f32 0.0, %v7157
      %7159 = vmatmul.f32.gmra.mxu0 %v7066
      %v7160 = vpop.f32.mrf.mxu0
      %v7161 = vadd.f32 0.0, %v7160
      %7162 = vmatmul.f32.gmra.mxu0 %v7069
      %v7163 = vpop.f32.mrf.mxu0
      %v7164 = vadd.f32 0.0, %v7163
      %7165 = vmatmul.f32.gmra.mxu0 %v7072
      %v7166 = vpop.f32.mrf.mxu0
      %v7167 = vadd.f32 0.0, %v7166
      %7168 = vmatmul.f32.gmra.mxu0 %v7075
      %v7169 = vpop.f32.mrf.mxu0
      %v7170 = vadd.f32 0.0, %v7169
      %7171 = vmatmul.f32.gmra.mxu0 %v7078
      %v7172 = vpop.f32.mrf.mxu0
      %v7173 = vadd.f32 0.0, %v7172
      %7174 = vmatmul.f32.gmra.mxu0 %v7081
      %v7175 = vpop.f32.mrf.mxu0
      %v7176 = vadd.f32 0.0, %v7175
      %7177 = vmatmul.f32.gmra.mxu0 %v7084
      %v7178 = vpop.f32.mrf.mxu0
      %v7179 = vadd.f32 0.0, %v7178
      %7180 = vmatmul.f32.gmra.mxu0 %v7087
      %v7181 = vpop.f32.mrf.mxu0
      %v7182 = vadd.f32 0.0, %v7181
      %7183 = vmatmul.f32.gmra.mxu0 %v7090
      %v7184 = vpop.f32.mrf.mxu0
      %v7185 = vadd.f32 0.0, %v7184
      %7186 = vmatmul.f32.gmra.mxu0 %v7093
      %v7187 = vpop.f32.mrf.mxu0
      %v7188 = vadd.f32 0.0, %v7187
      %7189 = vmatmul.f32.gmra.mxu0 %v7096
      %v7190 = vpop.f32.mrf.mxu0
      %7191 = vdwg.mxu0
      %v7193 = vsel %vm391, %v6888, 0
      %v7196 = vsel %vm391, %v6889, 0
      %v7199 = vsel %vm391, %v6890, 0
      %v7202 = vsel %vm391, %v6891, 0
      %v7205 = vsel %vm391, %v6892, 0
      %v7208 = vsel %vm391, %v6893, 0
      %v7211 = vsel %vm391, %v6894, 0
      %v7214 = vsel %vm391, %v6895, 0
      %v7217 = vsel %vm391, %v6896, 0
      %v7220 = vsel %vm391, %v6897, 0
      %v7223 = vsel %vm391, %v6898, 0
      %v7226 = vsel %vm391, %v6899, 0
      %v7229 = vsel %vm391, %v6900, 0
      %v7232 = vsel %vm391, %v6901, 0
      %v7235 = vsel %vm391, %v6902, 0
      %v7238 = vsel %vm391, %v6903, 0
      %v7241 = vsel %vm391, %v6904, 0
      %v7244 = vsel %vm391, %v6905, 0
      %v7247 = vsel %vm391, %v6906, 0
      %v7250 = vsel %vm391, %v6907, 0
      %v7253 = vsel %vm391, %v6908, 0
      %v7256 = vsel %vm391, %v6909, 0
      %v7259 = vsel %vm391, %v6910, 0
      %v7262 = vsel %vm391, %v6911, 0
      %v7265 = vsel %vm391, %v6912, 0
      %v7268 = vsel %vm391, %v6913, 0
      %7270 = vmatpush.msra.mxu0 0.0
      %7271 = vmatpush.msra.mxu0 0.0
      %7272 = vmatpush.msra.mxu0 0.0
      %7273 = vmatpush.msra.mxu0 0.0
      %7274 = vmatpush.msra.mxu0 0.0
      %7275 = vmatpush.msra.mxu0 0.0
      %7276 = vmatpush.msra.mxu0 0.0
      %7277 = vmatpush.msra.mxu0 0.0
      %7278 = vmatpush.msra.mxu0 0.0
      %7279 = vmatpush.msra.mxu0 0.0
      %7280 = vmatpush.msra.mxu0 0.0
      %7281 = vmatpush.msra.mxu0 0.0
      %7282 = vmatpush.msra.mxu0 0.0
      %7283 = vmatpush.msra.mxu0 0.0
      %7284 = vmatpush.msra.mxu0 0.0
      %7285 = vmatpush.msra.mxu0 %v6914
      %7286 = vmatmul.f32.gmra.mxu0 %v7193
      %v7287 = vpop.f32.mrf.mxu0
      %v7288 = vadd.f32 %v7116, %v7287
      %7289 = vmatmul.f32.gmra.mxu0 %v7196
      %v7290 = vpop.f32.mrf.mxu0
      %v7291 = vadd.f32 %v7119, %v7290
      %7292 = vmatmul.f32.gmra.mxu0 %v7199
      %v7293 = vpop.f32.mrf.mxu0
      %v7294 = vadd.f32 %v7122, %v7293
      %7295 = vmatmul.f32.gmra.mxu0 %v7202
      %v7296 = vpop.f32.mrf.mxu0
      %v7297 = vadd.f32 %v7125, %v7296
      %7298 = vmatmul.f32.gmra.mxu0 %v7205
      %v7299 = vpop.f32.mrf.mxu0
      %v7300 = vadd.f32 %v7128, %v7299
      %7301 = vmatmul.f32.gmra.mxu0 %v7208
      %v7302 = vpop.f32.mrf.mxu0
      %v7303 = vadd.f32 %v7131, %v7302
      %7304 = vmatmul.f32.gmra.mxu0 %v7211
      %v7305 = vpop.f32.mrf.mxu0
      %v7306 = vadd.f32 %v7134, %v7305
      %7307 = vmatmul.f32.gmra.mxu0 %v7214
      %v7308 = vpop.f32.mrf.mxu0
      %v7309 = vadd.f32 %v7137, %v7308
      %7310 = vmatmul.f32.gmra.mxu0 %v7217
      %v7311 = vpop.f32.mrf.mxu0
      %v7312 = vadd.f32 %v7140, %v7311
      %7313 = vmatmul.f32.gmra.mxu0 %v7220
      %v7314 = vpop.f32.mrf.mxu0
      %v7315 = vadd.f32 %v7143, %v7314
      %7316 = vmatmul.f32.gmra.mxu0 %v7223
      %v7317 = vpop.f32.mrf.mxu0
      %v7318 = vadd.f32 %v7146, %v7317
      %7319 = vmatmul.f32.gmra.mxu0 %v7226
      %v7320 = vpop.f32.mrf.mxu0
      %v7321 = vadd.f32 %v7149, %v7320
      %7322 = vmatmul.f32.gmra.mxu0 %v7229
      %v7323 = vpop.f32.mrf.mxu0
      %v7324 = vadd.f32 %v7152, %v7323
      %7325 = vmatmul.f32.gmra.mxu0 %v7232
      %v7326 = vpop.f32.mrf.mxu0
      %v7327 = vadd.f32 %v7155, %v7326
      %7328 = vmatmul.f32.gmra.mxu0 %v7235
      %v7329 = vpop.f32.mrf.mxu0
      %v7330 = vadd.f32 %v7158, %v7329
      %7331 = vmatmul.f32.gmra.mxu0 %v7238
      %v7332 = vpop.f32.mrf.mxu0
      %v7333 = vadd.f32 %v7161, %v7332
      %7334 = vmatmul.f32.gmra.mxu0 %v7241
      %v7335 = vpop.f32.mrf.mxu0
      %v7336 = vadd.f32 %v7164, %v7335
      %7337 = vmatmul.f32.gmra.mxu0 %v7244
      %v7338 = vpop.f32.mrf.mxu0
      %v7339 = vadd.f32 %v7167, %v7338
      %7340 = vmatmul.f32.gmra.mxu0 %v7247
      %v7341 = vpop.f32.mrf.mxu0
      %v7342 = vadd.f32 %v7170, %v7341
      %7343 = vmatmul.f32.gmra.mxu0 %v7250
      %v7344 = vpop.f32.mrf.mxu0
      %v7345 = vadd.f32 %v7173, %v7344
      %7346 = vmatmul.f32.gmra.mxu0 %v7253
      %v7347 = vpop.f32.mrf.mxu0
      %v7348 = vadd.f32 %v7176, %v7347
      %7349 = vmatmul.f32.gmra.mxu0 %v7256
      %v7350 = vpop.f32.mrf.mxu0
      %v7351 = vadd.f32 %v7179, %v7350
      %7352 = vmatmul.f32.gmra.mxu0 %v7259
      %v7353 = vpop.f32.mrf.mxu0
      %v7354 = vadd.f32 %v7182, %v7353
      %7355 = vmatmul.f32.gmra.mxu0 %v7262
      %v7356 = vpop.f32.mrf.mxu0
      %v7357 = vadd.f32 %v7185, %v7356
      %7358 = vmatmul.f32.gmra.mxu0 %v7265
      %v7359 = vpop.f32.mrf.mxu0
      %v7360 = vadd.f32 %v7188, %v7359
      %7361 = vmatmul.f32.gmra.mxu0 %v7268
      %v7362 = vpop.f32.mrf.mxu0
      %7363 = vdwg.mxu0
      %v7364 = vrot.slane %v6784, 3
      %v7365 = vrot.slane %v6785, 3
      %v7366 = vrot.slane %v6786, 3
      %v7367 = vrot.slane %v6787, 3
      %v7368 = vrot.slane %v6788, 3
      %v7369 = vrot.slane %v6789, 3
      %v7370 = vrot.slane %v6790, 3
      %v7371 = vrot.slane %v6791, 3
      %v7372 = vrot.slane %v6792, 3
      %v7373 = vrot.slane %v6793, 3
      %v7374 = vrot.slane %v6794, 3
      %v7375 = vrot.slane %v6795, 3
      %v7376 = vrot.slane %v6796, 3
      %v7377 = vrot.slane %v6797, 3
      %v7378 = vrot.slane %v6798, 3
      %v7379 = vrot.slane %v6799, 3
      %v7380 = vrot.slane %v6800, 3
      %v7381 = vrot.slane %v6801, 3
      %v7382 = vrot.slane %v6802, 3
      %v7383 = vrot.slane %v6803, 3
      %v7384 = vrot.slane %v6804, 3
      %v7385 = vrot.slane %v6805, 3
      %v7386 = vrot.slane %v6806, 3
      %v7387 = vrot.slane %v6807, 3
      %v7388 = vrot.slane %v6808, 3
      %v7389 = vrot.slane %v6809, 3
      %v7390 = vsel %vm3519, %v7388, %v7389
      %v7391 = vsel %vm3519, %v7387, %v7388
      %v7392 = vsel %vm3519, %v7386, %v7387
      %v7393 = vsel %vm3519, %v7385, %v7386
      %v7394 = vsel %vm3519, %v7384, %v7385
      %v7395 = vsel %vm3519, %v7383, %v7384
      %v7396 = vsel %vm3519, %v7382, %v7383
      %v7397 = vsel %vm3519, %v7381, %v7382
      %v7398 = vsel %vm3519, %v7380, %v7381
      %v7399 = vsel %vm3519, %v7379, %v7380
      %v7400 = vsel %vm3519, %v7378, %v7379
      %v7401 = vsel %vm3519, %v7377, %v7378
      %v7402 = vsel %vm3519, %v7376, %v7377
      %v7403 = vsel %vm3519, %v7375, %v7376
      %v7404 = vsel %vm3519, %v7374, %v7375
      %v7405 = vsel %vm3519, %v7373, %v7374
      %v7406 = vsel %vm3519, %v7372, %v7373
      %v7407 = vsel %vm3519, %v7371, %v7372
      %v7408 = vsel %vm3519, %v7370, %v7371
      %v7409 = vsel %vm3519, %v7369, %v7370
      %v7410 = vsel %vm3519, %v7368, %v7369
      %v7411 = vsel %vm3519, %v7367, %v7368
      %v7412 = vsel %vm3519, %v7366, %v7367
      %v7413 = vsel %vm3519, %v7365, %v7366
      %v7414 = vsel %vm3519, %v7364, %v7365
      %v7415 = vsel %vm3519, %v7389, %v7364
      %v7416 = vld [vmem:[%s3546] sm:$0xff]
      %v7417 = vld [vmem:[%s3546 + $0x8] sm:$0xff]
      %v7418 = vld [vmem:[%s3546 + $0x10] sm:$0xff]
      %v7419 = vld [vmem:[%s3546 + $0x18] sm:$0xff]
      %v7420 = vld [vmem:[%s3546 + $0x20] sm:$0xff]
      %v7421 = vld [vmem:[%s3546 + $0x28] sm:$0xff]
      %v7422 = vld [vmem:[%s3546 + $0x30] sm:$0xff]
      %v7423 = vld [vmem:[%s3546 + $0x38] sm:$0xff]
      %v7424 = vld [vmem:[%s3546 + $0x40] sm:$0xff]
      %v7425 = vld [vmem:[%s3546 + $0x48] sm:$0xff]
      %v7426 = vld [vmem:[%s3546 + $0x50] sm:$0xff]
      %v7427 = vld [vmem:[%s3546 + $0x58] sm:$0xff]
      %v7428 = vld [vmem:[%s3546 + $0x60] sm:$0xff]
      %v7429 = vld [vmem:[%s3546 + $0x68] sm:$0xff]
      %v7430 = vld [vmem:[%s3546 + $0x70] sm:$0xff]
      %v7431 = vld [vmem:[%s3546 + $0x78] sm:$0xff]
      %v7432 = vld [vmem:[%s3546 + $0x80] sm:$0xff]
      %v7433 = vld [vmem:[%s3546 + $0x88] sm:$0xff]
      %v7434 = vld [vmem:[%s3546 + $0x90] sm:$0xff]
      %v7435 = vld [vmem:[%s3546 + $0x98] sm:$0xff]
      %v7436 = vld [vmem:[%s3546 + $0xa0] sm:$0xff]
      %v7437 = vld [vmem:[%s3546 + $0xa8] sm:$0xff]
      %v7438 = vld [vmem:[%s3546 + $0xb0] sm:$0xff]
      %v7439 = vld [vmem:[%s3546 + $0xb8] sm:$0xff]
      %v7440 = vld [vmem:[%s3546 + $0xc0] sm:$0xff]
      %v7441 = vld [vmem:[%s3546 + $0xc8] sm:$0xff]
      %v7442 = vmul.f32 %v7390, %v7416
      %v7443 = vmul.f32 %v7415, %v7417
      %v7444 = vmul.f32 %v7414, %v7418
      %v7445 = vmul.f32 %v7413, %v7419
      %v7446 = vmul.f32 %v7412, %v7420
      %v7447 = vmul.f32 %v7411, %v7421
      %v7448 = vmul.f32 %v7410, %v7422
      %v7449 = vmul.f32 %v7409, %v7423
      %v7450 = vmul.f32 %v7408, %v7424
      %v7451 = vmul.f32 %v7407, %v7425
      %v7452 = vmul.f32 %v7406, %v7426
      %v7453 = vmul.f32 %v7405, %v7427
      %v7454 = vmul.f32 %v7404, %v7428
      %v7455 = vmul.f32 %v7403, %v7429
      %v7456 = vmul.f32 %v7402, %v7430
      %v7457 = vmul.f32 %v7401, %v7431
      %v7458 = vmul.f32 %v7400, %v7432
      %v7459 = vmul.f32 %v7399, %v7433
      %v7460 = vmul.f32 %v7398, %v7434
      %v7461 = vmul.f32 %v7397, %v7435
      %v7462 = vmul.f32 %v7396, %v7436
      %v7463 = vmul.f32 %v7395, %v7437
      %v7464 = vmul.f32 %v7394, %v7438
      %v7465 = vmul.f32 %v7393, %v7439
      %v7466 = vmul.f32 %v7392, %v7440
      %v7467 = vmul.f32 %v7391, %v7441
      %v7468 = vld [vmem:[%s3599] sm:$0xff]
      %v7470 = vsel %vm391, %v7442, 0
      %v7473 = vsel %vm391, %v7443, 0
      %v7476 = vsel %vm391, %v7444, 0
      %v7479 = vsel %vm391, %v7445, 0
      %v7482 = vsel %vm391, %v7446, 0
      %v7485 = vsel %vm391, %v7447, 0
      %v7488 = vsel %vm391, %v7448, 0
      %v7491 = vsel %vm391, %v7449, 0
      %v7494 = vsel %vm391, %v7450, 0
      %v7497 = vsel %vm391, %v7451, 0
      %v7500 = vsel %vm391, %v7452, 0
      %v7503 = vsel %vm391, %v7453, 0
      %v7506 = vsel %vm391, %v7454, 0
      %v7509 = vsel %vm391, %v7455, 0
      %v7512 = vsel %vm391, %v7456, 0
      %v7515 = vsel %vm391, %v7457, 0
      %v7518 = vsel %vm391, %v7458, 0
      %v7521 = vsel %vm391, %v7459, 0
      %v7524 = vsel %vm391, %v7460, 0
      %v7527 = vsel %vm391, %v7461, 0
      %v7530 = vsel %vm391, %v7462, 0
      %v7533 = vsel %vm391, %v7463, 0
      %v7536 = vsel %vm391, %v7464, 0
      %v7539 = vsel %vm391, %v7465, 0
      %v7542 = vsel %vm391, %v7466, 0
      %v7545 = vsel %vm391, %v7467, 0
      %7547 = vmatpush.msra.mxu0 0.0
      %7548 = vmatpush.msra.mxu0 0.0
      %7549 = vmatpush.msra.mxu0 0.0
      %7550 = vmatpush.msra.mxu0 0.0
      %7551 = vmatpush.msra.mxu0 0.0
      %7552 = vmatpush.msra.mxu0 0.0
      %7553 = vmatpush.msra.mxu0 0.0
      %7554 = vmatpush.msra.mxu0 0.0
      %7555 = vmatpush.msra.mxu0 0.0
      %7556 = vmatpush.msra.mxu0 0.0
      %7557 = vmatpush.msra.mxu0 0.0
      %7558 = vmatpush.msra.mxu0 0.0
      %7559 = vmatpush.msra.mxu0 0.0
      %7560 = vmatpush.msra.mxu0 0.0
      %7561 = vmatpush.msra.mxu0 0.0
      %7562 = vmatpush.msra.mxu0 %v7468
      %7563 = vmatmul.f32.gmra.mxu0 %v7470
      %v7564 = vpop.f32.mrf.mxu0
      %v7565 = vadd.f32 0.0, %v7564
      %7566 = vmatmul.f32.gmra.mxu0 %v7473
      %v7567 = vpop.f32.mrf.mxu0
      %v7568 = vadd.f32 0.0, %v7567
      %7569 = vmatmul.f32.gmra.mxu0 %v7476
      %v7570 = vpop.f32.mrf.mxu0
      %v7571 = vadd.f32 0.0, %v7570
      %7572 = vmatmul.f32.gmra.mxu0 %v7479
      %v7573 = vpop.f32.mrf.mxu0
      %v7574 = vadd.f32 0.0, %v7573
      %7575 = vmatmul.f32.gmra.mxu0 %v7482
      %v7576 = vpop.f32.mrf.mxu0
      %v7577 = vadd.f32 0.0, %v7576
      %7578 = vmatmul.f32.gmra.mxu0 %v7485
      %v7579 = vpop.f32.mrf.mxu0
      %v7580 = vadd.f32 0.0, %v7579
      %7581 = vmatmul.f32.gmra.mxu0 %v7488
      %v7582 = vpop.f32.mrf.mxu0
      %v7583 = vadd.f32 0.0, %v7582
      %7584 = vmatmul.f32.gmra.mxu0 %v7491
      %v7585 = vpop.f32.mrf.mxu0
      %v7586 = vadd.f32 0.0, %v7585
      %7587 = vmatmul.f32.gmra.mxu0 %v7494
      %v7588 = vpop.f32.mrf.mxu0
      %v7589 = vadd.f32 0.0, %v7588
      %7590 = vmatmul.f32.gmra.mxu0 %v7497
      %v7591 = vpop.f32.mrf.mxu0
      %v7592 = vadd.f32 0.0, %v7591
      %7593 = vmatmul.f32.gmra.mxu0 %v7500
      %v7594 = vpop.f32.mrf.mxu0
      %v7595 = vadd.f32 0.0, %v7594
      %7596 = vmatmul.f32.gmra.mxu0 %v7503
      %v7597 = vpop.f32.mrf.mxu0
      %v7598 = vadd.f32 0.0, %v7597
      %7599 = vmatmul.f32.gmra.mxu0 %v7506
      %v7600 = vpop.f32.mrf.mxu0
      %v7601 = vadd.f32 0.0, %v7600
      %7602 = vmatmul.f32.gmra.mxu0 %v7509
      %v7603 = vpop.f32.mrf.mxu0
      %v7604 = vadd.f32 0.0, %v7603
      %7605 = vmatmul.f32.gmra.mxu0 %v7512
      %v7606 = vpop.f32.mrf.mxu0
      %v7607 = vadd.f32 0.0, %v7606
      %7608 = vmatmul.f32.gmra.mxu0 %v7515
      %v7609 = vpop.f32.mrf.mxu0
      %v7610 = vadd.f32 0.0, %v7609
      %7611 = vmatmul.f32.gmra.mxu0 %v7518
      %v7612 = vpop.f32.mrf.mxu0
      %v7613 = vadd.f32 0.0, %v7612
      %7614 = vmatmul.f32.gmra.mxu0 %v7521
      %v7615 = vpop.f32.mrf.mxu0
      %v7616 = vadd.f32 0.0, %v7615
      %7617 = vmatmul.f32.gmra.mxu0 %v7524
      %v7618 = vpop.f32.mrf.mxu0
      %v7619 = vadd.f32 0.0, %v7618
      %7620 = vmatmul.f32.gmra.mxu0 %v7527
      %v7621 = vpop.f32.mrf.mxu0
      %v7622 = vadd.f32 0.0, %v7621
      %7623 = vmatmul.f32.gmra.mxu0 %v7530
      %v7624 = vpop.f32.mrf.mxu0
      %v7625 = vadd.f32 0.0, %v7624
      %7626 = vmatmul.f32.gmra.mxu0 %v7533
      %v7627 = vpop.f32.mrf.mxu0
      %v7628 = vadd.f32 0.0, %v7627
      %7629 = vmatmul.f32.gmra.mxu0 %v7536
      %v7630 = vpop.f32.mrf.mxu0
      %v7631 = vadd.f32 0.0, %v7630
      %7632 = vmatmul.f32.gmra.mxu0 %v7539
      %v7633 = vpop.f32.mrf.mxu0
      %v7634 = vadd.f32 0.0, %v7633
      %7635 = vmatmul.f32.gmra.mxu0 %v7542
      %v7636 = vpop.f32.mrf.mxu0
      %v7637 = vadd.f32 0.0, %v7636
      %7638 = vmatmul.f32.gmra.mxu0 %v7545
      %v7639 = vpop.f32.mrf.mxu0
      %7640 = vdwg.mxu0
      %v7641 = vadd.f32 %v7288, %v7565
      %v7642 = vadd.f32 %v7291, %v7568
      %v7643 = vadd.f32 %v7294, %v7571
      %v7644 = vadd.f32 %v7297, %v7574
      %v7645 = vadd.f32 %v7300, %v7577
      %v7646 = vadd.f32 %v7303, %v7580
      %v7647 = vadd.f32 %v7306, %v7583
      %v7648 = vadd.f32 %v7309, %v7586
      %v7649 = vadd.f32 %v7312, %v7589
      %v7650 = vadd.f32 %v7315, %v7592
      %v7651 = vadd.f32 %v7318, %v7595
      %v7652 = vadd.f32 %v7321, %v7598
      %v7653 = vadd.f32 %v7324, %v7601
      %v7654 = vadd.f32 %v7327, %v7604
      %v7655 = vadd.f32 %v7330, %v7607
      %v7656 = vadd.f32 %v7333, %v7610
      %v7657 = vadd.f32 %v7336, %v7613
      %v7658 = vadd.f32 %v7339, %v7616
      %v7659 = vadd.f32 %v7342, %v7619
      %v7660 = vadd.f32 %v7345, %v7622
      %v7661 = vadd.f32 %v7348, %v7625
      %v7662 = vadd.f32 %v7351, %v7628
      %v7663 = vadd.f32 %v7354, %v7631
      %v7664 = vadd.f32 %v7357, %v7634
      %v7665 = vadd.f32 %v7360, %v7637
      %v7666 = vrot.slane %v6784, 7
      %v7667 = vrot.slane %v6785, 7
      %v7668 = vrot.slane %v6786, 7
      %v7669 = vrot.slane %v6787, 7
      %v7670 = vrot.slane %v6788, 7
      %v7671 = vrot.slane %v6789, 7
      %v7672 = vrot.slane %v6790, 7
      %v7673 = vrot.slane %v6791, 7
      %v7674 = vrot.slane %v6792, 7
      %v7675 = vrot.slane %v6793, 7
      %v7676 = vrot.slane %v6794, 7
      %v7677 = vrot.slane %v6795, 7
      %v7678 = vrot.slane %v6796, 7
      %v7679 = vrot.slane %v6797, 7
      %v7680 = vrot.slane %v6798, 7
      %v7681 = vrot.slane %v6799, 7
      %v7682 = vrot.slane %v6800, 7
      %v7683 = vrot.slane %v6801, 7
      %v7684 = vrot.slane %v6802, 7
      %v7685 = vrot.slane %v6803, 7
      %v7686 = vrot.slane %v6804, 7
      %v7687 = vrot.slane %v6805, 7
      %v7688 = vrot.slane %v6806, 7
      %v7689 = vrot.slane %v6807, 7
      %v7690 = vrot.slane %v6808, 7
      %v7691 = vrot.slane %v6809, 7
      %v7692 = vsel %vm3824, %v7690, %v7691
      %v7693 = vsel %vm3824, %v7689, %v7690
      %v7694 = vsel %vm3824, %v7688, %v7689
      %v7695 = vsel %vm3824, %v7687, %v7688
      %v7696 = vsel %vm3824, %v7686, %v7687
      %v7697 = vsel %vm3824, %v7685, %v7686
      %v7698 = vsel %vm3824, %v7684, %v7685
      %v7699 = vsel %vm3824, %v7683, %v7684
      %v7700 = vsel %vm3824, %v7682, %v7683
      %v7701 = vsel %vm3824, %v7681, %v7682
      %v7702 = vsel %vm3824, %v7680, %v7681
      %v7703 = vsel %vm3824, %v7679, %v7680
      %v7704 = vsel %vm3824, %v7678, %v7679
      %v7705 = vsel %vm3824, %v7677, %v7678
      %v7706 = vsel %vm3824, %v7676, %v7677
      %v7707 = vsel %vm3824, %v7675, %v7676
      %v7708 = vsel %vm3824, %v7674, %v7675
      %v7709 = vsel %vm3824, %v7673, %v7674
      %v7710 = vsel %vm3824, %v7672, %v7673
      %v7711 = vsel %vm3824, %v7671, %v7672
      %v7712 = vsel %vm3824, %v7670, %v7671
      %v7713 = vsel %vm3824, %v7669, %v7670
      %v7714 = vsel %vm3824, %v7668, %v7669
      %v7715 = vsel %vm3824, %v7667, %v7668
      %v7716 = vsel %vm3824, %v7666, %v7667
      %v7717 = vsel %vm3824, %v7691, %v7666
      %v7718 = vld [vmem:[%s3851] sm:$0xff]
      %v7719 = vld [vmem:[%s3851 + $0x8] sm:$0xff]
      %v7720 = vld [vmem:[%s3851 + $0x10] sm:$0xff]
      %v7721 = vld [vmem:[%s3851 + $0x18] sm:$0xff]
      %v7722 = vld [vmem:[%s3851 + $0x20] sm:$0xff]
      %v7723 = vld [vmem:[%s3851 + $0x28] sm:$0xff]
      %v7724 = vld [vmem:[%s3851 + $0x30] sm:$0xff]
      %v7725 = vld [vmem:[%s3851 + $0x38] sm:$0xff]
      %v7726 = vld [vmem:[%s3851 + $0x40] sm:$0xff]
      %v7727 = vld [vmem:[%s3851 + $0x48] sm:$0xff]
      %v7728 = vld [vmem:[%s3851 + $0x50] sm:$0xff]
      %v7729 = vld [vmem:[%s3851 + $0x58] sm:$0xff]
      %v7730 = vld [vmem:[%s3851 + $0x60] sm:$0xff]
      %v7731 = vld [vmem:[%s3851 + $0x68] sm:$0xff]
      %v7732 = vld [vmem:[%s3851 + $0x70] sm:$0xff]
      %v7733 = vld [vmem:[%s3851 + $0x78] sm:$0xff]
      %v7734 = vld [vmem:[%s3851 + $0x80] sm:$0xff]
      %v7735 = vld [vmem:[%s3851 + $0x88] sm:$0xff]
      %v7736 = vld [vmem:[%s3851 + $0x90] sm:$0xff]
      %v7737 = vld [vmem:[%s3851 + $0x98] sm:$0xff]
      %v7738 = vld [vmem:[%s3851 + $0xa0] sm:$0xff]
      %v7739 = vld [vmem:[%s3851 + $0xa8] sm:$0xff]
      %v7740 = vld [vmem:[%s3851 + $0xb0] sm:$0xff]
      %v7741 = vld [vmem:[%s3851 + $0xb8] sm:$0xff]
      %v7742 = vld [vmem:[%s3851 + $0xc0] sm:$0xff]
      %v7743 = vld [vmem:[%s3851 + $0xc8] sm:$0xff]
      %v7744 = vmul.f32 %v7717, %v7718
      %v7745 = vmul.f32 %v7716, %v7719
      %v7746 = vmul.f32 %v7715, %v7720
      %v7747 = vmul.f32 %v7714, %v7721
      %v7748 = vmul.f32 %v7713, %v7722
      %v7749 = vmul.f32 %v7712, %v7723
      %v7750 = vmul.f32 %v7711, %v7724
      %v7751 = vmul.f32 %v7710, %v7725
      %v7752 = vmul.f32 %v7709, %v7726
      %v7753 = vmul.f32 %v7708, %v7727
      %v7754 = vmul.f32 %v7707, %v7728
      %v7755 = vmul.f32 %v7706, %v7729
      %v7756 = vmul.f32 %v7705, %v7730
      %v7757 = vmul.f32 %v7704, %v7731
      %v7758 = vmul.f32 %v7703, %v7732
      %v7759 = vmul.f32 %v7702, %v7733
      %v7760 = vmul.f32 %v7701, %v7734
      %v7761 = vmul.f32 %v7700, %v7735
      %v7762 = vmul.f32 %v7699, %v7736
      %v7763 = vmul.f32 %v7698, %v7737
      %v7764 = vmul.f32 %v7697, %v7738
      %v7765 = vmul.f32 %v7696, %v7739
      %v7766 = vmul.f32 %v7695, %v7740
      %v7767 = vmul.f32 %v7694, %v7741
      %v7768 = vmul.f32 %v7693, %v7742
      %v7769 = vmul.f32 %v7692, %v7743
      %v7770 = vld [vmem:[%s3904] sm:$0xff]
      %v7772 = vsel %vm391, %v7744, 0
      %v7775 = vsel %vm391, %v7745, 0
      %v7778 = vsel %vm391, %v7746, 0
      %v7781 = vsel %vm391, %v7747, 0
      %v7784 = vsel %vm391, %v7748, 0
      %v7787 = vsel %vm391, %v7749, 0
      %v7790 = vsel %vm391, %v7750, 0
      %v7793 = vsel %vm391, %v7751, 0
      %v7796 = vsel %vm391, %v7752, 0
      %v7799 = vsel %vm391, %v7753, 0
      %v7802 = vsel %vm391, %v7754, 0
      %v7805 = vsel %vm391, %v7755, 0
      %v7808 = vsel %vm391, %v7756, 0
      %v7811 = vsel %vm391, %v7757, 0
      %v7814 = vsel %vm391, %v7758, 0
      %v7817 = vsel %vm391, %v7759, 0
      %v7820 = vsel %vm391, %v7760, 0
      %v7823 = vsel %vm391, %v7761, 0
      %v7826 = vsel %vm391, %v7762, 0
      %v7829 = vsel %vm391, %v7763, 0
      %v7832 = vsel %vm391, %v7764, 0
      %v7835 = vsel %vm391, %v7765, 0
      %v7838 = vsel %vm391, %v7766, 0
      %v7841 = vsel %vm391, %v7767, 0
      %v7844 = vsel %vm391, %v7768, 0
      %v7847 = vsel %vm391, %v7769, 0
      %7849 = vmatpush.msra.mxu0 0.0
      %7850 = vmatpush.msra.mxu0 0.0
      %7851 = vmatpush.msra.mxu0 0.0
      %7852 = vmatpush.msra.mxu0 0.0
      %7853 = vmatpush.msra.mxu0 0.0
      %7854 = vmatpush.msra.mxu0 0.0
      %7855 = vmatpush.msra.mxu0 0.0
      %7856 = vmatpush.msra.mxu0 0.0
      %7857 = vmatpush.msra.mxu0 0.0
      %7858 = vmatpush.msra.mxu0 0.0
      %7859 = vmatpush.msra.mxu0 0.0
      %7860 = vmatpush.msra.mxu0 0.0
      %7861 = vmatpush.msra.mxu0 0.0
      %7862 = vmatpush.msra.mxu0 0.0
      %7863 = vmatpush.msra.mxu0 0.0
      %7864 = vmatpush.msra.mxu0 %v7770
      %7865 = vmatmul.f32.gmra.mxu0 %v7772
      %v7866 = vpop.f32.mrf.mxu0
      %v7867 = vadd.f32 0.0, %v7866
      %7868 = vmatmul.f32.gmra.mxu0 %v7775
      %v7869 = vpop.f32.mrf.mxu0
      %v7870 = vadd.f32 0.0, %v7869
      %7871 = vmatmul.f32.gmra.mxu0 %v7778
      %v7872 = vpop.f32.mrf.mxu0
      %v7873 = vadd.f32 0.0, %v7872
      %7874 = vmatmul.f32.gmra.mxu0 %v7781
      %v7875 = vpop.f32.mrf.mxu0
      %v7876 = vadd.f32 0.0, %v7875
      %7877 = vmatmul.f32.gmra.mxu0 %v7784
      %v7878 = vpop.f32.mrf.mxu0
      %v7879 = vadd.f32 0.0, %v7878
      %7880 = vmatmul.f32.gmra.mxu0 %v7787
      %v7881 = vpop.f32.mrf.mxu0
      %v7882 = vadd.f32 0.0, %v7881
      %7883 = vmatmul.f32.gmra.mxu0 %v7790
      %v7884 = vpop.f32.mrf.mxu0
      %v7885 = vadd.f32 0.0, %v7884
      %7886 = vmatmul.f32.gmra.mxu0 %v7793
      %v7887 = vpop.f32.mrf.mxu0
      %v7888 = vadd.f32 0.0, %v7887
      %7889 = vmatmul.f32.gmra.mxu0 %v7796
      %v7890 = vpop.f32.mrf.mxu0
      %v7891 = vadd.f32 0.0, %v7890
      %7892 = vmatmul.f32.gmra.mxu0 %v7799
      %v7893 = vpop.f32.mrf.mxu0
      %v7894 = vadd.f32 0.0, %v7893
      %7895 = vmatmul.f32.gmra.mxu0 %v7802
      %v7896 = vpop.f32.mrf.mxu0
      %v7897 = vadd.f32 0.0, %v7896
      %7898 = vmatmul.f32.gmra.mxu0 %v7805
      %v7899 = vpop.f32.mrf.mxu0
      %v7900 = vadd.f32 0.0, %v7899
      %7901 = vmatmul.f32.gmra.mxu0 %v7808
      %v7902 = vpop.f32.mrf.mxu0
      %v7903 = vadd.f32 0.0, %v7902
      %7904 = vmatmul.f32.gmra.mxu0 %v7811
      %v7905 = vpop.f32.mrf.mxu0
      %v7906 = vadd.f32 0.0, %v7905
      %7907 = vmatmul.f32.gmra.mxu0 %v7814
      %v7908 = vpop.f32.mrf.mxu0
      %v7909 = vadd.f32 0.0, %v7908
      %7910 = vmatmul.f32.gmra.mxu0 %v7817
      %v7911 = vpop.f32.mrf.mxu0
      %v7912 = vadd.f32 0.0, %v7911
      %7913 = vmatmul.f32.gmra.mxu0 %v7820
      %v7914 = vpop.f32.mrf.mxu0
      %v7915 = vadd.f32 0.0, %v7914
      %7916 = vmatmul.f32.gmra.mxu0 %v7823
      %v7917 = vpop.f32.mrf.mxu0
      %v7918 = vadd.f32 0.0, %v7917
      %7919 = vmatmul.f32.gmra.mxu0 %v7826
      %v7920 = vpop.f32.mrf.mxu0
      %v7921 = vadd.f32 0.0, %v7920
      %7922 = vmatmul.f32.gmra.mxu0 %v7829
      %v7923 = vpop.f32.mrf.mxu0
      %v7924 = vadd.f32 0.0, %v7923
      %7925 = vmatmul.f32.gmra.mxu0 %v7832
      %v7926 = vpop.f32.mrf.mxu0
      %v7927 = vadd.f32 0.0, %v7926
      %7928 = vmatmul.f32.gmra.mxu0 %v7835
      %v7929 = vpop.f32.mrf.mxu0
      %v7930 = vadd.f32 0.0, %v7929
      %7931 = vmatmul.f32.gmra.mxu0 %v7838
      %v7932 = vpop.f32.mrf.mxu0
      %v7933 = vadd.f32 0.0, %v7932
      %7934 = vmatmul.f32.gmra.mxu0 %v7841
      %v7935 = vpop.f32.mrf.mxu0
      %v7936 = vadd.f32 0.0, %v7935
      %7937 = vmatmul.f32.gmra.mxu0 %v7844
      %v7938 = vpop.f32.mrf.mxu0
      %v7939 = vadd.f32 0.0, %v7938
      %7940 = vmatmul.f32.gmra.mxu0 %v7847
      %v7941 = vpop.f32.mrf.mxu0
      %7942 = vdwg.mxu0
      %v7943 = vadd.f32 %v7641, %v7867
      %v7944 = vadd.f32 %v7642, %v7870
      %v7945 = vadd.f32 %v7643, %v7873
      %v7946 = vadd.f32 %v7644, %v7876
      %v7947 = vadd.f32 %v7645, %v7879
      %v7948 = vadd.f32 %v7646, %v7882
      %v7949 = vadd.f32 %v7647, %v7885
      %v7950 = vadd.f32 %v7648, %v7888
      %v7951 = vadd.f32 %v7649, %v7891
      %v7952 = vadd.f32 %v7650, %v7894
      %v7953 = vadd.f32 %v7651, %v7897
      %v7954 = vadd.f32 %v7652, %v7900
      %v7955 = vadd.f32 %v7653, %v7903
      %v7956 = vadd.f32 %v7654, %v7906
      %v7957 = vadd.f32 %v7655, %v7909
      %v7958 = vadd.f32 %v7656, %v7912
      %v7959 = vadd.f32 %v7657, %v7915
      %v7960 = vadd.f32 %v7658, %v7918
      %v7961 = vadd.f32 %v7659, %v7921
      %v7962 = vadd.f32 %v7660, %v7924
      %v7963 = vadd.f32 %v7661, %v7927
      %v7964 = vadd.f32 %v7662, %v7930
      %v7965 = vadd.f32 %v7663, %v7933
      %v7966 = vadd.f32 %v7664, %v7936
      %v7967 = vadd.f32 %v7665, %v7939
      %v7968 = vld [vmem:[%s4103] sm:$0xff]
      %v7969 = vld [vmem:[%s4103 + $0x8] sm:$0xff]
      %v7970 = vld [vmem:[%s4103 + $0x10] sm:$0xff]
      %v7971 = vld [vmem:[%s4103 + $0x18] sm:$0xff]
      %v7972 = vld [vmem:[%s4103 + $0x20] sm:$0xff]
      %v7973 = vld [vmem:[%s4103 + $0x28] sm:$0xff]
      %v7974 = vld [vmem:[%s4103 + $0x30] sm:$0xff]
      %v7975 = vld [vmem:[%s4103 + $0x38] sm:$0xff]
      %v7976 = vld [vmem:[%s4103 + $0x40] sm:$0xff]
      %v7977 = vld [vmem:[%s4103 + $0x48] sm:$0xff]
      %v7978 = vld [vmem:[%s4103 + $0x50] sm:$0xff]
      %v7979 = vld [vmem:[%s4103 + $0x58] sm:$0xff]
      %v7980 = vld [vmem:[%s4103 + $0x60] sm:$0xff]
      %v7981 = vld [vmem:[%s4103 + $0x68] sm:$0xff]
      %v7982 = vld [vmem:[%s4103 + $0x70] sm:$0xff]
      %v7983 = vld [vmem:[%s4103 + $0x78] sm:$0xff]
      %v7984 = vld [vmem:[%s4103 + $0x80] sm:$0xff]
      %v7985 = vld [vmem:[%s4103 + $0x88] sm:$0xff]
      %v7986 = vld [vmem:[%s4103 + $0x90] sm:$0xff]
      %v7987 = vld [vmem:[%s4103 + $0x98] sm:$0xff]
      %v7988 = vld [vmem:[%s4103 + $0xa0] sm:$0xff]
      %v7989 = vld [vmem:[%s4103 + $0xa8] sm:$0xff]
      %v7990 = vld [vmem:[%s4103 + $0xb0] sm:$0xff]
      %v7991 = vld [vmem:[%s4103 + $0xb8] sm:$0xff]
      %v7992 = vld [vmem:[%s4103 + $0xc0] sm:$0xff]
      %v7993 = vld [vmem:[%s4103 + $0xc8] sm:$0xff]
      %v7994 = vmul.f32 %v6784, %v7968
      %v7995 = vmul.f32 %v6785, %v7969
      %v7996 = vmul.f32 %v6786, %v7970
      %v7997 = vmul.f32 %v6787, %v7971
      %v7998 = vmul.f32 %v6788, %v7972
      %v7999 = vmul.f32 %v6789, %v7973
      %v8000 = vmul.f32 %v6790, %v7974
      %v8001 = vmul.f32 %v6791, %v7975
      %v8002 = vmul.f32 %v6792, %v7976
      %v8003 = vmul.f32 %v6793, %v7977
      %v8004 = vmul.f32 %v6794, %v7978
      %v8005 = vmul.f32 %v6795, %v7979
      %v8006 = vmul.f32 %v6796, %v7980
      %v8007 = vmul.f32 %v6797, %v7981
      %v8008 = vmul.f32 %v6798, %v7982
      %v8009 = vmul.f32 %v6799, %v7983
      %v8010 = vmul.f32 %v6800, %v7984
      %v8011 = vmul.f32 %v6801, %v7985
      %v8012 = vmul.f32 %v6802, %v7986
      %v8013 = vmul.f32 %v6803, %v7987
      %v8014 = vmul.f32 %v6804, %v7988
      %v8015 = vmul.f32 %v6805, %v7989
      %v8016 = vmul.f32 %v6806, %v7990
      %v8017 = vmul.f32 %v6807, %v7991
      %v8018 = vmul.f32 %v6808, %v7992
      %v8019 = vmul.f32 %v6809, %v7993
      %v8020 = vld [vmem:[%s4156] sm:$0xff]
      %v8022 = vsel %vm391, %v7994, 0
      %v8025 = vsel %vm391, %v7995, 0
      %v8028 = vsel %vm391, %v7996, 0
      %v8031 = vsel %vm391, %v7997, 0
      %v8034 = vsel %vm391, %v7998, 0
      %v8037 = vsel %vm391, %v7999, 0
      %v8040 = vsel %vm391, %v8000, 0
      %v8043 = vsel %vm391, %v8001, 0
      %v8046 = vsel %vm391, %v8002, 0
      %v8049 = vsel %vm391, %v8003, 0
      %v8052 = vsel %vm391, %v8004, 0
      %v8055 = vsel %vm391, %v8005, 0
      %v8058 = vsel %vm391, %v8006, 0
      %v8061 = vsel %vm391, %v8007, 0
      %v8064 = vsel %vm391, %v8008, 0
      %v8067 = vsel %vm391, %v8009, 0
      %v8070 = vsel %vm391, %v8010, 0
      %v8073 = vsel %vm391, %v8011, 0
      %v8076 = vsel %vm391, %v8012, 0
      %v8079 = vsel %vm391, %v8013, 0
      %v8082 = vsel %vm391, %v8014, 0
      %v8085 = vsel %vm391, %v8015, 0
      %v8088 = vsel %vm391, %v8016, 0
      %v8091 = vsel %vm391, %v8017, 0
      %v8094 = vsel %vm391, %v8018, 0
      %v8097 = vsel %vm391, %v8019, 0
      %8099 = vmatpush.msra.mxu0 0.0
      %8100 = vmatpush.msra.mxu0 0.0
      %8101 = vmatpush.msra.mxu0 0.0
      %8102 = vmatpush.msra.mxu0 0.0
      %8103 = vmatpush.msra.mxu0 0.0
      %8104 = vmatpush.msra.mxu0 0.0
      %8105 = vmatpush.msra.mxu0 0.0
      %8106 = vmatpush.msra.mxu0 0.0
      %8107 = vmatpush.msra.mxu0 0.0
      %8108 = vmatpush.msra.mxu0 0.0
      %8109 = vmatpush.msra.mxu0 0.0
      %8110 = vmatpush.msra.mxu0 0.0
      %8111 = vmatpush.msra.mxu0 0.0
      %8112 = vmatpush.msra.mxu0 0.0
      %8113 = vmatpush.msra.mxu0 0.0
      %8114 = vmatpush.msra.mxu0 %v8020
      %8115 = vmatmul.f32.gmra.mxu0 %v8022
      %v8116 = vpop.f32.mrf.mxu0
      %v8117 = vadd.f32 0.0, %v8116
      %8118 = vmatmul.f32.gmra.mxu0 %v8025
      %v8119 = vpop.f32.mrf.mxu0
      %v8120 = vadd.f32 0.0, %v8119
      %8121 = vmatmul.f32.gmra.mxu0 %v8028
      %v8122 = vpop.f32.mrf.mxu0
      %v8123 = vadd.f32 0.0, %v8122
      %8124 = vmatmul.f32.gmra.mxu0 %v8031
      %v8125 = vpop.f32.mrf.mxu0
      %v8126 = vadd.f32 0.0, %v8125
      %8127 = vmatmul.f32.gmra.mxu0 %v8034
      %v8128 = vpop.f32.mrf.mxu0
      %v8129 = vadd.f32 0.0, %v8128
      %8130 = vmatmul.f32.gmra.mxu0 %v8037
      %v8131 = vpop.f32.mrf.mxu0
      %v8132 = vadd.f32 0.0, %v8131
      %8133 = vmatmul.f32.gmra.mxu0 %v8040
      %v8134 = vpop.f32.mrf.mxu0
      %v8135 = vadd.f32 0.0, %v8134
      %8136 = vmatmul.f32.gmra.mxu0 %v8043
      %v8137 = vpop.f32.mrf.mxu0
      %v8138 = vadd.f32 0.0, %v8137
      %8139 = vmatmul.f32.gmra.mxu0 %v8046
      %v8140 = vpop.f32.mrf.mxu0
      %v8141 = vadd.f32 0.0, %v8140
      %8142 = vmatmul.f32.gmra.mxu0 %v8049
      %v8143 = vpop.f32.mrf.mxu0
      %v8144 = vadd.f32 0.0, %v8143
      %8145 = vmatmul.f32.gmra.mxu0 %v8052
      %v8146 = vpop.f32.mrf.mxu0
      %v8147 = vadd.f32 0.0, %v8146
      %8148 = vmatmul.f32.gmra.mxu0 %v8055
      %v8149 = vpop.f32.mrf.mxu0
      %v8150 = vadd.f32 0.0, %v8149
      %8151 = vmatmul.f32.gmra.mxu0 %v8058
      %v8152 = vpop.f32.mrf.mxu0
      %v8153 = vadd.f32 0.0, %v8152
      %8154 = vmatmul.f32.gmra.mxu0 %v8061
      %v8155 = vpop.f32.mrf.mxu0
      %v8156 = vadd.f32 0.0, %v8155
      %8157 = vmatmul.f32.gmra.mxu0 %v8064
      %v8158 = vpop.f32.mrf.mxu0
      %v8159 = vadd.f32 0.0, %v8158
      %8160 = vmatmul.f32.gmra.mxu0 %v8067
      %v8161 = vpop.f32.mrf.mxu0
      %v8162 = vadd.f32 0.0, %v8161
      %8163 = vmatmul.f32.gmra.mxu0 %v8070
      %v8164 = vpop.f32.mrf.mxu0
      %v8165 = vadd.f32 0.0, %v8164
      %8166 = vmatmul.f32.gmra.mxu0 %v8073
      %v8167 = vpop.f32.mrf.mxu0
      %v8168 = vadd.f32 0.0, %v8167
      %8169 = vmatmul.f32.gmra.mxu0 %v8076
      %v8170 = vpop.f32.mrf.mxu0
      %v8171 = vadd.f32 0.0, %v8170
      %8172 = vmatmul.f32.gmra.mxu0 %v8079
      %v8173 = vpop.f32.mrf.mxu0
      %v8174 = vadd.f32 0.0, %v8173
      %8175 = vmatmul.f32.gmra.mxu0 %v8082
      %v8176 = vpop.f32.mrf.mxu0
      %v8177 = vadd.f32 0.0, %v8176
      %8178 = vmatmul.f32.gmra.mxu0 %v8085
      %v8179 = vpop.f32.mrf.mxu0
      %v8180 = vadd.f32 0.0, %v8179
      %8181 = vmatmul.f32.gmra.mxu0 %v8088
      %v8182 = vpop.f32.mrf.mxu0
      %v8183 = vadd.f32 0.0, %v8182
      %8184 = vmatmul.f32.gmra.mxu0 %v8091
      %v8185 = vpop.f32.mrf.mxu0
      %v8186 = vadd.f32 0.0, %v8185
      %8187 = vmatmul.f32.gmra.mxu0 %v8094
      %v8188 = vpop.f32.mrf.mxu0
      %v8189 = vadd.f32 0.0, %v8188
      %8190 = vmatmul.f32.gmra.mxu0 %v8097
      %v8191 = vpop.f32.mrf.mxu0
      %8192 = vdwg.mxu0
      %v8193 = vadd.f32 %v7943, %v8117
      %v8194 = vadd.f32 %v7944, %v8120
      %v8195 = vadd.f32 %v7945, %v8123
      %v8196 = vadd.f32 %v7946, %v8126
      %v8197 = vadd.f32 %v7947, %v8129
      %v8198 = vadd.f32 %v7948, %v8132
      %v8199 = vadd.f32 %v7949, %v8135
      %v8200 = vadd.f32 %v7950, %v8138
      %v8201 = vadd.f32 %v7951, %v8141
      %v8202 = vadd.f32 %v7952, %v8144
      %v8203 = vadd.f32 %v7953, %v8147
      %v8204 = vadd.f32 %v7954, %v8150
      %v8205 = vadd.f32 %v7955, %v8153
      %v8206 = vadd.f32 %v7956, %v8156
      %v8207 = vadd.f32 %v7957, %v8159
      %v8208 = vadd.f32 %v7958, %v8162
      %v8209 = vadd.f32 %v7959, %v8165
      %v8210 = vadd.f32 %v7960, %v8168
      %v8211 = vadd.f32 %v7961, %v8171
      %v8212 = vadd.f32 %v7962, %v8174
      %v8213 = vadd.f32 %v7963, %v8177
      %v8214 = vadd.f32 %v7964, %v8180
      %v8215 = vadd.f32 %v7965, %v8183
      %v8216 = vadd.f32 %v7966, %v8186
      %v8217 = vadd.f32 %v7967, %v8189
      %v8218 = vld [vmem:[%s4355] sm:$0xff]
      %v8219 = vld [vmem:[%s4355 + $0x8] sm:$0xff]
      %v8220 = vld [vmem:[%s4355 + $0x10] sm:$0xff]
      %v8221 = vld [vmem:[%s4355 + $0x18] sm:$0xff]
      %v8222 = vld [vmem:[%s4355 + $0x20] sm:$0xff]
      %v8223 = vld [vmem:[%s4355 + $0x28] sm:$0xff]
      %v8224 = vld [vmem:[%s4355 + $0x30] sm:$0xff]
      %v8225 = vld [vmem:[%s4355 + $0x38] sm:$0xff]
      %v8226 = vld [vmem:[%s4355 + $0x40] sm:$0xff]
      %v8227 = vld [vmem:[%s4355 + $0x48] sm:$0xff]
      %v8228 = vld [vmem:[%s4355 + $0x50] sm:$0xff]
      %v8229 = vld [vmem:[%s4355 + $0x58] sm:$0xff]
      %v8230 = vld [vmem:[%s4355 + $0x60] sm:$0xff]
      %v8231 = vld [vmem:[%s4355 + $0x68] sm:$0xff]
      %v8232 = vld [vmem:[%s4355 + $0x70] sm:$0xff]
      %v8233 = vld [vmem:[%s4355 + $0x78] sm:$0xff]
      %v8234 = vld [vmem:[%s4355 + $0x80] sm:$0xff]
      %v8235 = vld [vmem:[%s4355 + $0x88] sm:$0xff]
      %v8236 = vld [vmem:[%s4355 + $0x90] sm:$0xff]
      %v8237 = vld [vmem:[%s4355 + $0x98] sm:$0xff]
      %v8238 = vld [vmem:[%s4355 + $0xa0] sm:$0xff]
      %v8239 = vld [vmem:[%s4355 + $0xa8] sm:$0xff]
      %v8240 = vld [vmem:[%s4355 + $0xb0] sm:$0xff]
      %v8241 = vld [vmem:[%s4355 + $0xb8] sm:$0xff]
      %v8242 = vld [vmem:[%s4355 + $0xc0] sm:$0xff]
      %v8243 = vld [vmem:[%s4355 + $0xc8] sm:$0xff]
      %v8244 = vmul.f32 %v6860, %v8218
      %v8245 = vmul.f32 %v6859, %v8219
      %v8246 = vmul.f32 %v6858, %v8220
      %v8247 = vmul.f32 %v6857, %v8221
      %v8248 = vmul.f32 %v6856, %v8222
      %v8249 = vmul.f32 %v6855, %v8223
      %v8250 = vmul.f32 %v6854, %v8224
      %v8251 = vmul.f32 %v6853, %v8225
      %v8252 = vmul.f32 %v6852, %v8226
      %v8253 = vmul.f32 %v6851, %v8227
      %v8254 = vmul.f32 %v6850, %v8228
      %v8255 = vmul.f32 %v6849, %v8229
      %v8256 = vmul.f32 %v6848, %v8230
      %v8257 = vmul.f32 %v6847, %v8231
      %v8258 = vmul.f32 %v6846, %v8232
      %v8259 = vmul.f32 %v6845, %v8233
      %v8260 = vmul.f32 %v6844, %v8234
      %v8261 = vmul.f32 %v6843, %v8235
      %v8262 = vmul.f32 %v6842, %v8236
      %v8263 = vmul.f32 %v6841, %v8237
      %v8264 = vmul.f32 %v6840, %v8238
      %v8265 = vmul.f32 %v6839, %v8239
      %v8266 = vmul.f32 %v6838, %v8240
      %v8267 = vmul.f32 %v6837, %v8241
      %v8268 = vmul.f32 %v6836, %v8242
      %v8269 = vmul.f32 %v6861, %v8243
      %v8270 = vld [vmem:[%s4408] sm:$0xff]
      %v8272 = vsel %vm391, %v8244, 0
      %v8275 = vsel %vm391, %v8245, 0
      %v8278 = vsel %vm391, %v8246, 0
      %v8281 = vsel %vm391, %v8247, 0
      %v8284 = vsel %vm391, %v8248, 0
      %v8287 = vsel %vm391, %v8249, 0
      %v8290 = vsel %vm391, %v8250, 0
      %v8293 = vsel %vm391, %v8251, 0
      %v8296 = vsel %vm391, %v8252, 0
      %v8299 = vsel %vm391, %v8253, 0
      %v8302 = vsel %vm391, %v8254, 0
      %v8305 = vsel %vm391, %v8255, 0
      %v8308 = vsel %vm391, %v8256, 0
      %v8311 = vsel %vm391, %v8257, 0
      %v8314 = vsel %vm391, %v8258, 0
      %v8317 = vsel %vm391, %v8259, 0
      %v8320 = vsel %vm391, %v8260, 0
      %v8323 = vsel %vm391, %v8261, 0
      %v8326 = vsel %vm391, %v8262, 0
      %v8329 = vsel %vm391, %v8263, 0
      %v8332 = vsel %vm391, %v8264, 0
      %v8335 = vsel %vm391, %v8265, 0
      %v8338 = vsel %vm391, %v8266, 0
      %v8341 = vsel %vm391, %v8267, 0
      %v8344 = vsel %vm391, %v8268, 0
      %v8347 = vsel %vm391, %v8269, 0
      %8349 = vmatpush.msra.mxu0 0.0
      %8350 = vmatpush.msra.mxu0 0.0
      %8351 = vmatpush.msra.mxu0 0.0
      %8352 = vmatpush.msra.mxu0 0.0
      %8353 = vmatpush.msra.mxu0 0.0
      %8354 = vmatpush.msra.mxu0 0.0
      %8355 = vmatpush.msra.mxu0 0.0
      %8356 = vmatpush.msra.mxu0 0.0
      %8357 = vmatpush.msra.mxu0 0.0
      %8358 = vmatpush.msra.mxu0 0.0
      %8359 = vmatpush.msra.mxu0 0.0
      %8360 = vmatpush.msra.mxu0 0.0
      %8361 = vmatpush.msra.mxu0 0.0
      %8362 = vmatpush.msra.mxu0 0.0
      %8363 = vmatpush.msra.mxu0 0.0
      %8364 = vmatpush.msra.mxu0 %v8270
      %8365 = vmatmul.f32.gmra.mxu0 %v8272
      %v8366 = vpop.f32.mrf.mxu0
      %v8367 = vadd.f32 0.0, %v8366
      %8368 = vmatmul.f32.gmra.mxu0 %v8275
      %v8369 = vpop.f32.mrf.mxu0
      %v8370 = vadd.f32 0.0, %v8369
      %8371 = vmatmul.f32.gmra.mxu0 %v8278
      %v8372 = vpop.f32.mrf.mxu0
      %v8373 = vadd.f32 0.0, %v8372
      %8374 = vmatmul.f32.gmra.mxu0 %v8281
      %v8375 = vpop.f32.mrf.mxu0
      %v8376 = vadd.f32 0.0, %v8375
      %8377 = vmatmul.f32.gmra.mxu0 %v8284
      %v8378 = vpop.f32.mrf.mxu0
      %v8379 = vadd.f32 0.0, %v8378
      %8380 = vmatmul.f32.gmra.mxu0 %v8287
      %v8381 = vpop.f32.mrf.mxu0
      %v8382 = vadd.f32 0.0, %v8381
      %8383 = vmatmul.f32.gmra.mxu0 %v8290
      %v8384 = vpop.f32.mrf.mxu0
      %v8385 = vadd.f32 0.0, %v8384
      %8386 = vmatmul.f32.gmra.mxu0 %v8293
      %v8387 = vpop.f32.mrf.mxu0
      %v8388 = vadd.f32 0.0, %v8387
      %8389 = vmatmul.f32.gmra.mxu0 %v8296
      %v8390 = vpop.f32.mrf.mxu0
      %v8391 = vadd.f32 0.0, %v8390
      %8392 = vmatmul.f32.gmra.mxu0 %v8299
      %v8393 = vpop.f32.mrf.mxu0
      %v8394 = vadd.f32 0.0, %v8393
      %8395 = vmatmul.f32.gmra.mxu0 %v8302
      %v8396 = vpop.f32.mrf.mxu0
      %v8397 = vadd.f32 0.0, %v8396
      %8398 = vmatmul.f32.gmra.mxu0 %v8305
      %v8399 = vpop.f32.mrf.mxu0
      %v8400 = vadd.f32 0.0, %v8399
      %8401 = vmatmul.f32.gmra.mxu0 %v8308
      %v8402 = vpop.f32.mrf.mxu0
      %v8403 = vadd.f32 0.0, %v8402
      %8404 = vmatmul.f32.gmra.mxu0 %v8311
      %v8405 = vpop.f32.mrf.mxu0
      %v8406 = vadd.f32 0.0, %v8405
      %8407 = vmatmul.f32.gmra.mxu0 %v8314
      %v8408 = vpop.f32.mrf.mxu0
      %v8409 = vadd.f32 0.0, %v8408
      %8410 = vmatmul.f32.gmra.mxu0 %v8317
      %v8411 = vpop.f32.mrf.mxu0
      %v8412 = vadd.f32 0.0, %v8411
      %8413 = vmatmul.f32.gmra.mxu0 %v8320
      %v8414 = vpop.f32.mrf.mxu0
      %v8415 = vadd.f32 0.0, %v8414
      %8416 = vmatmul.f32.gmra.mxu0 %v8323
      %v8417 = vpop.f32.mrf.mxu0
      %v8418 = vadd.f32 0.0, %v8417
      %8419 = vmatmul.f32.gmra.mxu0 %v8326
      %v8420 = vpop.f32.mrf.mxu0
      %v8421 = vadd.f32 0.0, %v8420
      %8422 = vmatmul.f32.gmra.mxu0 %v8329
      %v8423 = vpop.f32.mrf.mxu0
      %v8424 = vadd.f32 0.0, %v8423
      %8425 = vmatmul.f32.gmra.mxu0 %v8332
      %v8426 = vpop.f32.mrf.mxu0
      %v8427 = vadd.f32 0.0, %v8426
      %8428 = vmatmul.f32.gmra.mxu0 %v8335
      %v8429 = vpop.f32.mrf.mxu0
      %v8430 = vadd.f32 0.0, %v8429
      %8431 = vmatmul.f32.gmra.mxu0 %v8338
      %v8432 = vpop.f32.mrf.mxu0
      %v8433 = vadd.f32 0.0, %v8432
      %8434 = vmatmul.f32.gmra.mxu0 %v8341
      %v8435 = vpop.f32.mrf.mxu0
      %v8436 = vadd.f32 0.0, %v8435
      %8437 = vmatmul.f32.gmra.mxu0 %v8344
      %v8438 = vpop.f32.mrf.mxu0
      %v8439 = vadd.f32 0.0, %v8438
      %8440 = vmatmul.f32.gmra.mxu0 %v8347
      %v8441 = vpop.f32.mrf.mxu0
      %8442 = vdwg.mxu0
      %v8443 = vadd.f32 %v8193, %v8367
      %v8444 = vadd.f32 %v8194, %v8370
      %v8445 = vadd.f32 %v8195, %v8373
      %v8446 = vadd.f32 %v8196, %v8376
      %v8447 = vadd.f32 %v8197, %v8379
      %v8448 = vadd.f32 %v8198, %v8382
      %v8449 = vadd.f32 %v8199, %v8385
      %v8450 = vadd.f32 %v8200, %v8388
      %v8451 = vadd.f32 %v8201, %v8391
      %v8452 = vadd.f32 %v8202, %v8394
      %v8453 = vadd.f32 %v8203, %v8397
      %v8454 = vadd.f32 %v8204, %v8400
      %v8455 = vadd.f32 %v8205, %v8403
      %v8456 = vadd.f32 %v8206, %v8406
      %v8457 = vadd.f32 %v8207, %v8409
      %v8458 = vadd.f32 %v8208, %v8412
      %v8459 = vadd.f32 %v8209, %v8415
      %v8460 = vadd.f32 %v8210, %v8418
      %v8461 = vadd.f32 %v8211, %v8421
      %v8462 = vadd.f32 %v8212, %v8424
      %v8463 = vadd.f32 %v8213, %v8427
      %v8464 = vadd.f32 %v8214, %v8430
      %v8465 = vadd.f32 %v8215, %v8433
      %v8466 = vadd.f32 %v8216, %v8436
      %v8467 = vadd.f32 %v8217, %v8439
      %v8468 = vrot.slane %v6784, 5
      %v8469 = vrot.slane %v6785, 5
      %v8470 = vrot.slane %v6786, 5
      %v8471 = vrot.slane %v6787, 5
      %v8472 = vrot.slane %v6788, 5
      %v8473 = vrot.slane %v6789, 5
      %v8474 = vrot.slane %v6790, 5
      %v8475 = vrot.slane %v6791, 5
      %v8476 = vrot.slane %v6792, 5
      %v8477 = vrot.slane %v6793, 5
      %v8478 = vrot.slane %v6794, 5
      %v8479 = vrot.slane %v6795, 5
      %v8480 = vrot.slane %v6796, 5
      %v8481 = vrot.slane %v6797, 5
      %v8482 = vrot.slane %v6798, 5
      %v8483 = vrot.slane %v6799, 5
      %v8484 = vrot.slane %v6800, 5
      %v8485 = vrot.slane %v6801, 5
      %v8486 = vrot.slane %v6802, 5
      %v8487 = vrot.slane %v6803, 5
      %v8488 = vrot.slane %v6804, 5
      %v8489 = vrot.slane %v6805, 5
      %v8490 = vrot.slane %v6806, 5
      %v8491 = vrot.slane %v6807, 5
      %v8492 = vrot.slane %v6808, 5
      %v8493 = vrot.slane %v6809, 5
      %v8494 = vsel %vm4633, %v8492, %v8493
      %v8495 = vsel %vm4633, %v8491, %v8492
      %v8496 = vsel %vm4633, %v8490, %v8491
      %v8497 = vsel %vm4633, %v8489, %v8490
      %v8498 = vsel %vm4633, %v8488, %v8489
      %v8499 = vsel %vm4633, %v8487, %v8488
      %v8500 = vsel %vm4633, %v8486, %v8487
      %v8501 = vsel %vm4633, %v8485, %v8486
      %v8502 = vsel %vm4633, %v8484, %v8485
      %v8503 = vsel %vm4633, %v8483, %v8484
      %v8504 = vsel %vm4633, %v8482, %v8483
      %v8505 = vsel %vm4633, %v8481, %v8482
      %v8506 = vsel %vm4633, %v8480, %v8481
      %v8507 = vsel %vm4633, %v8479, %v8480
      %v8508 = vsel %vm4633, %v8478, %v8479
      %v8509 = vsel %vm4633, %v8477, %v8478
      %v8510 = vsel %vm4633, %v8476, %v8477
      %v8511 = vsel %vm4633, %v8475, %v8476
      %v8512 = vsel %vm4633, %v8474, %v8475
      %v8513 = vsel %vm4633, %v8473, %v8474
      %v8514 = vsel %vm4633, %v8472, %v8473
      %v8515 = vsel %vm4633, %v8471, %v8472
      %v8516 = vsel %vm4633, %v8470, %v8471
      %v8517 = vsel %vm4633, %v8469, %v8470
      %v8518 = vsel %vm4633, %v8468, %v8469
      %v8519 = vsel %vm4633, %v8493, %v8468
      %v8520 = vld [vmem:[%s4660] sm:$0xff]
      %v8521 = vld [vmem:[%s4660 + $0x8] sm:$0xff]
      %v8522 = vld [vmem:[%s4660 + $0x10] sm:$0xff]
      %v8523 = vld [vmem:[%s4660 + $0x18] sm:$0xff]
      %v8524 = vld [vmem:[%s4660 + $0x20] sm:$0xff]
      %v8525 = vld [vmem:[%s4660 + $0x28] sm:$0xff]
      %v8526 = vld [vmem:[%s4660 + $0x30] sm:$0xff]
      %v8527 = vld [vmem:[%s4660 + $0x38] sm:$0xff]
      %v8528 = vld [vmem:[%s4660 + $0x40] sm:$0xff]
      %v8529 = vld [vmem:[%s4660 + $0x48] sm:$0xff]
      %v8530 = vld [vmem:[%s4660 + $0x50] sm:$0xff]
      %v8531 = vld [vmem:[%s4660 + $0x58] sm:$0xff]
      %v8532 = vld [vmem:[%s4660 + $0x60] sm:$0xff]
      %v8533 = vld [vmem:[%s4660 + $0x68] sm:$0xff]
      %v8534 = vld [vmem:[%s4660 + $0x70] sm:$0xff]
      %v8535 = vld [vmem:[%s4660 + $0x78] sm:$0xff]
      %v8536 = vld [vmem:[%s4660 + $0x80] sm:$0xff]
      %v8537 = vld [vmem:[%s4660 + $0x88] sm:$0xff]
      %v8538 = vld [vmem:[%s4660 + $0x90] sm:$0xff]
      %v8539 = vld [vmem:[%s4660 + $0x98] sm:$0xff]
      %v8540 = vld [vmem:[%s4660 + $0xa0] sm:$0xff]
      %v8541 = vld [vmem:[%s4660 + $0xa8] sm:$0xff]
      %v8542 = vld [vmem:[%s4660 + $0xb0] sm:$0xff]
      %v8543 = vld [vmem:[%s4660 + $0xb8] sm:$0xff]
      %v8544 = vld [vmem:[%s4660 + $0xc0] sm:$0xff]
      %v8545 = vld [vmem:[%s4660 + $0xc8] sm:$0xff]
      %v8546 = vmul.f32 %v8517, %v8520
      %v8547 = vmul.f32 %v8516, %v8521
      %v8548 = vmul.f32 %v8515, %v8522
      %v8549 = vmul.f32 %v8514, %v8523
      %v8550 = vmul.f32 %v8513, %v8524
      %v8551 = vmul.f32 %v8512, %v8525
      %v8552 = vmul.f32 %v8511, %v8526
      %v8553 = vmul.f32 %v8510, %v8527
      %v8554 = vmul.f32 %v8509, %v8528
      %v8555 = vmul.f32 %v8508, %v8529
      %v8556 = vmul.f32 %v8507, %v8530
      %v8557 = vmul.f32 %v8506, %v8531
      %v8558 = vmul.f32 %v8505, %v8532
      %v8559 = vmul.f32 %v8504, %v8533
      %v8560 = vmul.f32 %v8503, %v8534
      %v8561 = vmul.f32 %v8502, %v8535
      %v8562 = vmul.f32 %v8501, %v8536
      %v8563 = vmul.f32 %v8500, %v8537
      %v8564 = vmul.f32 %v8499, %v8538
      %v8565 = vmul.f32 %v8498, %v8539
      %v8566 = vmul.f32 %v8497, %v8540
      %v8567 = vmul.f32 %v8496, %v8541
      %v8568 = vmul.f32 %v8495, %v8542
      %v8569 = vmul.f32 %v8494, %v8543
      %v8570 = vmul.f32 %v8519, %v8544
      %v8571 = vmul.f32 %v8518, %v8545
      %v8572 = vld [vmem:[%s4713] sm:$0xff]
      %v8574 = vsel %vm391, %v8546, 0
      %v8577 = vsel %vm391, %v8547, 0
      %v8580 = vsel %vm391, %v8548, 0
      %v8583 = vsel %vm391, %v8549, 0
      %v8586 = vsel %vm391, %v8550, 0
      %v8589 = vsel %vm391, %v8551, 0
      %v8592 = vsel %vm391, %v8552, 0
      %v8595 = vsel %vm391, %v8553, 0
      %v8598 = vsel %vm391, %v8554, 0
      %v8601 = vsel %vm391, %v8555, 0
      %v8604 = vsel %vm391, %v8556, 0
      %v8607 = vsel %vm391, %v8557, 0
      %v8610 = vsel %vm391, %v8558, 0
      %v8613 = vsel %vm391, %v8559, 0
      %v8616 = vsel %vm391, %v8560, 0
      %v8619 = vsel %vm391, %v8561, 0
      %v8622 = vsel %vm391, %v8562, 0
      %v8625 = vsel %vm391, %v8563, 0
      %v8628 = vsel %vm391, %v8564, 0
      %v8631 = vsel %vm391, %v8565, 0
      %v8634 = vsel %vm391, %v8566, 0
      %v8637 = vsel %vm391, %v8567, 0
      %v8640 = vsel %vm391, %v8568, 0
      %v8643 = vsel %vm391, %v8569, 0
      %v8646 = vsel %vm391, %v8570, 0
      %v8649 = vsel %vm391, %v8571, 0
      %8651 = vmatpush.msra.mxu0 0.0
      %8652 = vmatpush.msra.mxu0 0.0
      %8653 = vmatpush.msra.mxu0 0.0
      %8654 = vmatpush.msra.mxu0 0.0
      %8655 = vmatpush.msra.mxu0 0.0
      %8656 = vmatpush.msra.mxu0 0.0
      %8657 = vmatpush.msra.mxu0 0.0
      %8658 = vmatpush.msra.mxu0 0.0
      %8659 = vmatpush.msra.mxu0 0.0
      %8660 = vmatpush.msra.mxu0 0.0
      %8661 = vmatpush.msra.mxu0 0.0
      %8662 = vmatpush.msra.mxu0 0.0
      %8663 = vmatpush.msra.mxu0 0.0
      %8664 = vmatpush.msra.mxu0 0.0
      %8665 = vmatpush.msra.mxu0 0.0
      %8666 = vmatpush.msra.mxu0 %v8572
      %8667 = vmatmul.f32.gmra.mxu0 %v8574
      %v8668 = vpop.f32.mrf.mxu0
      %v8669 = vadd.f32 0.0, %v8668
      %8670 = vmatmul.f32.gmra.mxu0 %v8577
      %v8671 = vpop.f32.mrf.mxu0
      %v8672 = vadd.f32 0.0, %v8671
      %8673 = vmatmul.f32.gmra.mxu0 %v8580
      %v8674 = vpop.f32.mrf.mxu0
      %v8675 = vadd.f32 0.0, %v8674
      %8676 = vmatmul.f32.gmra.mxu0 %v8583
      %v8677 = vpop.f32.mrf.mxu0
      %v8678 = vadd.f32 0.0, %v8677
      %8679 = vmatmul.f32.gmra.mxu0 %v8586
      %v8680 = vpop.f32.mrf.mxu0
      %v8681 = vadd.f32 0.0, %v8680
      %8682 = vmatmul.f32.gmra.mxu0 %v8589
      %v8683 = vpop.f32.mrf.mxu0
      %v8684 = vadd.f32 0.0, %v8683
      %8685 = vmatmul.f32.gmra.mxu0 %v8592
      %v8686 = vpop.f32.mrf.mxu0
      %v8687 = vadd.f32 0.0, %v8686
      %8688 = vmatmul.f32.gmra.mxu0 %v8595
      %v8689 = vpop.f32.mrf.mxu0
      %v8690 = vadd.f32 0.0, %v8689
      %8691 = vmatmul.f32.gmra.mxu0 %v8598
      %v8692 = vpop.f32.mrf.mxu0
      %v8693 = vadd.f32 0.0, %v8692
      %8694 = vmatmul.f32.gmra.mxu0 %v8601
      %v8695 = vpop.f32.mrf.mxu0
      %v8696 = vadd.f32 0.0, %v8695
      %8697 = vmatmul.f32.gmra.mxu0 %v8604
      %v8698 = vpop.f32.mrf.mxu0
      %v8699 = vadd.f32 0.0, %v8698
      %8700 = vmatmul.f32.gmra.mxu0 %v8607
      %v8701 = vpop.f32.mrf.mxu0
      %v8702 = vadd.f32 0.0, %v8701
      %8703 = vmatmul.f32.gmra.mxu0 %v8610
      %v8704 = vpop.f32.mrf.mxu0
      %v8705 = vadd.f32 0.0, %v8704
      %8706 = vmatmul.f32.gmra.mxu0 %v8613
      %v8707 = vpop.f32.mrf.mxu0
      %v8708 = vadd.f32 0.0, %v8707
      %8709 = vmatmul.f32.gmra.mxu0 %v8616
      %v8710 = vpop.f32.mrf.mxu0
      %v8711 = vadd.f32 0.0, %v8710
      %8712 = vmatmul.f32.gmra.mxu0 %v8619
      %v8713 = vpop.f32.mrf.mxu0
      %v8714 = vadd.f32 0.0, %v8713
      %8715 = vmatmul.f32.gmra.mxu0 %v8622
      %v8716 = vpop.f32.mrf.mxu0
      %v8717 = vadd.f32 0.0, %v8716
      %8718 = vmatmul.f32.gmra.mxu0 %v8625
      %v8719 = vpop.f32.mrf.mxu0
      %v8720 = vadd.f32 0.0, %v8719
      %8721 = vmatmul.f32.gmra.mxu0 %v8628
      %v8722 = vpop.f32.mrf.mxu0
      %v8723 = vadd.f32 0.0, %v8722
      %8724 = vmatmul.f32.gmra.mxu0 %v8631
      %v8725 = vpop.f32.mrf.mxu0
      %v8726 = vadd.f32 0.0, %v8725
      %8727 = vmatmul.f32.gmra.mxu0 %v8634
      %v8728 = vpop.f32.mrf.mxu0
      %v8729 = vadd.f32 0.0, %v8728
      %8730 = vmatmul.f32.gmra.mxu0 %v8637
      %v8731 = vpop.f32.mrf.mxu0
      %v8732 = vadd.f32 0.0, %v8731
      %8733 = vmatmul.f32.gmra.mxu0 %v8640
      %v8734 = vpop.f32.mrf.mxu0
      %v8735 = vadd.f32 0.0, %v8734
      %8736 = vmatmul.f32.gmra.mxu0 %v8643
      %v8737 = vpop.f32.mrf.mxu0
      %v8738 = vadd.f32 0.0, %v8737
      %8739 = vmatmul.f32.gmra.mxu0 %v8646
      %v8740 = vpop.f32.mrf.mxu0
      %v8741 = vadd.f32 0.0, %v8740
      %8742 = vmatmul.f32.gmra.mxu0 %v8649
      %v8743 = vpop.f32.mrf.mxu0
      %8744 = vdwg.mxu0
      %v8745 = vadd.f32 %v8443, %v8669
      %v8746 = vadd.f32 %v8444, %v8672
      %v8747 = vadd.f32 %v8445, %v8675
      %v8748 = vadd.f32 %v8446, %v8678
      %v8749 = vadd.f32 %v8447, %v8681
      %v8750 = vadd.f32 %v8448, %v8684
      %v8751 = vadd.f32 %v8449, %v8687
      %v8752 = vadd.f32 %v8450, %v8690
      %v8753 = vadd.f32 %v8451, %v8693
      %v8754 = vadd.f32 %v8452, %v8696
      %v8755 = vadd.f32 %v8453, %v8699
      %v8756 = vadd.f32 %v8454, %v8702
      %v8757 = vadd.f32 %v8455, %v8705
      %v8758 = vadd.f32 %v8456, %v8708
      %v8759 = vadd.f32 %v8457, %v8711
      %v8760 = vadd.f32 %v8458, %v8714
      %v8761 = vadd.f32 %v8459, %v8717
      %v8762 = vadd.f32 %v8460, %v8720
      %v8763 = vadd.f32 %v8461, %v8723
      %v8764 = vadd.f32 %v8462, %v8726
      %v8765 = vadd.f32 %v8463, %v8729
      %v8766 = vadd.f32 %v8464, %v8732
      %v8767 = vadd.f32 %v8465, %v8735
      %v8768 = vadd.f32 %v8466, %v8738
      %v8769 = vadd.f32 %v8467, %v8741
      %v8770 = vrot.slane %v6784, 6
      %v8771 = vrot.slane %v6785, 6
      %v8772 = vrot.slane %v6786, 6
      %v8773 = vrot.slane %v6787, 6
      %v8774 = vrot.slane %v6788, 6
      %v8775 = vrot.slane %v6789, 6
      %v8776 = vrot.slane %v6790, 6
      %v8777 = vrot.slane %v6791, 6
      %v8778 = vrot.slane %v6792, 6
      %v8779 = vrot.slane %v6793, 6
      %v8780 = vrot.slane %v6794, 6
      %v8781 = vrot.slane %v6795, 6
      %v8782 = vrot.slane %v6796, 6
      %v8783 = vrot.slane %v6797, 6
      %v8784 = vrot.slane %v6798, 6
      %v8785 = vrot.slane %v6799, 6
      %v8786 = vrot.slane %v6800, 6
      %v8787 = vrot.slane %v6801, 6
      %v8788 = vrot.slane %v6802, 6
      %v8789 = vrot.slane %v6803, 6
      %v8790 = vrot.slane %v6804, 6
      %v8791 = vrot.slane %v6805, 6
      %v8792 = vrot.slane %v6806, 6
      %v8793 = vrot.slane %v6807, 6
      %v8794 = vrot.slane %v6808, 6
      %v8795 = vrot.slane %v6809, 6
      %v8796 = vsel %vm4938, %v8794, %v8795
      %v8797 = vsel %vm4938, %v8793, %v8794
      %v8798 = vsel %vm4938, %v8792, %v8793
      %v8799 = vsel %vm4938, %v8791, %v8792
      %v8800 = vsel %vm4938, %v8790, %v8791
      %v8801 = vsel %vm4938, %v8789, %v8790
      %v8802 = vsel %vm4938, %v8788, %v8789
      %v8803 = vsel %vm4938, %v8787, %v8788
      %v8804 = vsel %vm4938, %v8786, %v8787
      %v8805 = vsel %vm4938, %v8785, %v8786
      %v8806 = vsel %vm4938, %v8784, %v8785
      %v8807 = vsel %vm4938, %v8783, %v8784
      %v8808 = vsel %vm4938, %v8782, %v8783
      %v8809 = vsel %vm4938, %v8781, %v8782
      %v8810 = vsel %vm4938, %v8780, %v8781
      %v8811 = vsel %vm4938, %v8779, %v8780
      %v8812 = vsel %vm4938, %v8778, %v8779
      %v8813 = vsel %vm4938, %v8777, %v8778
      %v8814 = vsel %vm4938, %v8776, %v8777
      %v8815 = vsel %vm4938, %v8775, %v8776
      %v8816 = vsel %vm4938, %v8774, %v8775
      %v8817 = vsel %vm4938, %v8773, %v8774
      %v8818 = vsel %vm4938, %v8772, %v8773
      %v8819 = vsel %vm4938, %v8771, %v8772
      %v8820 = vsel %vm4938, %v8770, %v8771
      %v8821 = vsel %vm4938, %v8795, %v8770
      %v8822 = vld [vmem:[%s4965] sm:$0xff]
      %v8823 = vld [vmem:[%s4965 + $0x8] sm:$0xff]
      %v8824 = vld [vmem:[%s4965 + $0x10] sm:$0xff]
      %v8825 = vld [vmem:[%s4965 + $0x18] sm:$0xff]
      %v8826 = vld [vmem:[%s4965 + $0x20] sm:$0xff]
      %v8827 = vld [vmem:[%s4965 + $0x28] sm:$0xff]
      %v8828 = vld [vmem:[%s4965 + $0x30] sm:$0xff]
      %v8829 = vld [vmem:[%s4965 + $0x38] sm:$0xff]
      %v8830 = vld [vmem:[%s4965 + $0x40] sm:$0xff]
      %v8831 = vld [vmem:[%s4965 + $0x48] sm:$0xff]
      %v8832 = vld [vmem:[%s4965 + $0x50] sm:$0xff]
      %v8833 = vld [vmem:[%s4965 + $0x58] sm:$0xff]
      %v8834 = vld [vmem:[%s4965 + $0x60] sm:$0xff]
      %v8835 = vld [vmem:[%s4965 + $0x68] sm:$0xff]
      %v8836 = vld [vmem:[%s4965 + $0x70] sm:$0xff]
      %v8837 = vld [vmem:[%s4965 + $0x78] sm:$0xff]
      %v8838 = vld [vmem:[%s4965 + $0x80] sm:$0xff]
      %v8839 = vld [vmem:[%s4965 + $0x88] sm:$0xff]
      %v8840 = vld [vmem:[%s4965 + $0x90] sm:$0xff]
      %v8841 = vld [vmem:[%s4965 + $0x98] sm:$0xff]
      %v8842 = vld [vmem:[%s4965 + $0xa0] sm:$0xff]
      %v8843 = vld [vmem:[%s4965 + $0xa8] sm:$0xff]
      %v8844 = vld [vmem:[%s4965 + $0xb0] sm:$0xff]
      %v8845 = vld [vmem:[%s4965 + $0xb8] sm:$0xff]
      %v8846 = vld [vmem:[%s4965 + $0xc0] sm:$0xff]
      %v8847 = vld [vmem:[%s4965 + $0xc8] sm:$0xff]
      %v8848 = vmul.f32 %v8819, %v8822
      %v8849 = vmul.f32 %v8818, %v8823
      %v8850 = vmul.f32 %v8817, %v8824
      %v8851 = vmul.f32 %v8816, %v8825
      %v8852 = vmul.f32 %v8815, %v8826
      %v8853 = vmul.f32 %v8814, %v8827
      %v8854 = vmul.f32 %v8813, %v8828
      %v8855 = vmul.f32 %v8812, %v8829
      %v8856 = vmul.f32 %v8811, %v8830
      %v8857 = vmul.f32 %v8810, %v8831
      %v8858 = vmul.f32 %v8809, %v8832
      %v8859 = vmul.f32 %v8808, %v8833
      %v8860 = vmul.f32 %v8807, %v8834
      %v8861 = vmul.f32 %v8806, %v8835
      %v8862 = vmul.f32 %v8805, %v8836
      %v8863 = vmul.f32 %v8804, %v8837
      %v8864 = vmul.f32 %v8803, %v8838
      %v8865 = vmul.f32 %v8802, %v8839
      %v8866 = vmul.f32 %v8801, %v8840
      %v8867 = vmul.f32 %v8800, %v8841
      %v8868 = vmul.f32 %v8799, %v8842
      %v8869 = vmul.f32 %v8798, %v8843
      %v8870 = vmul.f32 %v8797, %v8844
      %v8871 = vmul.f32 %v8796, %v8845
      %v8872 = vmul.f32 %v8821, %v8846
      %v8873 = vmul.f32 %v8820, %v8847
      %v8874 = vld [vmem:[%s5018] sm:$0xff]
      %v8876 = vsel %vm391, %v8848, 0
      %v8879 = vsel %vm391, %v8849, 0
      %v8882 = vsel %vm391, %v8850, 0
      %v8885 = vsel %vm391, %v8851, 0
      %v8888 = vsel %vm391, %v8852, 0
      %v8891 = vsel %vm391, %v8853, 0
      %v8894 = vsel %vm391, %v8854, 0
      %v8897 = vsel %vm391, %v8855, 0
      %v8900 = vsel %vm391, %v8856, 0
      %v8903 = vsel %vm391, %v8857, 0
      %v8906 = vsel %vm391, %v8858, 0
      %v8909 = vsel %vm391, %v8859, 0
      %v8912 = vsel %vm391, %v8860, 0
      %v8915 = vsel %vm391, %v8861, 0
      %v8918 = vsel %vm391, %v8862, 0
      %v8921 = vsel %vm391, %v8863, 0
      %v8924 = vsel %vm391, %v8864, 0
      %v8927 = vsel %vm391, %v8865, 0
      %v8930 = vsel %vm391, %v8866, 0
      %v8933 = vsel %vm391, %v8867, 0
      %v8936 = vsel %vm391, %v8868, 0
      %v8939 = vsel %vm391, %v8869, 0
      %v8942 = vsel %vm391, %v8870, 0
      %v8945 = vsel %vm391, %v8871, 0
      %v8948 = vsel %vm391, %v8872, 0
      %v8951 = vsel %vm391, %v8873, 0
      %8953 = vmatpush.msra.mxu0 0.0
      %8954 = vmatpush.msra.mxu0 0.0
      %8955 = vmatpush.msra.mxu0 0.0
      %8956 = vmatpush.msra.mxu0 0.0
      %8957 = vmatpush.msra.mxu0 0.0
      %8958 = vmatpush.msra.mxu0 0.0
      %8959 = vmatpush.msra.mxu0 0.0
      %8960 = vmatpush.msra.mxu0 0.0
      %8961 = vmatpush.msra.mxu0 0.0
      %8962 = vmatpush.msra.mxu0 0.0
      %8963 = vmatpush.msra.mxu0 0.0
      %8964 = vmatpush.msra.mxu0 0.0
      %8965 = vmatpush.msra.mxu0 0.0
      %8966 = vmatpush.msra.mxu0 0.0
      %8967 = vmatpush.msra.mxu0 0.0
      %8968 = vmatpush.msra.mxu0 %v8874
      %8969 = vmatmul.f32.gmra.mxu0 %v8876
      %v8970 = vpop.f32.mrf.mxu0
      %v8971 = vadd.f32 0.0, %v8970
      %8972 = vmatmul.f32.gmra.mxu0 %v8879
      %v8973 = vpop.f32.mrf.mxu0
      %v8974 = vadd.f32 0.0, %v8973
      %8975 = vmatmul.f32.gmra.mxu0 %v8882
      %v8976 = vpop.f32.mrf.mxu0
      %v8977 = vadd.f32 0.0, %v8976
      %8978 = vmatmul.f32.gmra.mxu0 %v8885
      %v8979 = vpop.f32.mrf.mxu0
      %v8980 = vadd.f32 0.0, %v8979
      %8981 = vmatmul.f32.gmra.mxu0 %v8888
      %v8982 = vpop.f32.mrf.mxu0
      %v8983 = vadd.f32 0.0, %v8982
      %8984 = vmatmul.f32.gmra.mxu0 %v8891
      %v8985 = vpop.f32.mrf.mxu0
      %v8986 = vadd.f32 0.0, %v8985
      %8987 = vmatmul.f32.gmra.mxu0 %v8894
      %v8988 = vpop.f32.mrf.mxu0
      %v8989 = vadd.f32 0.0, %v8988
      %8990 = vmatmul.f32.gmra.mxu0 %v8897
      %v8991 = vpop.f32.mrf.mxu0
      %v8992 = vadd.f32 0.0, %v8991
      %8993 = vmatmul.f32.gmra.mxu0 %v8900
      %v8994 = vpop.f32.mrf.mxu0
      %v8995 = vadd.f32 0.0, %v8994
      %8996 = vmatmul.f32.gmra.mxu0 %v8903
      %v8997 = vpop.f32.mrf.mxu0
      %v8998 = vadd.f32 0.0, %v8997
      %8999 = vmatmul.f32.gmra.mxu0 %v8906
      %v9000 = vpop.f32.mrf.mxu0
      %v9001 = vadd.f32 0.0, %v9000
      %9002 = vmatmul.f32.gmra.mxu0 %v8909
      %v9003 = vpop.f32.mrf.mxu0
      %v9004 = vadd.f32 0.0, %v9003
      %9005 = vmatmul.f32.gmra.mxu0 %v8912
      %v9006 = vpop.f32.mrf.mxu0
      %v9007 = vadd.f32 0.0, %v9006
      %9008 = vmatmul.f32.gmra.mxu0 %v8915
      %v9009 = vpop.f32.mrf.mxu0
      %v9010 = vadd.f32 0.0, %v9009
      %9011 = vmatmul.f32.gmra.mxu0 %v8918
      %v9012 = vpop.f32.mrf.mxu0
      %v9013 = vadd.f32 0.0, %v9012
      %9014 = vmatmul.f32.gmra.mxu0 %v8921
      %v9015 = vpop.f32.mrf.mxu0
      %v9016 = vadd.f32 0.0, %v9015
      %9017 = vmatmul.f32.gmra.mxu0 %v8924
      %v9018 = vpop.f32.mrf.mxu0
      %v9019 = vadd.f32 0.0, %v9018
      %9020 = vmatmul.f32.gmra.mxu0 %v8927
      %v9021 = vpop.f32.mrf.mxu0
      %v9022 = vadd.f32 0.0, %v9021
      %9023 = vmatmul.f32.gmra.mxu0 %v8930
      %v9024 = vpop.f32.mrf.mxu0
      %v9025 = vadd.f32 0.0, %v9024
      %9026 = vmatmul.f32.gmra.mxu0 %v8933
      %v9027 = vpop.f32.mrf.mxu0
      %v9028 = vadd.f32 0.0, %v9027
      %9029 = vmatmul.f32.gmra.mxu0 %v8936
      %v9030 = vpop.f32.mrf.mxu0
      %v9031 = vadd.f32 0.0, %v9030
      %9032 = vmatmul.f32.gmra.mxu0 %v8939
      %v9033 = vpop.f32.mrf.mxu0
      %v9034 = vadd.f32 0.0, %v9033
      %9035 = vmatmul.f32.gmra.mxu0 %v8942
      %v9036 = vpop.f32.mrf.mxu0
      %v9037 = vadd.f32 0.0, %v9036
      %9038 = vmatmul.f32.gmra.mxu0 %v8945
      %v9039 = vpop.f32.mrf.mxu0
      %v9040 = vadd.f32 0.0, %v9039
      %9041 = vmatmul.f32.gmra.mxu0 %v8948
      %v9042 = vpop.f32.mrf.mxu0
      %v9043 = vadd.f32 0.0, %v9042
      %9044 = vmatmul.f32.gmra.mxu0 %v8951
      %v9045 = vpop.f32.mrf.mxu0
      %9046 = vdwg.mxu0
      %v9047 = vadd.f32 %v8745, %v8971
      %v9048 = vadd.f32 %v8746, %v8974
      %v9049 = vadd.f32 %v8747, %v8977
      %v9050 = vadd.f32 %v8748, %v8980
      %v9051 = vadd.f32 %v8749, %v8983
      %v9052 = vadd.f32 %v8750, %v8986
      %v9053 = vadd.f32 %v8751, %v8989
      %v9054 = vadd.f32 %v8752, %v8992
      %v9055 = vadd.f32 %v8753, %v8995
      %v9056 = vadd.f32 %v8754, %v8998
      %v9057 = vadd.f32 %v8755, %v9001
      %v9058 = vadd.f32 %v8756, %v9004
      %v9059 = vadd.f32 %v8757, %v9007
      %v9060 = vadd.f32 %v8758, %v9010
      %v9061 = vadd.f32 %v8759, %v9013
      %v9062 = vadd.f32 %v8760, %v9016
      %v9063 = vadd.f32 %v8761, %v9019
      %v9064 = vadd.f32 %v8762, %v9022
      %v9065 = vadd.f32 %v8763, %v9025
      %v9066 = vadd.f32 %v8764, %v9028
      %v9067 = vadd.f32 %v8765, %v9031
      %v9068 = vadd.f32 %v8766, %v9034
      %v9069 = vadd.f32 %v8767, %v9037
      %v9070 = vadd.f32 %v8768, %v9040
      %v9071 = vadd.f32 %v8769, %v9043
      %v9072 = vld [vmem:[%s5217] sm:$0xff]
      %v9073 = vld [vmem:[%s5217 + $0x8] sm:$0xff]
      %v9074 = vld [vmem:[%s5217 + $0x10] sm:$0xff]
      %v9075 = vld [vmem:[%s5217 + $0x18] sm:$0xff]
      %v9076 = vld [vmem:[%s5217 + $0x20] sm:$0xff]
      %v9077 = vld [vmem:[%s5217 + $0x28] sm:$0xff]
      %v9078 = vld [vmem:[%s5217 + $0x30] sm:$0xff]
      %v9079 = vld [vmem:[%s5217 + $0x38] sm:$0xff]
      %v9080 = vld [vmem:[%s5217 + $0x40] sm:$0xff]
      %v9081 = vld [vmem:[%s5217 + $0x48] sm:$0xff]
      %v9082 = vld [vmem:[%s5217 + $0x50] sm:$0xff]
      %v9083 = vld [vmem:[%s5217 + $0x58] sm:$0xff]
      %v9084 = vld [vmem:[%s5217 + $0x60] sm:$0xff]
      %v9085 = vld [vmem:[%s5217 + $0x68] sm:$0xff]
      %v9086 = vld [vmem:[%s5217 + $0x70] sm:$0xff]
      %v9087 = vld [vmem:[%s5217 + $0x78] sm:$0xff]
      %v9088 = vld [vmem:[%s5217 + $0x80] sm:$0xff]
      %v9089 = vld [vmem:[%s5217 + $0x88] sm:$0xff]
      %v9090 = vld [vmem:[%s5217 + $0x90] sm:$0xff]
      %v9091 = vld [vmem:[%s5217 + $0x98] sm:$0xff]
      %v9092 = vld [vmem:[%s5217 + $0xa0] sm:$0xff]
      %v9093 = vld [vmem:[%s5217 + $0xa8] sm:$0xff]
      %v9094 = vld [vmem:[%s5217 + $0xb0] sm:$0xff]
      %v9095 = vld [vmem:[%s5217 + $0xb8] sm:$0xff]
      %v9096 = vld [vmem:[%s5217 + $0xc0] sm:$0xff]
      %v9097 = vld [vmem:[%s5217 + $0xc8] sm:$0xff]
      %v9098 = vmul.f32 %v7715, %v9072
      %v9099 = vmul.f32 %v7714, %v9073
      %v9100 = vmul.f32 %v7713, %v9074
      %v9101 = vmul.f32 %v7712, %v9075
      %v9102 = vmul.f32 %v7711, %v9076
      %v9103 = vmul.f32 %v7710, %v9077
      %v9104 = vmul.f32 %v7709, %v9078
      %v9105 = vmul.f32 %v7708, %v9079
      %v9106 = vmul.f32 %v7707, %v9080
      %v9107 = vmul.f32 %v7706, %v9081
      %v9108 = vmul.f32 %v7705, %v9082
      %v9109 = vmul.f32 %v7704, %v9083
      %v9110 = vmul.f32 %v7703, %v9084
      %v9111 = vmul.f32 %v7702, %v9085
      %v9112 = vmul.f32 %v7701, %v9086
      %v9113 = vmul.f32 %v7700, %v9087
      %v9114 = vmul.f32 %v7699, %v9088
      %v9115 = vmul.f32 %v7698, %v9089
      %v9116 = vmul.f32 %v7697, %v9090
      %v9117 = vmul.f32 %v7696, %v9091
      %v9118 = vmul.f32 %v7695, %v9092
      %v9119 = vmul.f32 %v7694, %v9093
      %v9120 = vmul.f32 %v7693, %v9094
      %v9121 = vmul.f32 %v7692, %v9095
      %v9122 = vmul.f32 %v7717, %v9096
      %v9123 = vmul.f32 %v7716, %v9097
      %v9124 = vld [vmem:[%s5270] sm:$0xff]
      %v9126 = vsel %vm391, %v9098, 0
      %v9129 = vsel %vm391, %v9099, 0
      %v9132 = vsel %vm391, %v9100, 0
      %v9135 = vsel %vm391, %v9101, 0
      %v9138 = vsel %vm391, %v9102, 0
      %v9141 = vsel %vm391, %v9103, 0
      %v9144 = vsel %vm391, %v9104, 0
      %v9147 = vsel %vm391, %v9105, 0
      %v9150 = vsel %vm391, %v9106, 0
      %v9153 = vsel %vm391, %v9107, 0
      %v9156 = vsel %vm391, %v9108, 0
      %v9159 = vsel %vm391, %v9109, 0
      %v9162 = vsel %vm391, %v9110, 0
      %v9165 = vsel %vm391, %v9111, 0
      %v9168 = vsel %vm391, %v9112, 0
      %v9171 = vsel %vm391, %v9113, 0
      %v9174 = vsel %vm391, %v9114, 0
      %v9177 = vsel %vm391, %v9115, 0
      %v9180 = vsel %vm391, %v9116, 0
      %v9183 = vsel %vm391, %v9117, 0
      %v9186 = vsel %vm391, %v9118, 0
      %v9189 = vsel %vm391, %v9119, 0
      %v9192 = vsel %vm391, %v9120, 0
      %v9195 = vsel %vm391, %v9121, 0
      %v9198 = vsel %vm391, %v9122, 0
      %v9201 = vsel %vm391, %v9123, 0
      %9203 = vmatpush.msra.mxu0 0.0
      %9204 = vmatpush.msra.mxu0 0.0
      %9205 = vmatpush.msra.mxu0 0.0
      %9206 = vmatpush.msra.mxu0 0.0
      %9207 = vmatpush.msra.mxu0 0.0
      %9208 = vmatpush.msra.mxu0 0.0
      %9209 = vmatpush.msra.mxu0 0.0
      %9210 = vmatpush.msra.mxu0 0.0
      %9211 = vmatpush.msra.mxu0 0.0
      %9212 = vmatpush.msra.mxu0 0.0
      %9213 = vmatpush.msra.mxu0 0.0
      %9214 = vmatpush.msra.mxu0 0.0
      %9215 = vmatpush.msra.mxu0 0.0
      %9216 = vmatpush.msra.mxu0 0.0
      %9217 = vmatpush.msra.mxu0 0.0
      %9218 = vmatpush.msra.mxu0 %v9124
      %9219 = vmatmul.f32.gmra.mxu0 %v9126
      %v9220 = vpop.f32.mrf.mxu0
      %v9221 = vadd.f32 0.0, %v9220
      %9222 = vmatmul.f32.gmra.mxu0 %v9129
      %v9223 = vpop.f32.mrf.mxu0
      %v9224 = vadd.f32 0.0, %v9223
      %9225 = vmatmul.f32.gmra.mxu0 %v9132
      %v9226 = vpop.f32.mrf.mxu0
      %v9227 = vadd.f32 0.0, %v9226
      %9228 = vmatmul.f32.gmra.mxu0 %v9135
      %v9229 = vpop.f32.mrf.mxu0
      %v9230 = vadd.f32 0.0, %v9229
      %9231 = vmatmul.f32.gmra.mxu0 %v9138
      %v9232 = vpop.f32.mrf.mxu0
      %v9233 = vadd.f32 0.0, %v9232
      %9234 = vmatmul.f32.gmra.mxu0 %v9141
      %v9235 = vpop.f32.mrf.mxu0
      %v9236 = vadd.f32 0.0, %v9235
      %9237 = vmatmul.f32.gmra.mxu0 %v9144
      %v9238 = vpop.f32.mrf.mxu0
      %v9239 = vadd.f32 0.0, %v9238
      %9240 = vmatmul.f32.gmra.mxu0 %v9147
      %v9241 = vpop.f32.mrf.mxu0
      %v9242 = vadd.f32 0.0, %v9241
      %9243 = vmatmul.f32.gmra.mxu0 %v9150
      %v9244 = vpop.f32.mrf.mxu0
      %v9245 = vadd.f32 0.0, %v9244
      %9246 = vmatmul.f32.gmra.mxu0 %v9153
      %v9247 = vpop.f32.mrf.mxu0
      %v9248 = vadd.f32 0.0, %v9247
      %9249 = vmatmul.f32.gmra.mxu0 %v9156
      %v9250 = vpop.f32.mrf.mxu0
      %v9251 = vadd.f32 0.0, %v9250
      %9252 = vmatmul.f32.gmra.mxu0 %v9159
      %v9253 = vpop.f32.mrf.mxu0
      %v9254 = vadd.f32 0.0, %v9253
      %9255 = vmatmul.f32.gmra.mxu0 %v9162
      %v9256 = vpop.f32.mrf.mxu0
      %v9257 = vadd.f32 0.0, %v9256
      %9258 = vmatmul.f32.gmra.mxu0 %v9165
      %v9259 = vpop.f32.mrf.mxu0
      %v9260 = vadd.f32 0.0, %v9259
      %9261 = vmatmul.f32.gmra.mxu0 %v9168
      %v9262 = vpop.f32.mrf.mxu0
      %v9263 = vadd.f32 0.0, %v9262
      %9264 = vmatmul.f32.gmra.mxu0 %v9171
      %v9265 = vpop.f32.mrf.mxu0
      %v9266 = vadd.f32 0.0, %v9265
      %9267 = vmatmul.f32.gmra.mxu0 %v9174
      %v9268 = vpop.f32.mrf.mxu0
      %v9269 = vadd.f32 0.0, %v9268
      %9270 = vmatmul.f32.gmra.mxu0 %v9177
      %v9271 = vpop.f32.mrf.mxu0
      %v9272 = vadd.f32 0.0, %v9271
      %9273 = vmatmul.f32.gmra.mxu0 %v9180
      %v9274 = vpop.f32.mrf.mxu0
      %v9275 = vadd.f32 0.0, %v9274
      %9276 = vmatmul.f32.gmra.mxu0 %v9183
      %v9277 = vpop.f32.mrf.mxu0
      %v9278 = vadd.f32 0.0, %v9277
      %9279 = vmatmul.f32.gmra.mxu0 %v9186
      %v9280 = vpop.f32.mrf.mxu0
      %v9281 = vadd.f32 0.0, %v9280
      %9282 = vmatmul.f32.gmra.mxu0 %v9189
      %v9283 = vpop.f32.mrf.mxu0
      %v9284 = vadd.f32 0.0, %v9283
      %9285 = vmatmul.f32.gmra.mxu0 %v9192
      %v9286 = vpop.f32.mrf.mxu0
      %v9287 = vadd.f32 0.0, %v9286
      %9288 = vmatmul.f32.gmra.mxu0 %v9195
      %v9289 = vpop.f32.mrf.mxu0
      %v9290 = vadd.f32 0.0, %v9289
      %9291 = vmatmul.f32.gmra.mxu0 %v9198
      %v9292 = vpop.f32.mrf.mxu0
      %v9293 = vadd.f32 0.0, %v9292
      %9294 = vmatmul.f32.gmra.mxu0 %v9201
      %v9295 = vpop.f32.mrf.mxu0
      %9296 = vdwg.mxu0
      %v9297 = vadd.f32 %v9047, %v9221
      %v9298 = vadd.f32 %v9048, %v9224
      %v9299 = vadd.f32 %v9049, %v9227
      %v9300 = vadd.f32 %v9050, %v9230
      %v9301 = vadd.f32 %v9051, %v9233
      %v9302 = vadd.f32 %v9052, %v9236
      %v9303 = vadd.f32 %v9053, %v9239
      %v9304 = vadd.f32 %v9054, %v9242
      %v9305 = vadd.f32 %v9055, %v9245
      %v9306 = vadd.f32 %v9056, %v9248
      %v9307 = vadd.f32 %v9057, %v9251
      %v9308 = vadd.f32 %v9058, %v9254
      %v9309 = vadd.f32 %v9059, %v9257
      %v9310 = vadd.f32 %v9060, %v9260
      %v9311 = vadd.f32 %v9061, %v9263
      %v9312 = vadd.f32 %v9062, %v9266
      %v9313 = vadd.f32 %v9063, %v9269
      %v9314 = vadd.f32 %v9064, %v9272
      %v9315 = vadd.f32 %v9065, %v9275
      %v9316 = vadd.f32 %v9066, %v9278
      %v9317 = vadd.f32 %v9067, %v9281
      %v9318 = vadd.f32 %v9068, %v9284
      %v9319 = vadd.f32 %v9069, %v9287
      %v9320 = vadd.f32 %v9070, %v9290
      %v9321 = vadd.f32 %v9071, %v9293
      %v9322 = vmul.f32 %v9297, 1.702
      %v9323 = vmul.f32 %v9298, 1.702
      %v9324 = vmul.f32 %v9299, 1.702
      %v9325 = vmul.f32 %v9300, 1.702
      %v9326 = vmul.f32 %v9301, 1.702
      %v9327 = vmul.f32 %v9302, 1.702
      %v9328 = vmul.f32 %v9303, 1.702
      %v9329 = vmul.f32 %v9304, 1.702
      %v9330 = vmul.f32 %v9305, 1.702
      %v9331 = vmul.f32 %v9306, 1.702
      %v9332 = vmul.f32 %v9307, 1.702
      %v9333 = vmul.f32 %v9308, 1.702
      %v9334 = vmul.f32 %v9309, 1.702
      %v9335 = vmul.f32 %v9310, 1.702
      %v9336 = vmul.f32 %v9311, 1.702
      %v9337 = vmul.f32 %v9312, 1.702
      %v9338 = vmul.f32 %v9313, 1.702
      %v9339 = vmul.f32 %v9314, 1.702
      %v9340 = vmul.f32 %v9315, 1.702
      %v9341 = vmul.f32 %v9316, 1.702
      %v9342 = vmul.f32 %v9317, 1.702
      %v9343 = vmul.f32 %v9318, 1.702
      %v9344 = vmul.f32 %v9319, 1.702
      %v9345 = vmul.f32 %v9320, 1.702
      %v9346 = vmul.f32 %v9321, 1.702
      %v9347 = vxor.u32 %v9322, 2147483648
      %v9348 = vxor.u32 %v9323, 2147483648
      %v9349 = vxor.u32 %v9324, 2147483648
      %v9350 = vxor.u32 %v9325, 2147483648
      %v9351 = vxor.u32 %v9326, 2147483648
      %v9352 = vxor.u32 %v9327, 2147483648
      %v9353 = vxor.u32 %v9328, 2147483648
      %v9354 = vxor.u32 %v9329, 2147483648
      %v9355 = vxor.u32 %v9330, 2147483648
      %v9356 = vxor.u32 %v9331, 2147483648
      %v9357 = vxor.u32 %v9332, 2147483648
      %v9358 = vxor.u32 %v9333, 2147483648
      %v9359 = vxor.u32 %v9334, 2147483648
      %v9360 = vxor.u32 %v9335, 2147483648
      %v9361 = vxor.u32 %v9336, 2147483648
      %v9362 = vxor.u32 %v9337, 2147483648
      %v9363 = vxor.u32 %v9338, 2147483648
      %v9364 = vxor.u32 %v9339, 2147483648
      %v9365 = vxor.u32 %v9340, 2147483648
      %v9366 = vxor.u32 %v9341, 2147483648
      %v9367 = vxor.u32 %v9342, 2147483648
      %v9368 = vxor.u32 %v9343, 2147483648
      %v9369 = vxor.u32 %v9344, 2147483648
      %v9370 = vxor.u32 %v9345, 2147483648
      %v9371 = vxor.u32 %v9346, 2147483648
      %v9372 = vmul.f32 %v9347, 1.442695
      %v9373 = vpow.pop %v9372
      %v9374 = vmul.f32 %v9348, 1.442695
      %v9375 = vpow.pop %v9374
      %v9376 = vmul.f32 %v9349, 1.442695
      %v9377 = vpow.pop %v9376
      %v9378 = vmul.f32 %v9350, 1.442695
      %v9379 = vpow.pop %v9378
      %v9380 = vmul.f32 %v9351, 1.442695
      %v9381 = vpow.pop %v9380
      %v9382 = vmul.f32 %v9352, 1.442695
      %v9383 = vpow.pop %v9382
      %v9384 = vmul.f32 %v9353, 1.442695
      %v9385 = vpow.pop %v9384
      %v9386 = vmul.f32 %v9354, 1.442695
      %v9387 = vpow.pop %v9386
      %v9388 = vmul.f32 %v9355, 1.442695
      %v9389 = vpow.pop %v9388
      %v9390 = vmul.f32 %v9356, 1.442695
      %v9391 = vpow.pop %v9390
      %v9392 = vmul.f32 %v9357, 1.442695
      %v9393 = vpow.pop %v9392
      %v9394 = vmul.f32 %v9358, 1.442695
      %v9395 = vpow.pop %v9394
      %v9396 = vmul.f32 %v9359, 1.442695
      %v9397 = vpow.pop %v9396
      %v9398 = vmul.f32 %v9360, 1.442695
      %v9399 = vpow.pop %v9398
      %v9400 = vmul.f32 %v9361, 1.442695
      %v9401 = vpow.pop %v9400
      %v9402 = vmul.f32 %v9362, 1.442695
      %v9403 = vpow.pop %v9402
      %v9404 = vmul.f32 %v9363, 1.442695
      %v9405 = vpow.pop %v9404
      %v9406 = vmul.f32 %v9364, 1.442695
      %v9407 = vpow.pop %v9406
      %v9408 = vmul.f32 %v9365, 1.442695
      %v9409 = vpow.pop %v9408
      %v9410 = vmul.f32 %v9366, 1.442695
      %v9411 = vpow.pop %v9410
      %v9412 = vmul.f32 %v9367, 1.442695
      %v9413 = vpow.pop %v9412
      %v9414 = vmul.f32 %v9368, 1.442695
      %v9415 = vpow.pop %v9414
      %v9416 = vmul.f32 %v9369, 1.442695
      %v9417 = vpow.pop %v9416
      %v9418 = vmul.f32 %v9370, 1.442695
      %v9419 = vpow.pop %v9418
      %v9420 = vmul.f32 %v9371, 1.442695
      %v9421 = vpow.pop %v9420
      %v9422 = vadd.f32 %v9373, 1.0
      %v9423 = vadd.f32 %v9375, 1.0
      %v9424 = vadd.f32 %v9377, 1.0
      %v9425 = vadd.f32 %v9379, 1.0
      %v9426 = vadd.f32 %v9381, 1.0
      %v9427 = vadd.f32 %v9383, 1.0
      %v9428 = vadd.f32 %v9385, 1.0
      %v9429 = vadd.f32 %v9387, 1.0
      %v9430 = vadd.f32 %v9389, 1.0
      %v9431 = vadd.f32 %v9391, 1.0
      %v9432 = vadd.f32 %v9393, 1.0
      %v9433 = vadd.f32 %v9395, 1.0
      %v9434 = vadd.f32 %v9397, 1.0
      %v9435 = vadd.f32 %v9399, 1.0
      %v9436 = vadd.f32 %v9401, 1.0
      %v9437 = vadd.f32 %v9403, 1.0
      %v9438 = vadd.f32 %v9405, 1.0
      %v9439 = vadd.f32 %v9407, 1.0
      %v9440 = vadd.f32 %v9409, 1.0
      %v9441 = vadd.f32 %v9411, 1.0
      %v9442 = vadd.f32 %v9413, 1.0
      %v9443 = vadd.f32 %v9415, 1.0
      %v9444 = vadd.f32 %v9417, 1.0
      %v9445 = vadd.f32 %v9419, 1.0
      %v9446 = vadd.f32 %v9421, 1.0
      %v9447 = vrcp.pop %v9422
      %v9448 = vmul.f32 %v9422, %v9447
      %v9449 = vsub.f32 1.0, %v9448
      %v9450 = vmul.f32 %v9447, %v9449
      %v9451 = vadd.f32 %v9447, %v9450
      %vm9452 = vweird.f32 %v9422
      %vm9453 = vweird.f32 %v9447
      %vm9454 = vmor %vm9452, %vm9453
      %v9455 = vsel %vm9454, %v9447, %v9451
      %v9456 = vand.u32 2147483647, %v9422
      %vm9457 = vcmp.eq.f32.partialorder %v9456, 8.507059e+37
      %v9458 = vand.u32 %v9422, 2147483648
      %v9459 = vor.u32 1.1754944e-38, %v9458
      %v9460 = vsel %vm9457, %v9459, %v9455
      %v9461 = vmul.f32 1.0, %v9460
      %v9462 = vrcp.pop %v9423
      %v9463 = vmul.f32 %v9423, %v9462
      %v9464 = vsub.f32 1.0, %v9463
      %v9465 = vmul.f32 %v9462, %v9464
      %v9466 = vadd.f32 %v9462, %v9465
      %vm9467 = vweird.f32 %v9423
      %vm9468 = vweird.f32 %v9462
      %vm9469 = vmor %vm9467, %vm9468
      %v9470 = vsel %vm9469, %v9462, %v9466
      %v9471 = vand.u32 2147483647, %v9423
      %vm9472 = vcmp.eq.f32.partialorder %v9471, 8.507059e+37
      %v9473 = vand.u32 %v9423, 2147483648
      %v9474 = vor.u32 1.1754944e-38, %v9473
      %v9475 = vsel %vm9472, %v9474, %v9470
      %v9476 = vmul.f32 1.0, %v9475
      %v9477 = vrcp.pop %v9424
      %v9478 = vmul.f32 %v9424, %v9477
      %v9479 = vsub.f32 1.0, %v9478
      %v9480 = vmul.f32 %v9477, %v9479
      %v9481 = vadd.f32 %v9477, %v9480
      %vm9482 = vweird.f32 %v9424
      %vm9483 = vweird.f32 %v9477
      %vm9484 = vmor %vm9482, %vm9483
      %v9485 = vsel %vm9484, %v9477, %v9481
      %v9486 = vand.u32 2147483647, %v9424
      %vm9487 = vcmp.eq.f32.partialorder %v9486, 8.507059e+37
      %v9488 = vand.u32 %v9424, 2147483648
      %v9489 = vor.u32 1.1754944e-38, %v9488
      %v9490 = vsel %vm9487, %v9489, %v9485
      %v9491 = vmul.f32 1.0, %v9490
      %v9492 = vrcp.pop %v9425
      %v9493 = vmul.f32 %v9425, %v9492
      %v9494 = vsub.f32 1.0, %v9493
      %v9495 = vmul.f32 %v9492, %v9494
      %v9496 = vadd.f32 %v9492, %v9495
      %vm9497 = vweird.f32 %v9425
      %vm9498 = vweird.f32 %v9492
      %vm9499 = vmor %vm9497, %vm9498
      %v9500 = vsel %vm9499, %v9492, %v9496
      %v9501 = vand.u32 2147483647, %v9425
      %vm9502 = vcmp.eq.f32.partialorder %v9501, 8.507059e+37
      %v9503 = vand.u32 %v9425, 2147483648
      %v9504 = vor.u32 1.1754944e-38, %v9503
      %v9505 = vsel %vm9502, %v9504, %v9500
      %v9506 = vmul.f32 1.0, %v9505
      %v9507 = vrcp.pop %v9426
      %v9508 = vmul.f32 %v9426, %v9507
      %v9509 = vsub.f32 1.0, %v9508
      %v9510 = vmul.f32 %v9507, %v9509
      %v9511 = vadd.f32 %v9507, %v9510
      %vm9512 = vweird.f32 %v9426
      %vm9513 = vweird.f32 %v9507
      %vm9514 = vmor %vm9512, %vm9513
      %v9515 = vsel %vm9514, %v9507, %v9511
      %v9516 = vand.u32 2147483647, %v9426
      %vm9517 = vcmp.eq.f32.partialorder %v9516, 8.507059e+37
      %v9518 = vand.u32 %v9426, 2147483648
      %v9519 = vor.u32 1.1754944e-38, %v9518
      %v9520 = vsel %vm9517, %v9519, %v9515
      %v9521 = vmul.f32 1.0, %v9520
      %v9522 = vrcp.pop %v9427
      %v9523 = vmul.f32 %v9427, %v9522
      %v9524 = vsub.f32 1.0, %v9523
      %v9525 = vmul.f32 %v9522, %v9524
      %v9526 = vadd.f32 %v9522, %v9525
      %vm9527 = vweird.f32 %v9427
      %vm9528 = vweird.f32 %v9522
      %vm9529 = vmor %vm9527, %vm9528
      %v9530 = vsel %vm9529, %v9522, %v9526
      %v9531 = vand.u32 2147483647, %v9427
      %vm9532 = vcmp.eq.f32.partialorder %v9531, 8.507059e+37
      %v9533 = vand.u32 %v9427, 2147483648
      %v9534 = vor.u32 1.1754944e-38, %v9533
      %v9535 = vsel %vm9532, %v9534, %v9530
      %v9536 = vmul.f32 1.0, %v9535
      %v9537 = vrcp.pop %v9428
      %v9538 = vmul.f32 %v9428, %v9537
      %v9539 = vsub.f32 1.0, %v9538
      %v9540 = vmul.f32 %v9537, %v9539
      %v9541 = vadd.f32 %v9537, %v9540
      %vm9542 = vweird.f32 %v9428
      %vm9543 = vweird.f32 %v9537
      %vm9544 = vmor %vm9542, %vm9543
      %v9545 = vsel %vm9544, %v9537, %v9541
      %v9546 = vand.u32 2147483647, %v9428
      %vm9547 = vcmp.eq.f32.partialorder %v9546, 8.507059e+37
      %v9548 = vand.u32 %v9428, 2147483648
      %v9549 = vor.u32 1.1754944e-38, %v9548
      %v9550 = vsel %vm9547, %v9549, %v9545
      %v9551 = vmul.f32 1.0, %v9550
      %v9552 = vrcp.pop %v9429
      %v9553 = vmul.f32 %v9429, %v9552
      %v9554 = vsub.f32 1.0, %v9553
      %v9555 = vmul.f32 %v9552, %v9554
      %v9556 = vadd.f32 %v9552, %v9555
      %vm9557 = vweird.f32 %v9429
      %vm9558 = vweird.f32 %v9552
      %vm9559 = vmor %vm9557, %vm9558
      %v9560 = vsel %vm9559, %v9552, %v9556
      %v9561 = vand.u32 2147483647, %v9429
      %vm9562 = vcmp.eq.f32.partialorder %v9561, 8.507059e+37
      %v9563 = vand.u32 %v9429, 2147483648
      %v9564 = vor.u32 1.1754944e-38, %v9563
      %v9565 = vsel %vm9562, %v9564, %v9560
      %v9566 = vmul.f32 1.0, %v9565
      %v9567 = vrcp.pop %v9430
      %v9568 = vmul.f32 %v9430, %v9567
      %v9569 = vsub.f32 1.0, %v9568
      %v9570 = vmul.f32 %v9567, %v9569
      %v9571 = vadd.f32 %v9567, %v9570
      %vm9572 = vweird.f32 %v9430
      %vm9573 = vweird.f32 %v9567
      %vm9574 = vmor %vm9572, %vm9573
      %v9575 = vsel %vm9574, %v9567, %v9571
      %v9576 = vand.u32 2147483647, %v9430
      %vm9577 = vcmp.eq.f32.partialorder %v9576, 8.507059e+37
      %v9578 = vand.u32 %v9430, 2147483648
      %v9579 = vor.u32 1.1754944e-38, %v9578
      %v9580 = vsel %vm9577, %v9579, %v9575
      %v9581 = vmul.f32 1.0, %v9580
      %v9582 = vrcp.pop %v9431
      %v9583 = vmul.f32 %v9431, %v9582
      %v9584 = vsub.f32 1.0, %v9583
      %v9585 = vmul.f32 %v9582, %v9584
      %v9586 = vadd.f32 %v9582, %v9585
      %vm9587 = vweird.f32 %v9431
      %vm9588 = vweird.f32 %v9582
      %vm9589 = vmor %vm9587, %vm9588
      %v9590 = vsel %vm9589, %v9582, %v9586
      %v9591 = vand.u32 2147483647, %v9431
      %vm9592 = vcmp.eq.f32.partialorder %v9591, 8.507059e+37
      %v9593 = vand.u32 %v9431, 2147483648
      %v9594 = vor.u32 1.1754944e-38, %v9593
      %v9595 = vsel %vm9592, %v9594, %v9590
      %v9596 = vmul.f32 1.0, %v9595
      %v9597 = vrcp.pop %v9432
      %v9598 = vmul.f32 %v9432, %v9597
      %v9599 = vsub.f32 1.0, %v9598
      %v9600 = vmul.f32 %v9597, %v9599
      %v9601 = vadd.f32 %v9597, %v9600
      %vm9602 = vweird.f32 %v9432
      %vm9603 = vweird.f32 %v9597
      %vm9604 = vmor %vm9602, %vm9603
      %v9605 = vsel %vm9604, %v9597, %v9601
      %v9606 = vand.u32 2147483647, %v9432
      %vm9607 = vcmp.eq.f32.partialorder %v9606, 8.507059e+37
      %v9608 = vand.u32 %v9432, 2147483648
      %v9609 = vor.u32 1.1754944e-38, %v9608
      %v9610 = vsel %vm9607, %v9609, %v9605
      %v9611 = vmul.f32 1.0, %v9610
      %v9612 = vrcp.pop %v9433
      %v9613 = vmul.f32 %v9433, %v9612
      %v9614 = vsub.f32 1.0, %v9613
      %v9615 = vmul.f32 %v9612, %v9614
      %v9616 = vadd.f32 %v9612, %v9615
      %vm9617 = vweird.f32 %v9433
      %vm9618 = vweird.f32 %v9612
      %vm9619 = vmor %vm9617, %vm9618
      %v9620 = vsel %vm9619, %v9612, %v9616
      %v9621 = vand.u32 2147483647, %v9433
      %vm9622 = vcmp.eq.f32.partialorder %v9621, 8.507059e+37
      %v9623 = vand.u32 %v9433, 2147483648
      %v9624 = vor.u32 1.1754944e-38, %v9623
      %v9625 = vsel %vm9622, %v9624, %v9620
      %v9626 = vmul.f32 1.0, %v9625
      %v9627 = vrcp.pop %v9434
      %v9628 = vmul.f32 %v9434, %v9627
      %v9629 = vsub.f32 1.0, %v9628
      %v9630 = vmul.f32 %v9627, %v9629
      %v9631 = vadd.f32 %v9627, %v9630
      %vm9632 = vweird.f32 %v9434
      %vm9633 = vweird.f32 %v9627
      %vm9634 = vmor %vm9632, %vm9633
      %v9635 = vsel %vm9634, %v9627, %v9631
      %v9636 = vand.u32 2147483647, %v9434
      %vm9637 = vcmp.eq.f32.partialorder %v9636, 8.507059e+37
      %v9638 = vand.u32 %v9434, 2147483648
      %v9639 = vor.u32 1.1754944e-38, %v9638
      %v9640 = vsel %vm9637, %v9639, %v9635
      %v9641 = vmul.f32 1.0, %v9640
      %v9642 = vrcp.pop %v9435
      %v9643 = vmul.f32 %v9435, %v9642
      %v9644 = vsub.f32 1.0, %v9643
      %v9645 = vmul.f32 %v9642, %v9644
      %v9646 = vadd.f32 %v9642, %v9645
      %vm9647 = vweird.f32 %v9435
      %vm9648 = vweird.f32 %v9642
      %vm9649 = vmor %vm9647, %vm9648
      %v9650 = vsel %vm9649, %v9642, %v9646
      %v9651 = vand.u32 2147483647, %v9435
      %vm9652 = vcmp.eq.f32.partialorder %v9651, 8.507059e+37
      %v9653 = vand.u32 %v9435, 2147483648
      %v9654 = vor.u32 1.1754944e-38, %v9653
      %v9655 = vsel %vm9652, %v9654, %v9650
      %v9656 = vmul.f32 1.0, %v9655
      %v9657 = vrcp.pop %v9436
      %v9658 = vmul.f32 %v9436, %v9657
      %v9659 = vsub.f32 1.0, %v9658
      %v9660 = vmul.f32 %v9657, %v9659
      %v9661 = vadd.f32 %v9657, %v9660
      %vm9662 = vweird.f32 %v9436
      %vm9663 = vweird.f32 %v9657
      %vm9664 = vmor %vm9662, %vm9663
      %v9665 = vsel %vm9664, %v9657, %v9661
      %v9666 = vand.u32 2147483647, %v9436
      %vm9667 = vcmp.eq.f32.partialorder %v9666, 8.507059e+37
      %v9668 = vand.u32 %v9436, 2147483648
      %v9669 = vor.u32 1.1754944e-38, %v9668
      %v9670 = vsel %vm9667, %v9669, %v9665
      %v9671 = vmul.f32 1.0, %v9670
      %v9672 = vrcp.pop %v9437
      %v9673 = vmul.f32 %v9437, %v9672
      %v9674 = vsub.f32 1.0, %v9673
      %v9675 = vmul.f32 %v9672, %v9674
      %v9676 = vadd.f32 %v9672, %v9675
      %vm9677 = vweird.f32 %v9437
      %vm9678 = vweird.f32 %v9672
      %vm9679 = vmor %vm9677, %vm9678
      %v9680 = vsel %vm9679, %v9672, %v9676
      %v9681 = vand.u32 2147483647, %v9437
      %vm9682 = vcmp.eq.f32.partialorder %v9681, 8.507059e+37
      %v9683 = vand.u32 %v9437, 2147483648
      %v9684 = vor.u32 1.1754944e-38, %v9683
      %v9685 = vsel %vm9682, %v9684, %v9680
      %v9686 = vmul.f32 1.0, %v9685
      %v9687 = vrcp.pop %v9438
      %v9688 = vmul.f32 %v9438, %v9687
      %v9689 = vsub.f32 1.0, %v9688
      %v9690 = vmul.f32 %v9687, %v9689
      %v9691 = vadd.f32 %v9687, %v9690
      %vm9692 = vweird.f32 %v9438
      %vm9693 = vweird.f32 %v9687
      %vm9694 = vmor %vm9692, %vm9693
      %v9695 = vsel %vm9694, %v9687, %v9691
      %v9696 = vand.u32 2147483647, %v9438
      %vm9697 = vcmp.eq.f32.partialorder %v9696, 8.507059e+37
      %v9698 = vand.u32 %v9438, 2147483648
      %v9699 = vor.u32 1.1754944e-38, %v9698
      %v9700 = vsel %vm9697, %v9699, %v9695
      %v9701 = vmul.f32 1.0, %v9700
      %v9702 = vrcp.pop %v9439
      %v9703 = vmul.f32 %v9439, %v9702
      %v9704 = vsub.f32 1.0, %v9703
      %v9705 = vmul.f32 %v9702, %v9704
      %v9706 = vadd.f32 %v9702, %v9705
      %vm9707 = vweird.f32 %v9439
      %vm9708 = vweird.f32 %v9702
      %vm9709 = vmor %vm9707, %vm9708
      %v9710 = vsel %vm9709, %v9702, %v9706
      %v9711 = vand.u32 2147483647, %v9439
      %vm9712 = vcmp.eq.f32.partialorder %v9711, 8.507059e+37
      %v9713 = vand.u32 %v9439, 2147483648
      %v9714 = vor.u32 1.1754944e-38, %v9713
      %v9715 = vsel %vm9712, %v9714, %v9710
      %v9716 = vmul.f32 1.0, %v9715
      %v9717 = vrcp.pop %v9440
      %v9718 = vmul.f32 %v9440, %v9717
      %v9719 = vsub.f32 1.0, %v9718
      %v9720 = vmul.f32 %v9717, %v9719
      %v9721 = vadd.f32 %v9717, %v9720
      %vm9722 = vweird.f32 %v9440
      %vm9723 = vweird.f32 %v9717
      %vm9724 = vmor %vm9722, %vm9723
      %v9725 = vsel %vm9724, %v9717, %v9721
      %v9726 = vand.u32 2147483647, %v9440
      %vm9727 = vcmp.eq.f32.partialorder %v9726, 8.507059e+37
      %v9728 = vand.u32 %v9440, 2147483648
      %v9729 = vor.u32 1.1754944e-38, %v9728
      %v9730 = vsel %vm9727, %v9729, %v9725
      %v9731 = vmul.f32 1.0, %v9730
      %v9732 = vrcp.pop %v9441
      %v9733 = vmul.f32 %v9441, %v9732
      %v9734 = vsub.f32 1.0, %v9733
      %v9735 = vmul.f32 %v9732, %v9734
      %v9736 = vadd.f32 %v9732, %v9735
      %vm9737 = vweird.f32 %v9441
      %vm9738 = vweird.f32 %v9732
      %vm9739 = vmor %vm9737, %vm9738
      %v9740 = vsel %vm9739, %v9732, %v9736
      %v9741 = vand.u32 2147483647, %v9441
      %vm9742 = vcmp.eq.f32.partialorder %v9741, 8.507059e+37
      %v9743 = vand.u32 %v9441, 2147483648
      %v9744 = vor.u32 1.1754944e-38, %v9743
      %v9745 = vsel %vm9742, %v9744, %v9740
      %v9746 = vmul.f32 1.0, %v9745
      %v9747 = vrcp.pop %v9442
      %v9748 = vmul.f32 %v9442, %v9747
      %v9749 = vsub.f32 1.0, %v9748
      %v9750 = vmul.f32 %v9747, %v9749
      %v9751 = vadd.f32 %v9747, %v9750
      %vm9752 = vweird.f32 %v9442
      %vm9753 = vweird.f32 %v9747
      %vm9754 = vmor %vm9752, %vm9753
      %v9755 = vsel %vm9754, %v9747, %v9751
      %v9756 = vand.u32 2147483647, %v9442
      %vm9757 = vcmp.eq.f32.partialorder %v9756, 8.507059e+37
      %v9758 = vand.u32 %v9442, 2147483648
      %v9759 = vor.u32 1.1754944e-38, %v9758
      %v9760 = vsel %vm9757, %v9759, %v9755
      %v9761 = vmul.f32 1.0, %v9760
      %v9762 = vrcp.pop %v9443
      %v9763 = vmul.f32 %v9443, %v9762
      %v9764 = vsub.f32 1.0, %v9763
      %v9765 = vmul.f32 %v9762, %v9764
      %v9766 = vadd.f32 %v9762, %v9765
      %vm9767 = vweird.f32 %v9443
      %vm9768 = vweird.f32 %v9762
      %vm9769 = vmor %vm9767, %vm9768
      %v9770 = vsel %vm9769, %v9762, %v9766
      %v9771 = vand.u32 2147483647, %v9443
      %vm9772 = vcmp.eq.f32.partialorder %v9771, 8.507059e+37
      %v9773 = vand.u32 %v9443, 2147483648
      %v9774 = vor.u32 1.1754944e-38, %v9773
      %v9775 = vsel %vm9772, %v9774, %v9770
      %v9776 = vmul.f32 1.0, %v9775
      %v9777 = vrcp.pop %v9444
      %v9778 = vmul.f32 %v9444, %v9777
      %v9779 = vsub.f32 1.0, %v9778
      %v9780 = vmul.f32 %v9777, %v9779
      %v9781 = vadd.f32 %v9777, %v9780
      %vm9782 = vweird.f32 %v9444
      %vm9783 = vweird.f32 %v9777
      %vm9784 = vmor %vm9782, %vm9783
      %v9785 = vsel %vm9784, %v9777, %v9781
      %v9786 = vand.u32 2147483647, %v9444
      %vm9787 = vcmp.eq.f32.partialorder %v9786, 8.507059e+37
      %v9788 = vand.u32 %v9444, 2147483648
      %v9789 = vor.u32 1.1754944e-38, %v9788
      %v9790 = vsel %vm9787, %v9789, %v9785
      %v9791 = vmul.f32 1.0, %v9790
      %v9792 = vrcp.pop %v9445
      %v9793 = vmul.f32 %v9445, %v9792
      %v9794 = vsub.f32 1.0, %v9793
      %v9795 = vmul.f32 %v9792, %v9794
      %v9796 = vadd.f32 %v9792, %v9795
      %vm9797 = vweird.f32 %v9445
      %vm9798 = vweird.f32 %v9792
      %vm9799 = vmor %vm9797, %vm9798
      %v9800 = vsel %vm9799, %v9792, %v9796
      %v9801 = vand.u32 2147483647, %v9445
      %vm9802 = vcmp.eq.f32.partialorder %v9801, 8.507059e+37
      %v9803 = vand.u32 %v9445, 2147483648
      %v9804 = vor.u32 1.1754944e-38, %v9803
      %v9805 = vsel %vm9802, %v9804, %v9800
      %v9806 = vmul.f32 1.0, %v9805
      %v9807 = vrcp.pop %v9446
      %v9808 = vmul.f32 %v9446, %v9807
      %v9809 = vsub.f32 1.0, %v9808
      %v9810 = vmul.f32 %v9807, %v9809
      %v9811 = vadd.f32 %v9807, %v9810
      %vm9812 = vweird.f32 %v9446
      %vm9813 = vweird.f32 %v9807
      %vm9814 = vmor %vm9812, %vm9813
      %v9815 = vsel %vm9814, %v9807, %v9811
      %v9816 = vand.u32 2147483647, %v9446
      %vm9817 = vcmp.eq.f32.partialorder %v9816, 8.507059e+37
      %v9818 = vand.u32 %v9446, 2147483648
      %v9819 = vor.u32 1.1754944e-38, %v9818
      %v9820 = vsel %vm9817, %v9819, %v9815
      %v9821 = vmul.f32 1.0, %v9820
      %v9822 = vmul.f32 %v9297, %v9461
      %v9823 = vmul.f32 %v9298, %v9476
      %v9824 = vmul.f32 %v9299, %v9491
      %v9825 = vmul.f32 %v9300, %v9506
      %v9826 = vmul.f32 %v9301, %v9521
      %v9827 = vmul.f32 %v9302, %v9536
      %v9828 = vmul.f32 %v9303, %v9551
      %v9829 = vmul.f32 %v9304, %v9566
      %v9830 = vmul.f32 %v9305, %v9581
      %v9831 = vmul.f32 %v9306, %v9596
      %v9832 = vmul.f32 %v9307, %v9611
      %v9833 = vmul.f32 %v9308, %v9626
      %v9834 = vmul.f32 %v9309, %v9641
      %v9835 = vmul.f32 %v9310, %v9656
      %v9836 = vmul.f32 %v9311, %v9671
      %v9837 = vmul.f32 %v9312, %v9686
      %v9838 = vmul.f32 %v9313, %v9701
      %v9839 = vmul.f32 %v9314, %v9716
      %v9840 = vmul.f32 %v9315, %v9731
      %v9841 = vmul.f32 %v9316, %v9746
      %v9842 = vmul.f32 %v9317, %v9761
      %v9843 = vmul.f32 %v9318, %v9776
      %v9844 = vmul.f32 %v9319, %v9791
      %v9845 = vmul.f32 %v9320, %v9806
      %v9846 = vmul.f32 %v9321, %v9821
      %v9848 = vsel %vm391, %v9822, 0
      %v9851 = vsel %vm391, %v9823, 0
      %v9854 = vsel %vm391, %v9824, 0
      %v9857 = vsel %vm391, %v9825, 0
      %v9860 = vsel %vm391, %v9826, 0
      %v9863 = vsel %vm391, %v9827, 0
      %v9866 = vsel %vm391, %v9828, 0
      %v9869 = vsel %vm391, %v9829, 0
      %v9872 = vsel %vm391, %v9830, 0
      %v9875 = vsel %vm391, %v9831, 0
      %v9878 = vsel %vm391, %v9832, 0
      %v9881 = vsel %vm391, %v9833, 0
      %v9884 = vsel %vm391, %v9834, 0
      %v9887 = vsel %vm391, %v9835, 0
      %v9890 = vsel %vm391, %v9836, 0
      %v9893 = vsel %vm391, %v9837, 0
      %v9896 = vsel %vm391, %v9838, 0
      %v9899 = vsel %vm391, %v9839, 0
      %v9902 = vsel %vm391, %v9840, 0
      %v9905 = vsel %vm391, %v9841, 0
      %v9908 = vsel %vm391, %v9842, 0
      %v9911 = vsel %vm391, %v9843, 0
      %v9914 = vsel %vm391, %v9844, 0
      %v9917 = vsel %vm391, %v9845, 0
      %v9920 = vsel %vm391, %v9846, 0
      %9922 = vmatpush.msra.mxu0 0.0
      %9923 = vmatpush.msra.mxu0 0.0
      %9924 = vmatpush.msra.mxu0 0.0
      %9925 = vmatpush.msra.mxu0 0.0
      %9926 = vmatpush.msra.mxu0 0.0
      %9927 = vmatpush.msra.mxu0 0.0
      %9928 = vmatpush.msra.mxu0 0.0
      %9929 = vmatpush.msra.mxu0 0.0
      %9930 = vmatpush.msra.mxu0 0.0
      %9931 = vmatpush.msra.mxu0 0.0
      %9932 = vmatpush.msra.mxu0 0.0
      %9933 = vmatpush.msra.mxu0 0.0
      %9934 = vmatpush.msra.mxu0 0.0
      %9935 = vmatpush.msra.mxu0 0.0
      %9936 = vmatpush.msra.mxu0 0.0
      %9937 = vmatpush.msra.mxu0 %v384
      %9938 = vmatmul.f32.gmra.mxu0 %v9848
      %v9939 = vpop.f32.mrf.mxu0
      %v9940 = vadd.f32 %v5995, %v9939
      %9941 = vmatmul.f32.gmra.mxu0 %v9851
      %v9942 = vpop.f32.mrf.mxu0
      %v9943 = vadd.f32 %v5995, %v9942
      %9944 = vmatmul.f32.gmra.mxu0 %v9854
      %v9945 = vpop.f32.mrf.mxu0
      %v9946 = vadd.f32 %v5995, %v9945
      %9947 = vmatmul.f32.gmra.mxu0 %v9857
      %v9948 = vpop.f32.mrf.mxu0
      %v9949 = vadd.f32 %v5995, %v9948
      %9950 = vmatmul.f32.gmra.mxu0 %v9860
      %v9951 = vpop.f32.mrf.mxu0
      %v9952 = vadd.f32 %v5995, %v9951
      %9953 = vmatmul.f32.gmra.mxu0 %v9863
      %v9954 = vpop.f32.mrf.mxu0
      %v9955 = vadd.f32 %v5995, %v9954
      %9956 = vmatmul.f32.gmra.mxu0 %v9866
      %v9957 = vpop.f32.mrf.mxu0
      %v9958 = vadd.f32 %v5995, %v9957
      %9959 = vmatmul.f32.gmra.mxu0 %v9869
      %v9960 = vpop.f32.mrf.mxu0
      %v9961 = vadd.f32 %v5995, %v9960
      %9962 = vmatmul.f32.gmra.mxu0 %v9872
      %v9963 = vpop.f32.mrf.mxu0
      %v9964 = vadd.f32 %v5995, %v9963
      %9965 = vmatmul.f32.gmra.mxu0 %v9875
      %v9966 = vpop.f32.mrf.mxu0
      %v9967 = vadd.f32 %v5995, %v9966
      %9968 = vmatmul.f32.gmra.mxu0 %v9878
      %v9969 = vpop.f32.mrf.mxu0
      %v9970 = vadd.f32 %v5995, %v9969
      %9971 = vmatmul.f32.gmra.mxu0 %v9881
      %v9972 = vpop.f32.mrf.mxu0
      %v9973 = vadd.f32 %v5995, %v9972
      %9974 = vmatmul.f32.gmra.mxu0 %v9884
      %v9975 = vpop.f32.mrf.mxu0
      %v9976 = vadd.f32 %v5995, %v9975
      %9977 = vmatmul.f32.gmra.mxu0 %v9887
      %v9978 = vpop.f32.mrf.mxu0
      %v9979 = vadd.f32 %v5995, %v9978
      %9980 = vmatmul.f32.gmra.mxu0 %v9890
      %v9981 = vpop.f32.mrf.mxu0
      %v9982 = vadd.f32 %v5995, %v9981
      %9983 = vmatmul.f32.gmra.mxu0 %v9893
      %v9984 = vpop.f32.mrf.mxu0
      %v9985 = vadd.f32 %v5995, %v9984
      %9986 = vmatmul.f32.gmra.mxu0 %v9896
      %v9987 = vpop.f32.mrf.mxu0
      %v9988 = vadd.f32 %v5995, %v9987
      %9989 = vmatmul.f32.gmra.mxu0 %v9899
      %v9990 = vpop.f32.mrf.mxu0
      %v9991 = vadd.f32 %v5995, %v9990
      %9992 = vmatmul.f32.gmra.mxu0 %v9902
      %v9993 = vpop.f32.mrf.mxu0
      %v9994 = vadd.f32 %v5995, %v9993
      %9995 = vmatmul.f32.gmra.mxu0 %v9905
      %v9996 = vpop.f32.mrf.mxu0
      %v9997 = vadd.f32 %v5995, %v9996
      %9998 = vmatmul.f32.gmra.mxu0 %v9908
      %v9999 = vpop.f32.mrf.mxu0
      %v10000 = vadd.f32 %v5995, %v9999
      %10001 = vmatmul.f32.gmra.mxu0 %v9911
      %v10002 = vpop.f32.mrf.mxu0
      %v10003 = vadd.f32 %v5995, %v10002
      %10004 = vmatmul.f32.gmra.mxu0 %v9914
      %v10005 = vpop.f32.mrf.mxu0
      %v10006 = vadd.f32 %v5995, %v10005
      %10007 = vmatmul.f32.gmra.mxu0 %v9917
      %v10008 = vpop.f32.mrf.mxu0
      %v10009 = vadd.f32 %v5995, %v10008
      %10010 = vmatmul.f32.gmra.mxu0 %v9920
      %v10011 = vpop.f32.mrf.mxu0
      %v10012 = vadd.f32 %v5995, %v10011
      %10013 = vdwg.mxu0
      %10014 = vmatpush.msra.mxu0 0.0
      %10015 = vmatpush.msra.mxu0 0.0
      %10016 = vmatpush.msra.mxu0 0.0
      %10017 = vmatpush.msra.mxu0 0.0
      %10018 = vmatpush.msra.mxu0 0.0
      %10019 = vmatpush.msra.mxu0 0.0
      %10020 = vmatpush.msra.mxu0 0.0
      %10021 = vmatpush.msra.mxu0 0.0
      %10022 = vmatpush.msra.mxu0 0.0
      %10023 = vmatpush.msra.mxu0 0.0
      %10024 = vmatpush.msra.mxu0 0.0
      %10025 = vmatpush.msra.mxu0 0.0
      %10026 = vmatpush.msra.mxu0 0.0
      %10027 = vmatpush.msra.mxu0 0.0
      %10028 = vmatpush.msra.mxu0 0.0
      %10029 = vmatpush.msra.mxu0 %v385
      %10030 = vmatmul.f32.gmra.mxu0 %v9848
      %v10031 = vpop.f32.mrf.mxu0
      %v10032 = vadd.f32 %v5996, %v10031
      %10033 = vmatmul.f32.gmra.mxu0 %v9851
      %v10034 = vpop.f32.mrf.mxu0
      %v10035 = vadd.f32 %v5996, %v10034
      %10036 = vmatmul.f32.gmra.mxu0 %v9854
      %v10037 = vpop.f32.mrf.mxu0
      %v10038 = vadd.f32 %v5996, %v10037
      %10039 = vmatmul.f32.gmra.mxu0 %v9857
      %v10040 = vpop.f32.mrf.mxu0
      %v10041 = vadd.f32 %v5996, %v10040
      %10042 = vmatmul.f32.gmra.mxu0 %v9860
      %v10043 = vpop.f32.mrf.mxu0
      %v10044 = vadd.f32 %v5996, %v10043
      %10045 = vmatmul.f32.gmra.mxu0 %v9863
      %v10046 = vpop.f32.mrf.mxu0
      %v10047 = vadd.f32 %v5996, %v10046
      %10048 = vmatmul.f32.gmra.mxu0 %v9866
      %v10049 = vpop.f32.mrf.mxu0
      %v10050 = vadd.f32 %v5996, %v10049
      %10051 = vmatmul.f32.gmra.mxu0 %v9869
      %v10052 = vpop.f32.mrf.mxu0
      %v10053 = vadd.f32 %v5996, %v10052
      %10054 = vmatmul.f32.gmra.mxu0 %v9872
      %v10055 = vpop.f32.mrf.mxu0
      %v10056 = vadd.f32 %v5996, %v10055
      %10057 = vmatmul.f32.gmra.mxu0 %v9875
      %v10058 = vpop.f32.mrf.mxu0
      %v10059 = vadd.f32 %v5996, %v10058
      %10060 = vmatmul.f32.gmra.mxu0 %v9878
      %v10061 = vpop.f32.mrf.mxu0
      %v10062 = vadd.f32 %v5996, %v10061
      %10063 = vmatmul.f32.gmra.mxu0 %v9881
      %v10064 = vpop.f32.mrf.mxu0
      %v10065 = vadd.f32 %v5996, %v10064
      %10066 = vmatmul.f32.gmra.mxu0 %v9884
      %v10067 = vpop.f32.mrf.mxu0
      %v10068 = vadd.f32 %v5996, %v10067
      %10069 = vmatmul.f32.gmra.mxu0 %v9887
      %v10070 = vpop.f32.mrf.mxu0
      %v10071 = vadd.f32 %v5996, %v10070
      %10072 = vmatmul.f32.gmra.mxu0 %v9890
      %v10073 = vpop.f32.mrf.mxu0
      %v10074 = vadd.f32 %v5996, %v10073
      %10075 = vmatmul.f32.gmra.mxu0 %v9893
      %v10076 = vpop.f32.mrf.mxu0
      %v10077 = vadd.f32 %v5996, %v10076
      %10078 = vmatmul.f32.gmra.mxu0 %v9896
      %v10079 = vpop.f32.mrf.mxu0
      %v10080 = vadd.f32 %v5996, %v10079
      %10081 = vmatmul.f32.gmra.mxu0 %v9899
      %v10082 = vpop.f32.mrf.mxu0
      %v10083 = vadd.f32 %v5996, %v10082
      %10084 = vmatmul.f32.gmra.mxu0 %v9902
      %v10085 = vpop.f32.mrf.mxu0
      %v10086 = vadd.f32 %v5996, %v10085
      %10087 = vmatmul.f32.gmra.mxu0 %v9905
      %v10088 = vpop.f32.mrf.mxu0
      %v10089 = vadd.f32 %v5996, %v10088
      %10090 = vmatmul.f32.gmra.mxu0 %v9908
      %v10091 = vpop.f32.mrf.mxu0
      %v10092 = vadd.f32 %v5996, %v10091
      %10093 = vmatmul.f32.gmra.mxu0 %v9911
      %v10094 = vpop.f32.mrf.mxu0
      %v10095 = vadd.f32 %v5996, %v10094
      %10096 = vmatmul.f32.gmra.mxu0 %v9914
      %v10097 = vpop.f32.mrf.mxu0
      %v10098 = vadd.f32 %v5996, %v10097
      %10099 = vmatmul.f32.gmra.mxu0 %v9917
      %v10100 = vpop.f32.mrf.mxu0
      %v10101 = vadd.f32 %v5996, %v10100
      %10102 = vmatmul.f32.gmra.mxu0 %v9920
      %v10103 = vpop.f32.mrf.mxu0
      %v10104 = vadd.f32 %v5996, %v10103
      %10105 = vdwg.mxu0
      %10106 = vmatpush.msra.mxu0 0.0
      %10107 = vmatpush.msra.mxu0 0.0
      %10108 = vmatpush.msra.mxu0 0.0
      %10109 = vmatpush.msra.mxu0 0.0
      %10110 = vmatpush.msra.mxu0 0.0
      %10111 = vmatpush.msra.mxu0 0.0
      %10112 = vmatpush.msra.mxu0 0.0
      %10113 = vmatpush.msra.mxu0 0.0
      %10114 = vmatpush.msra.mxu0 0.0
      %10115 = vmatpush.msra.mxu0 0.0
      %10116 = vmatpush.msra.mxu0 0.0
      %10117 = vmatpush.msra.mxu0 0.0
      %10118 = vmatpush.msra.mxu0 0.0
      %10119 = vmatpush.msra.mxu0 0.0
      %10120 = vmatpush.msra.mxu0 0.0
      %10121 = vmatpush.msra.mxu0 %v386
      %10122 = vmatmul.f32.gmra.mxu0 %v9848
      %v10123 = vpop.f32.mrf.mxu0
      %v10124 = vadd.f32 %v5997, %v10123
      %10125 = vmatmul.f32.gmra.mxu0 %v9851
      %v10126 = vpop.f32.mrf.mxu0
      %v10127 = vadd.f32 %v5997, %v10126
      %10128 = vmatmul.f32.gmra.mxu0 %v9854
      %v10129 = vpop.f32.mrf.mxu0
      %v10130 = vadd.f32 %v5997, %v10129
      %10131 = vmatmul.f32.gmra.mxu0 %v9857
      %v10132 = vpop.f32.mrf.mxu0
      %v10133 = vadd.f32 %v5997, %v10132
      %10134 = vmatmul.f32.gmra.mxu0 %v9860
      %v10135 = vpop.f32.mrf.mxu0
      %v10136 = vadd.f32 %v5997, %v10135
      %10137 = vmatmul.f32.gmra.mxu0 %v9863
      %v10138 = vpop.f32.mrf.mxu0
      %v10139 = vadd.f32 %v5997, %v10138
      %10140 = vmatmul.f32.gmra.mxu0 %v9866
      %v10141 = vpop.f32.mrf.mxu0
      %v10142 = vadd.f32 %v5997, %v10141
      %10143 = vmatmul.f32.gmra.mxu0 %v9869
      %v10144 = vpop.f32.mrf.mxu0
      %v10145 = vadd.f32 %v5997, %v10144
      %10146 = vmatmul.f32.gmra.mxu0 %v9872
      %v10147 = vpop.f32.mrf.mxu0
      %v10148 = vadd.f32 %v5997, %v10147
      %10149 = vmatmul.f32.gmra.mxu0 %v9875
      %v10150 = vpop.f32.mrf.mxu0
      %v10151 = vadd.f32 %v5997, %v10150
      %10152 = vmatmul.f32.gmra.mxu0 %v9878
      %v10153 = vpop.f32.mrf.mxu0
      %v10154 = vadd.f32 %v5997, %v10153
      %10155 = vmatmul.f32.gmra.mxu0 %v9881
      %v10156 = vpop.f32.mrf.mxu0
      %v10157 = vadd.f32 %v5997, %v10156
      %10158 = vmatmul.f32.gmra.mxu0 %v9884
      %v10159 = vpop.f32.mrf.mxu0
      %v10160 = vadd.f32 %v5997, %v10159
      %10161 = vmatmul.f32.gmra.mxu0 %v9887
      %v10162 = vpop.f32.mrf.mxu0
      %v10163 = vadd.f32 %v5997, %v10162
      %10164 = vmatmul.f32.gmra.mxu0 %v9890
      %v10165 = vpop.f32.mrf.mxu0
      %v10166 = vadd.f32 %v5997, %v10165
      %10167 = vmatmul.f32.gmra.mxu0 %v9893
      %v10168 = vpop.f32.mrf.mxu0
      %v10169 = vadd.f32 %v5997, %v10168
      %10170 = vmatmul.f32.gmra.mxu0 %v9896
      %v10171 = vpop.f32.mrf.mxu0
      %v10172 = vadd.f32 %v5997, %v10171
      %10173 = vmatmul.f32.gmra.mxu0 %v9899
      %v10174 = vpop.f32.mrf.mxu0
      %v10175 = vadd.f32 %v5997, %v10174
      %10176 = vmatmul.f32.gmra.mxu0 %v9902
      %v10177 = vpop.f32.mrf.mxu0
      %v10178 = vadd.f32 %v5997, %v10177
      %10179 = vmatmul.f32.gmra.mxu0 %v9905
      %v10180 = vpop.f32.mrf.mxu0
      %v10181 = vadd.f32 %v5997, %v10180
      %10182 = vmatmul.f32.gmra.mxu0 %v9908
      %v10183 = vpop.f32.mrf.mxu0
      %v10184 = vadd.f32 %v5997, %v10183
      %10185 = vmatmul.f32.gmra.mxu0 %v9911
      %v10186 = vpop.f32.mrf.mxu0
      %v10187 = vadd.f32 %v5997, %v10186
      %10188 = vmatmul.f32.gmra.mxu0 %v9914
      %v10189 = vpop.f32.mrf.mxu0
      %v10190 = vadd.f32 %v5997, %v10189
      %10191 = vmatmul.f32.gmra.mxu0 %v9917
      %v10192 = vpop.f32.mrf.mxu0
      %v10193 = vadd.f32 %v5997, %v10192
      %10194 = vmatmul.f32.gmra.mxu0 %v9920
      %v10195 = vpop.f32.mrf.mxu0
      %v10196 = vadd.f32 %v5997, %v10195
      %10197 = vdwg.mxu0
      %10198 = vmatpush.msra.mxu0 0.0
      %10199 = vmatpush.msra.mxu0 0.0
      %10200 = vmatpush.msra.mxu0 0.0
      %10201 = vmatpush.msra.mxu0 0.0
      %10202 = vmatpush.msra.mxu0 0.0
      %10203 = vmatpush.msra.mxu0 0.0
      %10204 = vmatpush.msra.mxu0 0.0
      %10205 = vmatpush.msra.mxu0 0.0
      %10206 = vmatpush.msra.mxu0 0.0
      %10207 = vmatpush.msra.mxu0 0.0
      %10208 = vmatpush.msra.mxu0 0.0
      %10209 = vmatpush.msra.mxu0 0.0
      %10210 = vmatpush.msra.mxu0 0.0
      %10211 = vmatpush.msra.mxu0 0.0
      %10212 = vmatpush.msra.mxu0 0.0
      %10213 = vmatpush.msra.mxu0 %v387
      %10214 = vmatmul.f32.gmra.mxu0 %v9848
      %v10215 = vpop.f32.mrf.mxu0
      %v10216 = vadd.f32 %v5998, %v10215
      %10217 = vmatmul.f32.gmra.mxu0 %v9851
      %v10218 = vpop.f32.mrf.mxu0
      %v10219 = vadd.f32 %v5998, %v10218
      %10220 = vmatmul.f32.gmra.mxu0 %v9854
      %v10221 = vpop.f32.mrf.mxu0
      %v10222 = vadd.f32 %v5998, %v10221
      %10223 = vmatmul.f32.gmra.mxu0 %v9857
      %v10224 = vpop.f32.mrf.mxu0
      %v10225 = vadd.f32 %v5998, %v10224
      %10226 = vmatmul.f32.gmra.mxu0 %v9860
      %v10227 = vpop.f32.mrf.mxu0
      %v10228 = vadd.f32 %v5998, %v10227
      %10229 = vmatmul.f32.gmra.mxu0 %v9863
      %v10230 = vpop.f32.mrf.mxu0
      %v10231 = vadd.f32 %v5998, %v10230
      %10232 = vmatmul.f32.gmra.mxu0 %v9866
      %v10233 = vpop.f32.mrf.mxu0
      %v10234 = vadd.f32 %v5998, %v10233
      %10235 = vmatmul.f32.gmra.mxu0 %v9869
      %v10236 = vpop.f32.mrf.mxu0
      %v10237 = vadd.f32 %v5998, %v10236
      %10238 = vmatmul.f32.gmra.mxu0 %v9872
      %v10239 = vpop.f32.mrf.mxu0
      %v10240 = vadd.f32 %v5998, %v10239
      %10241 = vmatmul.f32.gmra.mxu0 %v9875
      %v10242 = vpop.f32.mrf.mxu0
      %v10243 = vadd.f32 %v5998, %v10242
      %10244 = vmatmul.f32.gmra.mxu0 %v9878
      %v10245 = vpop.f32.mrf.mxu0
      %v10246 = vadd.f32 %v5998, %v10245
      %10247 = vmatmul.f32.gmra.mxu0 %v9881
      %v10248 = vpop.f32.mrf.mxu0
      %v10249 = vadd.f32 %v5998, %v10248
      %10250 = vmatmul.f32.gmra.mxu0 %v9884
      %v10251 = vpop.f32.mrf.mxu0
      %v10252 = vadd.f32 %v5998, %v10251
      %10253 = vmatmul.f32.gmra.mxu0 %v9887
      %v10254 = vpop.f32.mrf.mxu0
      %v10255 = vadd.f32 %v5998, %v10254
      %10256 = vmatmul.f32.gmra.mxu0 %v9890
      %v10257 = vpop.f32.mrf.mxu0
      %v10258 = vadd.f32 %v5998, %v10257
      %10259 = vmatmul.f32.gmra.mxu0 %v9893
      %v10260 = vpop.f32.mrf.mxu0
      %v10261 = vadd.f32 %v5998, %v10260
      %10262 = vmatmul.f32.gmra.mxu0 %v9896
      %v10263 = vpop.f32.mrf.mxu0
      %v10264 = vadd.f32 %v5998, %v10263
      %10265 = vmatmul.f32.gmra.mxu0 %v9899
      %v10266 = vpop.f32.mrf.mxu0
      %v10267 = vadd.f32 %v5998, %v10266
      %10268 = vmatmul.f32.gmra.mxu0 %v9902
      %v10269 = vpop.f32.mrf.mxu0
      %v10270 = vadd.f32 %v5998, %v10269
      %10271 = vmatmul.f32.gmra.mxu0 %v9905
      %v10272 = vpop.f32.mrf.mxu0
      %v10273 = vadd.f32 %v5998, %v10272
      %10274 = vmatmul.f32.gmra.mxu0 %v9908
      %v10275 = vpop.f32.mrf.mxu0
      %v10276 = vadd.f32 %v5998, %v10275
      %10277 = vmatmul.f32.gmra.mxu0 %v9911
      %v10278 = vpop.f32.mrf.mxu0
      %v10279 = vadd.f32 %v5998, %v10278
      %10280 = vmatmul.f32.gmra.mxu0 %v9914
      %v10281 = vpop.f32.mrf.mxu0
      %v10282 = vadd.f32 %v5998, %v10281
      %10283 = vmatmul.f32.gmra.mxu0 %v9917
      %v10284 = vpop.f32.mrf.mxu0
      %v10285 = vadd.f32 %v5998, %v10284
      %10286 = vmatmul.f32.gmra.mxu0 %v9920
      %v10287 = vpop.f32.mrf.mxu0
      %v10288 = vadd.f32 %v5998, %v10287
      %10289 = vdwg.mxu0
      %10290 = vmatpush.msra.mxu0 0.0
      %10291 = vmatpush.msra.mxu0 0.0
      %10292 = vmatpush.msra.mxu0 0.0
      %10293 = vmatpush.msra.mxu0 0.0
      %10294 = vmatpush.msra.mxu0 0.0
      %10295 = vmatpush.msra.mxu0 0.0
      %10296 = vmatpush.msra.mxu0 0.0
      %10297 = vmatpush.msra.mxu0 0.0
      %10298 = vmatpush.msra.mxu0 0.0
      %10299 = vmatpush.msra.mxu0 0.0
      %10300 = vmatpush.msra.mxu0 0.0
      %10301 = vmatpush.msra.mxu0 0.0
      %10302 = vmatpush.msra.mxu0 0.0
      %10303 = vmatpush.msra.mxu0 0.0
      %10304 = vmatpush.msra.mxu0 0.0
      %10305 = vmatpush.msra.mxu0 %v388
      %10306 = vmatmul.f32.gmra.mxu0 %v9848
      %v10307 = vpop.f32.mrf.mxu0
      %v10308 = vadd.f32 %v5999, %v10307
      %10309 = vmatmul.f32.gmra.mxu0 %v9851
      %v10310 = vpop.f32.mrf.mxu0
      %v10311 = vadd.f32 %v5999, %v10310
      %10312 = vmatmul.f32.gmra.mxu0 %v9854
      %v10313 = vpop.f32.mrf.mxu0
      %v10314 = vadd.f32 %v5999, %v10313
      %10315 = vmatmul.f32.gmra.mxu0 %v9857
      %v10316 = vpop.f32.mrf.mxu0
      %v10317 = vadd.f32 %v5999, %v10316
      %10318 = vmatmul.f32.gmra.mxu0 %v9860
      %v10319 = vpop.f32.mrf.mxu0
      %v10320 = vadd.f32 %v5999, %v10319
      %10321 = vmatmul.f32.gmra.mxu0 %v9863
      %v10322 = vpop.f32.mrf.mxu0
      %v10323 = vadd.f32 %v5999, %v10322
      %10324 = vmatmul.f32.gmra.mxu0 %v9866
      %v10325 = vpop.f32.mrf.mxu0
      %v10326 = vadd.f32 %v5999, %v10325
      %10327 = vmatmul.f32.gmra.mxu0 %v9869
      %v10328 = vpop.f32.mrf.mxu0
      %v10329 = vadd.f32 %v5999, %v10328
      %10330 = vmatmul.f32.gmra.mxu0 %v9872
      %v10331 = vpop.f32.mrf.mxu0
      %v10332 = vadd.f32 %v5999, %v10331
      %10333 = vmatmul.f32.gmra.mxu0 %v9875
      %v10334 = vpop.f32.mrf.mxu0
      %v10335 = vadd.f32 %v5999, %v10334
      %10336 = vmatmul.f32.gmra.mxu0 %v9878
      %v10337 = vpop.f32.mrf.mxu0
      %v10338 = vadd.f32 %v5999, %v10337
      %10339 = vmatmul.f32.gmra.mxu0 %v9881
      %v10340 = vpop.f32.mrf.mxu0
      %v10341 = vadd.f32 %v5999, %v10340
      %10342 = vmatmul.f32.gmra.mxu0 %v9884
      %v10343 = vpop.f32.mrf.mxu0
      %v10344 = vadd.f32 %v5999, %v10343
      %10345 = vmatmul.f32.gmra.mxu0 %v9887
      %v10346 = vpop.f32.mrf.mxu0
      %v10347 = vadd.f32 %v5999, %v10346
      %10348 = vmatmul.f32.gmra.mxu0 %v9890
      %v10349 = vpop.f32.mrf.mxu0
      %v10350 = vadd.f32 %v5999, %v10349
      %10351 = vmatmul.f32.gmra.mxu0 %v9893
      %v10352 = vpop.f32.mrf.mxu0
      %v10353 = vadd.f32 %v5999, %v10352
      %10354 = vmatmul.f32.gmra.mxu0 %v9896
      %v10355 = vpop.f32.mrf.mxu0
      %v10356 = vadd.f32 %v5999, %v10355
      %10357 = vmatmul.f32.gmra.mxu0 %v9899
      %v10358 = vpop.f32.mrf.mxu0
      %v10359 = vadd.f32 %v5999, %v10358
      %10360 = vmatmul.f32.gmra.mxu0 %v9902
      %v10361 = vpop.f32.mrf.mxu0
      %v10362 = vadd.f32 %v5999, %v10361
      %10363 = vmatmul.f32.gmra.mxu0 %v9905
      %v10364 = vpop.f32.mrf.mxu0
      %v10365 = vadd.f32 %v5999, %v10364
      %10366 = vmatmul.f32.gmra.mxu0 %v9908
      %v10367 = vpop.f32.mrf.mxu0
      %v10368 = vadd.f32 %v5999, %v10367
      %10369 = vmatmul.f32.gmra.mxu0 %v9911
      %v10370 = vpop.f32.mrf.mxu0
      %v10371 = vadd.f32 %v5999, %v10370
      %10372 = vmatmul.f32.gmra.mxu0 %v9914
      %v10373 = vpop.f32.mrf.mxu0
      %v10374 = vadd.f32 %v5999, %v10373
      %10375 = vmatmul.f32.gmra.mxu0 %v9917
      %v10376 = vpop.f32.mrf.mxu0
      %v10377 = vadd.f32 %v5999, %v10376
      %10378 = vmatmul.f32.gmra.mxu0 %v9920
      %v10379 = vpop.f32.mrf.mxu0
      %v10380 = vadd.f32 %v5999, %v10379
      %10381 = vdwg.mxu0
      %10382 = vmatpush.msra.mxu0 0.0
      %10383 = vmatpush.msra.mxu0 0.0
      %10384 = vmatpush.msra.mxu0 0.0
      %10385 = vmatpush.msra.mxu0 0.0
      %10386 = vmatpush.msra.mxu0 0.0
      %10387 = vmatpush.msra.mxu0 0.0
      %10388 = vmatpush.msra.mxu0 0.0
      %10389 = vmatpush.msra.mxu0 0.0
      %10390 = vmatpush.msra.mxu0 0.0
      %10391 = vmatpush.msra.mxu0 0.0
      %10392 = vmatpush.msra.mxu0 0.0
      %10393 = vmatpush.msra.mxu0 0.0
      %10394 = vmatpush.msra.mxu0 0.0
      %10395 = vmatpush.msra.mxu0 0.0
      %10396 = vmatpush.msra.mxu0 0.0
      %10397 = vmatpush.msra.mxu0 %v389
      %10398 = vmatmul.f32.gmra.mxu0 %v9848
      %v10399 = vpop.f32.mrf.mxu0
      %v10400 = vadd.f32 %v6000, %v10399
      %10401 = vmatmul.f32.gmra.mxu0 %v9851
      %v10402 = vpop.f32.mrf.mxu0
      %v10403 = vadd.f32 %v6000, %v10402
      %10404 = vmatmul.f32.gmra.mxu0 %v9854
      %v10405 = vpop.f32.mrf.mxu0
      %v10406 = vadd.f32 %v6000, %v10405
      %10407 = vmatmul.f32.gmra.mxu0 %v9857
      %v10408 = vpop.f32.mrf.mxu0
      %v10409 = vadd.f32 %v6000, %v10408
      %10410 = vmatmul.f32.gmra.mxu0 %v9860
      %v10411 = vpop.f32.mrf.mxu0
      %v10412 = vadd.f32 %v6000, %v10411
      %10413 = vmatmul.f32.gmra.mxu0 %v9863
      %v10414 = vpop.f32.mrf.mxu0
      %v10415 = vadd.f32 %v6000, %v10414
      %10416 = vmatmul.f32.gmra.mxu0 %v9866
      %v10417 = vpop.f32.mrf.mxu0
      %v10418 = vadd.f32 %v6000, %v10417
      %10419 = vmatmul.f32.gmra.mxu0 %v9869
      %v10420 = vpop.f32.mrf.mxu0
      %v10421 = vadd.f32 %v6000, %v10420
      %10422 = vmatmul.f32.gmra.mxu0 %v9872
      %v10423 = vpop.f32.mrf.mxu0
      %v10424 = vadd.f32 %v6000, %v10423
      %10425 = vmatmul.f32.gmra.mxu0 %v9875
      %v10426 = vpop.f32.mrf.mxu0
      %v10427 = vadd.f32 %v6000, %v10426
      %10428 = vmatmul.f32.gmra.mxu0 %v9878
      %v10429 = vpop.f32.mrf.mxu0
      %v10430 = vadd.f32 %v6000, %v10429
      %10431 = vmatmul.f32.gmra.mxu0 %v9881
      %v10432 = vpop.f32.mrf.mxu0
      %v10433 = vadd.f32 %v6000, %v10432
      %10434 = vmatmul.f32.gmra.mxu0 %v9884
      %v10435 = vpop.f32.mrf.mxu0
      %v10436 = vadd.f32 %v6000, %v10435
      %10437 = vmatmul.f32.gmra.mxu0 %v9887
      %v10438 = vpop.f32.mrf.mxu0
      %v10439 = vadd.f32 %v6000, %v10438
      %10440 = vmatmul.f32.gmra.mxu0 %v9890
      %v10441 = vpop.f32.mrf.mxu0
      %v10442 = vadd.f32 %v6000, %v10441
      %10443 = vmatmul.f32.gmra.mxu0 %v9893
      %v10444 = vpop.f32.mrf.mxu0
      %v10445 = vadd.f32 %v6000, %v10444
      %10446 = vmatmul.f32.gmra.mxu0 %v9896
      %v10447 = vpop.f32.mrf.mxu0
      %v10448 = vadd.f32 %v6000, %v10447
      %10449 = vmatmul.f32.gmra.mxu0 %v9899
      %v10450 = vpop.f32.mrf.mxu0
      %v10451 = vadd.f32 %v6000, %v10450
      %10452 = vmatmul.f32.gmra.mxu0 %v9902
      %v10453 = vpop.f32.mrf.mxu0
      %v10454 = vadd.f32 %v6000, %v10453
      %10455 = vmatmul.f32.gmra.mxu0 %v9905
      %v10456 = vpop.f32.mrf.mxu0
      %v10457 = vadd.f32 %v6000, %v10456
      %10458 = vmatmul.f32.gmra.mxu0 %v9908
      %v10459 = vpop.f32.mrf.mxu0
      %v10460 = vadd.f32 %v6000, %v10459
      %10461 = vmatmul.f32.gmra.mxu0 %v9911
      %v10462 = vpop.f32.mrf.mxu0
      %v10463 = vadd.f32 %v6000, %v10462
      %10464 = vmatmul.f32.gmra.mxu0 %v9914
      %v10465 = vpop.f32.mrf.mxu0
      %v10466 = vadd.f32 %v6000, %v10465
      %10467 = vmatmul.f32.gmra.mxu0 %v9917
      %v10468 = vpop.f32.mrf.mxu0
      %v10469 = vadd.f32 %v6000, %v10468
      %10470 = vmatmul.f32.gmra.mxu0 %v9920
      %v10471 = vpop.f32.mrf.mxu0
      %v10472 = vadd.f32 %v6000, %v10471
      %10473 = vdwg.mxu0
      %s10474 = scalar_lea.vmem %s285, 1200
      %10475 = vst [vmem:[%s10474] sm:$0xff] %v9940
      %10476 = vst [vmem:[%s10474 + $0x8] sm:$0xff] %v10032
      %10477 = vst [vmem:[%s10474 + $0x10] sm:$0xff] %v10124
      %10478 = vst [vmem:[%s10474 + $0x18] sm:$0xff] %v10216
      %10479 = vst [vmem:[%s10474 + $0x20] sm:$0xff] %v10308
      %10480 = vst [vmem:[%s10474 + $0x28] sm:$0xff] %v10400
      %10481 = vst [vmem:[%s10474 + $0x30] sm:$0xff] %v9943
      %10482 = vst [vmem:[%s10474 + $0x38] sm:$0xff] %v10035
      %10483 = vst [vmem:[%s10474 + $0x40] sm:$0xff] %v10127
      %10484 = vst [vmem:[%s10474 + $0x48] sm:$0xff] %v10219
      %10485 = vst [vmem:[%s10474 + $0x50] sm:$0xff] %v10311
      %10486 = vst [vmem:[%s10474 + $0x58] sm:$0xff] %v10403
      %10487 = vst [vmem:[%s10474 + $0x60] sm:$0xff] %v9946
      %10488 = vst [vmem:[%s10474 + $0x68] sm:$0xff] %v10038
      %10489 = vst [vmem:[%s10474 + $0x70] sm:$0xff] %v10130
      %10490 = vst [vmem:[%s10474 + $0x78] sm:$0xff] %v10222
      %10491 = vst [vmem:[%s10474 + $0x80] sm:$0xff] %v10314
      %10492 = vst [vmem:[%s10474 + $0x88] sm:$0xff] %v10406
      %10493 = vst [vmem:[%s10474 + $0x90] sm:$0xff] %v9949
      %10494 = vst [vmem:[%s10474 + $0x98] sm:$0xff] %v10041
      %10495 = vst [vmem:[%s10474 + $0xa0] sm:$0xff] %v10133
      %10496 = vst [vmem:[%s10474 + $0xa8] sm:$0xff] %v10225
      %10497 = vst [vmem:[%s10474 + $0xb0] sm:$0xff] %v10317
      %10498 = vst [vmem:[%s10474 + $0xb8] sm:$0xff] %v10409
      %10499 = vst [vmem:[%s10474 + $0xc0] sm:$0xff] %v9952
      %10500 = vst [vmem:[%s10474 + $0xc8] sm:$0xff] %v10044
      %10501 = vst [vmem:[%s10474 + $0xd0] sm:$0xff] %v10136
      %10502 = vst [vmem:[%s10474 + $0xd8] sm:$0xff] %v10228
      %10503 = vst [vmem:[%s10474 + $0xe0] sm:$0xff] %v10320
      %10504 = vst [vmem:[%s10474 + $0xe8] sm:$0xff] %v10412
      %10505 = vst [vmem:[%s10474 + $0xf0] sm:$0xff] %v9955
      %10506 = vst [vmem:[%s10474 + $0xf8] sm:$0xff] %v10047
      %10507 = vst [vmem:[%s10474 + $0x100] sm:$0xff] %v10139
      %10508 = vst [vmem:[%s10474 + $0x108] sm:$0xff] %v10231
      %10509 = vst [vmem:[%s10474 + $0x110] sm:$0xff] %v10323
      %10510 = vst [vmem:[%s10474 + $0x118] sm:$0xff] %v10415
      %10511 = vst [vmem:[%s10474 + $0x120] sm:$0xff] %v9958
      %10512 = vst [vmem:[%s10474 + $0x128] sm:$0xff] %v10050
      %10513 = vst [vmem:[%s10474 + $0x130] sm:$0xff] %v10142
      %10514 = vst [vmem:[%s10474 + $0x138] sm:$0xff] %v10234
      %10515 = vst [vmem:[%s10474 + $0x140] sm:$0xff] %v10326
      %10516 = vst [vmem:[%s10474 + $0x148] sm:$0xff] %v10418
      %10517 = vst [vmem:[%s10474 + $0x150] sm:$0xff] %v9961
      %10518 = vst [vmem:[%s10474 + $0x158] sm:$0xff] %v10053
      %10519 = vst [vmem:[%s10474 + $0x160] sm:$0xff] %v10145
      %10520 = vst [vmem:[%s10474 + $0x168] sm:$0xff] %v10237
      %10521 = vst [vmem:[%s10474 + $0x170] sm:$0xff] %v10329
      %10522 = vst [vmem:[%s10474 + $0x178] sm:$0xff] %v10421
      %10523 = vst [vmem:[%s10474 + $0x180] sm:$0xff] %v9964
      %10524 = vst [vmem:[%s10474 + $0x188] sm:$0xff] %v10056
      %10525 = vst [vmem:[%s10474 + $0x190] sm:$0xff] %v10148
      %10526 = vst [vmem:[%s10474 + $0x198] sm:$0xff] %v10240
      %10527 = vst [vmem:[%s10474 + $0x1a0] sm:$0xff] %v10332
      %10528 = vst [vmem:[%s10474 + $0x1a8] sm:$0xff] %v10424
      %10529 = vst [vmem:[%s10474 + $0x1b0] sm:$0xff] %v9967
      %10530 = vst [vmem:[%s10474 + $0x1b8] sm:$0xff] %v10059
      %10531 = vst [vmem:[%s10474 + $0x1c0] sm:$0xff] %v10151
      %10532 = vst [vmem:[%s10474 + $0x1c8] sm:$0xff] %v10243
      %10533 = vst [vmem:[%s10474 + $0x1d0] sm:$0xff] %v10335
      %10534 = vst [vmem:[%s10474 + $0x1d8] sm:$0xff] %v10427
      %10535 = vst [vmem:[%s10474 + $0x1e0] sm:$0xff] %v9970
      %10536 = vst [vmem:[%s10474 + $0x1e8] sm:$0xff] %v10062
      %10537 = vst [vmem:[%s10474 + $0x1f0] sm:$0xff] %v10154
      %10538 = vst [vmem:[%s10474 + $0x1f8] sm:$0xff] %v10246
      %10539 = vst [vmem:[%s10474 + $0x200] sm:$0xff] %v10338
      %10540 = vst [vmem:[%s10474 + $0x208] sm:$0xff] %v10430
      %10541 = vst [vmem:[%s10474 + $0x210] sm:$0xff] %v9973
      %10542 = vst [vmem:[%s10474 + $0x218] sm:$0xff] %v10065
      %10543 = vst [vmem:[%s10474 + $0x220] sm:$0xff] %v10157
      %10544 = vst [vmem:[%s10474 + $0x228] sm:$0xff] %v10249
      %10545 = vst [vmem:[%s10474 + $0x230] sm:$0xff] %v10341
      %10546 = vst [vmem:[%s10474 + $0x238] sm:$0xff] %v10433
      %10547 = vst [vmem:[%s10474 + $0x240] sm:$0xff] %v9976
      %10548 = vst [vmem:[%s10474 + $0x248] sm:$0xff] %v10068
      %10549 = vst [vmem:[%s10474 + $0x250] sm:$0xff] %v10160
      %10550 = vst [vmem:[%s10474 + $0x258] sm:$0xff] %v10252
      %10551 = vst [vmem:[%s10474 + $0x260] sm:$0xff] %v10344
      %10552 = vst [vmem:[%s10474 + $0x268] sm:$0xff] %v10436
      %10553 = vst [vmem:[%s10474 + $0x270] sm:$0xff] %v9979
      %10554 = vst [vmem:[%s10474 + $0x278] sm:$0xff] %v10071
      %10555 = vst [vmem:[%s10474 + $0x280] sm:$0xff] %v10163
      %10556 = vst [vmem:[%s10474 + $0x288] sm:$0xff] %v10255
      %10557 = vst [vmem:[%s10474 + $0x290] sm:$0xff] %v10347
      %10558 = vst [vmem:[%s10474 + $0x298] sm:$0xff] %v10439
      %10559 = vst [vmem:[%s10474 + $0x2a0] sm:$0xff] %v9982
      %10560 = vst [vmem:[%s10474 + $0x2a8] sm:$0xff] %v10074
      %10561 = vst [vmem:[%s10474 + $0x2b0] sm:$0xff] %v10166
      %10562 = vst [vmem:[%s10474 + $0x2b8] sm:$0xff] %v10258
      %10563 = vst [vmem:[%s10474 + $0x2c0] sm:$0xff] %v10350
      %10564 = vst [vmem:[%s10474 + $0x2c8] sm:$0xff] %v10442
      %10565 = vst [vmem:[%s10474 + $0x2d0] sm:$0xff] %v9985
      %10566 = vst [vmem:[%s10474 + $0x2d8] sm:$0xff] %v10077
      %10567 = vst [vmem:[%s10474 + $0x2e0] sm:$0xff] %v10169
      %10568 = vst [vmem:[%s10474 + $0x2e8] sm:$0xff] %v10261
      %10569 = vst [vmem:[%s10474 + $0x2f0] sm:$0xff] %v10353
      %10570 = vst [vmem:[%s10474 + $0x2f8] sm:$0xff] %v10445
      %10571 = vst [vmem:[%s10474 + $0x300] sm:$0xff] %v9988
      %10572 = vst [vmem:[%s10474 + $0x308] sm:$0xff] %v10080
      %10573 = vst [vmem:[%s10474 + $0x310] sm:$0xff] %v10172
      %10574 = vst [vmem:[%s10474 + $0x318] sm:$0xff] %v10264
      %10575 = vst [vmem:[%s10474 + $0x320] sm:$0xff] %v10356
      %10576 = vst [vmem:[%s10474 + $0x328] sm:$0xff] %v10448
      %10577 = vst [vmem:[%s10474 + $0x330] sm:$0xff] %v9991
      %10578 = vst [vmem:[%s10474 + $0x338] sm:$0xff] %v10083
      %10579 = vst [vmem:[%s10474 + $0x340] sm:$0xff] %v10175
      %10580 = vst [vmem:[%s10474 + $0x348] sm:$0xff] %v10267
      %10581 = vst [vmem:[%s10474 + $0x350] sm:$0xff] %v10359
      %10582 = vst [vmem:[%s10474 + $0x358] sm:$0xff] %v10451
      %10583 = vst [vmem:[%s10474 + $0x360] sm:$0xff] %v9994
      %10584 = vst [vmem:[%s10474 + $0x368] sm:$0xff] %v10086
      %10585 = vst [vmem:[%s10474 + $0x370] sm:$0xff] %v10178
      %10586 = vst [vmem:[%s10474 + $0x378] sm:$0xff] %v10270
      %10587 = vst [vmem:[%s10474 + $0x380] sm:$0xff] %v10362
      %10588 = vst [vmem:[%s10474 + $0x388] sm:$0xff] %v10454
      %10589 = vst [vmem:[%s10474 + $0x390] sm:$0xff] %v9997
      %10590 = vst [vmem:[%s10474 + $0x398] sm:$0xff] %v10089
      %10591 = vst [vmem:[%s10474 + $0x3a0] sm:$0xff] %v10181
      %10592 = vst [vmem:[%s10474 + $0x3a8] sm:$0xff] %v10273
      %10593 = vst [vmem:[%s10474 + $0x3b0] sm:$0xff] %v10365
      %10594 = vst [vmem:[%s10474 + $0x3b8] sm:$0xff] %v10457
      %10595 = vst [vmem:[%s10474 + $0x3c0] sm:$0xff] %v10000
      %10596 = vst [vmem:[%s10474 + $0x3c8] sm:$0xff] %v10092
      %10597 = vst [vmem:[%s10474 + $0x3d0] sm:$0xff] %v10184
      %10598 = vst [vmem:[%s10474 + $0x3d8] sm:$0xff] %v10276
      %10599 = vst [vmem:[%s10474 + $0x3e0] sm:$0xff] %v10368
      %10600 = vst [vmem:[%s10474 + $0x3e8] sm:$0xff] %v10460
      %10601 = vst [vmem:[%s10474 + $0x3f0] sm:$0xff] %v10003
      %10602 = vst [vmem:[%s10474 + $0x3f8] sm:$0xff] %v10095
      %10603 = vst [vmem:[%s10474 + $0x400] sm:$0xff] %v10187
      %10604 = vst [vmem:[%s10474 + $0x408] sm:$0xff] %v10279
      %10605 = vst [vmem:[%s10474 + $0x410] sm:$0xff] %v10371
      %10606 = vst [vmem:[%s10474 + $0x418] sm:$0xff] %v10463
      %10607 = vst [vmem:[%s10474 + $0x420] sm:$0xff] %v10006
      %10608 = vst [vmem:[%s10474 + $0x428] sm:$0xff] %v10098
      %10609 = vst [vmem:[%s10474 + $0x430] sm:$0xff] %v10190
      %10610 = vst [vmem:[%s10474 + $0x438] sm:$0xff] %v10282
      %10611 = vst [vmem:[%s10474 + $0x440] sm:$0xff] %v10374
      %10612 = vst [vmem:[%s10474 + $0x448] sm:$0xff] %v10466
      %10613 = vst [vmem:[%s10474 + $0x450] sm:$0xff] %v10009
      %10614 = vst [vmem:[%s10474 + $0x458] sm:$0xff] %v10101
      %10615 = vst [vmem:[%s10474 + $0x460] sm:$0xff] %v10193
      %10616 = vst [vmem:[%s10474 + $0x468] sm:$0xff] %v10285
      %10617 = vst [vmem:[%s10474 + $0x470] sm:$0xff] %v10377
      %10618 = vst [vmem:[%s10474 + $0x478] sm:$0xff] %v10469
      %10619 = vst [vmem:[%s10474 + $0x480] sm:$0x1f] %v10012
      %10620 = vst [vmem:[%s10474 + $0x488] sm:$0x1f] %v10104
      %10621 = vst [vmem:[%s10474 + $0x490] sm:$0x1f] %v10196
      %10622 = vst [vmem:[%s10474 + $0x498] sm:$0x1f] %v10288
      %10623 = vst [vmem:[%s10474 + $0x4a0] sm:$0x1f] %v10380
      %10624 = vst [vmem:[%s10474 + $0x4a8] sm:$0x1f] %v10472
      %s10625 = smul.u32 2, %s18
      %p10626 = scmp.lt.s32.totalorder %s10625, 3
      %s10627 = scalar_select %p10626, %s10625, 3
      %s10628 = smul.addr %s10627, 150
      %s10629 = smul.addr %s10628, 8
      %s10630 = scalar_lea.vmem %s7, %s10629
      // Predicated region
      $region49: #{tpu_custom_call.1} parent=47 // pred_check
        %p10631 = pneg %p188
      $region50: #{tpu_custom_call.1} parent=47 // pred_check_branch
        %10633 = sbr.rel (%p10631) target = $region52
      $region51: #{tpu_custom_call.1} parent=47 // pred_region
        %s10634 = smul.u32 2, %s18
      $region52: #{tpu_custom_call.1} parent=47 // pred_fallthru
        _
    $region48: #{tpu_custom_call.1} parent=5 // pred_fallthru
      _
    %p10635 = scmp.le.s32.totalorder 2, %s13
    // Predicated region
    $region53: #{tpu_custom_call.1} parent=5 // pred_check
      %p10636 = pneg %p10635
    $region54: #{tpu_custom_call.1} parent=5 // pred_check_branch
      %10638 = sbr.rel (%p10636) target = $region56
    $region55: #{tpu_custom_call.1} parent=5 // pred_region
      %s10639 = ssub.s32 %s13, 2
      // Predicated region
      $region57: #{tpu_custom_call.1} parent=55 // pred_check
        %p10640 = pneg %p194
      $region58: #{tpu_custom_call.1} parent=55 // pred_check_branch
        %10642 = sbr.rel (%p10640) target = $region60
      $region59: #{tpu_custom_call.1} parent=55 // pred_region
        %s10643 = smul.u32 2, %s19
        %p10644 = scmp.lt.s32.totalorder %s10643, 3
        %s10645 = scalar_select %p10644, %s10643, 3
        %s10646 = smul.addr %s10645, 150
        %s10647 = smul.addr %s10646, 8
        %s10648 = scalar_lea.vmem %s7, %s10647
      $region60: #{tpu_custom_call.1} parent=55 // pred_fallthru
        _
    $region56: #{tpu_custom_call.1} parent=5 // pred_fallthru
      _
  $region6: #{tpu_custom_call.1} parent=0 // loop_footer
    %s17 = sadd.s32 1, %s13
  $region7: #{tpu_custom_call.1} parent=0 // loop_footer_branch
    %12 = sbr.rel target = $region3
  $region8: #{tpu_custom_call.1} parent=0 // loop_exit
    _

</llo_original>
